<compile_context>
chip_gen: v6e
topology: v6e:2x2x1
jax: 0.10.0
libtpu: 0.0.40
codegen_flags: <defaults>
</compile_context>

<pallas_src>
import functools

import jax
import jax.numpy as jnp
from jax import lax
from jax.experimental import pallas as pl
from jax.experimental.pallas import tpu as pltpu

NEG_SLOPE = 0.01  # nn.LeakyReLU default negative_slope


def _round_up(x, m):
    return ((x + m - 1) // m) * m


# --------------------------------------------------------------------------
# Generic tiled linear:  Y = act(X @ W + b), reduction over K tiled on the grid.
# Weights are PRE-padded (and possibly bf16) at init time; only the tiny X is
# padded/cast per call.
# --------------------------------------------------------------------------
def _linear_kernel(x_ref, w_ref, b_ref, o_ref, acc_ref, *, apply_act):
    k = pl.program_id(2)

    @pl.when(k == 0)
    def _():
        acc_ref[...] = jnp.zeros_like(acc_ref)

    acc_ref[...] += jnp.dot(x_ref[...], w_ref[...],
                            preferred_element_type=jnp.float32)

    @pl.when(k == pl.num_programs(2) - 1)
    def _():
        y = acc_ref[...] + b_ref[...]
        if apply_act:
            y = jnp.where(y > 0, y, NEG_SLOPE * y)
        o_ref[...] = y.astype(o_ref.dtype)


def prep_linear_weights(w, b, *, dtype=jnp.float32, tk_max=2048, tn_max=512):
    """Pad (K, N) weight / (N,) bias once; optionally store weight in bf16."""
    K, N = w.shape
    tk = min(tk_max, _round_up(K, 128))
    Kp = _round_up(K, tk)
    tn = min(tn_max, _round_up(N, 128))
    Np = _round_up(N, tn)
    wp = jnp.zeros((Kp, Np), dtype).at[:K, :N].set(w.astype(dtype))
    bp = jnp.zeros((1, Np), jnp.float32).at[0, :N].set(b.astype(jnp.float32))
    return wp, bp


def apply_linear(x, wp, bp, *, n_out, apply_act=False):
    """x: (M, K) f32 (unpadded).  wp/bp: pre-padded weight/bias from prep_linear_weights."""
    M, K = x.shape
    Kp, Np = wp.shape
    dtype = wp.dtype
    tk = min(2048, Kp)          # must match prep_linear_weights tiling
    tn = min(512, Np)           # tn=512 -> two parallel N tiles (v7x 2 TCs) on the mix matmul
    Mp = _round_up(M, 16)
    tm = Mp

    xp = jnp.zeros((Mp, Kp), dtype).at[:M, :K].set(x.astype(dtype))
    grid = (Mp // tm, Np // tn, Kp // tk)
    out = pl.pallas_call(
        functools.partial(_linear_kernel, apply_act=apply_act),
        out_shape=jax.ShapeDtypeStruct((Mp, Np), jnp.float32),
        grid=grid,
        in_specs=[
            pl.BlockSpec((tm, tk), lambda i, j, k: (i, k)),
            pl.BlockSpec((tk, tn), lambda i, j, k: (k, j)),
            pl.BlockSpec((1, tn), lambda i, j, k: (0, j)),
        ],
        out_specs=pl.BlockSpec((tm, tn), lambda i, j, k: (i, j)),
        scratch_shapes=[pltpu.VMEM((tm, tn), jnp.float32)],
        compiler_params=pltpu.CompilerParams(
            dimension_semantics=("parallel", "parallel", "arbitrary")),
    )(xp, wp, bp)
    return out[:M, :n_out]


# --------------------------------------------------------------------------
# Fused molecule branch: 3x SAGEConv(mean)+LeakyReLU -> global max pool -> fcg1
# All feature widths pre-padded to multiples of 128; one pallas_call.
# --------------------------------------------------------------------------
def _mol_kernel(a_ref, x_ref, m_ref,
                w1l_ref, w1r_ref, b1_ref,
                w2l_ref, w2r_ref, b2_ref,
                w3l_ref, w3r_ref, b3_ref,
                wg_ref, bg_ref, o_ref, *, n_graphs):
    a = a_ref[...]

    def sage(h, wl, wr, b):
        agg = jnp.dot(a, h, preferred_element_type=jnp.float32)
        y = (jnp.dot(agg, wl, preferred_element_type=jnp.float32)
             + jnp.dot(h, wr, preferred_element_type=jnp.float32) + b)
        return jnp.where(y > 0, y, NEG_SLOPE * y)

    h = sage(x_ref[...], w1l_ref[...], w1r_ref[...], b1_ref[...])
    h = sage(h, w2l_ref[...], w2r_ref[...], b2_ref[...])
    h = sage(h, w3l_ref[...], w3r_ref[...], b3_ref[...])

    # global max pool per graph, accumulated locally, single lane-dense store at end
    m = m_ref[...]                                    # (N_pad, n_graphs) one-hot (f32)
    neg = jnp.float32(-1e30)
    pooled = jnp.concatenate(
        [jnp.max(jnp.where(m[:, g:g + 1] > 0.5, h, neg), axis=0, keepdims=True)
         for g in range(n_graphs)], axis=0)           # (n_graphs, F3p)

    o_ref[...] = (jnp.dot(pooled, wg_ref[...], preferred_element_type=jnp.float32)
                  + bg_ref[...])                      # mol_fc_g1 (no activation)


def mol_branch(a_mean, x_pad, mask, mp, n_graphs):
    hidden_out = mp['wg'].shape[1]
    return pl.pallas_call(
        functools.partial(_mol_kernel, n_graphs=n_graphs),
        out_shape=jax.ShapeDtypeStruct((n_graphs, hidden_out), jnp.float32),
    )(a_mean, x_pad, mask,
      mp['w1l'], mp['w1r'], mp['b1'],
      mp['w2l'], mp['w2r'], mp['b2'],
      mp['w3l'], mp['w3r'], mp['b3'],
      mp['wg'], mp['bg'])


# --------------------------------------------------------------------------
# LSTM recurrence (input projection already hoisted out) + length-masked mean.
#   gx[t] = x[t] @ W_ih + (b_ih + b_hh)   -- precomputed by one batched matmul
#   in-loop: gates = gx[t] + h @ W_hh ; masked accumulate of h ; divide by t_total.
# The loop is bounded by max(len) read from SMEM.
# --------------------------------------------------------------------------
def _lstm_kernel(maxlen_ref, lens_ref, gx_ref, whh_ref, o_ref,
                 h_ref, c_ref, acc_ref, *, hidden, t_total):
    h_ref[...] = jnp.zeros_like(h_ref)
    c_ref[...] = jnp.zeros_like(c_ref)
    acc_ref[...] = jnp.zeros_like(acc_ref)
    n_steps = maxlen_ref[0]                           # scalar from SMEM

    def step(t, carry):
        gates = gx_ref[t] + jnp.dot(h_ref[...], whh_ref[...],
                                    preferred_element_type=jnp.float32)
        i = jax.nn.sigmoid(gates[:, 0 * hidden:1 * hidden])
        f = jax.nn.sigmoid(gates[:, 1 * hidden:2 * hidden])
        g = jnp.tanh(gates[:, 2 * hidden:3 * hidden])
        o = jax.nn.sigmoid(gates[:, 3 * hidden:4 * hidden])
        c = f * c_ref[...] + i * g
        h = o * jnp.tanh(c)
        c_ref[...] = c
        h_ref[...] = h
        mask = (t < lens_ref[...]).astype(jnp.float32)   # (B, 1)
        acc_ref[...] += mask * h
        return carry

    lax.fori_loop(0, n_steps, step, 0)
    o_ref[...] = acc_ref[...] * (1.0 / jnp.float32(t_total))


def lstm_recurrence_mean(gx, whh, lens_v, maxlen, *, hidden, t_total):
    T, B, G = gx.shape
    return pl.pallas_call(
        functools.partial(_lstm_kernel, hidden=hidden, t_total=t_total),
        out_shape=jax.ShapeDtypeStruct((B, hidden), jnp.float32),
        in_specs=[
            pl.BlockSpec(memory_space=pltpu.MemorySpace.SMEM),   # maxlen (1,) int32
            pl.BlockSpec(memory_space=pltpu.MemorySpace.VMEM),   # lens   (B, 1) int32
            pl.BlockSpec(memory_space=pltpu.MemorySpace.VMEM),   # gx     (T, B, 4H)
            pl.BlockSpec(memory_space=pltpu.MemorySpace.VMEM),   # whh    (H, 4H)
        ],
        out_specs=pl.BlockSpec(memory_space=pltpu.MemorySpace.VMEM),
        scratch_shapes=[pltpu.VMEM((B, hidden), jnp.float32),
                        pltpu.VMEM((B, hidden), jnp.float32),
                        pltpu.VMEM((B, hidden), jnp.float32)],
    )(maxlen, lens_v, gx, whh)


# --------------------------------------------------------------------------
# Parameter init (deterministic, synthetic) + one-time preparation (pad / cast).
# --------------------------------------------------------------------------
def init_params(key, emb_size, hidden, nf_mol, n_output=1):
    ks = jax.random.split(key, 20)

    def w(k, shape, scale=0.05):
        return scale * jax.random.normal(k, shape, jnp.float32)

    p = {}
    p['c1_wl'] = w(ks[0], (nf_mol, nf_mol * 2))
    p['c1_wr'] = w(ks[1], (nf_mol, nf_mol * 2))
    p['c1_b'] = w(ks[2], (nf_mol * 2,))
    p['c2_wl'] = w(ks[3], (nf_mol * 2, nf_mol * 2))
    p['c2_wr'] = w(ks[4], (nf_mol * 2, nf_mol * 2))
    p['c2_b'] = w(ks[5], (nf_mol * 2,))
    p['c3_wl'] = w(ks[6], (nf_mol * 2, nf_mol * 4))
    p['c3_wr'] = w(ks[7], (nf_mol * 2, nf_mol * 4))
    p['c3_b'] = w(ks[8], (nf_mol * 4,))
    p['fcg1_w'] = w(ks[9], (nf_mol * 4, hidden))
    p['fcg1_b'] = w(ks[10], (hidden,))
    p['lstm_wih'] = w(ks[11], (emb_size, 4 * hidden))
    p['lstm_whh'] = w(ks[12], (hidden, 4 * hidden))
    p['lstm_b'] = w(ks[13], (4 * hidden,))            # b_ih + b_hh combined
    d_mix = (hidden + 1) * (hidden + 1)               # 129*129 = 16641
    p['mix_w'] = w(ks[14], (d_mix, 1024), scale=0.01)
    p['mix_b'] = w(ks[15], (1024,))
    p['fc1_w'] = w(ks[16], (1024 + 2 * (hidden + 1), 512))
    p['fc1_b'] = w(ks[17], (512,))
    p['fc2_w'] = w(ks[18], (512, n_output))
    p['fc2_b'] = w(ks[19], (n_output,))
    return p


def prepare_params(p, *, hidden, nf_mol):
    """One-time padding / dtype conversion of all weights (no per-forward re-padding)."""
    F0, F1, F2 = nf_mol, nf_mol * 2, nf_mol * 4
    F0p, F1p, F2p = _round_up(F0, 128), _round_up(F1, 128), _round_up(F2, 128)
    Hp = _round_up(hidden, 128)

    def pad_w(w, rp, cp):
        r, c = w.shape
        return jnp.zeros((rp, cp), jnp.float32).at[:r, :c].set(w)

    def pad_b(b, cp):
        return jnp.zeros((1, cp), jnp.float32).at[0, :b.shape[0]].set(b)

    wih, lstm_b = prep_linear_weights(p['lstm_wih'], p['lstm_b'], dtype=jnp.float32)
    mix_w, mix_b = prep_linear_weights(p['mix_w'], p['mix_b'], dtype=jnp.bfloat16)
    fc1_w, fc1_b = prep_linear_weights(p['fc1_w'], p['fc1_b'], dtype=jnp.bfloat16)
    fc2_w, fc2_b = prep_linear_weights(p['fc2_w'], p['fc2_b'], dtype=jnp.float32)

    return {
        'mol': {
            'w1l': pad_w(p['c1_wl'], F0p, F1p), 'w1r': pad_w(p['c1_wr'], F0p, F1p),
            'b1': pad_b(p['c1_b'], F1p),
            'w2l': pad_w(p['c2_wl'], F1p, F1p), 'w2r': pad_w(p['c2_wr'], F1p, F1p),
            'b2': pad_b(p['c2_b'], F1p),
            'w3l': pad_w(p['c3_wl'], F1p, F2p), 'w3r': pad_w(p['c3_wr'], F1p, F2p),
            'b3': pad_b(p['c3_b'], F2p),
            'wg': pad_w(p['fcg1_w'], F2p, Hp), 'bg': pad_b(p['fcg1_b'], Hp),
        },
        'lstm_wih': wih, 'lstm_b': lstm_b, 'lstm_whh': p['lstm_whh'],
        'mix_w': mix_w, 'mix_b': mix_b,
        'fc1_w': fc1_w, 'fc1_b': fc1_b,
        'fc2_w': fc2_w, 'fc2_b': fc2_b,
    }


# --------------------------------------------------------------------------
# Forward pass
# --------------------------------------------------------------------------
def cpi_regression_forward(prep, mol_x, mol_edge_index, mol_batch,
                           data_pro, data_pro_len, *, n_graphs,
                           hidden=128, max_length=16, n_output=1):
    B = n_graphs
    n_nodes, nf = mol_x.shape
    n_pad = _round_up(n_nodes, 8)
    F0p = prep['mol']['w1l'].shape[0]

    # ---- molecule branch (single fused Pallas kernel)
    # mean-aggregation adjacency: A[i, j] = 1/in_deg(i) for edge j -> i
    src, dst = mol_edge_index[0], mol_edge_index[1]
    a = jnp.zeros((n_pad, n_pad), jnp.float32).at[dst, src].add(1.0)
    deg = a.sum(axis=1, keepdims=True)
    a_mean = jnp.where(deg > 0, a / jnp.maximum(deg, 1.0), 0.0)
    x_pad = jnp.zeros((n_pad, F0p), jnp.float32).at[:n_nodes, :nf].set(mol_x)
    batch_pad = jnp.full((n_pad,), -1, jnp.int32).at[:n_nodes].set(mol_batch.astype(jnp.int32))
    mask = (batch_pad[:, None] == jnp.arange(n_graphs, dtype=jnp.int32)[None, :])
    mask = mask.astype(jnp.float32)                                  # (N_pad, B)
    x = mol_branch(a_mean, x_pad, mask, prep['mol'], n_graphs)       # (B, Hp)
    x = x[:, :hidden]                                                # (B, 128)

    # ---- protein branch: batched input projection, then LSTM recurrence kernel
    Bp, T, E = data_pro.shape
    t_total = max(1500, max_length)   # pad_packed_sequence(total_length=max(1500, max_length))
    gx_flat = apply_linear(data_pro.reshape(Bp * T, E), prep['lstm_wih'],
                           prep['lstm_b'], n_out=4 * hidden)         # (B*T, 4H)
    gx = gx_flat.reshape(Bp, T, 4 * hidden).transpose(1, 0, 2)       # (T, B, 4H) time-major
    lens_v = data_pro_len.reshape(Bp, 1).astype(jnp.int32)
    maxlen = jnp.minimum(jnp.max(data_pro_len), T).astype(jnp.int32).reshape(1)
    xt = lstm_recurrence_mean(gx, prep['lstm_whh'], lens_v, maxlen,
                              hidden=hidden, t_total=t_total)        # (B, 128)

    # ---- mix: outer product (tiny glue) feeding the big Pallas matmul
    ones = jnp.ones((B, 1), jnp.float32)
    prot_out = jnp.concatenate([xt, ones], axis=1)                   # (B, 129)
    comp_out = jnp.concatenate([x, ones], axis=1)                    # (B, 129)
    outer = (prot_out[:, :, None] * comp_out[:, None, :]).reshape(B, -1)   # (B, 16641)

    mixed = apply_linear(outer, prep['mix_w'], prep['mix_b'],
                         n_out=1024, apply_act=True)                 # Linear(16641,1024)+LeakyReLU
    cat = jnp.concatenate([mixed, prot_out, comp_out], axis=1)       # (B, 1282) skip connection
    h1 = apply_linear(cat, prep['fc1_w'], prep['fc1_b'],
                      n_out=512, apply_act=True)                     # Linear(1282,512)+LeakyReLU
    out = apply_linear(h1, prep['fc2_w'], prep['fc2_b'],
                       n_out=n_output, apply_act=False)              # Linear(512,1)
    return out


# --------------------------------------------------------------------------
if __name__ == "__main__":
    key = jax.random.PRNGKey(0)
    B = 2                 # number of protein/compound pairs (graphs)
    emb_size = 32
    max_length = 16
    hidden = 128          # module default hidden_size
    nf_mol = 78           # module default num_features_mol
    n_per_graph = 10
    n_nodes = B * n_per_graph

    k_params, k_molx, k_pro = jax.random.split(key, 3)
    params = init_params(k_params, emb_size, hidden, nf_mol, n_output=1)
    prep = prepare_params(params, hidden=hidden, nf_mol=nf_mol)   # one-time pad / bf16 cast

    # molecule graphs: two 10-node chains with bidirectional edges
    mol_x = jax.random.normal(k_molx, (n_nodes, nf_mol), jnp.float32)
    edges = []
    for gidx in range(B):
        base = gidx * n_per_graph
        for i in range(n_per_graph - 1):
            edges.append((base + i, base + i + 1))
            edges.append((base + i + 1, base + i))
    edge_index = jnp.array(edges, dtype=jnp.int32).T             # (2, E)
    mol_batch = jnp.repeat(jnp.arange(B, dtype=jnp.int32), n_per_graph)

    # protein sequences (padded) + lengths
    data_pro = jax.random.normal(k_pro, (B, max_length, emb_size), jnp.float32)
    data_pro_len = jnp.array([max_length, 11], dtype=jnp.int32)

    fwd = jax.jit(functools.partial(cpi_regression_forward, n_graphs=B,
                                    hidden=hidden, max_length=max_length, n_output=1))
    out = jax.block_until_ready(fwd(prep, mol_x, edge_index, mol_batch,
                                    data_pro, data_pro_len))
    assert out.shape == (B, 1), out.shape
    print("KERNEL_OK")
</pallas_src>

<mosaic_0001>
module attributes {stable_mosaic.version = 11 : i64} {
  func.func @_mol_kernel(%arg0: memref<24x24xf32, #tpu.memory_space<vmem>>, %arg1: memref<24x128xf32, #tpu.memory_space<vmem>>, %arg2: memref<24x2xf32, #tpu.memory_space<vmem>>, %arg3: memref<128x256xf32, #tpu.memory_space<vmem>>, %arg4: memref<128x256xf32, #tpu.memory_space<vmem>>, %arg5: memref<1x256xf32, #tpu.memory_space<vmem>>, %arg6: memref<256x256xf32, #tpu.memory_space<vmem>>, %arg7: memref<256x256xf32, #tpu.memory_space<vmem>>, %arg8: memref<1x256xf32, #tpu.memory_space<vmem>>, %arg9: memref<256x384xf32, #tpu.memory_space<vmem>>, %arg10: memref<256x384xf32, #tpu.memory_space<vmem>>, %arg11: memref<1x384xf32, #tpu.memory_space<vmem>>, %arg12: memref<384x128xf32, #tpu.memory_space<vmem>>, %arg13: memref<1x128xf32, #tpu.memory_space<vmem>>, %arg14: memref<2x128xf32, #tpu.memory_space<vmem>>) attributes {dimension_semantics = [], scalar_prefetch = 0 : i64, scratch_operands = 0 : i64, tpu.core_type = #tpu.core_type<tc>} {
    %c0 = arith.constant 0 : index
    %c0_0 = arith.constant 0 : index
    %0 = vector.load %arg0[%c0, %c0_0] : memref<24x24xf32, #tpu.memory_space<vmem>>, vector<24x24xf32>
    %c0_1 = arith.constant 0 : index
    %c0_2 = arith.constant 0 : index
    %1 = vector.load %arg1[%c0_1, %c0_2] : memref<24x128xf32, #tpu.memory_space<vmem>>, vector<24x128xf32>
    %c0_3 = arith.constant 0 : index
    %c0_4 = arith.constant 0 : index
    %2 = vector.load %arg3[%c0_3, %c0_4] : memref<128x256xf32, #tpu.memory_space<vmem>>, vector<128x256xf32>
    %c0_5 = arith.constant 0 : index
    %c0_6 = arith.constant 0 : index
    %3 = vector.load %arg4[%c0_5, %c0_6] : memref<128x256xf32, #tpu.memory_space<vmem>>, vector<128x256xf32>
    %c0_7 = arith.constant 0 : index
    %c0_8 = arith.constant 0 : index
    %4 = vector.load %arg5[%c0_7, %c0_8] : memref<1x256xf32, #tpu.memory_space<vmem>>, vector<1x256xf32>
    %cst = arith.constant dense<0.000000e+00> : vector<24x128xf32>
    %5 = tpu.matmul %0, %1, %cst {dimension_numbers = #tpu.dot_dimension_numbers<[1], [0], [0], [1], [0, 0, 1, 1], [], []>} : vector<24x24xf32>, vector<24x128xf32>, vector<24x128xf32> -> vector<24x128xf32>
    %cst_9 = arith.constant dense<0.000000e+00> : vector<24x256xf32>
    %6 = tpu.matmul %5, %2, %cst_9 {dimension_numbers = #tpu.dot_dimension_numbers<[1], [0], [0], [1], [0, 0, 1, 1], [], []>} : vector<24x128xf32>, vector<128x256xf32>, vector<24x256xf32> -> vector<24x256xf32>
    %cst_10 = arith.constant dense<0.000000e+00> : vector<24x256xf32>
    %7 = tpu.matmul %1, %3, %cst_10 {dimension_numbers = #tpu.dot_dimension_numbers<[1], [0], [0], [1], [0, 0, 1, 1], [], []>} : vector<24x128xf32>, vector<128x256xf32>, vector<24x256xf32> -> vector<24x256xf32>
    %8 = arith.addf %6, %7 : vector<24x256xf32>
    %9 = vector.broadcast %4 : vector<1x256xf32> to vector<24x256xf32>
    %10 = arith.addf %8, %9 : vector<24x256xf32>
    %cst_11 = arith.constant 0.000000e+00 : f32
    %11 = vector.broadcast %cst_11 : f32 to vector<24x256xf32>
    %12 = arith.cmpf ogt, %10, %11 : vector<24x256xf32>
    %cst_12 = arith.constant 0.00999999977 : f32
    %13 = vector.broadcast %cst_12 : f32 to vector<24x256xf32>
    %14 = arith.mulf %13, %10 : vector<24x256xf32>
    %15 = arith.select %12, %10, %14 : vector<24x256xi1>, vector<24x256xf32>
    %c0_13 = arith.constant 0 : index
    %c0_14 = arith.constant 0 : index
    %16 = vector.load %arg6[%c0_13, %c0_14] : memref<256x256xf32, #tpu.memory_space<vmem>>, vector<256x256xf32>
    %c0_15 = arith.constant 0 : index
    %c0_16 = arith.constant 0 : index
    %17 = vector.load %arg7[%c0_15, %c0_16] : memref<256x256xf32, #tpu.memory_space<vmem>>, vector<256x256xf32>
    %c0_17 = arith.constant 0 : index
    %c0_18 = arith.constant 0 : index
    %18 = vector.load %arg8[%c0_17, %c0_18] : memref<1x256xf32, #tpu.memory_space<vmem>>, vector<1x256xf32>
    %cst_19 = arith.constant dense<0.000000e+00> : vector<24x256xf32>
    %19 = tpu.matmul %0, %15, %cst_19 {dimension_numbers = #tpu.dot_dimension_numbers<[1], [0], [0], [1], [0, 0, 1, 1], [], []>} : vector<24x24xf32>, vector<24x256xf32>, vector<24x256xf32> -> vector<24x256xf32>
    %cst_20 = arith.constant dense<0.000000e+00> : vector<24x256xf32>
    %20 = tpu.matmul %19, %16, %cst_20 {dimension_numbers = #tpu.dot_dimension_numbers<[1], [0], [0], [1], [0, 0, 1, 1], [], []>} : vector<24x256xf32>, vector<256x256xf32>, vector<24x256xf32> -> vector<24x256xf32>
    %cst_21 = arith.constant dense<0.000000e+00> : vector<24x256xf32>
    %21 = tpu.matmul %15, %17, %cst_21 {dimension_numbers = #tpu.dot_dimension_numbers<[1], [0], [0], [1], [0, 0, 1, 1], [], []>} : vector<24x256xf32>, vector<256x256xf32>, vector<24x256xf32> -> vector<24x256xf32>
    %22 = arith.addf %20, %21 : vector<24x256xf32>
    %23 = vector.broadcast %18 : vector<1x256xf32> to vector<24x256xf32>
    %24 = arith.addf %22, %23 : vector<24x256xf32>
    %cst_22 = arith.constant 0.000000e+00 : f32
    %25 = vector.broadcast %cst_22 : f32 to vector<24x256xf32>
    %26 = arith.cmpf ogt, %24, %25 : vector<24x256xf32>
    %cst_23 = arith.constant 0.00999999977 : f32
    %27 = vector.broadcast %cst_23 : f32 to vector<24x256xf32>
    %28 = arith.mulf %27, %24 : vector<24x256xf32>
    %29 = arith.select %26, %24, %28 : vector<24x256xi1>, vector<24x256xf32>
    %c0_24 = arith.constant 0 : index
    %c0_25 = arith.constant 0 : index
    %30 = vector.load %arg9[%c0_24, %c0_25] : memref<256x384xf32, #tpu.memory_space<vmem>>, vector<256x384xf32>
    %c0_26 = arith.constant 0 : index
    %c0_27 = arith.constant 0 : index
    %31 = vector.load %arg10[%c0_26, %c0_27] : memref<256x384xf32, #tpu.memory_space<vmem>>, vector<256x384xf32>
    %c0_28 = arith.constant 0 : index
    %c0_29 = arith.constant 0 : index
    %32 = vector.load %arg11[%c0_28, %c0_29] : memref<1x384xf32, #tpu.memory_space<vmem>>, vector<1x384xf32>
    %cst_30 = arith.constant dense<0.000000e+00> : vector<24x256xf32>
    %33 = tpu.matmul %0, %29, %cst_30 {dimension_numbers = #tpu.dot_dimension_numbers<[1], [0], [0], [1], [0, 0, 1, 1], [], []>} : vector<24x24xf32>, vector<24x256xf32>, vector<24x256xf32> -> vector<24x256xf32>
    %cst_31 = arith.constant dense<0.000000e+00> : vector<24x384xf32>
    %34 = tpu.matmul %33, %30, %cst_31 {dimension_numbers = #tpu.dot_dimension_numbers<[1], [0], [0], [1], [0, 0, 1, 1], [], []>} : vector<24x256xf32>, vector<256x384xf32>, vector<24x384xf32> -> vector<24x384xf32>
    %cst_32 = arith.constant dense<0.000000e+00> : vector<24x384xf32>
    %35 = tpu.matmul %29, %31, %cst_32 {dimension_numbers = #tpu.dot_dimension_numbers<[1], [0], [0], [1], [0, 0, 1, 1], [], []>} : vector<24x256xf32>, vector<256x384xf32>, vector<24x384xf32> -> vector<24x384xf32>
    %36 = arith.addf %34, %35 : vector<24x384xf32>
    %37 = vector.broadcast %32 : vector<1x384xf32> to vector<24x384xf32>
    %38 = arith.addf %36, %37 : vector<24x384xf32>
    %cst_33 = arith.constant 0.000000e+00 : f32
    %39 = vector.broadcast %cst_33 : f32 to vector<24x384xf32>
    %40 = arith.cmpf ogt, %38, %39 : vector<24x384xf32>
    %cst_34 = arith.constant 0.00999999977 : f32
    %41 = vector.broadcast %cst_34 : f32 to vector<24x384xf32>
    %42 = arith.mulf %41, %38 : vector<24x384xf32>
    %43 = arith.select %40, %38, %42 : vector<24x384xi1>, vector<24x384xf32>
    %c0_35 = arith.constant 0 : index
    %c0_36 = arith.constant 0 : index
    %44 = vector.load %arg2[%c0_35, %c0_36] : memref<24x2xf32, #tpu.memory_space<vmem>>, vector<24x2xf32>
    %45 = vector.extract_strided_slice %44 {offsets = [0, 0], sizes = [24, 1], strides = [1, 1]} : vector<24x2xf32> to vector<24x1xf32>
    %cst_37 = arith.constant 5.000000e-01 : f32
    %46 = vector.broadcast %cst_37 : f32 to vector<24x1xf32>
    %47 = arith.cmpf ogt, %45, %46 : vector<24x1xf32>
    %cst_38 = arith.constant -1.000000e+30 : f32
    %48 = vector.shape_cast %47 : vector<24x1xi1> to vector<24x1xi1>
    %49 = vector.broadcast %48 : vector<24x1xi1> to vector<24x384xi1>
    %50 = vector.broadcast %cst_38 : f32 to vector<24x384xf32>
    %51 = arith.select %49, %43, %50 : vector<24x384xi1>, vector<24x384xf32>
    %cst_39 = arith.constant dense<0xFF800000> : vector<384xf32>
    %52 = vector.multi_reduction <maximumf>, %51, %cst_39 [0] : vector<24x384xf32> to vector<384xf32>
    %53 = vector.shape_cast %52 : vector<384xf32> to vector<1x384xf32>
    %54 = vector.extract_strided_slice %44 {offsets = [0, 1], sizes = [24, 1], strides = [1, 1]} : vector<24x2xf32> to vector<24x1xf32>
    %cst_40 = arith.constant 5.000000e-01 : f32
    %55 = vector.broadcast %cst_40 : f32 to vector<24x1xf32>
    %56 = arith.cmpf ogt, %54, %55 : vector<24x1xf32>
    %cst_41 = arith.constant -1.000000e+30 : f32
    %57 = vector.shape_cast %56 : vector<24x1xi1> to vector<24x1xi1>
    %58 = vector.broadcast %57 : vector<24x1xi1> to vector<24x384xi1>
    %59 = vector.broadcast %cst_41 : f32 to vector<24x384xf32>
    %60 = arith.select %58, %43, %59 : vector<24x384xi1>, vector<24x384xf32>
    %cst_42 = arith.constant dense<0xFF800000> : vector<384xf32>
    %61 = vector.multi_reduction <maximumf>, %60, %cst_42 [0] : vector<24x384xf32> to vector<384xf32>
    %62 = vector.shape_cast %61 : vector<384xf32> to vector<1x384xf32>
    %63 = tpu.concatenate %53, %62 in 0 : vector<1x384xf32>, vector<1x384xf32> -> vector<2x384xf32>
    %c0_43 = arith.constant 0 : index
    %c0_44 = arith.constant 0 : index
    %64 = vector.load %arg12[%c0_43, %c0_44] : memref<384x128xf32, #tpu.memory_space<vmem>>, vector<384x128xf32>
    %cst_45 = arith.constant dense<0.000000e+00> : vector<2x128xf32>
    %65 = tpu.matmul %63, %64, %cst_45 {dimension_numbers = #tpu.dot_dimension_numbers<[1], [0], [0], [1], [0, 0, 1, 1], [], []>} : vector<2x384xf32>, vector<384x128xf32>, vector<2x128xf32> -> vector<2x128xf32>
    %c0_46 = arith.constant 0 : index
    %c0_47 = arith.constant 0 : index
    %66 = vector.load %arg13[%c0_46, %c0_47] : memref<1x128xf32, #tpu.memory_space<vmem>>, vector<1x128xf32>
    %67 = vector.broadcast %66 : vector<1x128xf32> to vector<2x128xf32>
    %68 = arith.addf %65, %67 : vector<2x128xf32>
    %c0_48 = arith.constant 0 : index
    %c0_49 = arith.constant 0 : index
    %69 = vector.load %arg14[%c0_48, %c0_49] : memref<2x128xf32, #tpu.memory_space<vmem>>, vector<2x128xf32>
    tpu.vector_store %arg14[%c0_48, %c0_49], %68 {strides = array<i32>} : memref<2x128xf32, #tpu.memory_space<vmem>>, vector<2x128xf32>,
    return
  }
}

module attributes {stable_mosaic.version = 11 : i64} {
  func.func @_linear_kernel(%arg0: i32, %arg1: i32, %arg2: i32, %arg3: memref<32x128xf32, #tpu.memory_space<vmem>>, %arg4: memref<128x512xf32, #tpu.memory_space<vmem>>, %arg5: memref<1x512xf32, #tpu.memory_space<vmem>>, %arg6: memref<32x512xf32, #tpu.memory_space<vmem>>, %arg7: memref<32x512xf32, #tpu.memory_space<vmem>>) attributes {dimension_semantics = [#tpu.dimension_semantics<parallel>, #tpu.dimension_semantics<parallel>, #tpu.dimension_semantics<arbitrary>], iteration_bounds = array<i64: 1, 1, 1>, scalar_prefetch = 0 : i64, scratch_operands = 1 : i64, tpu.core_type = #tpu.core_type<tc>, window_params = [{transform_indices = @transform_0, window_bounds = array<i64: 32, 128>}, {transform_indices = @transform_1, window_bounds = array<i64: 128, 512>}, {transform_indices = @transform_2, window_bounds = array<i64: 1, 512>}, {transform_indices = @transform_3, window_bounds = array<i64: 32, 512>}]} {
    %c0_i32 = arith.constant 0 : i32
    %0 = arith.cmpi eq, %arg2, %c0_i32 : i32
    %1 = arith.extui %0 : i1 to i32
    %c0_i32_0 = arith.constant 0 : i32
    %2 = arith.cmpi ne, %1, %c0_i32_0 : i32
    scf.if %2 {
      %cst_10 = arith.constant 0.000000e+00 : f32
      %12 = vector.broadcast %cst_10 : f32 to vector<32x512xf32>
      %c0_11 = arith.constant 0 : index
      %c0_12 = arith.constant 0 : index
      %13 = vector.load %arg7[%c0_11, %c0_12] : memref<32x512xf32, #tpu.memory_space<vmem>>, vector<32x512xf32>
      tpu.vector_store %arg7[%c0_11, %c0_12], %12 {strides = array<i32>} : memref<32x512xf32, #tpu.memory_space<vmem>>, vector<32x512xf32>,
    } else {
    }
    %c0 = arith.constant 0 : index
    %c0_1 = arith.constant 0 : index
    %3 = vector.load %arg7[%c0, %c0_1] : memref<32x512xf32, #tpu.memory_space<vmem>>, vector<32x512xf32>
    %c0_2 = arith.constant 0 : index
    %c0_3 = arith.constant 0 : index
    %4 = vector.load %arg3[%c0_2, %c0_3] : memref<32x128xf32, #tpu.memory_space<vmem>>, vector<32x128xf32>
    %c0_4 = arith.constant 0 : index
    %c0_5 = arith.constant 0 : index
    %5 = vector.load %arg4[%c0_4, %c0_5] : memref<128x512xf32, #tpu.memory_space<vmem>>, vector<128x512xf32>
    %cst = arith.constant dense<0.000000e+00> : vector<32x512xf32>
    %6 = tpu.matmul %4, %5, %cst {dimension_numbers = #tpu.dot_dimension_numbers<[1], [0], [0], [1], [0, 0, 1, 1], [], []>} : vector<32x128xf32>, vector<128x512xf32>, vector<32x512xf32> -> vector<32x512xf32>
    %7 = arith.addf %3, %6 : vector<32x512xf32>
    %c0_6 = arith.constant 0 : index
    %c0_7 = arith.constant 0 : index
    %8 = vector.load %arg7[%c0_6, %c0_7] : memref<32x512xf32, #tpu.memory_space<vmem>>, vector<32x512xf32>
    tpu.vector_store %arg7[%c0_6, %c0_7], %7 {strides = array<i32>} : memref<32x512xf32, #tpu.memory_space<vmem>>, vector<32x512xf32>,
    %c0_i32_8 = arith.constant 0 : i32
    %9 = arith.cmpi eq, %arg2, %c0_i32_8 : i32
    %10 = arith.extui %9 : i1 to i32
    %c0_i32_9 = arith.constant 0 : i32
    %11 = arith.cmpi ne, %10, %c0_i32_9 : i32
    scf.if %11 {
      %c0_10 = arith.constant 0 : index
      %c0_11 = arith.constant 0 : index
      %12 = vector.load %arg7[%c0_10, %c0_11] : memref<32x512xf32, #tpu.memory_space<vmem>>, vector<32x512xf32>
      %c0_12 = arith.constant 0 : index
      %c0_13 = arith.constant 0 : index
      %13 = vector.load %arg5[%c0_12, %c0_13] : memref<1x512xf32, #tpu.memory_space<vmem>>, vector<1x512xf32>
      %14 = vector.broadcast %13 : vector<1x512xf32> to vector<32x512xf32>
      %15 = arith.addf %12, %14 : vector<32x512xf32>
      %c0_14 = arith.constant 0 : index
      %c0_15 = arith.constant 0 : index
      %16 = vector.load %arg6[%c0_14, %c0_15] : memref<32x512xf32, #tpu.memory_space<vmem>>, vector<32x512xf32>
      tpu.vector_store %arg6[%c0_14, %c0_15], %15 {strides = array<i32>} : memref<32x512xf32, #tpu.memory_space<vmem>>, vector<32x512xf32>,
    } else {
    }
    return
  }
  func.func @transform_0(%arg0: i32, %arg1: i32, %arg2: i32) -> (i32, i32) {
    %c0_i32 = arith.constant 0 : i32
    return %arg0, %arg2 : i32, i32
  }
  func.func @transform_1(%arg0: i32, %arg1: i32, %arg2: i32) -> (i32, i32) {
    %c0_i32 = arith.constant 0 : i32
    return %arg2, %arg1 : i32, i32
  }
  func.func @transform_2(%arg0: i32, %arg1: i32, %arg2: i32) -> (i32, i32) {
    %c0_i32 = arith.constant 0 : i32
    %c0_i32_0 = arith.constant 0 : i32
    return %c0_i32, %arg1 : i32, i32
  }
  func.func @transform_3(%arg0: i32, %arg1: i32, %arg2: i32) -> (i32, i32) {
    %c0_i32 = arith.constant 0 : i32
    return %arg0, %arg1 : i32, i32
  }
}

module attributes {stable_mosaic.version = 11 : i64} {
  func.func @_lstm_kernel(%arg0: memref<1xi32, #tpu.memory_space<smem>>, %arg1: memref<2x1xi32, #tpu.memory_space<vmem>>, %arg2: memref<16x2x512xf32, #tpu.memory_space<vmem>>, %arg3: memref<128x512xf32, #tpu.memory_space<vmem>>, %arg4: memref<2x128xf32, #tpu.memory_space<vmem>>, %arg5: memref<2x128xf32, #tpu.memory_space<vmem>>, %arg6: memref<2x128xf32, #tpu.memory_space<vmem>>, %arg7: memref<2x128xf32, #tpu.memory_space<vmem>>) attributes {dimension_semantics = [], scalar_prefetch = 0 : i64, scratch_operands = 3 : i64, tpu.core_type = #tpu.core_type<tc>} {
    %cst = arith.constant 0.000000e+00 : f32
    %0 = vector.broadcast %cst : f32 to vector<2x128xf32>
    %c0 = arith.constant 0 : index
    %c0_0 = arith.constant 0 : index
    %1 = vector.load %arg5[%c0, %c0_0] : memref<2x128xf32, #tpu.memory_space<vmem>>, vector<2x128xf32>
    tpu.vector_store %arg5[%c0, %c0_0], %0 {strides = array<i32>} : memref<2x128xf32, #tpu.memory_space<vmem>>, vector<2x128xf32>,
    %cst_1 = arith.constant 0.000000e+00 : f32
    %2 = vector.broadcast %cst_1 : f32 to vector<2x128xf32>
    %c0_2 = arith.constant 0 : index
    %c0_3 = arith.constant 0 : index
    %3 = vector.load %arg6[%c0_2, %c0_3] : memref<2x128xf32, #tpu.memory_space<vmem>>, vector<2x128xf32>
    tpu.vector_store %arg6[%c0_2, %c0_3], %2 {strides = array<i32>} : memref<2x128xf32, #tpu.memory_space<vmem>>, vector<2x128xf32>,
    %cst_4 = arith.constant 0.000000e+00 : f32
    %4 = vector.broadcast %cst_4 : f32 to vector<2x128xf32>
    %c0_5 = arith.constant 0 : index
    %c0_6 = arith.constant 0 : index
    %5 = vector.load %arg7[%c0_5, %c0_6] : memref<2x128xf32, #tpu.memory_space<vmem>>, vector<2x128xf32>
    tpu.vector_store %arg7[%c0_5, %c0_6], %4 {strides = array<i32>} : memref<2x128xf32, #tpu.memory_space<vmem>>, vector<2x128xf32>,
    %c0_7 = arith.constant 0 : index
    %6 = memref.load %arg0[%c0_7] : memref<1xi32, #tpu.memory_space<smem>>
    %c0_i32 = arith.constant 0 : i32
    %c0_i32_8 = arith.constant 0 : i32
    %7 = arith.subi %6, %c0_i32_8 : i32
    %8 = arith.addi %c0_i32_8, %7 : i32
    %c1_i32 = arith.constant 1 : i32
    scf.for %arg8 = %c0_i32_8 to %8 step %c1_i32  : i32 {
      %14 = arith.index_cast %arg8 : i32 to index
      %c0_15 = arith.constant 0 : index
      %c0_16 = arith.constant 0 : index
      %15 = vector.load %arg2[%14, %c0_15, %c0_16] : memref<16x2x512xf32, #tpu.memory_space<vmem>>, vector<1x2x512xf32>
      %16 = vector.shape_cast %15 : vector<1x2x512xf32> to vector<2x512xf32>
      %c0_17 = arith.constant 0 : index
      %c0_18 = arith.constant 0 : index
      %17 = vector.load %arg5[%c0_17, %c0_18] : memref<2x128xf32, #tpu.memory_space<vmem>>, vector<2x128xf32>
      %c0_19 = arith.constant 0 : index
      %c0_20 = arith.constant 0 : index
      %18 = vector.load %arg3[%c0_19, %c0_20] : memref<128x512xf32, #tpu.memory_space<vmem>>, vector<128x512xf32>
      %cst_21 = arith.constant dense<0.000000e+00> : vector<2x512xf32>
      %19 = tpu.matmul %17, %18, %cst_21 {dimension_numbers = #tpu.dot_dimension_numbers<[1], [0], [0], [1], [0, 0, 1, 1], [], []>} : vector<2x128xf32>, vector<128x512xf32>, vector<2x512xf32> -> vector<2x512xf32>
      %20 = arith.addf %16, %19 : vector<2x512xf32>
      %21 = vector.extract_strided_slice %20 {offsets = [0, 0], sizes = [2, 128], strides = [1, 1]} : vector<2x512xf32> to vector<2x128xf32>
      %22 = arith.negf %21 : vector<2x128xf32>
      %23 = math.exp %22 : vector<2x128xf32>
      %cst_22 = arith.constant 1.000000e+00 : f32
      %24 = vector.broadcast %cst_22 : f32 to vector<2x128xf32>
      %25 = arith.addf %24, %23 : vector<2x128xf32>
      %26 = arith.divf %24, %25 : vector<2x128xf32>
      %27 = vector.extract_strided_slice %20 {offsets = [0, 128], sizes = [2, 128], strides = [1, 1]} : vector<2x512xf32> to vector<2x128xf32>
      %28 = arith.negf %27 : vector<2x128xf32>
      %29 = math.exp %28 : vector<2x128xf32>
      %cst_23 = arith.constant 1.000000e+00 : f32
      %30 = vector.broadcast %cst_23 : f32 to vector<2x128xf32>
      %31 = arith.addf %30, %29 : vector<2x128xf32>
      %32 = arith.divf %30, %31 : vector<2x128xf32>
      %33 = vector.extract_strided_slice %20 {offsets = [0, 256], sizes = [2, 128], strides = [1, 1]} : vector<2x512xf32> to vector<2x128xf32>
      %34 = math.tanh %33 : vector<2x128xf32>
      %35 = vector.extract_strided_slice %20 {offsets = [0, 384], sizes = [2, 128], strides = [1, 1]} : vector<2x512xf32> to vector<2x128xf32>
      %36 = arith.negf %35 : vector<2x128xf32>
      %37 = math.exp %36 : vector<2x128xf32>
      %cst_24 = arith.constant 1.000000e+00 : f32
      %38 = vector.broadcast %cst_24 : f32 to vector<2x128xf32>
      %39 = arith.addf %38, %37 : vector<2x128xf32>
      %40 = arith.divf %38, %39 : vector<2x128xf32>
      %c0_25 = arith.constant 0 : index
      %c0_26 = arith.constant 0 : index
      %41 = vector.load %arg6[%c0_25, %c0_26] : memref<2x128xf32, #tpu.memory_space<vmem>>, vector<2x128xf32>
      %42 = arith.mulf %32, %41 : vector<2x128xf32>
      %43 = arith.mulf %26, %34 : vector<2x128xf32>
      %44 = arith.addf %42, %43 : vector<2x128xf32>
      %45 = math.tanh %44 : vector<2x128xf32>
      %46 = arith.mulf %40, %45 : vector<2x128xf32>
      %c0_27 = arith.constant 0 : index
      %c0_28 = arith.constant 0 : index
      %47 = vector.load %arg6[%c0_27, %c0_28] : memref<2x128xf32, #tpu.memory_space<vmem>>, vector<2x128xf32>
      tpu.vector_store %arg6[%c0_27, %c0_28], %44 {strides = array<i32>} : memref<2x128xf32, #tpu.memory_space<vmem>>, vector<2x128xf32>,
      %c0_29 = arith.constant 0 : index
      %c0_30 = arith.constant 0 : index
      %48 = vector.load %arg5[%c0_29, %c0_30] : memref<2x128xf32, #tpu.memory_space<vmem>>, vector<2x128xf32>
      tpu.vector_store %arg5[%c0_29, %c0_30], %46 {strides = array<i32>} : memref<2x128xf32, #tpu.memory_space<vmem>>, vector<2x128xf32>,
      %c0_31 = arith.constant 0 : index
      %c0_32 = arith.constant 0 : index
      %49 = vector.load %arg1[%c0_31, %c0_32] : memref<2x1xi32, #tpu.memory_space<vmem>>, vector<2x1xi32>
      %50 = vector.broadcast %arg8 : i32 to vector<2x1xi32>
      %51 = arith.cmpi slt, %50, %49 : vector<2x1xi32>
      %52 = arith.extui %51 : vector<2x1xi1> to vector<2x1xi32>
      %53 = arith.sitofp %52 : vector<2x1xi32> to vector<2x1xf32>
      %c0_33 = arith.constant 0 : index
      %c0_34 = arith.constant 0 : index
      %54 = vector.load %arg7[%c0_33, %c0_34] : memref<2x128xf32, #tpu.memory_space<vmem>>, vector<2x128xf32>
      %55 = vector.broadcast %53 : vector<2x1xf32> to vector<2x128xf32>
      %56 = arith.mulf %55, %46 : vector<2x128xf32>
      %57 = arith.addf %54, %56 : vector<2x128xf32>
      %c0_35 = arith.constant 0 : index
      %c0_36 = arith.constant 0 : index
      %58 = vector.load %arg7[%c0_35, %c0_36] : memref<2x128xf32, #tpu.memory_space<vmem>>, vector<2x128xf32>
      tpu.vector_store %arg7[%c0_35, %c0_36], %57 {strides = array<i32>} : memref<2x128xf32, #tpu.memory_space<vmem>>, vector<2x128xf32>,
    }
    %c0_9 = arith.constant 0 : index
    %c0_10 = arith.constant 0 : index
    %9 = vector.load %arg7[%c0_9, %c0_10] : memref<2x128xf32, #tpu.memory_space<vmem>>, vector<2x128xf32>
    %cst_11 = arith.constant 1.000000e+00 : f32
    %cst_12 = arith.constant 1.500000e+03 : f32
    %10 = arith.divf %cst_11, %cst_12 : f32
    %11 = vector.broadcast %10 : f32 to vector<2x128xf32>
    %12 = arith.mulf %9, %11 : vector<2x128xf32>
    %c0_13 = arith.constant 0 : index
    %c0_14 = arith.constant 0 : index
    %13 = vector.load %arg4[%c0_13, %c0_14] : memref<2x128xf32, #tpu.memory_space<vmem>>, vector<2x128xf32>
    tpu.vector_store %arg4[%c0_13, %c0_14], %12 {strides = array<i32>} : memref<2x128xf32, #tpu.memory_space<vmem>>, vector<2x128xf32>,
    return
  }
}

module attributes {stable_mosaic.version = 11 : i64} {
  func.func @_linear_kernel(%arg0: i32, %arg1: i32, %arg2: i32, %arg3: memref<16x2048xbf16, #tpu.memory_space<vmem>>, %arg4: memref<2048x512xbf16, #tpu.memory_space<vmem>>, %arg5: memref<1x512xf32, #tpu.memory_space<vmem>>, %arg6: memref<16x512xf32, #tpu.memory_space<vmem>>, %arg7: memref<16x512xf32, #tpu.memory_space<vmem>>) attributes {dimension_semantics = [#tpu.dimension_semantics<parallel>, #tpu.dimension_semantics<parallel>, #tpu.dimension_semantics<arbitrary>], iteration_bounds = array<i64: 1, 2, 9>, scalar_prefetch = 0 : i64, scratch_operands = 1 : i64, tpu.core_type = #tpu.core_type<tc>, window_params = [{transform_indices = @transform_0, window_bounds = array<i64: 16, 2048>}, {transform_indices = @transform_1, window_bounds = array<i64: 2048, 512>}, {transform_indices = @transform_2, window_bounds = array<i64: 1, 512>}, {transform_indices = @transform_3, window_bounds = array<i64: 16, 512>}]} {
    %c0_i32 = arith.constant 0 : i32
    %0 = arith.cmpi eq, %arg2, %c0_i32 : i32
    %1 = arith.extui %0 : i1 to i32
    %c0_i32_0 = arith.constant 0 : i32
    %2 = arith.cmpi ne, %1, %c0_i32_0 : i32
    scf.if %2 {
      %cst_9 = arith.constant 0.000000e+00 : f32
      %12 = vector.broadcast %cst_9 : f32 to vector<16x512xf32>
      %c0_10 = arith.constant 0 : index
      %c0_11 = arith.constant 0 : index
      %13 = vector.load %arg7[%c0_10, %c0_11] : memref<16x512xf32, #tpu.memory_space<vmem>>, vector<16x512xf32>
      tpu.vector_store %arg7[%c0_10, %c0_11], %12 {strides = array<i32>} : memref<16x512xf32, #tpu.memory_space<vmem>>, vector<16x512xf32>,
    } else {
    }
    %c0 = arith.constant 0 : index
    %c0_1 = arith.constant 0 : index
    %3 = vector.load %arg7[%c0, %c0_1] : memref<16x512xf32, #tpu.memory_space<vmem>>, vector<16x512xf32>
    %c0_2 = arith.constant 0 : index
    %c0_3 = arith.constant 0 : index
    %4 = vector.load %arg3[%c0_2, %c0_3] : memref<16x2048xbf16, #tpu.memory_space<vmem>>, vector<16x2048xbf16>
    %c0_4 = arith.constant 0 : index
    %c0_5 = arith.constant 0 : index
    %5 = vector.load %arg4[%c0_4, %c0_5] : memref<2048x512xbf16, #tpu.memory_space<vmem>>, vector<2048x512xbf16>
    %cst = arith.constant dense<0.000000e+00> : vector<16x512xf32>
    %6 = tpu.matmul %4, %5, %cst {dimension_numbers = #tpu.dot_dimension_numbers<[1], [0], [0], [1], [0, 0, 1, 1], [], []>} : vector<16x2048xbf16>, vector<2048x512xbf16>, vector<16x512xf32> -> vector<16x512xf32>
    %7 = arith.addf %3, %6 : vector<16x512xf32>
    %c0_6 = arith.constant 0 : index
    %c0_7 = arith.constant 0 : index
    %8 = vector.load %arg7[%c0_6, %c0_7] : memref<16x512xf32, #tpu.memory_space<vmem>>, vector<16x512xf32>
    tpu.vector_store %arg7[%c0_6, %c0_7], %7 {strides = array<i32>} : memref<16x512xf32, #tpu.memory_space<vmem>>, vector<16x512xf32>,
    %c8_i32 = arith.constant 8 : i32
    %9 = arith.cmpi eq, %arg2, %c8_i32 : i32
    %10 = arith.extui %9 : i1 to i32
    %c0_i32_8 = arith.constant 0 : i32
    %11 = arith.cmpi ne, %10, %c0_i32_8 : i32
    scf.if %11 {
      %c0_9 = arith.constant 0 : index
      %c0_10 = arith.constant 0 : index
      %12 = vector.load %arg7[%c0_9, %c0_10] : memref<16x512xf32, #tpu.memory_space<vmem>>, vector<16x512xf32>
      %c0_11 = arith.constant 0 : index
      %c0_12 = arith.constant 0 : index
      %13 = vector.load %arg5[%c0_11, %c0_12] : memref<1x512xf32, #tpu.memory_space<vmem>>, vector<1x512xf32>
      %14 = vector.broadcast %13 : vector<1x512xf32> to vector<16x512xf32>
      %15 = arith.addf %12, %14 : vector<16x512xf32>
      %cst_13 = arith.constant 0.000000e+00 : f32
      %16 = vector.broadcast %cst_13 : f32 to vector<16x512xf32>
      %17 = arith.cmpf ogt, %15, %16 : vector<16x512xf32>
      %cst_14 = arith.constant 0.00999999977 : f32
      %18 = vector.broadcast %cst_14 : f32 to vector<16x512xf32>
      %19 = arith.mulf %18, %15 : vector<16x512xf32>
      %20 = arith.select %17, %15, %19 : vector<16x512xi1>, vector<16x512xf32>
      %c0_15 = arith.constant 0 : index
      %c0_16 = arith.constant 0 : index
      %21 = vector.load %arg6[%c0_15, %c0_16] : memref<16x512xf32, #tpu.memory_space<vmem>>, vector<16x512xf32>
      tpu.vector_store %arg6[%c0_15, %c0_16], %20 {strides = array<i32>} : memref<16x512xf32, #tpu.memory_space<vmem>>, vector<16x512xf32>,
    } else {
    }
    return
  }
  func.func @transform_0(%arg0: i32, %arg1: i32, %arg2: i32) -> (i32, i32) {
    %c0_i32 = arith.constant 0 : i32
    return %arg0, %arg2 : i32, i32
  }
  func.func @transform_1(%arg0: i32, %arg1: i32, %arg2: i32) -> (i32, i32) {
    %c0_i32 = arith.constant 0 : i32
    return %arg2, %arg1 : i32, i32
  }
  func.func @transform_2(%arg0: i32, %arg1: i32, %arg2: i32) -> (i32, i32) {
    %c0_i32 = arith.constant 0 : i32
    %c0_i32_0 = arith.constant 0 : i32
    return %c0_i32, %arg1 : i32, i32
  }
  func.func @transform_3(%arg0: i32, %arg1: i32, %arg2: i32) -> (i32, i32) {
    %c0_i32 = arith.constant 0 : i32
    return %arg0, %arg1 : i32, i32
  }
}

module attributes {stable_mosaic.version = 11 : i64} {
  func.func @_linear_kernel(%arg0: i32, %arg1: i32, %arg2: i32, %arg3: memref<16x1408xbf16, #tpu.memory_space<vmem>>, %arg4: memref<1408x512xbf16, #tpu.memory_space<vmem>>, %arg5: memref<1x512xf32, #tpu.memory_space<vmem>>, %arg6: memref<16x512xf32, #tpu.memory_space<vmem>>, %arg7: memref<16x512xf32, #tpu.memory_space<vmem>>) attributes {dimension_semantics = [#tpu.dimension_semantics<parallel>, #tpu.dimension_semantics<parallel>, #tpu.dimension_semantics<arbitrary>], iteration_bounds = array<i64: 1, 1, 1>, scalar_prefetch = 0 : i64, scratch_operands = 1 : i64, tpu.core_type = #tpu.core_type<tc>, window_params = [{transform_indices = @transform_0, window_bounds = array<i64: 16, 1408>}, {transform_indices = @transform_1, window_bounds = array<i64: 1408, 512>}, {transform_indices = @transform_2, window_bounds = array<i64: 1, 512>}, {transform_indices = @transform_3, window_bounds = array<i64: 16, 512>}]} {
    %c0_i32 = arith.constant 0 : i32
    %0 = arith.cmpi eq, %arg2, %c0_i32 : i32
    %1 = arith.extui %0 : i1 to i32
    %c0_i32_0 = arith.constant 0 : i32
    %2 = arith.cmpi ne, %1, %c0_i32_0 : i32
    scf.if %2 {
      %cst_10 = arith.constant 0.000000e+00 : f32
      %12 = vector.broadcast %cst_10 : f32 to vector<16x512xf32>
      %c0_11 = arith.constant 0 : index
      %c0_12 = arith.constant 0 : index
      %13 = vector.load %arg7[%c0_11, %c0_12] : memref<16x512xf32, #tpu.memory_space<vmem>>, vector<16x512xf32>
      tpu.vector_store %arg7[%c0_11, %c0_12], %12 {strides = array<i32>} : memref<16x512xf32, #tpu.memory_space<vmem>>, vector<16x512xf32>,
    } else {
    }
    %c0 = arith.constant 0 : index
    %c0_1 = arith.constant 0 : index
    %3 = vector.load %arg7[%c0, %c0_1] : memref<16x512xf32, #tpu.memory_space<vmem>>, vector<16x512xf32>
    %c0_2 = arith.constant 0 : index
    %c0_3 = arith.constant 0 : index
    %4 = vector.load %arg3[%c0_2, %c0_3] : memref<16x1408xbf16, #tpu.memory_space<vmem>>, vector<16x1408xbf16>
    %c0_4 = arith.constant 0 : index
    %c0_5 = arith.constant 0 : index
    %5 = vector.load %arg4[%c0_4, %c0_5] : memref<1408x512xbf16, #tpu.memory_space<vmem>>, vector<1408x512xbf16>
    %cst = arith.constant dense<0.000000e+00> : vector<16x512xf32>
    %6 = tpu.matmul %4, %5, %cst {dimension_numbers = #tpu.dot_dimension_numbers<[1], [0], [0], [1], [0, 0, 1, 1], [], []>} : vector<16x1408xbf16>, vector<1408x512xbf16>, vector<16x512xf32> -> vector<16x512xf32>
    %7 = arith.addf %3, %6 : vector<16x512xf32>
    %c0_6 = arith.constant 0 : index
    %c0_7 = arith.constant 0 : index
    %8 = vector.load %arg7[%c0_6, %c0_7] : memref<16x512xf32, #tpu.memory_space<vmem>>, vector<16x512xf32>
    tpu.vector_store %arg7[%c0_6, %c0_7], %7 {strides = array<i32>} : memref<16x512xf32, #tpu.memory_space<vmem>>, vector<16x512xf32>,
    %c0_i32_8 = arith.constant 0 : i32
    %9 = arith.cmpi eq, %arg2, %c0_i32_8 : i32
    %10 = arith.extui %9 : i1 to i32
    %c0_i32_9 = arith.constant 0 : i32
    %11 = arith.cmpi ne, %10, %c0_i32_9 : i32
    scf.if %11 {
      %c0_10 = arith.constant 0 : index
      %c0_11 = arith.constant 0 : index
      %12 = vector.load %arg7[%c0_10, %c0_11] : memref<16x512xf32, #tpu.memory_space<vmem>>, vector<16x512xf32>
      %c0_12 = arith.constant 0 : index
      %c0_13 = arith.constant 0 : index
      %13 = vector.load %arg5[%c0_12, %c0_13] : memref<1x512xf32, #tpu.memory_space<vmem>>, vector<1x512xf32>
      %14 = vector.broadcast %13 : vector<1x512xf32> to vector<16x512xf32>
      %15 = arith.addf %12, %14 : vector<16x512xf32>
      %cst_14 = arith.constant 0.000000e+00 : f32
      %16 = vector.broadcast %cst_14 : f32 to vector<16x512xf32>
      %17 = arith.cmpf ogt, %15, %16 : vector<16x512xf32>
      %cst_15 = arith.constant 0.00999999977 : f32
      %18 = vector.broadcast %cst_15 : f32 to vector<16x512xf32>
      %19 = arith.mulf %18, %15 : vector<16x512xf32>
      %20 = arith.select %17, %15, %19 : vector<16x512xi1>, vector<16x512xf32>
      %c0_16 = arith.constant 0 : index
      %c0_17 = arith.constant 0 : index
      %21 = vector.load %arg6[%c0_16, %c0_17] : memref<16x512xf32, #tpu.memory_space<vmem>>, vector<16x512xf32>
      tpu.vector_store %arg6[%c0_16, %c0_17], %20 {strides = array<i32>} : memref<16x512xf32, #tpu.memory_space<vmem>>, vector<16x512xf32>,
    } else {
    }
    return
  }
  func.func @transform_0(%arg0: i32, %arg1: i32, %arg2: i32) -> (i32, i32) {
    %c0_i32 = arith.constant 0 : i32
    return %arg0, %arg2 : i32, i32
  }
  func.func @transform_1(%arg0: i32, %arg1: i32, %arg2: i32) -> (i32, i32) {
    %c0_i32 = arith.constant 0 : i32
    return %arg2, %arg1 : i32, i32
  }
  func.func @transform_2(%arg0: i32, %arg1: i32, %arg2: i32) -> (i32, i32) {
    %c0_i32 = arith.constant 0 : i32
    %c0_i32_0 = arith.constant 0 : i32
    return %c0_i32, %arg1 : i32, i32
  }
  func.func @transform_3(%arg0: i32, %arg1: i32, %arg2: i32) -> (i32, i32) {
    %c0_i32 = arith.constant 0 : i32
    return %arg0, %arg1 : i32, i32
  }
}

module attributes {stable_mosaic.version = 11 : i64} {
  func.func @_linear_kernel(%arg0: i32, %arg1: i32, %arg2: i32, %arg3: memref<16x512xf32, #tpu.memory_space<vmem>>, %arg4: memref<512x128xf32, #tpu.memory_space<vmem>>, %arg5: memref<1x128xf32, #tpu.memory_space<vmem>>, %arg6: memref<16x128xf32, #tpu.memory_space<vmem>>, %arg7: memref<16x128xf32, #tpu.memory_space<vmem>>) attributes {dimension_semantics = [#tpu.dimension_semantics<parallel>, #tpu.dimension_semantics<parallel>, #tpu.dimension_semantics<arbitrary>], iteration_bounds = array<i64: 1, 1, 1>, scalar_prefetch = 0 : i64, scratch_operands = 1 : i64, tpu.core_type = #tpu.core_type<tc>, window_params = [{transform_indices = @transform_0, window_bounds = array<i64: 16, 512>}, {transform_indices = @transform_1, window_bounds = array<i64: 512, 128>}, {transform_indices = @transform_2, window_bounds = array<i64: 1, 128>}, {transform_indices = @transform_3, window_bounds = array<i64: 16, 128>}]} {
    %c0_i32 = arith.constant 0 : i32
    %0 = arith.cmpi eq, %arg2, %c0_i32 : i32
    %1 = arith.extui %0 : i1 to i32
    %c0_i32_0 = arith.constant 0 : i32
    %2 = arith.cmpi ne, %1, %c0_i32_0 : i32
    scf.if %2 {
      %cst_10 = arith.constant 0.000000e+00 : f32
      %12 = vector.broadcast %cst_10 : f32 to vector<16x128xf32>
      %c0_11 = arith.constant 0 : index
      %c0_12 = arith.constant 0 : index
      %13 = vector.load %arg7[%c0_11, %c0_12] : memref<16x128xf32, #tpu.memory_space<vmem>>, vector<16x128xf32>
      tpu.vector_store %arg7[%c0_11, %c0_12], %12 {strides = array<i32>} : memref<16x128xf32, #tpu.memory_space<vmem>>, vector<16x128xf32>,
    } else {
    }
    %c0 = arith.constant 0 : index
    %c0_1 = arith.constant 0 : index
    %3 = vector.load %arg7[%c0, %c0_1] : memref<16x128xf32, #tpu.memory_space<vmem>>, vector<16x128xf32>
    %c0_2 = arith.constant 0 : index
    %c0_3 = arith.constant 0 : index
    %4 = vector.load %arg3[%c0_2, %c0_3] : memref<16x512xf32, #tpu.memory_space<vmem>>, vector<16x512xf32>
    %c0_4 = arith.constant 0 : index
    %c0_5 = arith.constant 0 : index
    %5 = vector.load %arg4[%c0_4, %c0_5] : memref<512x128xf32, #tpu.memory_space<vmem>>, vector<512x128xf32>
    %cst = arith.constant dense<0.000000e+00> : vector<16x128xf32>
    %6 = tpu.matmul %4, %5, %cst {dimension_numbers = #tpu.dot_dimension_numbers<[1], [0], [0], [1], [0, 0, 1, 1], [], []>} : vector<16x512xf32>, vector<512x128xf32>, vector<16x128xf32> -> vector<16x128xf32>
    %7 = arith.addf %3, %6 : vector<16x128xf32>
    %c0_6 = arith.constant 0 : index
    %c0_7 = arith.constant 0 : index
    %8 = vector.load %arg7[%c0_6, %c0_7] : memref<16x128xf32, #tpu.memory_space<vmem>>, vector<16x128xf32>
    tpu.vector_store %arg7[%c0_6, %c0_7], %7 {strides = array<i32>} : memref<16x128xf32, #tpu.memory_space<vmem>>, vector<16x128xf32>,
    %c0_i32_8 = arith.constant 0 : i32
    %9 = arith.cmpi eq, %arg2, %c0_i32_8 : i32
    %10 = arith.extui %9 : i1 to i32
    %c0_i32_9 = arith.constant 0 : i32
    %11 = arith.cmpi ne, %10, %c0_i32_9 : i32
    scf.if %11 {
      %c0_10 = arith.constant 0 : index
      %c0_11 = arith.constant 0 : index
      %12 = vector.load %arg7[%c0_10, %c0_11] : memref<16x128xf32, #tpu.memory_space<vmem>>, vector<16x128xf32>
      %c0_12 = arith.constant 0 : index
      %c0_13 = arith.constant 0 : index
      %13 = vector.load %arg5[%c0_12, %c0_13] : memref<1x128xf32, #tpu.memory_space<vmem>>, vector<1x128xf32>
      %14 = vector.broadcast %13 : vector<1x128xf32> to vector<16x128xf32>
      %15 = arith.addf %12, %14 : vector<16x128xf32>
      %c0_14 = arith.constant 0 : index
      %c0_15 = arith.constant 0 : index
      %16 = vector.load %arg6[%c0_14, %c0_15] : memref<16x128xf32, #tpu.memory_space<vmem>>, vector<16x128xf32>
      tpu.vector_store %arg6[%c0_14, %c0_15], %15 {strides = array<i32>} : memref<16x128xf32, #tpu.memory_space<vmem>>, vector<16x128xf32>,
    } else {
    }
    return
  }
  func.func @transform_0(%arg0: i32, %arg1: i32, %arg2: i32) -> (i32, i32) {
    %c0_i32 = arith.constant 0 : i32
    return %arg0, %arg2 : i32, i32
  }
  func.func @transform_1(%arg0: i32, %arg1: i32, %arg2: i32) -> (i32, i32) {
    %c0_i32 = arith.constant 0 : i32
    return %arg2, %arg1 : i32, i32
  }
  func.func @transform_2(%arg0: i32, %arg1: i32, %arg2: i32) -> (i32, i32) {
    %c0_i32 = arith.constant 0 : i32
    %c0_i32_0 = arith.constant 0 : i32
    return %c0_i32, %arg1 : i32, i32
  }
  func.func @transform_3(%arg0: i32, %arg1: i32, %arg2: i32) -> (i32, i32) {
    %c0_i32 = arith.constant 0 : i32
    return %arg0, %arg1 : i32, i32
  }
}

</mosaic_0001>

<llo_original>
// kernel: cpi_regression_forward.7
$region0: #{cpi_regression_forward.7}
  #allocation0 [shape = 'u32[]', space=smem, size = 0x4, offset = 0x4, fixed_abs, tag = 'smem constant byte address 0x4 - core index']
  #allocation1 [shape = 'u32[144,128]{1,0:T(1,128)}', space=vmem, size = 0x12000, scoped, tag = 'internal scratch']
  #allocation2 [shape = 'f32[32,512]{1,0:T(8,128)}', space=vmem, size = 0x10000, scoped, tag = 'scratch operand']
  %s0 = inlined_call_operand.vmem [shape: f32[32,128], index: 0, kind: input, shape index: {}]
  %s1 = inlined_call_operand.hbm [shape: f32[128,512], index: 1, kind: input, shape index: {}]
  %s2 = inlined_call_operand.hbm [shape: f32[1,512], index: 2, kind: input, shape index: {}]
  %s3 = inlined_call_operand.vmem [shape: f32[32,512], index: 3, kind: output, shape index: {}]
  %s4 = sld [smem:[#allocation0]]
  $region38: #{cpi_regression_forward.7} parent=0
    _
  %s6 = ssub.s32 1, %s4
  %s7 = scalar_select 0, %s6, %s4
  $region1: #{cpi_regression_forward.7} parent=0
    #allocation3 [shape = 'u8[262144]{0}', space=vmem, size = 0x40000, scoped, tag = 'input window, operand 1, single buffered']
    #allocation4 [shape = 's32[1]{0}', space=sflag, size = 0x4, scoped, tag = 'scoped memory for cpi_regression_forward.7']
    #allocation5 [shape = 'u8[2048]{0}', space=vmem, size = 0x800, scoped, tag = 'input window, operand 2, single buffered']
    #allocation6 [shape = 's32[1]{0}', space=sflag, size = 0x4, scoped, tag = 'scoped memory for cpi_regression_forward.7']
    %8 = vsyncpa [#allocation4], 0
    %9 = vsyncpa [#allocation6], 0
    // Predicated region
    $region2: #{cpi_regression_forward.7} parent=1 // pred_check
      _
    $region3: #{cpi_regression_forward.7} parent=1 // pred_check_branch
      %11 = sbr.rel (0) target = $region5
    $region4: #{cpi_regression_forward.7} parent=1 // pred_region
      _
    $region5: #{cpi_regression_forward.7} parent=1 // pred_fallthru
      _
    // Predicated region
    $region6: #{cpi_regression_forward.7} parent=1 // pred_check
      _
    $region7: #{cpi_regression_forward.7} parent=1 // pred_check_branch
      %13 = sbr.rel (0) target = $region9
    $region8: #{cpi_regression_forward.7} parent=1 // pred_region
      %s15 = ssub.s32 8192, 8192
      %16 = vsyncadd [#allocation4], %s15
      %s17 = sshll.u32 [#allocation3], 4
      %s18 = int_to_ptr.vmem [resolvable:$true] %s17
      %23 = dma.hbm_to_vmem [thread:$0]  %s1, 8192, %s18, [#allocation4], 512, 512, 32
    $region9: #{cpi_regression_forward.7} parent=1 // pred_fallthru
      _
    // Predicated region
    $region10: #{cpi_regression_forward.7} parent=1 // pred_check
      _
    $region11: #{cpi_regression_forward.7} parent=1 // pred_check_branch
      %25 = sbr.rel (0) target = $region13
    $region12: #{cpi_regression_forward.7} parent=1 // pred_region
      %s27 = ssub.s32 64, 64
      %28 = vsyncadd [#allocation6], %s27
      %s30 = sshll.u32 [#allocation5], 4
      %s31 = int_to_ptr.vmem [resolvable:$true] %s30
      %33 = dma.hbm_to_vmem [thread:$0]  %s2, 64, %s31, [#allocation6]
    $region13: #{cpi_regression_forward.7} parent=1 // pred_fallthru
      _
    // Predicated region
    $region14: #{cpi_regression_forward.7} parent=1 // pred_check
      _
    $region15: #{cpi_regression_forward.7} parent=1 // pred_check_branch
      %35 = sbr.rel (0) target = $region17
    $region16: #{cpi_regression_forward.7} parent=1 // pred_region
      %36 = dma.done [#allocation4], 8192
    $region17: #{cpi_regression_forward.7} parent=1 // pred_fallthru
      _
    // Predicated region
    $region18: #{cpi_regression_forward.7} parent=1 // pred_check
      _
    $region19: #{cpi_regression_forward.7} parent=1 // pred_check_branch
      %38 = sbr.rel (0) target = $region21
    $region20: #{cpi_regression_forward.7} parent=1 // pred_region
      %39 = dma.done [#allocation6], 64
    $region21: #{cpi_regression_forward.7} parent=1 // pred_fallthru
      _
    %p40 = scmp.eq.s32.totalorder 0, 0
    // Predicated region
    $region22: #{cpi_regression_forward.7} parent=1 // pred_check
      %p41 = pneg %p40
    $region23: #{cpi_regression_forward.7} parent=1 // pred_check_branch
      %43 = sbr.rel (%p41) target = $region25
    $region24: #{cpi_regression_forward.7} parent=1 // pred_region
      %44 = vst [vmem:[#allocation2] sm:$0xff] 0.0
      %45 = vst [vmem:[#allocation2 + $0x8] sm:$0xff] 0.0
      %46 = vst [vmem:[#allocation2 + $0x10] sm:$0xff] 0.0
      %47 = vst [vmem:[#allocation2 + $0x18] sm:$0xff] 0.0
      %48 = vst [vmem:[#allocation2 + $0x20] sm:$0xff] 0.0
      %49 = vst [vmem:[#allocation2 + $0x28] sm:$0xff] 0.0
      %50 = vst [vmem:[#allocation2 + $0x30] sm:$0xff] 0.0
      %51 = vst [vmem:[#allocation2 + $0x38] sm:$0xff] 0.0
      %52 = vst [vmem:[#allocation2 + $0x40] sm:$0xff] 0.0
      %53 = vst [vmem:[#allocation2 + $0x48] sm:$0xff] 0.0
      %54 = vst [vmem:[#allocation2 + $0x50] sm:$0xff] 0.0
      %55 = vst [vmem:[#allocation2 + $0x58] sm:$0xff] 0.0
      %56 = vst [vmem:[#allocation2 + $0x60] sm:$0xff] 0.0
      %57 = vst [vmem:[#allocation2 + $0x68] sm:$0xff] 0.0
      %58 = vst [vmem:[#allocation2 + $0x70] sm:$0xff] 0.0
      %59 = vst [vmem:[#allocation2 + $0x78] sm:$0xff] 0.0
    $region25: #{cpi_regression_forward.7} parent=1 // pred_fallthru
      _
    %v60 = vld [vmem:[#allocation2] sm:$0xff]
    %v61 = vld [vmem:[#allocation2 + $0x8] sm:$0xff]
    %v62 = vld [vmem:[#allocation2 + $0x10] sm:$0xff]
    %v63 = vld [vmem:[#allocation2 + $0x18] sm:$0xff]
    %v64 = vld [vmem:[#allocation2 + $0x20] sm:$0xff]
    %v65 = vld [vmem:[#allocation2 + $0x28] sm:$0xff]
    %v66 = vld [vmem:[#allocation2 + $0x30] sm:$0xff]
    %v67 = vld [vmem:[#allocation2 + $0x38] sm:$0xff]
    %v68 = vld [vmem:[#allocation2 + $0x40] sm:$0xff]
    %v69 = vld [vmem:[#allocation2 + $0x48] sm:$0xff]
    %v70 = vld [vmem:[#allocation2 + $0x50] sm:$0xff]
    %v71 = vld [vmem:[#allocation2 + $0x58] sm:$0xff]
    %v72 = vld [vmem:[#allocation2 + $0x60] sm:$0xff]
    %v73 = vld [vmem:[#allocation2 + $0x68] sm:$0xff]
    %v74 = vld [vmem:[#allocation2 + $0x70] sm:$0xff]
    %v75 = vld [vmem:[#allocation2 + $0x78] sm:$0xff]
    %v76 = vld [vmem:[%s0] sm:$0xff]
    %v77 = vld [vmem:[%s0 + $0x8] sm:$0xff]
    %v78 = vld [vmem:[%s0 + $0x10] sm:$0xff]
    %v79 = vld [vmem:[%s0 + $0x18] sm:$0xff]
    %v80 = vld [vmem:[#allocation3] sm:$0xff]
    %v81 = vld [vmem:[#allocation3 + $0x8] sm:$0xff]
    %v82 = vld [vmem:[#allocation3 + $0x10] sm:$0xff]
    %v83 = vld [vmem:[#allocation3 + $0x18] sm:$0xff]
    %v84 = vld [vmem:[#allocation3 + $0x20] sm:$0xff]
    %v85 = vld [vmem:[#allocation3 + $0x28] sm:$0xff]
    %v86 = vld [vmem:[#allocation3 + $0x30] sm:$0xff]
    %v87 = vld [vmem:[#allocation3 + $0x38] sm:$0xff]
    %v88 = vld [vmem:[#allocation3 + $0x40] sm:$0xff]
    %v89 = vld [vmem:[#allocation3 + $0x48] sm:$0xff]
    %v90 = vld [vmem:[#allocation3 + $0x50] sm:$0xff]
    %v91 = vld [vmem:[#allocation3 + $0x58] sm:$0xff]
    %v92 = vld [vmem:[#allocation3 + $0x60] sm:$0xff]
    %v93 = vld [vmem:[#allocation3 + $0x68] sm:$0xff]
    %v94 = vld [vmem:[#allocation3 + $0x70] sm:$0xff]
    %v95 = vld [vmem:[#allocation3 + $0x78] sm:$0xff]
    %v96 = vld [vmem:[#allocation3 + $0x80] sm:$0xff]
    %v97 = vld [vmem:[#allocation3 + $0x88] sm:$0xff]
    %v98 = vld [vmem:[#allocation3 + $0x90] sm:$0xff]
    %v99 = vld [vmem:[#allocation3 + $0x98] sm:$0xff]
    %v100 = vld [vmem:[#allocation3 + $0xa0] sm:$0xff]
    %v101 = vld [vmem:[#allocation3 + $0xa8] sm:$0xff]
    %v102 = vld [vmem:[#allocation3 + $0xb0] sm:$0xff]
    %v103 = vld [vmem:[#allocation3 + $0xb8] sm:$0xff]
    %v104 = vld [vmem:[#allocation3 + $0xc0] sm:$0xff]
    %v105 = vld [vmem:[#allocation3 + $0xc8] sm:$0xff]
    %v106 = vld [vmem:[#allocation3 + $0xd0] sm:$0xff]
    %v107 = vld [vmem:[#allocation3 + $0xd8] sm:$0xff]
    %v108 = vld [vmem:[#allocation3 + $0xe0] sm:$0xff]
    %v109 = vld [vmem:[#allocation3 + $0xe8] sm:$0xff]
    %v110 = vld [vmem:[#allocation3 + $0xf0] sm:$0xff]
    %v111 = vld [vmem:[#allocation3 + $0xf8] sm:$0xff]
    %v112 = vld [vmem:[#allocation3 + $0x100] sm:$0xff]
    %v113 = vld [vmem:[#allocation3 + $0x108] sm:$0xff]
    %v114 = vld [vmem:[#allocation3 + $0x110] sm:$0xff]
    %v115 = vld [vmem:[#allocation3 + $0x118] sm:$0xff]
    %v116 = vld [vmem:[#allocation3 + $0x120] sm:$0xff]
    %v117 = vld [vmem:[#allocation3 + $0x128] sm:$0xff]
    %v118 = vld [vmem:[#allocation3 + $0x130] sm:$0xff]
    %v119 = vld [vmem:[#allocation3 + $0x138] sm:$0xff]
    %v120 = vld [vmem:[#allocation3 + $0x140] sm:$0xff]
    %v121 = vld [vmem:[#allocation3 + $0x148] sm:$0xff]
    %v122 = vld [vmem:[#allocation3 + $0x150] sm:$0xff]
    %v123 = vld [vmem:[#allocation3 + $0x158] sm:$0xff]
    %v124 = vld [vmem:[#allocation3 + $0x160] sm:$0xff]
    %v125 = vld [vmem:[#allocation3 + $0x168] sm:$0xff]
    %v126 = vld [vmem:[#allocation3 + $0x170] sm:$0xff]
    %v127 = vld [vmem:[#allocation3 + $0x178] sm:$0xff]
    %v128 = vld [vmem:[#allocation3 + $0x180] sm:$0xff]
    %v129 = vld [vmem:[#allocation3 + $0x188] sm:$0xff]
    %v130 = vld [vmem:[#allocation3 + $0x190] sm:$0xff]
    %v131 = vld [vmem:[#allocation3 + $0x198] sm:$0xff]
    %v132 = vld [vmem:[#allocation3 + $0x1a0] sm:$0xff]
    %v133 = vld [vmem:[#allocation3 + $0x1a8] sm:$0xff]
    %v134 = vld [vmem:[#allocation3 + $0x1b0] sm:$0xff]
    %v135 = vld [vmem:[#allocation3 + $0x1b8] sm:$0xff]
    %v136 = vld [vmem:[#allocation3 + $0x1c0] sm:$0xff]
    %v137 = vld [vmem:[#allocation3 + $0x1c8] sm:$0xff]
    %v138 = vld [vmem:[#allocation3 + $0x1d0] sm:$0xff]
    %v139 = vld [vmem:[#allocation3 + $0x1d8] sm:$0xff]
    %v140 = vld [vmem:[#allocation3 + $0x1e0] sm:$0xff]
    %v141 = vld [vmem:[#allocation3 + $0x1e8] sm:$0xff]
    %v142 = vld [vmem:[#allocation3 + $0x1f0] sm:$0xff]
    %v143 = vld [vmem:[#allocation3 + $0x1f8] sm:$0xff]
    %144 = vmatprep.subr.mxu0 %v141
    %145 = vmatpush1.msra.mxu0 %v140
    %146 = vmatprep.subr.mxu0 %v137
    %147 = vmatpush1.msra.mxu0 %v136
    %148 = vmatprep.subr.mxu0 %v133
    %149 = vmatpush1.msra.mxu0 %v132
    %150 = vmatprep.subr.mxu0 %v129
    %151 = vmatpush1.msra.mxu0 %v128
    %152 = vmatprep.subr.mxu0 %v125
    %153 = vmatpush1.msra.mxu0 %v124
    %154 = vmatprep.subr.mxu0 %v121
    %155 = vmatpush1.msra.mxu0 %v120
    %156 = vmatprep.subr.mxu0 %v117
    %157 = vmatpush1.msra.mxu0 %v116
    %158 = vmatprep.subr.mxu0 %v113
    %159 = vmatpush1.msra.mxu0 %v112
    %160 = vmatprep.subr.mxu0 %v109
    %161 = vmatpush1.msra.mxu0 %v108
    %162 = vmatprep.subr.mxu0 %v105
    %163 = vmatpush1.msra.mxu0 %v104
    %164 = vmatprep.subr.mxu0 %v101
    %165 = vmatpush1.msra.mxu0 %v100
    %166 = vmatprep.subr.mxu0 %v97
    %167 = vmatpush1.msra.mxu0 %v96
    %168 = vmatprep.subr.mxu0 %v93
    %169 = vmatpush1.msra.mxu0 %v92
    %170 = vmatprep.subr.mxu0 %v89
    %171 = vmatpush1.msra.mxu0 %v88
    %172 = vmatprep.subr.mxu0 %v85
    %173 = vmatpush1.msra.mxu0 %v84
    %174 = vmatprep.subr.mxu0 %v81
    %175 = vmatpush1.msra.mxu0 %v80
    %176 = vmatprep.subr.mxu0 0.0
    %177 = vmatpush2.msra.mxu0 0.0
    %178 = vmatprep.subr.mxu0 0.0
    %179 = vmatpush2.msra.mxu0 0.0
    %180 = vmatprep.subr.mxu0 0.0
    %181 = vmatpush2.msra.mxu0 0.0
    %182 = vmatprep.subr.mxu0 0.0
    %183 = vmatpush2.msra.mxu0 0.0
    %184 = vmatprep.subr.mxu0 0.0
    %185 = vmatpush2.msra.mxu0 0.0
    %186 = vmatprep.subr.mxu0 0.0
    %187 = vmatpush2.msra.mxu0 0.0
    %188 = vmatprep.subr.mxu0 0.0
    %189 = vmatpush2.msra.mxu0 0.0
    %190 = vmatprep.subr.mxu0 0.0
    %191 = vmatpush2.msra.mxu0 0.0
    %192 = vmatprep.subr.mxu0 0.0
    %193 = vmatpush2.msra.mxu0 0.0
    %194 = vmatprep.subr.mxu0 0.0
    %195 = vmatpush2.msra.mxu0 0.0
    %196 = vmatprep.subr.mxu0 0.0
    %197 = vmatpush2.msra.mxu0 0.0
    %198 = vmatprep.subr.mxu0 0.0
    %199 = vmatpush2.msra.mxu0 0.0
    %200 = vmatprep.subr.mxu0 0.0
    %201 = vmatpush2.msra.mxu0 0.0
    %202 = vmatprep.subr.mxu0 0.0
    %203 = vmatpush2.msra.mxu0 0.0
    %204 = vmatprep.subr.mxu0 0.0
    %205 = vmatpush2.msra.mxu0 0.0
    %206 = vmatprep.subr.mxu0 0.0
    %207 = vmatpush2.msra.mxu0 0.0
    %208 = vmatprep.mubr.f32.mxu0 0.0
    %209 = vmatmul.mubr.f32.gmra.mxu0 %v76
    %v210 = vpop.f32.mrf.mxu0
    %v211 = vadd.f32 0.0, %v210
    %v212 = vpop.f32.mrf.mxu0
    %v213 = vadd.f32 0.0, %v212
    %214 = vmatprep.mubr.f32.mxu0 0.0
    %215 = vmatmul.mubr.f32.gmra.mxu0 %v77
    %v216 = vpop.f32.mrf.mxu0
    %v217 = vadd.f32 0.0, %v216
    %v218 = vpop.f32.mrf.mxu0
    %v219 = vadd.f32 0.0, %v218
    %220 = vmatprep.mubr.f32.mxu0 0.0
    %221 = vmatmul.mubr.f32.gmra.mxu0 %v78
    %v222 = vpop.f32.mrf.mxu0
    %v223 = vadd.f32 0.0, %v222
    %v224 = vpop.f32.mrf.mxu0
    %v225 = vadd.f32 0.0, %v224
    %226 = vmatprep.mubr.f32.mxu0 0.0
    %227 = vmatmul.mubr.f32.gmra.mxu0 %v79
    %v228 = vpop.f32.mrf.mxu0
    %v229 = vadd.f32 0.0, %v228
    %v230 = vpop.f32.mrf.mxu0
    %v231 = vadd.f32 0.0, %v230
    %232 = vdwg.mxu0
    %233 = vmatprep.subr.mxu0 %v143
    %234 = vmatpush1.msra.mxu0 %v142
    %235 = vmatprep.subr.mxu0 %v139
    %236 = vmatpush1.msra.mxu0 %v138
    %237 = vmatprep.subr.mxu0 %v135
    %238 = vmatpush1.msra.mxu0 %v134
    %239 = vmatprep.subr.mxu0 %v131
    %240 = vmatpush1.msra.mxu0 %v130
    %241 = vmatprep.subr.mxu0 %v127
    %242 = vmatpush1.msra.mxu0 %v126
    %243 = vmatprep.subr.mxu0 %v123
    %244 = vmatpush1.msra.mxu0 %v122
    %245 = vmatprep.subr.mxu0 %v119
    %246 = vmatpush1.msra.mxu0 %v118
    %247 = vmatprep.subr.mxu0 %v115
    %248 = vmatpush1.msra.mxu0 %v114
    %249 = vmatprep.subr.mxu0 %v111
    %250 = vmatpush1.msra.mxu0 %v110
    %251 = vmatprep.subr.mxu0 %v107
    %252 = vmatpush1.msra.mxu0 %v106
    %253 = vmatprep.subr.mxu0 %v103
    %254 = vmatpush1.msra.mxu0 %v102
    %255 = vmatprep.subr.mxu0 %v99
    %256 = vmatpush1.msra.mxu0 %v98
    %257 = vmatprep.subr.mxu0 %v95
    %258 = vmatpush1.msra.mxu0 %v94
    %259 = vmatprep.subr.mxu0 %v91
    %260 = vmatpush1.msra.mxu0 %v90
    %261 = vmatprep.subr.mxu0 %v87
    %262 = vmatpush1.msra.mxu0 %v86
    %263 = vmatprep.subr.mxu0 %v83
    %264 = vmatpush1.msra.mxu0 %v82
    %265 = vmatprep.subr.mxu0 0.0
    %266 = vmatpush2.msra.mxu0 0.0
    %267 = vmatprep.subr.mxu0 0.0
    %268 = vmatpush2.msra.mxu0 0.0
    %269 = vmatprep.subr.mxu0 0.0
    %270 = vmatpush2.msra.mxu0 0.0
    %271 = vmatprep.subr.mxu0 0.0
    %272 = vmatpush2.msra.mxu0 0.0
    %273 = vmatprep.subr.mxu0 0.0
    %274 = vmatpush2.msra.mxu0 0.0
    %275 = vmatprep.subr.mxu0 0.0
    %276 = vmatpush2.msra.mxu0 0.0
    %277 = vmatprep.subr.mxu0 0.0
    %278 = vmatpush2.msra.mxu0 0.0
    %279 = vmatprep.subr.mxu0 0.0
    %280 = vmatpush2.msra.mxu0 0.0
    %281 = vmatprep.subr.mxu0 0.0
    %282 = vmatpush2.msra.mxu0 0.0
    %283 = vmatprep.subr.mxu0 0.0
    %284 = vmatpush2.msra.mxu0 0.0
    %285 = vmatprep.subr.mxu0 0.0
    %286 = vmatpush2.msra.mxu0 0.0
    %287 = vmatprep.subr.mxu0 0.0
    %288 = vmatpush2.msra.mxu0 0.0
    %289 = vmatprep.subr.mxu0 0.0
    %290 = vmatpush2.msra.mxu0 0.0
    %291 = vmatprep.subr.mxu0 0.0
    %292 = vmatpush2.msra.mxu0 0.0
    %293 = vmatprep.subr.mxu0 0.0
    %294 = vmatpush2.msra.mxu0 0.0
    %295 = vmatprep.subr.mxu0 0.0
    %296 = vmatpush2.msra.mxu0 0.0
    %297 = vmatprep.mubr.f32.mxu0 0.0
    %298 = vmatmul.mubr.f32.gmra.mxu0 %v76
    %v299 = vpop.f32.mrf.mxu0
    %v300 = vadd.f32 0.0, %v299
    %v301 = vpop.f32.mrf.mxu0
    %v302 = vadd.f32 0.0, %v301
    %303 = vmatprep.mubr.f32.mxu0 0.0
    %304 = vmatmul.mubr.f32.gmra.mxu0 %v77
    %v305 = vpop.f32.mrf.mxu0
    %v306 = vadd.f32 0.0, %v305
    %v307 = vpop.f32.mrf.mxu0
    %v308 = vadd.f32 0.0, %v307
    %309 = vmatprep.mubr.f32.mxu0 0.0
    %310 = vmatmul.mubr.f32.gmra.mxu0 %v78
    %v311 = vpop.f32.mrf.mxu0
    %v312 = vadd.f32 0.0, %v311
    %v313 = vpop.f32.mrf.mxu0
    %v314 = vadd.f32 0.0, %v313
    %315 = vmatprep.mubr.f32.mxu0 0.0
    %316 = vmatmul.mubr.f32.gmra.mxu0 %v79
    %v317 = vpop.f32.mrf.mxu0
    %v318 = vadd.f32 0.0, %v317
    %v319 = vpop.f32.mrf.mxu0
    %v320 = vadd.f32 0.0, %v319
    %321 = vdwg.mxu0
    %v322 = vadd.f32 %v60, %v211
    %v323 = vadd.f32 %v61, %v213
    %v324 = vadd.f32 %v62, %v300
    %v325 = vadd.f32 %v63, %v302
    %v326 = vadd.f32 %v64, %v217
    %v327 = vadd.f32 %v65, %v219
    %v328 = vadd.f32 %v66, %v306
    %v329 = vadd.f32 %v67, %v308
    %v330 = vadd.f32 %v68, %v223
    %v331 = vadd.f32 %v69, %v225
    %v332 = vadd.f32 %v70, %v312
    %v333 = vadd.f32 %v71, %v314
    %v334 = vadd.f32 %v72, %v229
    %v335 = vadd.f32 %v73, %v231
    %v336 = vadd.f32 %v74, %v318
    %v337 = vadd.f32 %v75, %v320
    %338 = vst [vmem:[#allocation2] sm:$0xff] %v322
    %339 = vst [vmem:[#allocation2 + $0x8] sm:$0xff] %v323
    %340 = vst [vmem:[#allocation2 + $0x10] sm:$0xff] %v324
    %341 = vst [vmem:[#allocation2 + $0x18] sm:$0xff] %v325
    %342 = vst [vmem:[#allocation2 + $0x20] sm:$0xff] %v326
    %343 = vst [vmem:[#allocation2 + $0x28] sm:$0xff] %v327
    %344 = vst [vmem:[#allocation2 + $0x30] sm:$0xff] %v328
    %345 = vst [vmem:[#allocation2 + $0x38] sm:$0xff] %v329
    %346 = vst [vmem:[#allocation2 + $0x40] sm:$0xff] %v330
    %347 = vst [vmem:[#allocation2 + $0x48] sm:$0xff] %v331
    %348 = vst [vmem:[#allocation2 + $0x50] sm:$0xff] %v332
    %349 = vst [vmem:[#allocation2 + $0x58] sm:$0xff] %v333
    %350 = vst [vmem:[#allocation2 + $0x60] sm:$0xff] %v334
    %351 = vst [vmem:[#allocation2 + $0x68] sm:$0xff] %v335
    %352 = vst [vmem:[#allocation2 + $0x70] sm:$0xff] %v336
    %353 = vst [vmem:[#allocation2 + $0x78] sm:$0xff] %v337
    // Predicated region
    $region26: #{cpi_regression_forward.7} parent=1 // pred_check
      %p354 = pneg %p40
    $region27: #{cpi_regression_forward.7} parent=1 // pred_check_branch
      %356 = sbr.rel (%p354) target = $region29
    $region28: #{cpi_regression_forward.7} parent=1 // pred_region
      %v357 = vld [vmem:[#allocation2] sm:$0xff]
      %v358 = vld [vmem:[#allocation2 + $0x8] sm:$0xff]
      %v359 = vld [vmem:[#allocation2 + $0x10] sm:$0xff]
      %v360 = vld [vmem:[#allocation2 + $0x18] sm:$0xff]
      %v361 = vld [vmem:[#allocation2 + $0x20] sm:$0xff]
      %v362 = vld [vmem:[#allocation2 + $0x28] sm:$0xff]
      %v363 = vld [vmem:[#allocation2 + $0x30] sm:$0xff]
      %v364 = vld [vmem:[#allocation2 + $0x38] sm:$0xff]
      %v365 = vld [vmem:[#allocation2 + $0x40] sm:$0xff]
      %v366 = vld [vmem:[#allocation2 + $0x48] sm:$0xff]
      %v367 = vld [vmem:[#allocation2 + $0x50] sm:$0xff]
      %v368 = vld [vmem:[#allocation2 + $0x58] sm:$0xff]
      %v369 = vld [vmem:[#allocation2 + $0x60] sm:$0xff]
      %v370 = vld [vmem:[#allocation2 + $0x68] sm:$0xff]
      %v371 = vld [vmem:[#allocation2 + $0x70] sm:$0xff]
      %v372 = vld [vmem:[#allocation2 + $0x78] sm:$0xff]
      %v373 = vld [vmem:[#allocation5] sm:$0xf]
      %v375 = vlaneseq
      %v376 = vshrl.u32 %v375, 7
      %v377 = vsub.s32 0, %v376
      %v378 = vrot.slane %v373, %v377
      %v379 = vlaneseq
      %v380 = vshrl.u32 %v379, 7
      %v381 = vsub.s32 1, %v380
      %v382 = vrot.slane %v373, %v381
      %v383 = vlaneseq
      %v384 = vshrl.u32 %v383, 7
      %v385 = vsub.s32 2, %v384
      %v386 = vrot.slane %v373, %v385
      %v387 = vlaneseq
      %v388 = vshrl.u32 %v387, 7
      %v389 = vsub.s32 3, %v388
      %v390 = vrot.slane %v373, %v389
      %v395 = vadd.f32 %v357, %v378
      %v396 = vadd.f32 %v358, %v382
      %v397 = vadd.f32 %v359, %v386
      %v398 = vadd.f32 %v360, %v390
      %v399 = vadd.f32 %v361, %v378
      %v400 = vadd.f32 %v362, %v382
      %v401 = vadd.f32 %v363, %v386
      %v402 = vadd.f32 %v364, %v390
      %v403 = vadd.f32 %v365, %v378
      %v404 = vadd.f32 %v366, %v382
      %v405 = vadd.f32 %v367, %v386
      %v406 = vadd.f32 %v368, %v390
      %v407 = vadd.f32 %v369, %v378
      %v408 = vadd.f32 %v370, %v382
      %v409 = vadd.f32 %v371, %v386
      %v410 = vadd.f32 %v372, %v390
      %411 = vst [vmem:[%s3] sm:$0xff] %v395
      %412 = vst [vmem:[%s3 + $0x8] sm:$0xff] %v396
      %413 = vst [vmem:[%s3 + $0x10] sm:$0xff] %v397
      %414 = vst [vmem:[%s3 + $0x18] sm:$0xff] %v398
      %415 = vst [vmem:[%s3 + $0x20] sm:$0xff] %v399
      %416 = vst [vmem:[%s3 + $0x28] sm:$0xff] %v400
      %417 = vst [vmem:[%s3 + $0x30] sm:$0xff] %v401
      %418 = vst [vmem:[%s3 + $0x38] sm:$0xff] %v402
      %419 = vst [vmem:[%s3 + $0x40] sm:$0xff] %v403
      %420 = vst [vmem:[%s3 + $0x48] sm:$0xff] %v404
      %421 = vst [vmem:[%s3 + $0x50] sm:$0xff] %v405
      %422 = vst [vmem:[%s3 + $0x58] sm:$0xff] %v406
      %423 = vst [vmem:[%s3 + $0x60] sm:$0xff] %v407
      %424 = vst [vmem:[%s3 + $0x68] sm:$0xff] %v408
      %425 = vst [vmem:[%s3 + $0x70] sm:$0xff] %v409
      %426 = vst [vmem:[%s3 + $0x78] sm:$0xff] %v410
    $region29: #{cpi_regression_forward.7} parent=1 // pred_fallthru
      _
    // Predicated region
    $region30: #{cpi_regression_forward.7} parent=1 // pred_check
      _
    $region31: #{cpi_regression_forward.7} parent=1 // pred_check_branch
      %428 = sbr.rel (0) target = $region33
    $region32: #{cpi_regression_forward.7} parent=1 // pred_region
      _
    $region33: #{cpi_regression_forward.7} parent=1 // pred_fallthru
      _
    // Predicated region
    $region34: #{cpi_regression_forward.7} parent=1 // pred_check
      _
    $region35: #{cpi_regression_forward.7} parent=1 // pred_check_branch
      %430 = sbr.rel (0) target = $region37
    $region36: #{cpi_regression_forward.7} parent=1 // pred_region
      _
    $region37: #{cpi_regression_forward.7} parent=1 // pred_fallthru
      _
    %431 = vsyncpa [#allocation4], 1
    %432 = vsyncpa [#allocation6], 1

// kernel: cpi_regression_forward.8
$region0: #{cpi_regression_forward.8}
  #allocation0 [shape = 'u32[]', space=smem, size = 0x4, offset = 0x4, fixed_abs, tag = 'smem constant byte address 0x4 - core index']
  #allocation1 [shape = 'u32[144,128]{1,0:T(1,128)}', space=vmem, size = 0x12000, scoped, tag = 'internal scratch']
  #allocation2 [shape = 'f32[2,128]{1,0:T(2,128)}', space=vmem, size = 0x400, scoped, tag = 'scratch operand']
  #allocation3 [shape = 'f32[2,128]{1,0:T(2,128)}', space=vmem, size = 0x400, scoped, tag = 'scratch operand']
  #allocation4 [shape = 'f32[2,128]{1,0:T(2,128)}', space=vmem, size = 0x400, scoped, tag = 'scratch operand']
  #allocation5 [shape = 's32[1]{0:T(128)S(6)}', space=smem, size = 0x200, scoped, tag = 'scoped memory for cpi_regression_forward.8']
  %s0 = inlined_call_operand.<no memory space> [shape: s32[1], index: 0, kind: input, shape index: {}]
  %s1 = inlined_call_operand.vmem [shape: s32[2,1], index: 1, kind: input, shape index: {}]
  %s2 = inlined_call_operand.vmem [shape: f32[16,2,512], index: 2, kind: input, shape index: {}]
  %s3 = inlined_call_operand.hbm [shape: f32[128,512], index: 3, kind: input, shape index: {}]
  %s4 = inlined_call_operand.vmem [shape: f32[2,128], index: 4, kind: output, shape index: {}]
  %s5 = sld [smem:[#allocation0]]
  $region37: #{cpi_regression_forward.8} parent=0
    _
  %s7 = ssub.s32 1, %s5
  %s8 = scalar_select 0, %s7, %s5
  %9 = sst [smem:[#allocation5]] %s0
  $region1: #{cpi_regression_forward.8} parent=0
    #allocation6 [shape = 'u8[262144]{0}', space=vmem, size = 0x40000, scoped, tag = 'input window, operand 3, single buffered']
    #allocation7 [shape = 's32[1]{0}', space=sflag, size = 0x4, scoped, tag = 'scoped memory for cpi_regression_forward.8']
    %10 = vsyncpa [#allocation7], 0
    // Predicated region
    $region2: #{cpi_regression_forward.8} parent=1 // pred_check
      _
    $region3: #{cpi_regression_forward.8} parent=1 // pred_check_branch
      %12 = sbr.rel (0) target = $region5
    $region4: #{cpi_regression_forward.8} parent=1 // pred_region
      _
    $region5: #{cpi_regression_forward.8} parent=1 // pred_fallthru
      _
    // Predicated region
    $region6: #{cpi_regression_forward.8} parent=1 // pred_check
      _
    $region7: #{cpi_regression_forward.8} parent=1 // pred_check_branch
      %14 = sbr.rel (0) target = $region9
    $region8: #{cpi_regression_forward.8} parent=1 // pred_region
      _
    $region9: #{cpi_regression_forward.8} parent=1 // pred_fallthru
      _
    // Predicated region
    $region10: #{cpi_regression_forward.8} parent=1 // pred_check
      _
    $region11: #{cpi_regression_forward.8} parent=1 // pred_check_branch
      %16 = sbr.rel (0) target = $region13
    $region12: #{cpi_regression_forward.8} parent=1 // pred_region
      _
    $region13: #{cpi_regression_forward.8} parent=1 // pred_fallthru
      _
    // Predicated region
    $region14: #{cpi_regression_forward.8} parent=1 // pred_check
      _
    $region15: #{cpi_regression_forward.8} parent=1 // pred_check_branch
      %18 = sbr.rel (0) target = $region17
    $region16: #{cpi_regression_forward.8} parent=1 // pred_region
      %s20 = ssub.s32 8192, 8192
      %21 = vsyncadd [#allocation7], %s20
      %s22 = sshll.u32 [#allocation6], 4
      %s23 = int_to_ptr.vmem [resolvable:$true] %s22
      %28 = dma.hbm_to_vmem [thread:$0]  %s3, 8192, %s23, [#allocation7], 512, 512, 32
    $region17: #{cpi_regression_forward.8} parent=1 // pred_fallthru
      _
    // Predicated region
    $region18: #{cpi_regression_forward.8} parent=1 // pred_check
      _
    $region19: #{cpi_regression_forward.8} parent=1 // pred_check_branch
      %30 = sbr.rel (0) target = $region21
    $region20: #{cpi_regression_forward.8} parent=1 // pred_region
      %31 = dma.done [#allocation7], 8192
    $region21: #{cpi_regression_forward.8} parent=1 // pred_fallthru
      _
    %32 = vst [vmem:[#allocation2] sm:$0x3] 0.0
    %33 = vst [vmem:[#allocation3] sm:$0x3] 0.0
    %34 = vst [vmem:[#allocation4] sm:$0x3] 0.0
    %s35 = sld [smem:[#allocation5]]
    // While loop
    $region22: #{cpi_regression_forward.8} parent=1 // loop_pre_header
      _
    $region23: #{cpi_regression_forward.8} parent=1 // loop_header
      %s37 = sphi 0, %s39
      %p38 = scmp.ge.s32.totalorder %s37, %s35
    $region24: #{cpi_regression_forward.8} parent=1 // loop_header_branch
      %41 = sbr.rel (%p38) target = $region28
    $region25: #{cpi_regression_forward.8} parent=1 // loop_body
      %s42 = smul.u32 %s37, 4
      %s43 = smul.addr %s42, 2
      %s44 = scalar_lea.vmem %s2, %s43
      %v45 = vld [vmem:[%s44] sm:$0xff]
      %v46 = vld [vmem:[#allocation2] sm:$0x3]
      %v47 = vld [vmem:[#allocation6] sm:$0xff]
      %v48 = vld [vmem:[#allocation6 + $0x8] sm:$0xff]
      %v49 = vld [vmem:[#allocation6 + $0x10] sm:$0xff]
      %v50 = vld [vmem:[#allocation6 + $0x18] sm:$0xff]
      %v51 = vld [vmem:[#allocation6 + $0x20] sm:$0xff]
      %v52 = vld [vmem:[#allocation6 + $0x28] sm:$0xff]
      %v53 = vld [vmem:[#allocation6 + $0x30] sm:$0xff]
      %v54 = vld [vmem:[#allocation6 + $0x38] sm:$0xff]
      %v55 = vld [vmem:[#allocation6 + $0x40] sm:$0xff]
      %v56 = vld [vmem:[#allocation6 + $0x48] sm:$0xff]
      %v57 = vld [vmem:[#allocation6 + $0x50] sm:$0xff]
      %v58 = vld [vmem:[#allocation6 + $0x58] sm:$0xff]
      %v59 = vld [vmem:[#allocation6 + $0x60] sm:$0xff]
      %v60 = vld [vmem:[#allocation6 + $0x68] sm:$0xff]
      %v61 = vld [vmem:[#allocation6 + $0x70] sm:$0xff]
      %v62 = vld [vmem:[#allocation6 + $0x78] sm:$0xff]
      %v63 = vld [vmem:[#allocation6 + $0x80] sm:$0xff]
      %v64 = vld [vmem:[#allocation6 + $0x88] sm:$0xff]
      %v65 = vld [vmem:[#allocation6 + $0x90] sm:$0xff]
      %v66 = vld [vmem:[#allocation6 + $0x98] sm:$0xff]
      %v67 = vld [vmem:[#allocation6 + $0xa0] sm:$0xff]
      %v68 = vld [vmem:[#allocation6 + $0xa8] sm:$0xff]
      %v69 = vld [vmem:[#allocation6 + $0xb0] sm:$0xff]
      %v70 = vld [vmem:[#allocation6 + $0xb8] sm:$0xff]
      %v71 = vld [vmem:[#allocation6 + $0xc0] sm:$0xff]
      %v72 = vld [vmem:[#allocation6 + $0xc8] sm:$0xff]
      %v73 = vld [vmem:[#allocation6 + $0xd0] sm:$0xff]
      %v74 = vld [vmem:[#allocation6 + $0xd8] sm:$0xff]
      %v75 = vld [vmem:[#allocation6 + $0xe0] sm:$0xff]
      %v76 = vld [vmem:[#allocation6 + $0xe8] sm:$0xff]
      %v77 = vld [vmem:[#allocation6 + $0xf0] sm:$0xff]
      %v78 = vld [vmem:[#allocation6 + $0xf8] sm:$0xff]
      %v79 = vld [vmem:[#allocation6 + $0x100] sm:$0xff]
      %v80 = vld [vmem:[#allocation6 + $0x108] sm:$0xff]
      %v81 = vld [vmem:[#allocation6 + $0x110] sm:$0xff]
      %v82 = vld [vmem:[#allocation6 + $0x118] sm:$0xff]
      %v83 = vld [vmem:[#allocation6 + $0x120] sm:$0xff]
      %v84 = vld [vmem:[#allocation6 + $0x128] sm:$0xff]
      %v85 = vld [vmem:[#allocation6 + $0x130] sm:$0xff]
      %v86 = vld [vmem:[#allocation6 + $0x138] sm:$0xff]
      %v87 = vld [vmem:[#allocation6 + $0x140] sm:$0xff]
      %v88 = vld [vmem:[#allocation6 + $0x148] sm:$0xff]
      %v89 = vld [vmem:[#allocation6 + $0x150] sm:$0xff]
      %v90 = vld [vmem:[#allocation6 + $0x158] sm:$0xff]
      %v91 = vld [vmem:[#allocation6 + $0x160] sm:$0xff]
      %v92 = vld [vmem:[#allocation6 + $0x168] sm:$0xff]
      %v93 = vld [vmem:[#allocation6 + $0x170] sm:$0xff]
      %v94 = vld [vmem:[#allocation6 + $0x178] sm:$0xff]
      %v95 = vld [vmem:[#allocation6 + $0x180] sm:$0xff]
      %v96 = vld [vmem:[#allocation6 + $0x188] sm:$0xff]
      %v97 = vld [vmem:[#allocation6 + $0x190] sm:$0xff]
      %v98 = vld [vmem:[#allocation6 + $0x198] sm:$0xff]
      %v99 = vld [vmem:[#allocation6 + $0x1a0] sm:$0xff]
      %v100 = vld [vmem:[#allocation6 + $0x1a8] sm:$0xff]
      %v101 = vld [vmem:[#allocation6 + $0x1b0] sm:$0xff]
      %v102 = vld [vmem:[#allocation6 + $0x1b8] sm:$0xff]
      %v103 = vld [vmem:[#allocation6 + $0x1c0] sm:$0xff]
      %v104 = vld [vmem:[#allocation6 + $0x1c8] sm:$0xff]
      %v105 = vld [vmem:[#allocation6 + $0x1d0] sm:$0xff]
      %v106 = vld [vmem:[#allocation6 + $0x1d8] sm:$0xff]
      %v107 = vld [vmem:[#allocation6 + $0x1e0] sm:$0xff]
      %v108 = vld [vmem:[#allocation6 + $0x1e8] sm:$0xff]
      %v109 = vld [vmem:[#allocation6 + $0x1f0] sm:$0xff]
      %v110 = vld [vmem:[#allocation6 + $0x1f8] sm:$0xff]
      %111 = vmatprep.subr.mxu0 %v108
      %112 = vmatpush1.msra.mxu0 %v107
      %113 = vmatprep.subr.mxu0 %v104
      %114 = vmatpush1.msra.mxu0 %v103
      %115 = vmatprep.subr.mxu0 %v100
      %116 = vmatpush1.msra.mxu0 %v99
      %117 = vmatprep.subr.mxu0 %v96
      %118 = vmatpush1.msra.mxu0 %v95
      %119 = vmatprep.subr.mxu0 %v92
      %120 = vmatpush1.msra.mxu0 %v91
      %121 = vmatprep.subr.mxu0 %v88
      %122 = vmatpush1.msra.mxu0 %v87
      %123 = vmatprep.subr.mxu0 %v84
      %124 = vmatpush1.msra.mxu0 %v83
      %125 = vmatprep.subr.mxu0 %v80
      %126 = vmatpush1.msra.mxu0 %v79
      %127 = vmatprep.subr.mxu0 %v76
      %128 = vmatpush1.msra.mxu0 %v75
      %129 = vmatprep.subr.mxu0 %v72
      %130 = vmatpush1.msra.mxu0 %v71
      %131 = vmatprep.subr.mxu0 %v68
      %132 = vmatpush1.msra.mxu0 %v67
      %133 = vmatprep.subr.mxu0 %v64
      %134 = vmatpush1.msra.mxu0 %v63
      %135 = vmatprep.subr.mxu0 %v60
      %136 = vmatpush1.msra.mxu0 %v59
      %137 = vmatprep.subr.mxu0 %v56
      %138 = vmatpush1.msra.mxu0 %v55
      %139 = vmatprep.subr.mxu0 %v52
      %140 = vmatpush1.msra.mxu0 %v51
      %141 = vmatprep.subr.mxu0 %v48
      %142 = vmatpush1.msra.mxu0 %v47
      %143 = vmatprep.subr.mxu0 0.0
      %144 = vmatpush2.msra.mxu0 0.0
      %145 = vmatprep.subr.mxu0 0.0
      %146 = vmatpush2.msra.mxu0 0.0
      %147 = vmatprep.subr.mxu0 0.0
      %148 = vmatpush2.msra.mxu0 0.0
      %149 = vmatprep.subr.mxu0 0.0
      %150 = vmatpush2.msra.mxu0 0.0
      %151 = vmatprep.subr.mxu0 0.0
      %152 = vmatpush2.msra.mxu0 0.0
      %153 = vmatprep.subr.mxu0 0.0
      %154 = vmatpush2.msra.mxu0 0.0
      %155 = vmatprep.subr.mxu0 0.0
      %156 = vmatpush2.msra.mxu0 0.0
      %157 = vmatprep.subr.mxu0 0.0
      %158 = vmatpush2.msra.mxu0 0.0
      %159 = vmatprep.subr.mxu0 0.0
      %160 = vmatpush2.msra.mxu0 0.0
      %161 = vmatprep.subr.mxu0 0.0
      %162 = vmatpush2.msra.mxu0 0.0
      %163 = vmatprep.subr.mxu0 0.0
      %164 = vmatpush2.msra.mxu0 0.0
      %165 = vmatprep.subr.mxu0 0.0
      %166 = vmatpush2.msra.mxu0 0.0
      %167 = vmatprep.subr.mxu0 0.0
      %168 = vmatpush2.msra.mxu0 0.0
      %169 = vmatprep.subr.mxu0 0.0
      %170 = vmatpush2.msra.mxu0 0.0
      %171 = vmatprep.subr.mxu0 0.0
      %172 = vmatpush2.msra.mxu0 0.0
      %173 = vmatprep.subr.mxu0 0.0
      %174 = vmatpush2.msra.mxu0 0.0
      %175 = vmatprep.mubr.f32.mxu0 0.0
      %176 = vmatmul.mubr.f32.gmra.mxu0 %v46
      %v177 = vpop.f32.mrf.mxu0
      %v178 = vadd.f32 0.0, %v177
      %v179 = vpop.f32.mrf.mxu0
      %v180 = vadd.f32 0.0, %v179
      %181 = vdwg.mxu0
      %182 = vmatprep.subr.mxu0 %v110
      %183 = vmatpush1.msra.mxu0 %v109
      %184 = vmatprep.subr.mxu0 %v106
      %185 = vmatpush1.msra.mxu0 %v105
      %186 = vmatprep.subr.mxu0 %v102
      %187 = vmatpush1.msra.mxu0 %v101
      %188 = vmatprep.subr.mxu0 %v98
      %189 = vmatpush1.msra.mxu0 %v97
      %190 = vmatprep.subr.mxu0 %v94
      %191 = vmatpush1.msra.mxu0 %v93
      %192 = vmatprep.subr.mxu0 %v90
      %193 = vmatpush1.msra.mxu0 %v89
      %194 = vmatprep.subr.mxu0 %v86
      %195 = vmatpush1.msra.mxu0 %v85
      %196 = vmatprep.subr.mxu0 %v82
      %197 = vmatpush1.msra.mxu0 %v81
      %198 = vmatprep.subr.mxu0 %v78
      %199 = vmatpush1.msra.mxu0 %v77
      %200 = vmatprep.subr.mxu0 %v74
      %201 = vmatpush1.msra.mxu0 %v73
      %202 = vmatprep.subr.mxu0 %v70
      %203 = vmatpush1.msra.mxu0 %v69
      %204 = vmatprep.subr.mxu0 %v66
      %205 = vmatpush1.msra.mxu0 %v65
      %206 = vmatprep.subr.mxu0 %v62
      %207 = vmatpush1.msra.mxu0 %v61
      %208 = vmatprep.subr.mxu0 %v58
      %209 = vmatpush1.msra.mxu0 %v57
      %210 = vmatprep.subr.mxu0 %v54
      %211 = vmatpush1.msra.mxu0 %v53
      %212 = vmatprep.subr.mxu0 %v50
      %213 = vmatpush1.msra.mxu0 %v49
      %214 = vmatprep.subr.mxu0 0.0
      %215 = vmatpush2.msra.mxu0 0.0
      %216 = vmatprep.subr.mxu0 0.0
      %217 = vmatpush2.msra.mxu0 0.0
      %218 = vmatprep.subr.mxu0 0.0
      %219 = vmatpush2.msra.mxu0 0.0
      %220 = vmatprep.subr.mxu0 0.0
      %221 = vmatpush2.msra.mxu0 0.0
      %222 = vmatprep.subr.mxu0 0.0
      %223 = vmatpush2.msra.mxu0 0.0
      %224 = vmatprep.subr.mxu0 0.0
      %225 = vmatpush2.msra.mxu0 0.0
      %226 = vmatprep.subr.mxu0 0.0
      %227 = vmatpush2.msra.mxu0 0.0
      %228 = vmatprep.subr.mxu0 0.0
      %229 = vmatpush2.msra.mxu0 0.0
      %230 = vmatprep.subr.mxu0 0.0
      %231 = vmatpush2.msra.mxu0 0.0
      %232 = vmatprep.subr.mxu0 0.0
      %233 = vmatpush2.msra.mxu0 0.0
      %234 = vmatprep.subr.mxu0 0.0
      %235 = vmatpush2.msra.mxu0 0.0
      %236 = vmatprep.subr.mxu0 0.0
      %237 = vmatpush2.msra.mxu0 0.0
      %238 = vmatprep.subr.mxu0 0.0
      %239 = vmatpush2.msra.mxu0 0.0
      %240 = vmatprep.subr.mxu0 0.0
      %241 = vmatpush2.msra.mxu0 0.0
      %242 = vmatprep.subr.mxu0 0.0
      %243 = vmatpush2.msra.mxu0 0.0
      %244 = vmatprep.subr.mxu0 0.0
      %245 = vmatpush2.msra.mxu0 0.0
      %246 = vmatprep.mubr.f32.mxu0 0.0
      %247 = vmatmul.mubr.f32.gmra.mxu0 %v46
      %v248 = vpop.f32.mrf.mxu0
      %v249 = vadd.f32 0.0, %v248
      %v250 = vpop.f32.mrf.mxu0
      %v251 = vadd.f32 0.0, %v250
      %252 = vdwg.mxu0
      %v257 = vcombine.low %v178, %v180
      %v258 = vcombine.low %v249, %v251
      %v260 = vunpack.c.l.s4 1983009808
      %v261 = vunpack.c.0.s8 %v260
      %v262 = vlaneseq
      %v263 = vshrl.u32 %v262, 7
      %v264 = vsub.s32 %v261, %v263
      %v265 = vrot.slane %v257, %v264
      %v267 = vunpack.c.l.s4 1983009808
      %v268 = vunpack.c.0.s8 %v267
      %v269 = vlaneseq
      %v270 = vshrl.u32 %v269, 7
      %v271 = vsub.s32 %v268, %v270
      %v272 = vrot.slane %v258, %v271
      %v273 = vcombine.low %v265, %v272
      %v275 = vadd.f32 %v45, %v273
      %v276 = vxor.u32 %v275, 2147483648
      %v277 = vmul.f32 %v276, 1.442695
      %v278 = vpow.pop %v277
      %v279 = vadd.f32 %v278, 1.0
      %v280 = vrcp.pop %v279
      %v281 = vmul.f32 1.0, %v280
      %v283 = vrot.slane %v275, 2
      %v285 = vxor.u32 %v283, 2147483648
      %v286 = vmul.f32 %v285, 1.442695
      %v287 = vpow.pop %v286
      %v288 = vadd.f32 %v287, 1.0
      %v289 = vrcp.pop %v288
      %v290 = vmul.f32 1.0, %v289
      %v291 = vrot.slane %v275, 4
      %v293 = vtanh.pop %v291
      %v294 = vrot.slane %v275, 6
      %v296 = vxor.u32 %v294, 2147483648
      %v297 = vmul.f32 %v296, 1.442695
      %v298 = vpow.pop %v297
      %v299 = vadd.f32 %v298, 1.0
      %v300 = vrcp.pop %v299
      %v301 = vmul.f32 1.0, %v300
      %v302 = vld [vmem:[#allocation3] sm:$0x3]
      %v303 = vmul.f32 %v290, %v302
      %v304 = vmul.f32 %v281, %v293
      %v305 = vadd.f32 %v303, %v304
      %v306 = vtanh.pop %v305
      %v307 = vmul.f32 %v301, %v306
      %308 = vst [vmem:[#allocation3] sm:$0x3] %v305
      %309 = vst [vmem:[#allocation2] sm:$0x3] %v307
      %v310 = vld [vmem:[%s1] sm:$0x3]
      %v311 = vstv %s37
      %vm312 = vcmp.lt.s32.totalorder %v311, %v310
      %v313 = vsel %vm312, 1, 0
      %v314 = vcvt.s32.f32 %v313
      %v315 = vld [vmem:[#allocation4] sm:$0x3]
      %317 = vset.pattern.permute.xlu0 0
      %318 = vperm.xlu0 %317, %v314
      %v319 = vpop.permute.xlu0 %318
      %v321 = vmul.f32 %v319, %v307
      %v322 = vadd.f32 %v315, %v321
      %323 = vst [vmem:[#allocation4] sm:$0x3] %v322
    $region26: #{cpi_regression_forward.8} parent=1 // loop_footer
      %s39 = sadd.s32 %s37, 1
    $region27: #{cpi_regression_forward.8} parent=1 // loop_footer_branch
      %36 = sbr.rel target = $region23
    $region28: #{cpi_regression_forward.8} parent=1 // loop_exit
      _
    %v324 = vld [vmem:[#allocation4] sm:$0x3]
    %v325 = vmul.f32 %v324, 0.00066666666
    %326 = vst [vmem:[%s4] sm:$0x3] %v325
    // Predicated region
    $region29: #{cpi_regression_forward.8} parent=1 // pred_check
      _
    $region30: #{cpi_regression_forward.8} parent=1 // pred_check_branch
      %328 = sbr.rel (0) target = $region32
    $region31: #{cpi_regression_forward.8} parent=1 // pred_region
      _
    $region32: #{cpi_regression_forward.8} parent=1 // pred_fallthru
      _
    // Predicated region
    $region33: #{cpi_regression_forward.8} parent=1 // pred_check
      _
    $region34: #{cpi_regression_forward.8} parent=1 // pred_check_branch
      %330 = sbr.rel (0) target = $region36
    $region35: #{cpi_regression_forward.8} parent=1 // pred_region
      _
    $region36: #{cpi_regression_forward.8} parent=1 // pred_fallthru
      _
    %331 = vsyncpa [#allocation7], 1

// kernel: cpi_regression_forward.6
$region0: #{cpi_regression_forward.6}
  #allocation0 [shape = 'u32[]', space=smem, size = 0x4, offset = 0x4, fixed_abs, tag = 'smem constant byte address 0x4 - core index']
  #allocation1 [shape = 'u32[144,128]{1,0:T(1,128)}', space=vmem, size = 0x12000, scoped, tag = 'internal scratch']
  %s0 = inlined_call_operand.vmem [shape: f32[24,24], index: 0, kind: input, shape index: {}]
  %s1 = inlined_call_operand.vmem [shape: f32[24,128], index: 1, kind: input, shape index: {}]
  %s2 = inlined_call_operand.vmem [shape: f32[24,2], index: 2, kind: input, shape index: {}]
  %s3 = inlined_call_operand.hbm [shape: f32[128,256], index: 3, kind: input, shape index: {}]
  %s4 = inlined_call_operand.hbm [shape: f32[128,256], index: 4, kind: input, shape index: {}]
  %s5 = inlined_call_operand.hbm [shape: f32[1,256], index: 5, kind: input, shape index: {}]
  %s6 = inlined_call_operand.hbm [shape: f32[256,256], index: 6, kind: input, shape index: {}]
  %s7 = inlined_call_operand.hbm [shape: f32[256,256], index: 7, kind: input, shape index: {}]
  %s8 = inlined_call_operand.hbm [shape: f32[1,256], index: 8, kind: input, shape index: {}]
  %s9 = inlined_call_operand.hbm [shape: f32[256,384], index: 9, kind: input, shape index: {}]
  %s10 = inlined_call_operand.hbm [shape: f32[256,384], index: 10, kind: input, shape index: {}]
  %s11 = inlined_call_operand.hbm [shape: f32[1,384], index: 11, kind: input, shape index: {}]
  %s12 = inlined_call_operand.hbm [shape: f32[384,128], index: 12, kind: input, shape index: {}]
  %s13 = inlined_call_operand.hbm [shape: f32[1,128], index: 13, kind: input, shape index: {}]
  %s14 = inlined_call_operand.vmem [shape: f32[2,128], index: 14, kind: output, shape index: {}]
  %s15 = sld [smem:[#allocation0]]
  $region110: #{cpi_regression_forward.6} parent=0
    _
  %s17 = ssub.s32 1, %s15
  %s18 = scalar_select 0, %s17, %s15
  $region1: #{cpi_regression_forward.6} parent=0
    #allocation2 [shape = 'u8[131072]{0}', space=vmem, size = 0x20000, scoped, tag = 'input window, operand 3, single buffered']
    #allocation3 [shape = 's32[1]{0}', space=sflag, size = 0x4, scoped, tag = 'scoped memory for cpi_regression_forward.6']
    #allocation4 [shape = 'u8[131072]{0}', space=vmem, size = 0x20000, scoped, tag = 'input window, operand 4, single buffered']
    #allocation5 [shape = 's32[1]{0}', space=sflag, size = 0x4, scoped, tag = 'scoped memory for cpi_regression_forward.6']
    #allocation6 [shape = 'u8[1024]{0}', space=vmem, size = 0x400, scoped, tag = 'input window, operand 5, single buffered']
    #allocation7 [shape = 'u8[262144]{0}', space=vmem, size = 0x40000, scoped, tag = 'input window, operand 6, single buffered']
    #allocation8 [shape = 's32[1]{0}', space=sflag, size = 0x4, scoped, tag = 'scoped memory for cpi_regression_forward.6']
    #allocation9 [shape = 'u8[262144]{0}', space=vmem, size = 0x40000, scoped, tag = 'input window, operand 7, single buffered']
    #allocation10 [shape = 'u8[1024]{0}', space=vmem, size = 0x400, scoped, tag = 'input window, operand 8, single buffered']
    #allocation11 [shape = 's32[1]{0}', space=sflag, size = 0x4, scoped, tag = 'scoped memory for cpi_regression_forward.6']
    #allocation12 [shape = 'u8[393216]{0}', space=vmem, size = 0x60000, scoped, tag = 'input window, operand 9, single buffered']
    #allocation13 [shape = 'u8[393216]{0}', space=vmem, size = 0x60000, scoped, tag = 'input window, operand 10, single buffered']
    #allocation14 [shape = 's32[1]{0}', space=sflag, size = 0x4, scoped, tag = 'scoped memory for cpi_regression_forward.6']
    #allocation15 [shape = 'u8[1536]{0}', space=vmem, size = 0x800, scoped, tag = 'input window, operand 11, single buffered']
    #allocation16 [shape = 'u8[196608]{0}', space=vmem, size = 0x30000, scoped, tag = 'input window, operand 12, single buffered']
    #allocation17 [shape = 's32[1]{0}', space=sflag, size = 0x4, scoped, tag = 'scoped memory for cpi_regression_forward.6']
    #allocation18 [shape = 'u8[512]{0}', space=vmem, size = 0x400, scoped, tag = 'input window, operand 13, single buffered']
    %19 = vsyncpa [#allocation3], 0
    %20 = vsyncpa [#allocation5], 0
    %21 = vsyncpa [#allocation8], 0
    %22 = vsyncpa [#allocation11], 0
    %23 = vsyncpa [#allocation14], 0
    %24 = vsyncpa [#allocation17], 0
    // Predicated region
    $region2: #{cpi_regression_forward.6} parent=1 // pred_check
      _
    $region3: #{cpi_regression_forward.6} parent=1 // pred_check_branch
      %26 = sbr.rel (0) target = $region5
    $region4: #{cpi_regression_forward.6} parent=1 // pred_region
      _
    $region5: #{cpi_regression_forward.6} parent=1 // pred_fallthru
      _
    // Predicated region
    $region6: #{cpi_regression_forward.6} parent=1 // pred_check
      _
    $region7: #{cpi_regression_forward.6} parent=1 // pred_check_branch
      %28 = sbr.rel (0) target = $region9
    $region8: #{cpi_regression_forward.6} parent=1 // pred_region
      _
    $region9: #{cpi_regression_forward.6} parent=1 // pred_fallthru
      _
    // Predicated region
    $region10: #{cpi_regression_forward.6} parent=1 // pred_check
      _
    $region11: #{cpi_regression_forward.6} parent=1 // pred_check_branch
      %30 = sbr.rel (0) target = $region13
    $region12: #{cpi_regression_forward.6} parent=1 // pred_region
      _
    $region13: #{cpi_regression_forward.6} parent=1 // pred_fallthru
      _
    // Predicated region
    $region14: #{cpi_regression_forward.6} parent=1 // pred_check
      _
    $region15: #{cpi_regression_forward.6} parent=1 // pred_check_branch
      %32 = sbr.rel (0) target = $region17
    $region16: #{cpi_regression_forward.6} parent=1 // pred_region
      %s34 = ssub.s32 4096, 4096
      %35 = vsyncadd [#allocation3], %s34
      %s36 = sshll.u32 [#allocation2], 4
      %s37 = int_to_ptr.vmem [resolvable:$true] %s36
      %42 = dma.hbm_to_vmem [thread:$0]  %s3, 4096, %s37, [#allocation3], 256, 256, 16
    $region17: #{cpi_regression_forward.6} parent=1 // pred_fallthru
      _
    // Predicated region
    $region18: #{cpi_regression_forward.6} parent=1 // pred_check
      _
    $region19: #{cpi_regression_forward.6} parent=1 // pred_check_branch
      %44 = sbr.rel (0) target = $region21
    $region20: #{cpi_regression_forward.6} parent=1 // pred_region
      %s46 = ssub.s32 4096, 4096
      %47 = vsyncadd [#allocation5], %s46
      %s48 = sshll.u32 [#allocation4], 4
      %s49 = int_to_ptr.vmem [resolvable:$true] %s48
      %54 = dma.hbm_to_vmem [thread:$0]  %s4, 4096, %s49, [#allocation5], 256, 256, 16
    $region21: #{cpi_regression_forward.6} parent=1 // pred_fallthru
      _
    // Predicated region
    $region22: #{cpi_regression_forward.6} parent=1 // pred_check
      _
    $region23: #{cpi_regression_forward.6} parent=1 // pred_check_branch
      %56 = sbr.rel (0) target = $region25
    $region24: #{cpi_regression_forward.6} parent=1 // pred_region
      %s58 = ssub.s32 32, 32
      %59 = vsyncadd [#allocation5], %s58
      %s61 = sshll.u32 [#allocation6], 4
      %s62 = int_to_ptr.vmem [resolvable:$true] %s61
      %64 = dma.hbm_to_vmem [thread:$0]  %s5, 32, %s62, [#allocation5]
    $region25: #{cpi_regression_forward.6} parent=1 // pred_fallthru
      _
    // Predicated region
    $region26: #{cpi_regression_forward.6} parent=1 // pred_check
      _
    $region27: #{cpi_regression_forward.6} parent=1 // pred_check_branch
      %66 = sbr.rel (0) target = $region29
    $region28: #{cpi_regression_forward.6} parent=1 // pred_region
      %s68 = ssub.s32 8192, 8192
      %69 = vsyncadd [#allocation8], %s68
      %s70 = sshll.u32 [#allocation7], 4
      %s71 = int_to_ptr.vmem [resolvable:$true] %s70
      %76 = dma.hbm_to_vmem [thread:$0]  %s6, 8192, %s71, [#allocation8], 256, 256, 16
    $region29: #{cpi_regression_forward.6} parent=1 // pred_fallthru
      _
    // Predicated region
    $region30: #{cpi_regression_forward.6} parent=1 // pred_check
      _
    $region31: #{cpi_regression_forward.6} parent=1 // pred_check_branch
      %78 = sbr.rel (0) target = $region33
    $region32: #{cpi_regression_forward.6} parent=1 // pred_region
      %s80 = ssub.s32 8192, 8192
      %81 = vsyncadd [#allocation8], %s80
      %s82 = sshll.u32 [#allocation9], 4
      %s83 = int_to_ptr.vmem [resolvable:$true] %s82
      %88 = dma.hbm_to_vmem [thread:$0]  %s7, 8192, %s83, [#allocation8], 256, 256, 16
    $region33: #{cpi_regression_forward.6} parent=1 // pred_fallthru
      _
    // Predicated region
    $region34: #{cpi_regression_forward.6} parent=1 // pred_check
      _
    $region35: #{cpi_regression_forward.6} parent=1 // pred_check_branch
      %90 = sbr.rel (0) target = $region37
    $region36: #{cpi_regression_forward.6} parent=1 // pred_region
      %s92 = ssub.s32 32, 32
      %93 = vsyncadd [#allocation11], %s92
      %s95 = sshll.u32 [#allocation10], 4
      %s96 = int_to_ptr.vmem [resolvable:$true] %s95
      %98 = dma.hbm_to_vmem [thread:$0]  %s8, 32, %s96, [#allocation11]
    $region37: #{cpi_regression_forward.6} parent=1 // pred_fallthru
      _
    // Predicated region
    $region38: #{cpi_regression_forward.6} parent=1 // pred_check
      _
    $region39: #{cpi_regression_forward.6} parent=1 // pred_check_branch
      %100 = sbr.rel (0) target = $region41
    $region40: #{cpi_regression_forward.6} parent=1 // pred_region
      %s102 = ssub.s32 12288, 12288
      %103 = vsyncadd [#allocation11], %s102
      %s104 = sshll.u32 [#allocation12], 4
      %s105 = int_to_ptr.vmem [resolvable:$true] %s104
      %110 = dma.hbm_to_vmem [thread:$0]  %s9, 12288, %s105, [#allocation11], 384, 384, 24
    $region41: #{cpi_regression_forward.6} parent=1 // pred_fallthru
      _
    // Predicated region
    $region42: #{cpi_regression_forward.6} parent=1 // pred_check
      _
    $region43: #{cpi_regression_forward.6} parent=1 // pred_check_branch
      %112 = sbr.rel (0) target = $region45
    $region44: #{cpi_regression_forward.6} parent=1 // pred_region
      %s114 = ssub.s32 12288, 12288
      %115 = vsyncadd [#allocation14], %s114
      %s116 = sshll.u32 [#allocation13], 4
      %s117 = int_to_ptr.vmem [resolvable:$true] %s116
      %122 = dma.hbm_to_vmem [thread:$0]  %s10, 12288, %s117, [#allocation14], 384, 384, 24
    $region45: #{cpi_regression_forward.6} parent=1 // pred_fallthru
      _
    // Predicated region
    $region46: #{cpi_regression_forward.6} parent=1 // pred_check
      _
    $region47: #{cpi_regression_forward.6} parent=1 // pred_check_branch
      %124 = sbr.rel (0) target = $region49
    $region48: #{cpi_regression_forward.6} parent=1 // pred_region
      %s126 = ssub.s32 48, 48
      %127 = vsyncadd [#allocation14], %s126
      %s129 = sshll.u32 [#allocation15], 4
      %s130 = int_to_ptr.vmem [resolvable:$true] %s129
      %132 = dma.hbm_to_vmem [thread:$0]  %s11, 48, %s130, [#allocation14]
    $region49: #{cpi_regression_forward.6} parent=1 // pred_fallthru
      _
    // Predicated region
    $region50: #{cpi_regression_forward.6} parent=1 // pred_check
      _
    $region51: #{cpi_regression_forward.6} parent=1 // pred_check_branch
      %134 = sbr.rel (0) target = $region53
    $region52: #{cpi_regression_forward.6} parent=1 // pred_region
      %s136 = ssub.s32 6144, 6144
      %137 = vsyncadd [#allocation17], %s136
      %s138 = sshll.u32 [#allocation16], 4
      %s139 = int_to_ptr.vmem [resolvable:$true] %s138
      %144 = dma.hbm_to_vmem [thread:$0]  %s12, 6144, %s139, [#allocation17], 128, 128, 8
    $region53: #{cpi_regression_forward.6} parent=1 // pred_fallthru
      _
    // Predicated region
    $region54: #{cpi_regression_forward.6} parent=1 // pred_check
      _
    $region55: #{cpi_regression_forward.6} parent=1 // pred_check_branch
      %146 = sbr.rel (0) target = $region57
    $region56: #{cpi_regression_forward.6} parent=1 // pred_region
      %s148 = ssub.s32 16, 16
      %149 = vsyncadd [#allocation17], %s148
      %s151 = sshll.u32 [#allocation18], 4
      %s152 = int_to_ptr.vmem [resolvable:$true] %s151
      %154 = dma.hbm_to_vmem [thread:$0]  %s13, 16, %s152, [#allocation17]
    $region57: #{cpi_regression_forward.6} parent=1 // pred_fallthru
      _
    // Predicated region
    $region58: #{cpi_regression_forward.6} parent=1 // pred_check
      _
    $region59: #{cpi_regression_forward.6} parent=1 // pred_check_branch
      %156 = sbr.rel (0) target = $region61
    $region60: #{cpi_regression_forward.6} parent=1 // pred_region
      %157 = dma.done [#allocation3], 4096
    $region61: #{cpi_regression_forward.6} parent=1 // pred_fallthru
      _
    // Predicated region
    $region62: #{cpi_regression_forward.6} parent=1 // pred_check
      _
    $region63: #{cpi_regression_forward.6} parent=1 // pred_check_branch
      %159 = sbr.rel (0) target = $region65
    $region64: #{cpi_regression_forward.6} parent=1 // pred_region
      %160 = dma.done [#allocation5], 4096
    $region65: #{cpi_regression_forward.6} parent=1 // pred_fallthru
      _
    // Predicated region
    $region66: #{cpi_regression_forward.6} parent=1 // pred_check
      _
    $region67: #{cpi_regression_forward.6} parent=1 // pred_check_branch
      %162 = sbr.rel (0) target = $region69
    $region68: #{cpi_regression_forward.6} parent=1 // pred_region
      %163 = dma.done [#allocation5], 32
    $region69: #{cpi_regression_forward.6} parent=1 // pred_fallthru
      _
    // Predicated region
    $region70: #{cpi_regression_forward.6} parent=1 // pred_check
      _
    $region71: #{cpi_regression_forward.6} parent=1 // pred_check_branch
      %165 = sbr.rel (0) target = $region73
    $region72: #{cpi_regression_forward.6} parent=1 // pred_region
      %166 = dma.done [#allocation8], 8192
    $region73: #{cpi_regression_forward.6} parent=1 // pred_fallthru
      _
    // Predicated region
    $region74: #{cpi_regression_forward.6} parent=1 // pred_check
      _
    $region75: #{cpi_regression_forward.6} parent=1 // pred_check_branch
      %168 = sbr.rel (0) target = $region77
    $region76: #{cpi_regression_forward.6} parent=1 // pred_region
      %169 = dma.done [#allocation8], 8192
    $region77: #{cpi_regression_forward.6} parent=1 // pred_fallthru
      _
    // Predicated region
    $region78: #{cpi_regression_forward.6} parent=1 // pred_check
      _
    $region79: #{cpi_regression_forward.6} parent=1 // pred_check_branch
      %171 = sbr.rel (0) target = $region81
    $region80: #{cpi_regression_forward.6} parent=1 // pred_region
      %172 = dma.done [#allocation11], 32
    $region81: #{cpi_regression_forward.6} parent=1 // pred_fallthru
      _
    // Predicated region
    $region82: #{cpi_regression_forward.6} parent=1 // pred_check
      _
    $region83: #{cpi_regression_forward.6} parent=1 // pred_check_branch
      %174 = sbr.rel (0) target = $region85
    $region84: #{cpi_regression_forward.6} parent=1 // pred_region
      %175 = dma.done [#allocation11], 12288
    $region85: #{cpi_regression_forward.6} parent=1 // pred_fallthru
      _
    // Predicated region
    $region86: #{cpi_regression_forward.6} parent=1 // pred_check
      _
    $region87: #{cpi_regression_forward.6} parent=1 // pred_check_branch
      %177 = sbr.rel (0) target = $region89
    $region88: #{cpi_regression_forward.6} parent=1 // pred_region
      %178 = dma.done [#allocation14], 12288
    $region89: #{cpi_regression_forward.6} parent=1 // pred_fallthru
      _
    // Predicated region
    $region90: #{cpi_regression_forward.6} parent=1 // pred_check
      _
    $region91: #{cpi_regression_forward.6} parent=1 // pred_check_branch
      %180 = sbr.rel (0) target = $region93
    $region92: #{cpi_regression_forward.6} parent=1 // pred_region
      %181 = dma.done [#allocation14], 48
    $region93: #{cpi_regression_forward.6} parent=1 // pred_fallthru
      _
    // Predicated region
    $region94: #{cpi_regression_forward.6} parent=1 // pred_check
      _
    $region95: #{cpi_regression_forward.6} parent=1 // pred_check_branch
      %183 = sbr.rel (0) target = $region97
    $region96: #{cpi_regression_forward.6} parent=1 // pred_region
      %184 = dma.done [#allocation17], 6144
    $region97: #{cpi_regression_forward.6} parent=1 // pred_fallthru
      _
    // Predicated region
    $region98: #{cpi_regression_forward.6} parent=1 // pred_check
      _
    $region99: #{cpi_regression_forward.6} parent=1 // pred_check_branch
      %186 = sbr.rel (0) target = $region101
    $region100: #{cpi_regression_forward.6} parent=1 // pred_region
      %187 = dma.done [#allocation17], 16
    $region101: #{cpi_regression_forward.6} parent=1 // pred_fallthru
      _
    %v188 = vld [vmem:[%s0] sm:$0xff]
    %v189 = vld [vmem:[%s0 + $0x8] sm:$0xff]
    %v190 = vld [vmem:[%s0 + $0x10] sm:$0xff]
    %v191 = vld [vmem:[%s1] sm:$0xff]
    %v192 = vld [vmem:[%s1 + $0x8] sm:$0xff]
    %v193 = vld [vmem:[%s1 + $0x10] sm:$0xff]
    %v194 = vld [vmem:[#allocation2] sm:$0xff]
    %v195 = vld [vmem:[#allocation2 + $0x8] sm:$0xff]
    %v196 = vld [vmem:[#allocation2 + $0x10] sm:$0xff]
    %v197 = vld [vmem:[#allocation2 + $0x18] sm:$0xff]
    %v198 = vld [vmem:[#allocation2 + $0x20] sm:$0xff]
    %v199 = vld [vmem:[#allocation2 + $0x28] sm:$0xff]
    %v200 = vld [vmem:[#allocation2 + $0x30] sm:$0xff]
    %v201 = vld [vmem:[#allocation2 + $0x38] sm:$0xff]
    %v202 = vld [vmem:[#allocation2 + $0x40] sm:$0xff]
    %v203 = vld [vmem:[#allocation2 + $0x48] sm:$0xff]
    %v204 = vld [vmem:[#allocation2 + $0x50] sm:$0xff]
    %v205 = vld [vmem:[#allocation2 + $0x58] sm:$0xff]
    %v206 = vld [vmem:[#allocation2 + $0x60] sm:$0xff]
    %v207 = vld [vmem:[#allocation2 + $0x68] sm:$0xff]
    %v208 = vld [vmem:[#allocation2 + $0x70] sm:$0xff]
    %v209 = vld [vmem:[#allocation2 + $0x78] sm:$0xff]
    %v210 = vld [vmem:[#allocation2 + $0x80] sm:$0xff]
    %v211 = vld [vmem:[#allocation2 + $0x88] sm:$0xff]
    %v212 = vld [vmem:[#allocation2 + $0x90] sm:$0xff]
    %v213 = vld [vmem:[#allocation2 + $0x98] sm:$0xff]
    %v214 = vld [vmem:[#allocation2 + $0xa0] sm:$0xff]
    %v215 = vld [vmem:[#allocation2 + $0xa8] sm:$0xff]
    %v216 = vld [vmem:[#allocation2 + $0xb0] sm:$0xff]
    %v217 = vld [vmem:[#allocation2 + $0xb8] sm:$0xff]
    %v218 = vld [vmem:[#allocation2 + $0xc0] sm:$0xff]
    %v219 = vld [vmem:[#allocation2 + $0xc8] sm:$0xff]
    %v220 = vld [vmem:[#allocation2 + $0xd0] sm:$0xff]
    %v221 = vld [vmem:[#allocation2 + $0xd8] sm:$0xff]
    %v222 = vld [vmem:[#allocation2 + $0xe0] sm:$0xff]
    %v223 = vld [vmem:[#allocation2 + $0xe8] sm:$0xff]
    %v224 = vld [vmem:[#allocation2 + $0xf0] sm:$0xff]
    %v225 = vld [vmem:[#allocation2 + $0xf8] sm:$0xff]
    %v226 = vld [vmem:[#allocation4] sm:$0xff]
    %v227 = vld [vmem:[#allocation4 + $0x8] sm:$0xff]
    %v228 = vld [vmem:[#allocation4 + $0x10] sm:$0xff]
    %v229 = vld [vmem:[#allocation4 + $0x18] sm:$0xff]
    %v230 = vld [vmem:[#allocation4 + $0x20] sm:$0xff]
    %v231 = vld [vmem:[#allocation4 + $0x28] sm:$0xff]
    %v232 = vld [vmem:[#allocation4 + $0x30] sm:$0xff]
    %v233 = vld [vmem:[#allocation4 + $0x38] sm:$0xff]
    %v234 = vld [vmem:[#allocation4 + $0x40] sm:$0xff]
    %v235 = vld [vmem:[#allocation4 + $0x48] sm:$0xff]
    %v236 = vld [vmem:[#allocation4 + $0x50] sm:$0xff]
    %v237 = vld [vmem:[#allocation4 + $0x58] sm:$0xff]
    %v238 = vld [vmem:[#allocation4 + $0x60] sm:$0xff]
    %v239 = vld [vmem:[#allocation4 + $0x68] sm:$0xff]
    %v240 = vld [vmem:[#allocation4 + $0x70] sm:$0xff]
    %v241 = vld [vmem:[#allocation4 + $0x78] sm:$0xff]
    %v242 = vld [vmem:[#allocation4 + $0x80] sm:$0xff]
    %v243 = vld [vmem:[#allocation4 + $0x88] sm:$0xff]
    %v244 = vld [vmem:[#allocation4 + $0x90] sm:$0xff]
    %v245 = vld [vmem:[#allocation4 + $0x98] sm:$0xff]
    %v246 = vld [vmem:[#allocation4 + $0xa0] sm:$0xff]
    %v247 = vld [vmem:[#allocation4 + $0xa8] sm:$0xff]
    %v248 = vld [vmem:[#allocation4 + $0xb0] sm:$0xff]
    %v249 = vld [vmem:[#allocation4 + $0xb8] sm:$0xff]
    %v250 = vld [vmem:[#allocation4 + $0xc0] sm:$0xff]
    %v251 = vld [vmem:[#allocation4 + $0xc8] sm:$0xff]
    %v252 = vld [vmem:[#allocation4 + $0xd0] sm:$0xff]
    %v253 = vld [vmem:[#allocation4 + $0xd8] sm:$0xff]
    %v254 = vld [vmem:[#allocation4 + $0xe0] sm:$0xff]
    %v255 = vld [vmem:[#allocation4 + $0xe8] sm:$0xff]
    %v256 = vld [vmem:[#allocation4 + $0xf0] sm:$0xff]
    %v257 = vld [vmem:[#allocation4 + $0xf8] sm:$0xff]
    %v258 = vld [vmem:[#allocation6] sm:$0x3]
    %vm259 = vcmask 195584
    %v261 = vsel %vm259, %v188, 0
    %v264 = vsel %vm259, %v189, 0
    %v267 = vsel %vm259, %v190, 0
    %269 = vmatprep.subr.mxu0 0.0
    %270 = vmatpush1.msra.mxu0 0.0
    %271 = vmatprep.subr.mxu0 0.0
    %272 = vmatpush1.msra.mxu0 0.0
    %273 = vmatprep.subr.mxu0 0.0
    %274 = vmatpush1.msra.mxu0 0.0
    %275 = vmatprep.subr.mxu0 0.0
    %276 = vmatpush1.msra.mxu0 0.0
    %277 = vmatprep.subr.mxu0 0.0
    %278 = vmatpush1.msra.mxu0 0.0
    %279 = vmatprep.subr.mxu0 0.0
    %280 = vmatpush1.msra.mxu0 0.0
    %281 = vmatprep.subr.mxu0 0.0
    %282 = vmatpush1.msra.mxu0 0.0
    %283 = vmatprep.subr.mxu0 0.0
    %284 = vmatpush1.msra.mxu0 0.0
    %285 = vmatprep.subr.mxu0 0.0
    %286 = vmatpush1.msra.mxu0 0.0
    %287 = vmatprep.subr.mxu0 0.0
    %288 = vmatpush1.msra.mxu0 0.0
    %289 = vmatprep.subr.mxu0 0.0
    %290 = vmatpush1.msra.mxu0 0.0
    %291 = vmatprep.subr.mxu0 0.0
    %292 = vmatpush1.msra.mxu0 0.0
    %293 = vmatprep.subr.mxu0 0.0
    %294 = vmatpush1.msra.mxu0 0.0
    %295 = vmatprep.subr.mxu0 0.0
    %296 = vmatpush1.msra.mxu0 %v193
    %297 = vmatprep.subr.mxu0 0.0
    %298 = vmatpush1.msra.mxu0 %v192
    %299 = vmatprep.subr.mxu0 0.0
    %300 = vmatpush1.msra.mxu0 %v191
    %301 = vmatprep.subr.mxu0 0.0
    %302 = vmatpush2.msra.mxu0 0.0
    %303 = vmatprep.subr.mxu0 0.0
    %304 = vmatpush2.msra.mxu0 0.0
    %305 = vmatprep.subr.mxu0 0.0
    %306 = vmatpush2.msra.mxu0 0.0
    %307 = vmatprep.subr.mxu0 0.0
    %308 = vmatpush2.msra.mxu0 0.0
    %309 = vmatprep.subr.mxu0 0.0
    %310 = vmatpush2.msra.mxu0 0.0
    %311 = vmatprep.subr.mxu0 0.0
    %312 = vmatpush2.msra.mxu0 0.0
    %313 = vmatprep.subr.mxu0 0.0
    %314 = vmatpush2.msra.mxu0 0.0
    %315 = vmatprep.subr.mxu0 0.0
    %316 = vmatpush2.msra.mxu0 0.0
    %317 = vmatprep.subr.mxu0 0.0
    %318 = vmatpush2.msra.mxu0 0.0
    %319 = vmatprep.subr.mxu0 0.0
    %320 = vmatpush2.msra.mxu0 0.0
    %321 = vmatprep.subr.mxu0 0.0
    %322 = vmatpush2.msra.mxu0 0.0
    %323 = vmatprep.subr.mxu0 0.0
    %324 = vmatpush2.msra.mxu0 0.0
    %325 = vmatprep.subr.mxu0 0.0
    %326 = vmatpush2.msra.mxu0 0.0
    %327 = vmatprep.subr.mxu0 0.0
    %328 = vmatpush2.msra.mxu0 0.0
    %329 = vmatprep.subr.mxu0 0.0
    %330 = vmatpush2.msra.mxu0 0.0
    %331 = vmatprep.subr.mxu0 0.0
    %332 = vmatpush2.msra.mxu0 0.0
    %333 = vmatprep.mubr.f32.mxu0 0.0
    %334 = vmatmul.mubr.f32.gmra.mxu0 %v261
    %v335 = vpop.f32.mrf.mxu0
    %v336 = vadd.f32 0.0, %v335
    %v337 = vpop.f32.mrf.mxu0
    %338 = vmatprep.mubr.f32.mxu0 0.0
    %339 = vmatmul.mubr.f32.gmra.mxu0 %v264
    %v340 = vpop.f32.mrf.mxu0
    %v341 = vadd.f32 0.0, %v340
    %v342 = vpop.f32.mrf.mxu0
    %343 = vmatprep.mubr.f32.mxu0 0.0
    %344 = vmatmul.mubr.f32.gmra.mxu0 %v267
    %v345 = vpop.f32.mrf.mxu0
    %v346 = vadd.f32 0.0, %v345
    %v347 = vpop.f32.mrf.mxu0
    %348 = vdwg.mxu0
    %349 = vmatprep.subr.mxu0 %v257
    %350 = vmatpush1.msra.mxu0 %v256
    %351 = vmatprep.subr.mxu0 %v255
    %352 = vmatpush1.msra.mxu0 %v254
    %353 = vmatprep.subr.mxu0 %v253
    %354 = vmatpush1.msra.mxu0 %v252
    %355 = vmatprep.subr.mxu0 %v251
    %356 = vmatpush1.msra.mxu0 %v250
    %357 = vmatprep.subr.mxu0 %v249
    %358 = vmatpush1.msra.mxu0 %v248
    %359 = vmatprep.subr.mxu0 %v247
    %360 = vmatpush1.msra.mxu0 %v246
    %361 = vmatprep.subr.mxu0 %v245
    %362 = vmatpush1.msra.mxu0 %v244
    %363 = vmatprep.subr.mxu0 %v243
    %364 = vmatpush1.msra.mxu0 %v242
    %365 = vmatprep.subr.mxu0 %v241
    %366 = vmatpush1.msra.mxu0 %v240
    %367 = vmatprep.subr.mxu0 %v239
    %368 = vmatpush1.msra.mxu0 %v238
    %369 = vmatprep.subr.mxu0 %v237
    %370 = vmatpush1.msra.mxu0 %v236
    %371 = vmatprep.subr.mxu0 %v235
    %372 = vmatpush1.msra.mxu0 %v234
    %373 = vmatprep.subr.mxu0 %v233
    %374 = vmatpush1.msra.mxu0 %v232
    %375 = vmatprep.subr.mxu0 %v231
    %376 = vmatpush1.msra.mxu0 %v230
    %377 = vmatprep.subr.mxu0 %v229
    %378 = vmatpush1.msra.mxu0 %v228
    %379 = vmatprep.subr.mxu0 %v227
    %380 = vmatpush1.msra.mxu0 %v226
    %381 = vmatprep.subr.mxu0 0.0
    %382 = vmatpush2.msra.mxu0 0.0
    %383 = vmatprep.subr.mxu0 0.0
    %384 = vmatpush2.msra.mxu0 0.0
    %385 = vmatprep.subr.mxu0 0.0
    %386 = vmatpush2.msra.mxu0 0.0
    %387 = vmatprep.subr.mxu0 0.0
    %388 = vmatpush2.msra.mxu0 0.0
    %389 = vmatprep.subr.mxu0 0.0
    %390 = vmatpush2.msra.mxu0 0.0
    %391 = vmatprep.subr.mxu0 0.0
    %392 = vmatpush2.msra.mxu0 0.0
    %393 = vmatprep.subr.mxu0 0.0
    %394 = vmatpush2.msra.mxu0 0.0
    %395 = vmatprep.subr.mxu0 0.0
    %396 = vmatpush2.msra.mxu0 0.0
    %397 = vmatprep.subr.mxu0 0.0
    %398 = vmatpush2.msra.mxu0 0.0
    %399 = vmatprep.subr.mxu0 0.0
    %400 = vmatpush2.msra.mxu0 0.0
    %401 = vmatprep.subr.mxu0 0.0
    %402 = vmatpush2.msra.mxu0 0.0
    %403 = vmatprep.subr.mxu0 0.0
    %404 = vmatpush2.msra.mxu0 0.0
    %405 = vmatprep.subr.mxu0 0.0
    %406 = vmatpush2.msra.mxu0 0.0
    %407 = vmatprep.subr.mxu0 0.0
    %408 = vmatpush2.msra.mxu0 0.0
    %409 = vmatprep.subr.mxu0 0.0
    %410 = vmatpush2.msra.mxu0 0.0
    %411 = vmatprep.subr.mxu0 0.0
    %412 = vmatpush2.msra.mxu0 0.0
    %413 = vmatprep.mubr.f32.mxu0 0.0
    %414 = vmatmul.mubr.f32.gmra.mxu0 %v191
    %v415 = vpop.f32.mrf.mxu0
    %v416 = vadd.f32 0.0, %v415
    %v417 = vpop.f32.mrf.mxu0
    %v418 = vadd.f32 0.0, %v417
    %419 = vmatprep.mubr.f32.mxu0 0.0
    %420 = vmatmul.mubr.f32.gmra.mxu0 %v192
    %v421 = vpop.f32.mrf.mxu0
    %v422 = vadd.f32 0.0, %v421
    %v423 = vpop.f32.mrf.mxu0
    %v424 = vadd.f32 0.0, %v423
    %425 = vmatprep.mubr.f32.mxu0 0.0
    %426 = vmatmul.mubr.f32.gmra.mxu0 %v193
    %v427 = vpop.f32.mrf.mxu0
    %v428 = vadd.f32 0.0, %v427
    %v429 = vpop.f32.mrf.mxu0
    %v430 = vadd.f32 0.0, %v429
    %431 = vdwg.mxu0
    %432 = vmatprep.subr.mxu0 %v225
    %433 = vmatpush1.msra.mxu0 %v224
    %434 = vmatprep.subr.mxu0 %v223
    %435 = vmatpush1.msra.mxu0 %v222
    %436 = vmatprep.subr.mxu0 %v221
    %437 = vmatpush1.msra.mxu0 %v220
    %438 = vmatprep.subr.mxu0 %v219
    %439 = vmatpush1.msra.mxu0 %v218
    %440 = vmatprep.subr.mxu0 %v217
    %441 = vmatpush1.msra.mxu0 %v216
    %442 = vmatprep.subr.mxu0 %v215
    %443 = vmatpush1.msra.mxu0 %v214
    %444 = vmatprep.subr.mxu0 %v213
    %445 = vmatpush1.msra.mxu0 %v212
    %446 = vmatprep.subr.mxu0 %v211
    %447 = vmatpush1.msra.mxu0 %v210
    %448 = vmatprep.subr.mxu0 %v209
    %449 = vmatpush1.msra.mxu0 %v208
    %450 = vmatprep.subr.mxu0 %v207
    %451 = vmatpush1.msra.mxu0 %v206
    %452 = vmatprep.subr.mxu0 %v205
    %453 = vmatpush1.msra.mxu0 %v204
    %454 = vmatprep.subr.mxu0 %v203
    %455 = vmatpush1.msra.mxu0 %v202
    %456 = vmatprep.subr.mxu0 %v201
    %457 = vmatpush1.msra.mxu0 %v200
    %458 = vmatprep.subr.mxu0 %v199
    %459 = vmatpush1.msra.mxu0 %v198
    %460 = vmatprep.subr.mxu0 %v197
    %461 = vmatpush1.msra.mxu0 %v196
    %462 = vmatprep.subr.mxu0 %v195
    %463 = vmatpush1.msra.mxu0 %v194
    %464 = vmatprep.subr.mxu0 0.0
    %465 = vmatpush2.msra.mxu0 0.0
    %466 = vmatprep.subr.mxu0 0.0
    %467 = vmatpush2.msra.mxu0 0.0
    %468 = vmatprep.subr.mxu0 0.0
    %469 = vmatpush2.msra.mxu0 0.0
    %470 = vmatprep.subr.mxu0 0.0
    %471 = vmatpush2.msra.mxu0 0.0
    %472 = vmatprep.subr.mxu0 0.0
    %473 = vmatpush2.msra.mxu0 0.0
    %474 = vmatprep.subr.mxu0 0.0
    %475 = vmatpush2.msra.mxu0 0.0
    %476 = vmatprep.subr.mxu0 0.0
    %477 = vmatpush2.msra.mxu0 0.0
    %478 = vmatprep.subr.mxu0 0.0
    %479 = vmatpush2.msra.mxu0 0.0
    %480 = vmatprep.subr.mxu0 0.0
    %481 = vmatpush2.msra.mxu0 0.0
    %482 = vmatprep.subr.mxu0 0.0
    %483 = vmatpush2.msra.mxu0 0.0
    %484 = vmatprep.subr.mxu0 0.0
    %485 = vmatpush2.msra.mxu0 0.0
    %486 = vmatprep.subr.mxu0 0.0
    %487 = vmatpush2.msra.mxu0 0.0
    %488 = vmatprep.subr.mxu0 0.0
    %489 = vmatpush2.msra.mxu0 0.0
    %490 = vmatprep.subr.mxu0 0.0
    %491 = vmatpush2.msra.mxu0 0.0
    %492 = vmatprep.subr.mxu0 0.0
    %493 = vmatpush2.msra.mxu0 0.0
    %494 = vmatprep.subr.mxu0 0.0
    %495 = vmatpush2.msra.mxu0 0.0
    %496 = vmatprep.mubr.f32.mxu0 0.0
    %497 = vmatmul.mubr.f32.gmra.mxu0 %v336
    %v498 = vpop.f32.mrf.mxu0
    %v499 = vadd.f32 %v416, %v498
    %v500 = vpop.f32.mrf.mxu0
    %v501 = vadd.f32 %v418, %v500
    %502 = vmatprep.mubr.f32.mxu0 0.0
    %503 = vmatmul.mubr.f32.gmra.mxu0 %v341
    %v504 = vpop.f32.mrf.mxu0
    %v505 = vadd.f32 %v422, %v504
    %v506 = vpop.f32.mrf.mxu0
    %v507 = vadd.f32 %v424, %v506
    %508 = vmatprep.mubr.f32.mxu0 0.0
    %509 = vmatmul.mubr.f32.gmra.mxu0 %v346
    %v510 = vpop.f32.mrf.mxu0
    %v511 = vadd.f32 %v428, %v510
    %v512 = vpop.f32.mrf.mxu0
    %v513 = vadd.f32 %v430, %v512
    %514 = vdwg.mxu0
    %v516 = vlaneseq
    %v517 = vshrl.u32 %v516, 7
    %v518 = vsub.s32 0, %v517
    %v519 = vrot.slane %v258, %v518
    %v520 = vlaneseq
    %v521 = vshrl.u32 %v520, 7
    %v522 = vsub.s32 1, %v521
    %v523 = vrot.slane %v258, %v522
    %v526 = vadd.f32 %v499, %v519
    %v527 = vadd.f32 %v501, %v523
    %v528 = vadd.f32 %v505, %v519
    %v529 = vadd.f32 %v507, %v523
    %v530 = vadd.f32 %v511, %v519
    %v531 = vadd.f32 %v513, %v523
    %vm532 = vcmp.gt.f32.partialorder %v526, 0.0
    %vm533 = vcmp.gt.f32.partialorder %v527, 0.0
    %vm534 = vcmp.gt.f32.partialorder %v528, 0.0
    %vm535 = vcmp.gt.f32.partialorder %v529, 0.0
    %vm536 = vcmp.gt.f32.partialorder %v530, 0.0
    %vm537 = vcmp.gt.f32.partialorder %v531, 0.0
    %v538 = vmul.f32 %v526, 0.01
    %v539 = vmul.f32 %v527, 0.01
    %v540 = vmul.f32 %v528, 0.01
    %v541 = vmul.f32 %v529, 0.01
    %v542 = vmul.f32 %v530, 0.01
    %v543 = vmul.f32 %v531, 0.01
    %v544 = vsel %vm532, %v526, %v538
    %v545 = vsel %vm533, %v527, %v539
    %v546 = vsel %vm534, %v528, %v540
    %v547 = vsel %vm535, %v529, %v541
    %v548 = vsel %vm536, %v530, %v542
    %v549 = vsel %vm537, %v531, %v543
    %v550 = vld [vmem:[#allocation7] sm:$0xff]
    %v551 = vld [vmem:[#allocation7 + $0x8] sm:$0xff]
    %v552 = vld [vmem:[#allocation7 + $0x10] sm:$0xff]
    %v553 = vld [vmem:[#allocation7 + $0x18] sm:$0xff]
    %v554 = vld [vmem:[#allocation7 + $0x20] sm:$0xff]
    %v555 = vld [vmem:[#allocation7 + $0x28] sm:$0xff]
    %v556 = vld [vmem:[#allocation7 + $0x30] sm:$0xff]
    %v557 = vld [vmem:[#allocation7 + $0x38] sm:$0xff]
    %v558 = vld [vmem:[#allocation7 + $0x40] sm:$0xff]
    %v559 = vld [vmem:[#allocation7 + $0x48] sm:$0xff]
    %v560 = vld [vmem:[#allocation7 + $0x50] sm:$0xff]
    %v561 = vld [vmem:[#allocation7 + $0x58] sm:$0xff]
    %v562 = vld [vmem:[#allocation7 + $0x60] sm:$0xff]
    %v563 = vld [vmem:[#allocation7 + $0x68] sm:$0xff]
    %v564 = vld [vmem:[#allocation7 + $0x70] sm:$0xff]
    %v565 = vld [vmem:[#allocation7 + $0x78] sm:$0xff]
    %v566 = vld [vmem:[#allocation7 + $0x80] sm:$0xff]
    %v567 = vld [vmem:[#allocation7 + $0x88] sm:$0xff]
    %v568 = vld [vmem:[#allocation7 + $0x90] sm:$0xff]
    %v569 = vld [vmem:[#allocation7 + $0x98] sm:$0xff]
    %v570 = vld [vmem:[#allocation7 + $0xa0] sm:$0xff]
    %v571 = vld [vmem:[#allocation7 + $0xa8] sm:$0xff]
    %v572 = vld [vmem:[#allocation7 + $0xb0] sm:$0xff]
    %v573 = vld [vmem:[#allocation7 + $0xb8] sm:$0xff]
    %v574 = vld [vmem:[#allocation7 + $0xc0] sm:$0xff]
    %v575 = vld [vmem:[#allocation7 + $0xc8] sm:$0xff]
    %v576 = vld [vmem:[#allocation7 + $0xd0] sm:$0xff]
    %v577 = vld [vmem:[#allocation7 + $0xd8] sm:$0xff]
    %v578 = vld [vmem:[#allocation7 + $0xe0] sm:$0xff]
    %v579 = vld [vmem:[#allocation7 + $0xe8] sm:$0xff]
    %v580 = vld [vmem:[#allocation7 + $0xf0] sm:$0xff]
    %v581 = vld [vmem:[#allocation7 + $0xf8] sm:$0xff]
    %v582 = vld [vmem:[#allocation7 + $0x100] sm:$0xff]
    %v583 = vld [vmem:[#allocation7 + $0x108] sm:$0xff]
    %v584 = vld [vmem:[#allocation7 + $0x110] sm:$0xff]
    %v585 = vld [vmem:[#allocation7 + $0x118] sm:$0xff]
    %v586 = vld [vmem:[#allocation7 + $0x120] sm:$0xff]
    %v587 = vld [vmem:[#allocation7 + $0x128] sm:$0xff]
    %v588 = vld [vmem:[#allocation7 + $0x130] sm:$0xff]
    %v589 = vld [vmem:[#allocation7 + $0x138] sm:$0xff]
    %v590 = vld [vmem:[#allocation7 + $0x140] sm:$0xff]
    %v591 = vld [vmem:[#allocation7 + $0x148] sm:$0xff]
    %v592 = vld [vmem:[#allocation7 + $0x150] sm:$0xff]
    %v593 = vld [vmem:[#allocation7 + $0x158] sm:$0xff]
    %v594 = vld [vmem:[#allocation7 + $0x160] sm:$0xff]
    %v595 = vld [vmem:[#allocation7 + $0x168] sm:$0xff]
    %v596 = vld [vmem:[#allocation7 + $0x170] sm:$0xff]
    %v597 = vld [vmem:[#allocation7 + $0x178] sm:$0xff]
    %v598 = vld [vmem:[#allocation7 + $0x180] sm:$0xff]
    %v599 = vld [vmem:[#allocation7 + $0x188] sm:$0xff]
    %v600 = vld [vmem:[#allocation7 + $0x190] sm:$0xff]
    %v601 = vld [vmem:[#allocation7 + $0x198] sm:$0xff]
    %v602 = vld [vmem:[#allocation7 + $0x1a0] sm:$0xff]
    %v603 = vld [vmem:[#allocation7 + $0x1a8] sm:$0xff]
    %v604 = vld [vmem:[#allocation7 + $0x1b0] sm:$0xff]
    %v605 = vld [vmem:[#allocation7 + $0x1b8] sm:$0xff]
    %v606 = vld [vmem:[#allocation7 + $0x1c0] sm:$0xff]
    %v607 = vld [vmem:[#allocation7 + $0x1c8] sm:$0xff]
    %v608 = vld [vmem:[#allocation7 + $0x1d0] sm:$0xff]
    %v609 = vld [vmem:[#allocation7 + $0x1d8] sm:$0xff]
    %v610 = vld [vmem:[#allocation7 + $0x1e0] sm:$0xff]
    %v611 = vld [vmem:[#allocation7 + $0x1e8] sm:$0xff]
    %v612 = vld [vmem:[#allocation7 + $0x1f0] sm:$0xff]
    %v613 = vld [vmem:[#allocation7 + $0x1f8] sm:$0xff]
    %v614 = vld [vmem:[#allocation9] sm:$0xff]
    %v615 = vld [vmem:[#allocation9 + $0x8] sm:$0xff]
    %v616 = vld [vmem:[#allocation9 + $0x10] sm:$0xff]
    %v617 = vld [vmem:[#allocation9 + $0x18] sm:$0xff]
    %v618 = vld [vmem:[#allocation9 + $0x20] sm:$0xff]
    %v619 = vld [vmem:[#allocation9 + $0x28] sm:$0xff]
    %v620 = vld [vmem:[#allocation9 + $0x30] sm:$0xff]
    %v621 = vld [vmem:[#allocation9 + $0x38] sm:$0xff]
    %v622 = vld [vmem:[#allocation9 + $0x40] sm:$0xff]
    %v623 = vld [vmem:[#allocation9 + $0x48] sm:$0xff]
    %v624 = vld [vmem:[#allocation9 + $0x50] sm:$0xff]
    %v625 = vld [vmem:[#allocation9 + $0x58] sm:$0xff]
    %v626 = vld [vmem:[#allocation9 + $0x60] sm:$0xff]
    %v627 = vld [vmem:[#allocation9 + $0x68] sm:$0xff]
    %v628 = vld [vmem:[#allocation9 + $0x70] sm:$0xff]
    %v629 = vld [vmem:[#allocation9 + $0x78] sm:$0xff]
    %v630 = vld [vmem:[#allocation9 + $0x80] sm:$0xff]
    %v631 = vld [vmem:[#allocation9 + $0x88] sm:$0xff]
    %v632 = vld [vmem:[#allocation9 + $0x90] sm:$0xff]
    %v633 = vld [vmem:[#allocation9 + $0x98] sm:$0xff]
    %v634 = vld [vmem:[#allocation9 + $0xa0] sm:$0xff]
    %v635 = vld [vmem:[#allocation9 + $0xa8] sm:$0xff]
    %v636 = vld [vmem:[#allocation9 + $0xb0] sm:$0xff]
    %v637 = vld [vmem:[#allocation9 + $0xb8] sm:$0xff]
    %v638 = vld [vmem:[#allocation9 + $0xc0] sm:$0xff]
    %v639 = vld [vmem:[#allocation9 + $0xc8] sm:$0xff]
    %v640 = vld [vmem:[#allocation9 + $0xd0] sm:$0xff]
    %v641 = vld [vmem:[#allocation9 + $0xd8] sm:$0xff]
    %v642 = vld [vmem:[#allocation9 + $0xe0] sm:$0xff]
    %v643 = vld [vmem:[#allocation9 + $0xe8] sm:$0xff]
    %v644 = vld [vmem:[#allocation9 + $0xf0] sm:$0xff]
    %v645 = vld [vmem:[#allocation9 + $0xf8] sm:$0xff]
    %v646 = vld [vmem:[#allocation9 + $0x100] sm:$0xff]
    %v647 = vld [vmem:[#allocation9 + $0x108] sm:$0xff]
    %v648 = vld [vmem:[#allocation9 + $0x110] sm:$0xff]
    %v649 = vld [vmem:[#allocation9 + $0x118] sm:$0xff]
    %v650 = vld [vmem:[#allocation9 + $0x120] sm:$0xff]
    %v651 = vld [vmem:[#allocation9 + $0x128] sm:$0xff]
    %v652 = vld [vmem:[#allocation9 + $0x130] sm:$0xff]
    %v653 = vld [vmem:[#allocation9 + $0x138] sm:$0xff]
    %v654 = vld [vmem:[#allocation9 + $0x140] sm:$0xff]
    %v655 = vld [vmem:[#allocation9 + $0x148] sm:$0xff]
    %v656 = vld [vmem:[#allocation9 + $0x150] sm:$0xff]
    %v657 = vld [vmem:[#allocation9 + $0x158] sm:$0xff]
    %v658 = vld [vmem:[#allocation9 + $0x160] sm:$0xff]
    %v659 = vld [vmem:[#allocation9 + $0x168] sm:$0xff]
    %v660 = vld [vmem:[#allocation9 + $0x170] sm:$0xff]
    %v661 = vld [vmem:[#allocation9 + $0x178] sm:$0xff]
    %v662 = vld [vmem:[#allocation9 + $0x180] sm:$0xff]
    %v663 = vld [vmem:[#allocation9 + $0x188] sm:$0xff]
    %v664 = vld [vmem:[#allocation9 + $0x190] sm:$0xff]
    %v665 = vld [vmem:[#allocation9 + $0x198] sm:$0xff]
    %v666 = vld [vmem:[#allocation9 + $0x1a0] sm:$0xff]
    %v667 = vld [vmem:[#allocation9 + $0x1a8] sm:$0xff]
    %v668 = vld [vmem:[#allocation9 + $0x1b0] sm:$0xff]
    %v669 = vld [vmem:[#allocation9 + $0x1b8] sm:$0xff]
    %v670 = vld [vmem:[#allocation9 + $0x1c0] sm:$0xff]
    %v671 = vld [vmem:[#allocation9 + $0x1c8] sm:$0xff]
    %v672 = vld [vmem:[#allocation9 + $0x1d0] sm:$0xff]
    %v673 = vld [vmem:[#allocation9 + $0x1d8] sm:$0xff]
    %v674 = vld [vmem:[#allocation9 + $0x1e0] sm:$0xff]
    %v675 = vld [vmem:[#allocation9 + $0x1e8] sm:$0xff]
    %v676 = vld [vmem:[#allocation9 + $0x1f0] sm:$0xff]
    %v677 = vld [vmem:[#allocation9 + $0x1f8] sm:$0xff]
    %v678 = vld [vmem:[#allocation10] sm:$0x3]
    %679 = vmatprep.subr.mxu0 0.0
    %680 = vmatpush1.msra.mxu0 0.0
    %681 = vmatprep.subr.mxu0 0.0
    %682 = vmatpush1.msra.mxu0 0.0
    %683 = vmatprep.subr.mxu0 0.0
    %684 = vmatpush1.msra.mxu0 0.0
    %685 = vmatprep.subr.mxu0 0.0
    %686 = vmatpush1.msra.mxu0 0.0
    %687 = vmatprep.subr.mxu0 0.0
    %688 = vmatpush1.msra.mxu0 0.0
    %689 = vmatprep.subr.mxu0 0.0
    %690 = vmatpush1.msra.mxu0 0.0
    %691 = vmatprep.subr.mxu0 0.0
    %692 = vmatpush1.msra.mxu0 0.0
    %693 = vmatprep.subr.mxu0 0.0
    %694 = vmatpush1.msra.mxu0 0.0
    %695 = vmatprep.subr.mxu0 0.0
    %696 = vmatpush1.msra.mxu0 0.0
    %697 = vmatprep.subr.mxu0 0.0
    %698 = vmatpush1.msra.mxu0 0.0
    %699 = vmatprep.subr.mxu0 0.0
    %700 = vmatpush1.msra.mxu0 0.0
    %701 = vmatprep.subr.mxu0 0.0
    %702 = vmatpush1.msra.mxu0 0.0
    %703 = vmatprep.subr.mxu0 0.0
    %704 = vmatpush1.msra.mxu0 0.0
    %705 = vmatprep.subr.mxu0 %v549
    %706 = vmatpush1.msra.mxu0 %v548
    %707 = vmatprep.subr.mxu0 %v547
    %708 = vmatpush1.msra.mxu0 %v546
    %709 = vmatprep.subr.mxu0 %v545
    %710 = vmatpush1.msra.mxu0 %v544
    %711 = vmatprep.subr.mxu0 0.0
    %712 = vmatpush2.msra.mxu0 0.0
    %713 = vmatprep.subr.mxu0 0.0
    %714 = vmatpush2.msra.mxu0 0.0
    %715 = vmatprep.subr.mxu0 0.0
    %716 = vmatpush2.msra.mxu0 0.0
    %717 = vmatprep.subr.mxu0 0.0
    %718 = vmatpush2.msra.mxu0 0.0
    %719 = vmatprep.subr.mxu0 0.0
    %720 = vmatpush2.msra.mxu0 0.0
    %721 = vmatprep.subr.mxu0 0.0
    %722 = vmatpush2.msra.mxu0 0.0
    %723 = vmatprep.subr.mxu0 0.0
    %724 = vmatpush2.msra.mxu0 0.0
    %725 = vmatprep.subr.mxu0 0.0
    %726 = vmatpush2.msra.mxu0 0.0
    %727 = vmatprep.subr.mxu0 0.0
    %728 = vmatpush2.msra.mxu0 0.0
    %729 = vmatprep.subr.mxu0 0.0
    %730 = vmatpush2.msra.mxu0 0.0
    %731 = vmatprep.subr.mxu0 0.0
    %732 = vmatpush2.msra.mxu0 0.0
    %733 = vmatprep.subr.mxu0 0.0
    %734 = vmatpush2.msra.mxu0 0.0
    %735 = vmatprep.subr.mxu0 0.0
    %736 = vmatpush2.msra.mxu0 0.0
    %737 = vmatprep.subr.mxu0 0.0
    %738 = vmatpush2.msra.mxu0 0.0
    %739 = vmatprep.subr.mxu0 0.0
    %740 = vmatpush2.msra.mxu0 0.0
    %741 = vmatprep.subr.mxu0 0.0
    %742 = vmatpush2.msra.mxu0 0.0
    %743 = vmatprep.mubr.f32.mxu0 0.0
    %744 = vmatmul.mubr.f32.gmra.mxu0 %v261
    %v745 = vpop.f32.mrf.mxu0
    %v746 = vadd.f32 0.0, %v745
    %v747 = vpop.f32.mrf.mxu0
    %v748 = vadd.f32 0.0, %v747
    %749 = vmatprep.mubr.f32.mxu0 0.0
    %750 = vmatmul.mubr.f32.gmra.mxu0 %v264
    %v751 = vpop.f32.mrf.mxu0
    %v752 = vadd.f32 0.0, %v751
    %v753 = vpop.f32.mrf.mxu0
    %v754 = vadd.f32 0.0, %v753
    %755 = vmatprep.mubr.f32.mxu0 0.0
    %756 = vmatmul.mubr.f32.gmra.mxu0 %v267
    %v757 = vpop.f32.mrf.mxu0
    %v758 = vadd.f32 0.0, %v757
    %v759 = vpop.f32.mrf.mxu0
    %v760 = vadd.f32 0.0, %v759
    %761 = vdwg.mxu0
    %762 = vmatprep.subr.mxu0 %v645
    %763 = vmatpush1.msra.mxu0 %v644
    %764 = vmatprep.subr.mxu0 %v643
    %765 = vmatpush1.msra.mxu0 %v642
    %766 = vmatprep.subr.mxu0 %v641
    %767 = vmatpush1.msra.mxu0 %v640
    %768 = vmatprep.subr.mxu0 %v639
    %769 = vmatpush1.msra.mxu0 %v638
    %770 = vmatprep.subr.mxu0 %v637
    %771 = vmatpush1.msra.mxu0 %v636
    %772 = vmatprep.subr.mxu0 %v635
    %773 = vmatpush1.msra.mxu0 %v634
    %774 = vmatprep.subr.mxu0 %v633
    %775 = vmatpush1.msra.mxu0 %v632
    %776 = vmatprep.subr.mxu0 %v631
    %777 = vmatpush1.msra.mxu0 %v630
    %778 = vmatprep.subr.mxu0 %v629
    %779 = vmatpush1.msra.mxu0 %v628
    %780 = vmatprep.subr.mxu0 %v627
    %781 = vmatpush1.msra.mxu0 %v626
    %782 = vmatprep.subr.mxu0 %v625
    %783 = vmatpush1.msra.mxu0 %v624
    %784 = vmatprep.subr.mxu0 %v623
    %785 = vmatpush1.msra.mxu0 %v622
    %786 = vmatprep.subr.mxu0 %v621
    %787 = vmatpush1.msra.mxu0 %v620
    %788 = vmatprep.subr.mxu0 %v619
    %789 = vmatpush1.msra.mxu0 %v618
    %790 = vmatprep.subr.mxu0 %v617
    %791 = vmatpush1.msra.mxu0 %v616
    %792 = vmatprep.subr.mxu0 %v615
    %793 = vmatpush1.msra.mxu0 %v614
    %794 = vmatprep.subr.mxu0 %v677
    %795 = vmatpush2.msra.mxu0 %v676
    %796 = vmatprep.subr.mxu0 %v675
    %797 = vmatpush2.msra.mxu0 %v674
    %798 = vmatprep.subr.mxu0 %v673
    %799 = vmatpush2.msra.mxu0 %v672
    %800 = vmatprep.subr.mxu0 %v671
    %801 = vmatpush2.msra.mxu0 %v670
    %802 = vmatprep.subr.mxu0 %v669
    %803 = vmatpush2.msra.mxu0 %v668
    %804 = vmatprep.subr.mxu0 %v667
    %805 = vmatpush2.msra.mxu0 %v666
    %806 = vmatprep.subr.mxu0 %v665
    %807 = vmatpush2.msra.mxu0 %v664
    %808 = vmatprep.subr.mxu0 %v663
    %809 = vmatpush2.msra.mxu0 %v662
    %810 = vmatprep.subr.mxu0 %v661
    %811 = vmatpush2.msra.mxu0 %v660
    %812 = vmatprep.subr.mxu0 %v659
    %813 = vmatpush2.msra.mxu0 %v658
    %814 = vmatprep.subr.mxu0 %v657
    %815 = vmatpush2.msra.mxu0 %v656
    %816 = vmatprep.subr.mxu0 %v655
    %817 = vmatpush2.msra.mxu0 %v654
    %818 = vmatprep.subr.mxu0 %v653
    %819 = vmatpush2.msra.mxu0 %v652
    %820 = vmatprep.subr.mxu0 %v651
    %821 = vmatpush2.msra.mxu0 %v650
    %822 = vmatprep.subr.mxu0 %v649
    %823 = vmatpush2.msra.mxu0 %v648
    %824 = vmatprep.subr.mxu0 %v647
    %825 = vmatpush2.msra.mxu0 %v646
    %826 = vmatprep.mubr.f32.mxu0 %v545
    %827 = vmatmul.mubr.f32.gmra.mxu0 %v544
    %v828 = vpop.f32.mrf.mxu0
    %v829 = vadd.f32 0.0, %v828
    %v830 = vpop.f32.mrf.mxu0
    %v831 = vadd.f32 0.0, %v830
    %832 = vmatprep.mubr.f32.mxu0 %v547
    %833 = vmatmul.mubr.f32.gmra.mxu0 %v546
    %v834 = vpop.f32.mrf.mxu0
    %v835 = vadd.f32 0.0, %v834
    %v836 = vpop.f32.mrf.mxu0
    %v837 = vadd.f32 0.0, %v836
    %838 = vmatprep.mubr.f32.mxu0 %v549
    %839 = vmatmul.mubr.f32.gmra.mxu0 %v548
    %v840 = vpop.f32.mrf.mxu0
    %v841 = vadd.f32 0.0, %v840
    %v842 = vpop.f32.mrf.mxu0
    %v843 = vadd.f32 0.0, %v842
    %844 = vdwg.mxu0
    %845 = vmatprep.subr.mxu0 %v581
    %846 = vmatpush1.msra.mxu0 %v580
    %847 = vmatprep.subr.mxu0 %v579
    %848 = vmatpush1.msra.mxu0 %v578
    %849 = vmatprep.subr.mxu0 %v577
    %850 = vmatpush1.msra.mxu0 %v576
    %851 = vmatprep.subr.mxu0 %v575
    %852 = vmatpush1.msra.mxu0 %v574
    %853 = vmatprep.subr.mxu0 %v573
    %854 = vmatpush1.msra.mxu0 %v572
    %855 = vmatprep.subr.mxu0 %v571
    %856 = vmatpush1.msra.mxu0 %v570
    %857 = vmatprep.subr.mxu0 %v569
    %858 = vmatpush1.msra.mxu0 %v568
    %859 = vmatprep.subr.mxu0 %v567
    %860 = vmatpush1.msra.mxu0 %v566
    %861 = vmatprep.subr.mxu0 %v565
    %862 = vmatpush1.msra.mxu0 %v564
    %863 = vmatprep.subr.mxu0 %v563
    %864 = vmatpush1.msra.mxu0 %v562
    %865 = vmatprep.subr.mxu0 %v561
    %866 = vmatpush1.msra.mxu0 %v560
    %867 = vmatprep.subr.mxu0 %v559
    %868 = vmatpush1.msra.mxu0 %v558
    %869 = vmatprep.subr.mxu0 %v557
    %870 = vmatpush1.msra.mxu0 %v556
    %871 = vmatprep.subr.mxu0 %v555
    %872 = vmatpush1.msra.mxu0 %v554
    %873 = vmatprep.subr.mxu0 %v553
    %874 = vmatpush1.msra.mxu0 %v552
    %875 = vmatprep.subr.mxu0 %v551
    %876 = vmatpush1.msra.mxu0 %v550
    %877 = vmatprep.subr.mxu0 %v613
    %878 = vmatpush2.msra.mxu0 %v612
    %879 = vmatprep.subr.mxu0 %v611
    %880 = vmatpush2.msra.mxu0 %v610
    %881 = vmatprep.subr.mxu0 %v609
    %882 = vmatpush2.msra.mxu0 %v608
    %883 = vmatprep.subr.mxu0 %v607
    %884 = vmatpush2.msra.mxu0 %v606
    %885 = vmatprep.subr.mxu0 %v605
    %886 = vmatpush2.msra.mxu0 %v604
    %887 = vmatprep.subr.mxu0 %v603
    %888 = vmatpush2.msra.mxu0 %v602
    %889 = vmatprep.subr.mxu0 %v601
    %890 = vmatpush2.msra.mxu0 %v600
    %891 = vmatprep.subr.mxu0 %v599
    %892 = vmatpush2.msra.mxu0 %v598
    %893 = vmatprep.subr.mxu0 %v597
    %894 = vmatpush2.msra.mxu0 %v596
    %895 = vmatprep.subr.mxu0 %v595
    %896 = vmatpush2.msra.mxu0 %v594
    %897 = vmatprep.subr.mxu0 %v593
    %898 = vmatpush2.msra.mxu0 %v592
    %899 = vmatprep.subr.mxu0 %v591
    %900 = vmatpush2.msra.mxu0 %v590
    %901 = vmatprep.subr.mxu0 %v589
    %902 = vmatpush2.msra.mxu0 %v588
    %903 = vmatprep.subr.mxu0 %v587
    %904 = vmatpush2.msra.mxu0 %v586
    %905 = vmatprep.subr.mxu0 %v585
    %906 = vmatpush2.msra.mxu0 %v584
    %907 = vmatprep.subr.mxu0 %v583
    %908 = vmatpush2.msra.mxu0 %v582
    %909 = vmatprep.mubr.f32.mxu0 %v748
    %910 = vmatmul.mubr.f32.gmra.mxu0 %v746
    %v911 = vpop.f32.mrf.mxu0
    %v912 = vadd.f32 %v829, %v911
    %v913 = vpop.f32.mrf.mxu0
    %v914 = vadd.f32 %v831, %v913
    %915 = vmatprep.mubr.f32.mxu0 %v754
    %916 = vmatmul.mubr.f32.gmra.mxu0 %v752
    %v917 = vpop.f32.mrf.mxu0
    %v918 = vadd.f32 %v835, %v917
    %v919 = vpop.f32.mrf.mxu0
    %v920 = vadd.f32 %v837, %v919
    %921 = vmatprep.mubr.f32.mxu0 %v760
    %922 = vmatmul.mubr.f32.gmra.mxu0 %v758
    %v923 = vpop.f32.mrf.mxu0
    %v924 = vadd.f32 %v841, %v923
    %v925 = vpop.f32.mrf.mxu0
    %v926 = vadd.f32 %v843, %v925
    %927 = vdwg.mxu0
    %v929 = vlaneseq
    %v930 = vshrl.u32 %v929, 7
    %v931 = vsub.s32 0, %v930
    %v932 = vrot.slane %v678, %v931
    %v933 = vlaneseq
    %v934 = vshrl.u32 %v933, 7
    %v935 = vsub.s32 1, %v934
    %v936 = vrot.slane %v678, %v935
    %v939 = vadd.f32 %v912, %v932
    %v940 = vadd.f32 %v914, %v936
    %v941 = vadd.f32 %v918, %v932
    %v942 = vadd.f32 %v920, %v936
    %v943 = vadd.f32 %v924, %v932
    %v944 = vadd.f32 %v926, %v936
    %vm945 = vcmp.gt.f32.partialorder %v939, 0.0
    %vm946 = vcmp.gt.f32.partialorder %v940, 0.0
    %vm947 = vcmp.gt.f32.partialorder %v941, 0.0
    %vm948 = vcmp.gt.f32.partialorder %v942, 0.0
    %vm949 = vcmp.gt.f32.partialorder %v943, 0.0
    %vm950 = vcmp.gt.f32.partialorder %v944, 0.0
    %v951 = vmul.f32 %v939, 0.01
    %v952 = vmul.f32 %v940, 0.01
    %v953 = vmul.f32 %v941, 0.01
    %v954 = vmul.f32 %v942, 0.01
    %v955 = vmul.f32 %v943, 0.01
    %v956 = vmul.f32 %v944, 0.01
    %v957 = vsel %vm945, %v939, %v951
    %v958 = vsel %vm946, %v940, %v952
    %v959 = vsel %vm947, %v941, %v953
    %v960 = vsel %vm948, %v942, %v954
    %v961 = vsel %vm949, %v943, %v955
    %v962 = vsel %vm950, %v944, %v956
    %v963 = vld [vmem:[#allocation12] sm:$0xff]
    %v964 = vld [vmem:[#allocation12 + $0x8] sm:$0xff]
    %v965 = vld [vmem:[#allocation12 + $0x10] sm:$0xff]
    %v966 = vld [vmem:[#allocation12 + $0x18] sm:$0xff]
    %v967 = vld [vmem:[#allocation12 + $0x20] sm:$0xff]
    %v968 = vld [vmem:[#allocation12 + $0x28] sm:$0xff]
    %v969 = vld [vmem:[#allocation12 + $0x30] sm:$0xff]
    %v970 = vld [vmem:[#allocation12 + $0x38] sm:$0xff]
    %v971 = vld [vmem:[#allocation12 + $0x40] sm:$0xff]
    %v972 = vld [vmem:[#allocation12 + $0x48] sm:$0xff]
    %v973 = vld [vmem:[#allocation12 + $0x50] sm:$0xff]
    %v974 = vld [vmem:[#allocation12 + $0x58] sm:$0xff]
    %v975 = vld [vmem:[#allocation12 + $0x60] sm:$0xff]
    %v976 = vld [vmem:[#allocation12 + $0x68] sm:$0xff]
    %v977 = vld [vmem:[#allocation12 + $0x70] sm:$0xff]
    %v978 = vld [vmem:[#allocation12 + $0x78] sm:$0xff]
    %v979 = vld [vmem:[#allocation12 + $0x80] sm:$0xff]
    %v980 = vld [vmem:[#allocation12 + $0x88] sm:$0xff]
    %v981 = vld [vmem:[#allocation12 + $0x90] sm:$0xff]
    %v982 = vld [vmem:[#allocation12 + $0x98] sm:$0xff]
    %v983 = vld [vmem:[#allocation12 + $0xa0] sm:$0xff]
    %v984 = vld [vmem:[#allocation12 + $0xa8] sm:$0xff]
    %v985 = vld [vmem:[#allocation12 + $0xb0] sm:$0xff]
    %v986 = vld [vmem:[#allocation12 + $0xb8] sm:$0xff]
    %v987 = vld [vmem:[#allocation12 + $0xc0] sm:$0xff]
    %v988 = vld [vmem:[#allocation12 + $0xc8] sm:$0xff]
    %v989 = vld [vmem:[#allocation12 + $0xd0] sm:$0xff]
    %v990 = vld [vmem:[#allocation12 + $0xd8] sm:$0xff]
    %v991 = vld [vmem:[#allocation12 + $0xe0] sm:$0xff]
    %v992 = vld [vmem:[#allocation12 + $0xe8] sm:$0xff]
    %v993 = vld [vmem:[#allocation12 + $0xf0] sm:$0xff]
    %v994 = vld [vmem:[#allocation12 + $0xf8] sm:$0xff]
    %v995 = vld [vmem:[#allocation12 + $0x100] sm:$0xff]
    %v996 = vld [vmem:[#allocation12 + $0x108] sm:$0xff]
    %v997 = vld [vmem:[#allocation12 + $0x110] sm:$0xff]
    %v998 = vld [vmem:[#allocation12 + $0x118] sm:$0xff]
    %v999 = vld [vmem:[#allocation12 + $0x120] sm:$0xff]
    %v1000 = vld [vmem:[#allocation12 + $0x128] sm:$0xff]
    %v1001 = vld [vmem:[#allocation12 + $0x130] sm:$0xff]
    %v1002 = vld [vmem:[#allocation12 + $0x138] sm:$0xff]
    %v1003 = vld [vmem:[#allocation12 + $0x140] sm:$0xff]
    %v1004 = vld [vmem:[#allocation12 + $0x148] sm:$0xff]
    %v1005 = vld [vmem:[#allocation12 + $0x150] sm:$0xff]
    %v1006 = vld [vmem:[#allocation12 + $0x158] sm:$0xff]
    %v1007 = vld [vmem:[#allocation12 + $0x160] sm:$0xff]
    %v1008 = vld [vmem:[#allocation12 + $0x168] sm:$0xff]
    %v1009 = vld [vmem:[#allocation12 + $0x170] sm:$0xff]
    %v1010 = vld [vmem:[#allocation12 + $0x178] sm:$0xff]
    %v1011 = vld [vmem:[#allocation12 + $0x180] sm:$0xff]
    %v1012 = vld [vmem:[#allocation12 + $0x188] sm:$0xff]
    %v1013 = vld [vmem:[#allocation12 + $0x190] sm:$0xff]
    %v1014 = vld [vmem:[#allocation12 + $0x198] sm:$0xff]
    %v1015 = vld [vmem:[#allocation12 + $0x1a0] sm:$0xff]
    %v1016 = vld [vmem:[#allocation12 + $0x1a8] sm:$0xff]
    %v1017 = vld [vmem:[#allocation12 + $0x1b0] sm:$0xff]
    %v1018 = vld [vmem:[#allocation12 + $0x1b8] sm:$0xff]
    %v1019 = vld [vmem:[#allocation12 + $0x1c0] sm:$0xff]
    %v1020 = vld [vmem:[#allocation12 + $0x1c8] sm:$0xff]
    %v1021 = vld [vmem:[#allocation12 + $0x1d0] sm:$0xff]
    %v1022 = vld [vmem:[#allocation12 + $0x1d8] sm:$0xff]
    %v1023 = vld [vmem:[#allocation12 + $0x1e0] sm:$0xff]
    %v1024 = vld [vmem:[#allocation12 + $0x1e8] sm:$0xff]
    %v1025 = vld [vmem:[#allocation12 + $0x1f0] sm:$0xff]
    %v1026 = vld [vmem:[#allocation12 + $0x1f8] sm:$0xff]
    %v1027 = vld [vmem:[#allocation12 + $0x200] sm:$0xff]
    %v1028 = vld [vmem:[#allocation12 + $0x208] sm:$0xff]
    %v1029 = vld [vmem:[#allocation12 + $0x210] sm:$0xff]
    %v1030 = vld [vmem:[#allocation12 + $0x218] sm:$0xff]
    %v1031 = vld [vmem:[#allocation12 + $0x220] sm:$0xff]
    %v1032 = vld [vmem:[#allocation12 + $0x228] sm:$0xff]
    %v1033 = vld [vmem:[#allocation12 + $0x230] sm:$0xff]
    %v1034 = vld [vmem:[#allocation12 + $0x238] sm:$0xff]
    %v1035 = vld [vmem:[#allocation12 + $0x240] sm:$0xff]
    %v1036 = vld [vmem:[#allocation12 + $0x248] sm:$0xff]
    %v1037 = vld [vmem:[#allocation12 + $0x250] sm:$0xff]
    %v1038 = vld [vmem:[#allocation12 + $0x258] sm:$0xff]
    %v1039 = vld [vmem:[#allocation12 + $0x260] sm:$0xff]
    %v1040 = vld [vmem:[#allocation12 + $0x268] sm:$0xff]
    %v1041 = vld [vmem:[#allocation12 + $0x270] sm:$0xff]
    %v1042 = vld [vmem:[#allocation12 + $0x278] sm:$0xff]
    %v1043 = vld [vmem:[#allocation12 + $0x280] sm:$0xff]
    %v1044 = vld [vmem:[#allocation12 + $0x288] sm:$0xff]
    %v1045 = vld [vmem:[#allocation12 + $0x290] sm:$0xff]
    %v1046 = vld [vmem:[#allocation12 + $0x298] sm:$0xff]
    %v1047 = vld [vmem:[#allocation12 + $0x2a0] sm:$0xff]
    %v1048 = vld [vmem:[#allocation12 + $0x2a8] sm:$0xff]
    %v1049 = vld [vmem:[#allocation12 + $0x2b0] sm:$0xff]
    %v1050 = vld [vmem:[#allocation12 + $0x2b8] sm:$0xff]
    %v1051 = vld [vmem:[#allocation12 + $0x2c0] sm:$0xff]
    %v1052 = vld [vmem:[#allocation12 + $0x2c8] sm:$0xff]
    %v1053 = vld [vmem:[#allocation12 + $0x2d0] sm:$0xff]
    %v1054 = vld [vmem:[#allocation12 + $0x2d8] sm:$0xff]
    %v1055 = vld [vmem:[#allocation12 + $0x2e0] sm:$0xff]
    %v1056 = vld [vmem:[#allocation12 + $0x2e8] sm:$0xff]
    %v1057 = vld [vmem:[#allocation12 + $0x2f0] sm:$0xff]
    %v1058 = vld [vmem:[#allocation12 + $0x2f8] sm:$0xff]
    %v1059 = vld [vmem:[#allocation13] sm:$0xff]
    %v1060 = vld [vmem:[#allocation13 + $0x8] sm:$0xff]
    %v1061 = vld [vmem:[#allocation13 + $0x10] sm:$0xff]
    %v1062 = vld [vmem:[#allocation13 + $0x18] sm:$0xff]
    %v1063 = vld [vmem:[#allocation13 + $0x20] sm:$0xff]
    %v1064 = vld [vmem:[#allocation13 + $0x28] sm:$0xff]
    %v1065 = vld [vmem:[#allocation13 + $0x30] sm:$0xff]
    %v1066 = vld [vmem:[#allocation13 + $0x38] sm:$0xff]
    %v1067 = vld [vmem:[#allocation13 + $0x40] sm:$0xff]
    %v1068 = vld [vmem:[#allocation13 + $0x48] sm:$0xff]
    %v1069 = vld [vmem:[#allocation13 + $0x50] sm:$0xff]
    %v1070 = vld [vmem:[#allocation13 + $0x58] sm:$0xff]
    %v1071 = vld [vmem:[#allocation13 + $0x60] sm:$0xff]
    %v1072 = vld [vmem:[#allocation13 + $0x68] sm:$0xff]
    %v1073 = vld [vmem:[#allocation13 + $0x70] sm:$0xff]
    %v1074 = vld [vmem:[#allocation13 + $0x78] sm:$0xff]
    %v1075 = vld [vmem:[#allocation13 + $0x80] sm:$0xff]
    %v1076 = vld [vmem:[#allocation13 + $0x88] sm:$0xff]
    %v1077 = vld [vmem:[#allocation13 + $0x90] sm:$0xff]
    %v1078 = vld [vmem:[#allocation13 + $0x98] sm:$0xff]
    %v1079 = vld [vmem:[#allocation13 + $0xa0] sm:$0xff]
    %v1080 = vld [vmem:[#allocation13 + $0xa8] sm:$0xff]
    %v1081 = vld [vmem:[#allocation13 + $0xb0] sm:$0xff]
    %v1082 = vld [vmem:[#allocation13 + $0xb8] sm:$0xff]
    %v1083 = vld [vmem:[#allocation13 + $0xc0] sm:$0xff]
    %v1084 = vld [vmem:[#allocation13 + $0xc8] sm:$0xff]
    %v1085 = vld [vmem:[#allocation13 + $0xd0] sm:$0xff]
    %v1086 = vld [vmem:[#allocation13 + $0xd8] sm:$0xff]
    %v1087 = vld [vmem:[#allocation13 + $0xe0] sm:$0xff]
    %v1088 = vld [vmem:[#allocation13 + $0xe8] sm:$0xff]
    %v1089 = vld [vmem:[#allocation13 + $0xf0] sm:$0xff]
    %v1090 = vld [vmem:[#allocation13 + $0xf8] sm:$0xff]
    %v1091 = vld [vmem:[#allocation13 + $0x100] sm:$0xff]
    %v1092 = vld [vmem:[#allocation13 + $0x108] sm:$0xff]
    %v1093 = vld [vmem:[#allocation13 + $0x110] sm:$0xff]
    %v1094 = vld [vmem:[#allocation13 + $0x118] sm:$0xff]
    %v1095 = vld [vmem:[#allocation13 + $0x120] sm:$0xff]
    %v1096 = vld [vmem:[#allocation13 + $0x128] sm:$0xff]
    %v1097 = vld [vmem:[#allocation13 + $0x130] sm:$0xff]
    %v1098 = vld [vmem:[#allocation13 + $0x138] sm:$0xff]
    %v1099 = vld [vmem:[#allocation13 + $0x140] sm:$0xff]
    %v1100 = vld [vmem:[#allocation13 + $0x148] sm:$0xff]
    %v1101 = vld [vmem:[#allocation13 + $0x150] sm:$0xff]
    %v1102 = vld [vmem:[#allocation13 + $0x158] sm:$0xff]
    %v1103 = vld [vmem:[#allocation13 + $0x160] sm:$0xff]
    %v1104 = vld [vmem:[#allocation13 + $0x168] sm:$0xff]
    %v1105 = vld [vmem:[#allocation13 + $0x170] sm:$0xff]
    %v1106 = vld [vmem:[#allocation13 + $0x178] sm:$0xff]
    %v1107 = vld [vmem:[#allocation13 + $0x180] sm:$0xff]
    %v1108 = vld [vmem:[#allocation13 + $0x188] sm:$0xff]
    %v1109 = vld [vmem:[#allocation13 + $0x190] sm:$0xff]
    %v1110 = vld [vmem:[#allocation13 + $0x198] sm:$0xff]
    %v1111 = vld [vmem:[#allocation13 + $0x1a0] sm:$0xff]
    %v1112 = vld [vmem:[#allocation13 + $0x1a8] sm:$0xff]
    %v1113 = vld [vmem:[#allocation13 + $0x1b0] sm:$0xff]
    %v1114 = vld [vmem:[#allocation13 + $0x1b8] sm:$0xff]
    %v1115 = vld [vmem:[#allocation13 + $0x1c0] sm:$0xff]
    %v1116 = vld [vmem:[#allocation13 + $0x1c8] sm:$0xff]
    %v1117 = vld [vmem:[#allocation13 + $0x1d0] sm:$0xff]
    %v1118 = vld [vmem:[#allocation13 + $0x1d8] sm:$0xff]
    %v1119 = vld [vmem:[#allocation13 + $0x1e0] sm:$0xff]
    %v1120 = vld [vmem:[#allocation13 + $0x1e8] sm:$0xff]
    %v1121 = vld [vmem:[#allocation13 + $0x1f0] sm:$0xff]
    %v1122 = vld [vmem:[#allocation13 + $0x1f8] sm:$0xff]
    %v1123 = vld [vmem:[#allocation13 + $0x200] sm:$0xff]
    %v1124 = vld [vmem:[#allocation13 + $0x208] sm:$0xff]
    %v1125 = vld [vmem:[#allocation13 + $0x210] sm:$0xff]
    %v1126 = vld [vmem:[#allocation13 + $0x218] sm:$0xff]
    %v1127 = vld [vmem:[#allocation13 + $0x220] sm:$0xff]
    %v1128 = vld [vmem:[#allocation13 + $0x228] sm:$0xff]
    %v1129 = vld [vmem:[#allocation13 + $0x230] sm:$0xff]
    %v1130 = vld [vmem:[#allocation13 + $0x238] sm:$0xff]
    %v1131 = vld [vmem:[#allocation13 + $0x240] sm:$0xff]
    %v1132 = vld [vmem:[#allocation13 + $0x248] sm:$0xff]
    %v1133 = vld [vmem:[#allocation13 + $0x250] sm:$0xff]
    %v1134 = vld [vmem:[#allocation13 + $0x258] sm:$0xff]
    %v1135 = vld [vmem:[#allocation13 + $0x260] sm:$0xff]
    %v1136 = vld [vmem:[#allocation13 + $0x268] sm:$0xff]
    %v1137 = vld [vmem:[#allocation13 + $0x270] sm:$0xff]
    %v1138 = vld [vmem:[#allocation13 + $0x278] sm:$0xff]
    %v1139 = vld [vmem:[#allocation13 + $0x280] sm:$0xff]
    %v1140 = vld [vmem:[#allocation13 + $0x288] sm:$0xff]
    %v1141 = vld [vmem:[#allocation13 + $0x290] sm:$0xff]
    %v1142 = vld [vmem:[#allocation13 + $0x298] sm:$0xff]
    %v1143 = vld [vmem:[#allocation13 + $0x2a0] sm:$0xff]
    %v1144 = vld [vmem:[#allocation13 + $0x2a8] sm:$0xff]
    %v1145 = vld [vmem:[#allocation13 + $0x2b0] sm:$0xff]
    %v1146 = vld [vmem:[#allocation13 + $0x2b8] sm:$0xff]
    %v1147 = vld [vmem:[#allocation13 + $0x2c0] sm:$0xff]
    %v1148 = vld [vmem:[#allocation13 + $0x2c8] sm:$0xff]
    %v1149 = vld [vmem:[#allocation13 + $0x2d0] sm:$0xff]
    %v1150 = vld [vmem:[#allocation13 + $0x2d8] sm:$0xff]
    %v1151 = vld [vmem:[#allocation13 + $0x2e0] sm:$0xff]
    %v1152 = vld [vmem:[#allocation13 + $0x2e8] sm:$0xff]
    %v1153 = vld [vmem:[#allocation13 + $0x2f0] sm:$0xff]
    %v1154 = vld [vmem:[#allocation13 + $0x2f8] sm:$0xff]
    %v1155 = vld [vmem:[#allocation15] sm:$0x7]
    %1156 = vmatprep.subr.mxu0 0.0
    %1157 = vmatpush1.msra.mxu0 0.0
    %1158 = vmatprep.subr.mxu0 0.0
    %1159 = vmatpush1.msra.mxu0 0.0
    %1160 = vmatprep.subr.mxu0 0.0
    %1161 = vmatpush1.msra.mxu0 0.0
    %1162 = vmatprep.subr.mxu0 0.0
    %1163 = vmatpush1.msra.mxu0 0.0
    %1164 = vmatprep.subr.mxu0 0.0
    %1165 = vmatpush1.msra.mxu0 0.0
    %1166 = vmatprep.subr.mxu0 0.0
    %1167 = vmatpush1.msra.mxu0 0.0
    %1168 = vmatprep.subr.mxu0 0.0
    %1169 = vmatpush1.msra.mxu0 0.0
    %1170 = vmatprep.subr.mxu0 0.0
    %1171 = vmatpush1.msra.mxu0 0.0
    %1172 = vmatprep.subr.mxu0 0.0
    %1173 = vmatpush1.msra.mxu0 0.0
    %1174 = vmatprep.subr.mxu0 0.0
    %1175 = vmatpush1.msra.mxu0 0.0
    %1176 = vmatprep.subr.mxu0 0.0
    %1177 = vmatpush1.msra.mxu0 0.0
    %1178 = vmatprep.subr.mxu0 0.0
    %1179 = vmatpush1.msra.mxu0 0.0
    %1180 = vmatprep.subr.mxu0 0.0
    %1181 = vmatpush1.msra.mxu0 0.0
    %1182 = vmatprep.subr.mxu0 %v962
    %1183 = vmatpush1.msra.mxu0 %v961
    %1184 = vmatprep.subr.mxu0 %v960
    %1185 = vmatpush1.msra.mxu0 %v959
    %1186 = vmatprep.subr.mxu0 %v958
    %1187 = vmatpush1.msra.mxu0 %v957
    %1188 = vmatprep.subr.mxu0 0.0
    %1189 = vmatpush2.msra.mxu0 0.0
    %1190 = vmatprep.subr.mxu0 0.0
    %1191 = vmatpush2.msra.mxu0 0.0
    %1192 = vmatprep.subr.mxu0 0.0
    %1193 = vmatpush2.msra.mxu0 0.0
    %1194 = vmatprep.subr.mxu0 0.0
    %1195 = vmatpush2.msra.mxu0 0.0
    %1196 = vmatprep.subr.mxu0 0.0
    %1197 = vmatpush2.msra.mxu0 0.0
    %1198 = vmatprep.subr.mxu0 0.0
    %1199 = vmatpush2.msra.mxu0 0.0
    %1200 = vmatprep.subr.mxu0 0.0
    %1201 = vmatpush2.msra.mxu0 0.0
    %1202 = vmatprep.subr.mxu0 0.0
    %1203 = vmatpush2.msra.mxu0 0.0
    %1204 = vmatprep.subr.mxu0 0.0
    %1205 = vmatpush2.msra.mxu0 0.0
    %1206 = vmatprep.subr.mxu0 0.0
    %1207 = vmatpush2.msra.mxu0 0.0
    %1208 = vmatprep.subr.mxu0 0.0
    %1209 = vmatpush2.msra.mxu0 0.0
    %1210 = vmatprep.subr.mxu0 0.0
    %1211 = vmatpush2.msra.mxu0 0.0
    %1212 = vmatprep.subr.mxu0 0.0
    %1213 = vmatpush2.msra.mxu0 0.0
    %1214 = vmatprep.subr.mxu0 0.0
    %1215 = vmatpush2.msra.mxu0 0.0
    %1216 = vmatprep.subr.mxu0 0.0
    %1217 = vmatpush2.msra.mxu0 0.0
    %1218 = vmatprep.subr.mxu0 0.0
    %1219 = vmatpush2.msra.mxu0 0.0
    %1220 = vmatprep.mubr.f32.mxu0 0.0
    %1221 = vmatmul.mubr.f32.gmra.mxu0 %v261
    %v1222 = vpop.f32.mrf.mxu0
    %v1223 = vadd.f32 0.0, %v1222
    %v1224 = vpop.f32.mrf.mxu0
    %v1225 = vadd.f32 0.0, %v1224
    %1226 = vmatprep.mubr.f32.mxu0 0.0
    %1227 = vmatmul.mubr.f32.gmra.mxu0 %v264
    %v1228 = vpop.f32.mrf.mxu0
    %v1229 = vadd.f32 0.0, %v1228
    %v1230 = vpop.f32.mrf.mxu0
    %v1231 = vadd.f32 0.0, %v1230
    %1232 = vmatprep.mubr.f32.mxu0 0.0
    %1233 = vmatmul.mubr.f32.gmra.mxu0 %v267
    %v1234 = vpop.f32.mrf.mxu0
    %v1235 = vadd.f32 0.0, %v1234
    %v1236 = vpop.f32.mrf.mxu0
    %v1237 = vadd.f32 0.0, %v1236
    %1238 = vdwg.mxu0
    %1239 = vmatprep.subr.mxu0 %v1105
    %1240 = vmatpush1.msra.mxu0 %v1104
    %1241 = vmatprep.subr.mxu0 %v1102
    %1242 = vmatpush1.msra.mxu0 %v1101
    %1243 = vmatprep.subr.mxu0 %v1099
    %1244 = vmatpush1.msra.mxu0 %v1098
    %1245 = vmatprep.subr.mxu0 %v1096
    %1246 = vmatpush1.msra.mxu0 %v1095
    %1247 = vmatprep.subr.mxu0 %v1093
    %1248 = vmatpush1.msra.mxu0 %v1092
    %1249 = vmatprep.subr.mxu0 %v1090
    %1250 = vmatpush1.msra.mxu0 %v1089
    %1251 = vmatprep.subr.mxu0 %v1087
    %1252 = vmatpush1.msra.mxu0 %v1086
    %1253 = vmatprep.subr.mxu0 %v1084
    %1254 = vmatpush1.msra.mxu0 %v1083
    %1255 = vmatprep.subr.mxu0 %v1081
    %1256 = vmatpush1.msra.mxu0 %v1080
    %1257 = vmatprep.subr.mxu0 %v1078
    %1258 = vmatpush1.msra.mxu0 %v1077
    %1259 = vmatprep.subr.mxu0 %v1075
    %1260 = vmatpush1.msra.mxu0 %v1074
    %1261 = vmatprep.subr.mxu0 %v1072
    %1262 = vmatpush1.msra.mxu0 %v1071
    %1263 = vmatprep.subr.mxu0 %v1069
    %1264 = vmatpush1.msra.mxu0 %v1068
    %1265 = vmatprep.subr.mxu0 %v1066
    %1266 = vmatpush1.msra.mxu0 %v1065
    %1267 = vmatprep.subr.mxu0 %v1063
    %1268 = vmatpush1.msra.mxu0 %v1062
    %1269 = vmatprep.subr.mxu0 %v1060
    %1270 = vmatpush1.msra.mxu0 %v1059
    %1271 = vmatprep.subr.mxu0 %v1153
    %1272 = vmatpush2.msra.mxu0 %v1152
    %1273 = vmatprep.subr.mxu0 %v1150
    %1274 = vmatpush2.msra.mxu0 %v1149
    %1275 = vmatprep.subr.mxu0 %v1147
    %1276 = vmatpush2.msra.mxu0 %v1146
    %1277 = vmatprep.subr.mxu0 %v1144
    %1278 = vmatpush2.msra.mxu0 %v1143
    %1279 = vmatprep.subr.mxu0 %v1141
    %1280 = vmatpush2.msra.mxu0 %v1140
    %1281 = vmatprep.subr.mxu0 %v1138
    %1282 = vmatpush2.msra.mxu0 %v1137
    %1283 = vmatprep.subr.mxu0 %v1135
    %1284 = vmatpush2.msra.mxu0 %v1134
    %1285 = vmatprep.subr.mxu0 %v1132
    %1286 = vmatpush2.msra.mxu0 %v1131
    %1287 = vmatprep.subr.mxu0 %v1129
    %1288 = vmatpush2.msra.mxu0 %v1128
    %1289 = vmatprep.subr.mxu0 %v1126
    %1290 = vmatpush2.msra.mxu0 %v1125
    %1291 = vmatprep.subr.mxu0 %v1123
    %1292 = vmatpush2.msra.mxu0 %v1122
    %1293 = vmatprep.subr.mxu0 %v1120
    %1294 = vmatpush2.msra.mxu0 %v1119
    %1295 = vmatprep.subr.mxu0 %v1117
    %1296 = vmatpush2.msra.mxu0 %v1116
    %1297 = vmatprep.subr.mxu0 %v1114
    %1298 = vmatpush2.msra.mxu0 %v1113
    %1299 = vmatprep.subr.mxu0 %v1111
    %1300 = vmatpush2.msra.mxu0 %v1110
    %1301 = vmatprep.subr.mxu0 %v1108
    %1302 = vmatpush2.msra.mxu0 %v1107
    %1303 = vmatprep.mubr.f32.mxu0 %v958
    %1304 = vmatmul.mubr.f32.gmra.mxu0 %v957
    %v1305 = vpop.f32.mrf.mxu0
    %v1306 = vadd.f32 0.0, %v1305
    %v1307 = vpop.f32.mrf.mxu0
    %v1308 = vadd.f32 0.0, %v1307
    %1309 = vmatprep.mubr.f32.mxu0 %v960
    %1310 = vmatmul.mubr.f32.gmra.mxu0 %v959
    %v1311 = vpop.f32.mrf.mxu0
    %v1312 = vadd.f32 0.0, %v1311
    %v1313 = vpop.f32.mrf.mxu0
    %v1314 = vadd.f32 0.0, %v1313
    %1315 = vmatprep.mubr.f32.mxu0 %v962
    %1316 = vmatmul.mubr.f32.gmra.mxu0 %v961
    %v1317 = vpop.f32.mrf.mxu0
    %v1318 = vadd.f32 0.0, %v1317
    %v1319 = vpop.f32.mrf.mxu0
    %v1320 = vadd.f32 0.0, %v1319
    %1321 = vdwg.mxu0
    %1322 = vmatprep.subr.mxu0 0.0
    %1323 = vmatpush1.msra.mxu0 %v1106
    %1324 = vmatprep.subr.mxu0 0.0
    %1325 = vmatpush1.msra.mxu0 %v1103
    %1326 = vmatprep.subr.mxu0 0.0
    %1327 = vmatpush1.msra.mxu0 %v1100
    %1328 = vmatprep.subr.mxu0 0.0
    %1329 = vmatpush1.msra.mxu0 %v1097
    %1330 = vmatprep.subr.mxu0 0.0
    %1331 = vmatpush1.msra.mxu0 %v1094
    %1332 = vmatprep.subr.mxu0 0.0
    %1333 = vmatpush1.msra.mxu0 %v1091
    %1334 = vmatprep.subr.mxu0 0.0
    %1335 = vmatpush1.msra.mxu0 %v1088
    %1336 = vmatprep.subr.mxu0 0.0
    %1337 = vmatpush1.msra.mxu0 %v1085
    %1338 = vmatprep.subr.mxu0 0.0
    %1339 = vmatpush1.msra.mxu0 %v1082
    %1340 = vmatprep.subr.mxu0 0.0
    %1341 = vmatpush1.msra.mxu0 %v1079
    %1342 = vmatprep.subr.mxu0 0.0
    %1343 = vmatpush1.msra.mxu0 %v1076
    %1344 = vmatprep.subr.mxu0 0.0
    %1345 = vmatpush1.msra.mxu0 %v1073
    %1346 = vmatprep.subr.mxu0 0.0
    %1347 = vmatpush1.msra.mxu0 %v1070
    %1348 = vmatprep.subr.mxu0 0.0
    %1349 = vmatpush1.msra.mxu0 %v1067
    %1350 = vmatprep.subr.mxu0 0.0
    %1351 = vmatpush1.msra.mxu0 %v1064
    %1352 = vmatprep.subr.mxu0 0.0
    %1353 = vmatpush1.msra.mxu0 %v1061
    %1354 = vmatprep.subr.mxu0 0.0
    %1355 = vmatpush2.msra.mxu0 %v1154
    %1356 = vmatprep.subr.mxu0 0.0
    %1357 = vmatpush2.msra.mxu0 %v1151
    %1358 = vmatprep.subr.mxu0 0.0
    %1359 = vmatpush2.msra.mxu0 %v1148
    %1360 = vmatprep.subr.mxu0 0.0
    %1361 = vmatpush2.msra.mxu0 %v1145
    %1362 = vmatprep.subr.mxu0 0.0
    %1363 = vmatpush2.msra.mxu0 %v1142
    %1364 = vmatprep.subr.mxu0 0.0
    %1365 = vmatpush2.msra.mxu0 %v1139
    %1366 = vmatprep.subr.mxu0 0.0
    %1367 = vmatpush2.msra.mxu0 %v1136
    %1368 = vmatprep.subr.mxu0 0.0
    %1369 = vmatpush2.msra.mxu0 %v1133
    %1370 = vmatprep.subr.mxu0 0.0
    %1371 = vmatpush2.msra.mxu0 %v1130
    %1372 = vmatprep.subr.mxu0 0.0
    %1373 = vmatpush2.msra.mxu0 %v1127
    %1374 = vmatprep.subr.mxu0 0.0
    %1375 = vmatpush2.msra.mxu0 %v1124
    %1376 = vmatprep.subr.mxu0 0.0
    %1377 = vmatpush2.msra.mxu0 %v1121
    %1378 = vmatprep.subr.mxu0 0.0
    %1379 = vmatpush2.msra.mxu0 %v1118
    %1380 = vmatprep.subr.mxu0 0.0
    %1381 = vmatpush2.msra.mxu0 %v1115
    %1382 = vmatprep.subr.mxu0 0.0
    %1383 = vmatpush2.msra.mxu0 %v1112
    %1384 = vmatprep.subr.mxu0 0.0
    %1385 = vmatpush2.msra.mxu0 %v1109
    %1386 = vmatprep.mubr.f32.mxu0 %v958
    %1387 = vmatmul.mubr.f32.gmra.mxu0 %v957
    %v1388 = vpop.f32.mrf.mxu0
    %v1389 = vadd.f32 0.0, %v1388
    %v1390 = vpop.f32.mrf.mxu0
    %1391 = vmatprep.mubr.f32.mxu0 %v960
    %1392 = vmatmul.mubr.f32.gmra.mxu0 %v959
    %v1393 = vpop.f32.mrf.mxu0
    %v1394 = vadd.f32 0.0, %v1393
    %v1395 = vpop.f32.mrf.mxu0
    %1396 = vmatprep.mubr.f32.mxu0 %v962
    %1397 = vmatmul.mubr.f32.gmra.mxu0 %v961
    %v1398 = vpop.f32.mrf.mxu0
    %v1399 = vadd.f32 0.0, %v1398
    %v1400 = vpop.f32.mrf.mxu0
    %1401 = vdwg.mxu0
    %1402 = vmatprep.subr.mxu0 %v1009
    %1403 = vmatpush1.msra.mxu0 %v1008
    %1404 = vmatprep.subr.mxu0 %v1006
    %1405 = vmatpush1.msra.mxu0 %v1005
    %1406 = vmatprep.subr.mxu0 %v1003
    %1407 = vmatpush1.msra.mxu0 %v1002
    %1408 = vmatprep.subr.mxu0 %v1000
    %1409 = vmatpush1.msra.mxu0 %v999
    %1410 = vmatprep.subr.mxu0 %v997
    %1411 = vmatpush1.msra.mxu0 %v996
    %1412 = vmatprep.subr.mxu0 %v994
    %1413 = vmatpush1.msra.mxu0 %v993
    %1414 = vmatprep.subr.mxu0 %v991
    %1415 = vmatpush1.msra.mxu0 %v990
    %1416 = vmatprep.subr.mxu0 %v988
    %1417 = vmatpush1.msra.mxu0 %v987
    %1418 = vmatprep.subr.mxu0 %v985
    %1419 = vmatpush1.msra.mxu0 %v984
    %1420 = vmatprep.subr.mxu0 %v982
    %1421 = vmatpush1.msra.mxu0 %v981
    %1422 = vmatprep.subr.mxu0 %v979
    %1423 = vmatpush1.msra.mxu0 %v978
    %1424 = vmatprep.subr.mxu0 %v976
    %1425 = vmatpush1.msra.mxu0 %v975
    %1426 = vmatprep.subr.mxu0 %v973
    %1427 = vmatpush1.msra.mxu0 %v972
    %1428 = vmatprep.subr.mxu0 %v970
    %1429 = vmatpush1.msra.mxu0 %v969
    %1430 = vmatprep.subr.mxu0 %v967
    %1431 = vmatpush1.msra.mxu0 %v966
    %1432 = vmatprep.subr.mxu0 %v964
    %1433 = vmatpush1.msra.mxu0 %v963
    %1434 = vmatprep.subr.mxu0 %v1057
    %1435 = vmatpush2.msra.mxu0 %v1056
    %1436 = vmatprep.subr.mxu0 %v1054
    %1437 = vmatpush2.msra.mxu0 %v1053
    %1438 = vmatprep.subr.mxu0 %v1051
    %1439 = vmatpush2.msra.mxu0 %v1050
    %1440 = vmatprep.subr.mxu0 %v1048
    %1441 = vmatpush2.msra.mxu0 %v1047
    %1442 = vmatprep.subr.mxu0 %v1045
    %1443 = vmatpush2.msra.mxu0 %v1044
    %1444 = vmatprep.subr.mxu0 %v1042
    %1445 = vmatpush2.msra.mxu0 %v1041
    %1446 = vmatprep.subr.mxu0 %v1039
    %1447 = vmatpush2.msra.mxu0 %v1038
    %1448 = vmatprep.subr.mxu0 %v1036
    %1449 = vmatpush2.msra.mxu0 %v1035
    %1450 = vmatprep.subr.mxu0 %v1033
    %1451 = vmatpush2.msra.mxu0 %v1032
    %1452 = vmatprep.subr.mxu0 %v1030
    %1453 = vmatpush2.msra.mxu0 %v1029
    %1454 = vmatprep.subr.mxu0 %v1027
    %1455 = vmatpush2.msra.mxu0 %v1026
    %1456 = vmatprep.subr.mxu0 %v1024
    %1457 = vmatpush2.msra.mxu0 %v1023
    %1458 = vmatprep.subr.mxu0 %v1021
    %1459 = vmatpush2.msra.mxu0 %v1020
    %1460 = vmatprep.subr.mxu0 %v1018
    %1461 = vmatpush2.msra.mxu0 %v1017
    %1462 = vmatprep.subr.mxu0 %v1015
    %1463 = vmatpush2.msra.mxu0 %v1014
    %1464 = vmatprep.subr.mxu0 %v1012
    %1465 = vmatpush2.msra.mxu0 %v1011
    %1466 = vmatprep.mubr.f32.mxu0 %v1225
    %1467 = vmatmul.mubr.f32.gmra.mxu0 %v1223
    %v1468 = vpop.f32.mrf.mxu0
    %v1469 = vadd.f32 %v1306, %v1468
    %v1470 = vpop.f32.mrf.mxu0
    %v1471 = vadd.f32 %v1308, %v1470
    %1472 = vmatprep.mubr.f32.mxu0 %v1231
    %1473 = vmatmul.mubr.f32.gmra.mxu0 %v1229
    %v1474 = vpop.f32.mrf.mxu0
    %v1475 = vadd.f32 %v1312, %v1474
    %v1476 = vpop.f32.mrf.mxu0
    %v1477 = vadd.f32 %v1314, %v1476
    %1478 = vmatprep.mubr.f32.mxu0 %v1237
    %1479 = vmatmul.mubr.f32.gmra.mxu0 %v1235
    %v1480 = vpop.f32.mrf.mxu0
    %v1481 = vadd.f32 %v1318, %v1480
    %v1482 = vpop.f32.mrf.mxu0
    %v1483 = vadd.f32 %v1320, %v1482
    %1484 = vdwg.mxu0
    %1485 = vmatprep.subr.mxu0 0.0
    %1486 = vmatpush1.msra.mxu0 %v1010
    %1487 = vmatprep.subr.mxu0 0.0
    %1488 = vmatpush1.msra.mxu0 %v1007
    %1489 = vmatprep.subr.mxu0 0.0
    %1490 = vmatpush1.msra.mxu0 %v1004
    %1491 = vmatprep.subr.mxu0 0.0
    %1492 = vmatpush1.msra.mxu0 %v1001
    %1493 = vmatprep.subr.mxu0 0.0
    %1494 = vmatpush1.msra.mxu0 %v998
    %1495 = vmatprep.subr.mxu0 0.0
    %1496 = vmatpush1.msra.mxu0 %v995
    %1497 = vmatprep.subr.mxu0 0.0
    %1498 = vmatpush1.msra.mxu0 %v992
    %1499 = vmatprep.subr.mxu0 0.0
    %1500 = vmatpush1.msra.mxu0 %v989
    %1501 = vmatprep.subr.mxu0 0.0
    %1502 = vmatpush1.msra.mxu0 %v986
    %1503 = vmatprep.subr.mxu0 0.0
    %1504 = vmatpush1.msra.mxu0 %v983
    %1505 = vmatprep.subr.mxu0 0.0
    %1506 = vmatpush1.msra.mxu0 %v980
    %1507 = vmatprep.subr.mxu0 0.0
    %1508 = vmatpush1.msra.mxu0 %v977
    %1509 = vmatprep.subr.mxu0 0.0
    %1510 = vmatpush1.msra.mxu0 %v974
    %1511 = vmatprep.subr.mxu0 0.0
    %1512 = vmatpush1.msra.mxu0 %v971
    %1513 = vmatprep.subr.mxu0 0.0
    %1514 = vmatpush1.msra.mxu0 %v968
    %1515 = vmatprep.subr.mxu0 0.0
    %1516 = vmatpush1.msra.mxu0 %v965
    %1517 = vmatprep.subr.mxu0 0.0
    %1518 = vmatpush2.msra.mxu0 %v1058
    %1519 = vmatprep.subr.mxu0 0.0
    %1520 = vmatpush2.msra.mxu0 %v1055
    %1521 = vmatprep.subr.mxu0 0.0
    %1522 = vmatpush2.msra.mxu0 %v1052
    %1523 = vmatprep.subr.mxu0 0.0
    %1524 = vmatpush2.msra.mxu0 %v1049
    %1525 = vmatprep.subr.mxu0 0.0
    %1526 = vmatpush2.msra.mxu0 %v1046
    %1527 = vmatprep.subr.mxu0 0.0
    %1528 = vmatpush2.msra.mxu0 %v1043
    %1529 = vmatprep.subr.mxu0 0.0
    %1530 = vmatpush2.msra.mxu0 %v1040
    %1531 = vmatprep.subr.mxu0 0.0
    %1532 = vmatpush2.msra.mxu0 %v1037
    %1533 = vmatprep.subr.mxu0 0.0
    %1534 = vmatpush2.msra.mxu0 %v1034
    %1535 = vmatprep.subr.mxu0 0.0
    %1536 = vmatpush2.msra.mxu0 %v1031
    %1537 = vmatprep.subr.mxu0 0.0
    %1538 = vmatpush2.msra.mxu0 %v1028
    %1539 = vmatprep.subr.mxu0 0.0
    %1540 = vmatpush2.msra.mxu0 %v1025
    %1541 = vmatprep.subr.mxu0 0.0
    %1542 = vmatpush2.msra.mxu0 %v1022
    %1543 = vmatprep.subr.mxu0 0.0
    %1544 = vmatpush2.msra.mxu0 %v1019
    %1545 = vmatprep.subr.mxu0 0.0
    %1546 = vmatpush2.msra.mxu0 %v1016
    %1547 = vmatprep.subr.mxu0 0.0
    %1548 = vmatpush2.msra.mxu0 %v1013
    %1549 = vmatprep.mubr.f32.mxu0 %v1225
    %1550 = vmatmul.mubr.f32.gmra.mxu0 %v1223
    %v1551 = vpop.f32.mrf.mxu0
    %v1552 = vadd.f32 %v1389, %v1551
    %v1553 = vpop.f32.mrf.mxu0
    %1554 = vmatprep.mubr.f32.mxu0 %v1231
    %1555 = vmatmul.mubr.f32.gmra.mxu0 %v1229
    %v1556 = vpop.f32.mrf.mxu0
    %v1557 = vadd.f32 %v1394, %v1556
    %v1558 = vpop.f32.mrf.mxu0
    %1559 = vmatprep.mubr.f32.mxu0 %v1237
    %1560 = vmatmul.mubr.f32.gmra.mxu0 %v1235
    %v1561 = vpop.f32.mrf.mxu0
    %v1562 = vadd.f32 %v1399, %v1561
    %v1563 = vpop.f32.mrf.mxu0
    %1564 = vdwg.mxu0
    %v1566 = vlaneseq
    %v1567 = vshrl.u32 %v1566, 7
    %v1568 = vsub.s32 0, %v1567
    %v1569 = vrot.slane %v1155, %v1568
    %v1570 = vlaneseq
    %v1571 = vshrl.u32 %v1570, 7
    %v1572 = vsub.s32 1, %v1571
    %v1573 = vrot.slane %v1155, %v1572
    %v1574 = vlaneseq
    %v1575 = vshrl.u32 %v1574, 7
    %v1576 = vsub.s32 2, %v1575
    %v1577 = vrot.slane %v1155, %v1576
    %v1581 = vadd.f32 %v1469, %v1569
    %v1582 = vadd.f32 %v1471, %v1573
    %v1583 = vadd.f32 %v1552, %v1577
    %v1584 = vadd.f32 %v1475, %v1569
    %v1585 = vadd.f32 %v1477, %v1573
    %v1586 = vadd.f32 %v1557, %v1577
    %v1587 = vadd.f32 %v1481, %v1569
    %v1588 = vadd.f32 %v1483, %v1573
    %v1589 = vadd.f32 %v1562, %v1577
    %vm1590 = vcmp.gt.f32.partialorder %v1581, 0.0
    %vm1591 = vcmp.gt.f32.partialorder %v1582, 0.0
    %vm1592 = vcmp.gt.f32.partialorder %v1583, 0.0
    %vm1593 = vcmp.gt.f32.partialorder %v1584, 0.0
    %vm1594 = vcmp.gt.f32.partialorder %v1585, 0.0
    %vm1595 = vcmp.gt.f32.partialorder %v1586, 0.0
    %vm1596 = vcmp.gt.f32.partialorder %v1587, 0.0
    %vm1597 = vcmp.gt.f32.partialorder %v1588, 0.0
    %vm1598 = vcmp.gt.f32.partialorder %v1589, 0.0
    %v1599 = vmul.f32 %v1581, 0.01
    %v1600 = vmul.f32 %v1582, 0.01
    %v1601 = vmul.f32 %v1583, 0.01
    %v1602 = vmul.f32 %v1584, 0.01
    %v1603 = vmul.f32 %v1585, 0.01
    %v1604 = vmul.f32 %v1586, 0.01
    %v1605 = vmul.f32 %v1587, 0.01
    %v1606 = vmul.f32 %v1588, 0.01
    %v1607 = vmul.f32 %v1589, 0.01
    %v1608 = vsel %vm1590, %v1581, %v1599
    %v1609 = vsel %vm1591, %v1582, %v1600
    %v1610 = vsel %vm1592, %v1583, %v1601
    %v1611 = vsel %vm1593, %v1584, %v1602
    %v1612 = vsel %vm1594, %v1585, %v1603
    %v1613 = vsel %vm1595, %v1586, %v1604
    %v1614 = vsel %vm1596, %v1587, %v1605
    %v1615 = vsel %vm1597, %v1588, %v1606
    %v1616 = vsel %vm1598, %v1589, %v1607
    %v1617 = vld [vmem:[%s2] sm:$0xff]
    %v1618 = vld [vmem:[%s2 + $0x8] sm:$0xff]
    %v1619 = vld [vmem:[%s2 + $0x10] sm:$0xff]
    %vm1620 = vcmp.gt.f32.partialorder %v1617, 0.5
    %vm1621 = vcmp.gt.f32.partialorder %v1618, 0.5
    %vm1622 = vcmp.gt.f32.partialorder %v1619, 0.5
    %v1623 = vsel %vm1620, 1, 0
    %v1624 = vsel %vm1621, 1, 0
    %v1625 = vsel %vm1622, 1, 0
    %1626 = vset.pattern.permute.xlu0 0
    %1627 = vperm.xlu0 %1626, %v1623
    %v1628 = vpop.permute.xlu0 %1627
    %1629 = vset.pattern.permute.xlu0 0
    %1630 = vperm.xlu0 %1629, %v1624
    %v1631 = vpop.permute.xlu0 %1630
    %1632 = vset.pattern.permute.xlu0 0
    %1633 = vperm.xlu0 %1632, %v1625
    %v1634 = vpop.permute.xlu0 %1633
    %vm1635 = vcmp.eq.s32.totalorder %v1628, 1
    %vm1636 = vcmp.eq.s32.totalorder %v1631, 1
    %vm1637 = vcmp.eq.s32.totalorder %v1634, 1
    %v1638 = vsel %vm1635, %v1608, -1e+30
    %v1639 = vsel %vm1635, %v1609, -1e+30
    %v1640 = vsel %vm1635, %v1610, -1e+30
    %v1641 = vsel %vm1636, %v1611, -1e+30
    %v1642 = vsel %vm1636, %v1612, -1e+30
    %v1643 = vsel %vm1636, %v1613, -1e+30
    %v1644 = vsel %vm1637, %v1614, -1e+30
    %v1645 = vsel %vm1637, %v1615, -1e+30
    %v1646 = vsel %vm1637, %v1616, -1e+30
    %v1647 = vmax.f32 %v1638, %v1644
    %v1648 = vmax.f32 %v1647, %v1641
    %v1649 = vrot.slane %v1648, 4
    %v1650 = vmax.f32 %v1648, %v1649
    %v1651 = vrot.slane %v1650, 2
    %v1652 = vmax.f32 %v1650, %v1651
    %v1653 = vrot.slane %v1652, 1
    %v1654 = vmax.f32 %v1652, %v1653
    %v1655 = vmax.f32 %v1639, %v1645
    %v1656 = vmax.f32 %v1655, %v1642
    %v1657 = vrot.slane %v1656, 4
    %v1658 = vmax.f32 %v1656, %v1657
    %v1659 = vrot.slane %v1658, 2
    %v1660 = vmax.f32 %v1658, %v1659
    %v1661 = vrot.slane %v1660, 1
    %v1662 = vmax.f32 %v1660, %v1661
    %v1663 = vmax.f32 %v1640, %v1646
    %v1664 = vmax.f32 %v1663, %v1643
    %v1665 = vrot.slane %v1664, 4
    %v1666 = vmax.f32 %v1664, %v1665
    %v1667 = vrot.slane %v1666, 2
    %v1668 = vmax.f32 %v1666, %v1667
    %v1669 = vrot.slane %v1668, 1
    %v1670 = vmax.f32 %v1668, %v1669
    %1671 = vset.pattern.permute.xlu0 1
    %1672 = vperm.xlu0 %1671, %v1623
    %v1673 = vpop.permute.xlu0 %1672
    %1674 = vset.pattern.permute.xlu0 1
    %1675 = vperm.xlu0 %1674, %v1624
    %v1676 = vpop.permute.xlu0 %1675
    %1677 = vset.pattern.permute.xlu0 1
    %1678 = vperm.xlu0 %1677, %v1625
    %v1679 = vpop.permute.xlu0 %1678
    %vm1680 = vcmp.eq.s32.totalorder %v1673, 1
    %vm1681 = vcmp.eq.s32.totalorder %v1676, 1
    %vm1682 = vcmp.eq.s32.totalorder %v1679, 1
    %v1683 = vsel %vm1680, %v1608, -1e+30
    %v1684 = vsel %vm1680, %v1609, -1e+30
    %v1685 = vsel %vm1680, %v1610, -1e+30
    %v1686 = vsel %vm1681, %v1611, -1e+30
    %v1687 = vsel %vm1681, %v1612, -1e+30
    %v1688 = vsel %vm1681, %v1613, -1e+30
    %v1689 = vsel %vm1682, %v1614, -1e+30
    %v1690 = vsel %vm1682, %v1615, -1e+30
    %v1691 = vsel %vm1682, %v1616, -1e+30
    %v1692 = vmax.f32 %v1683, %v1689
    %v1693 = vmax.f32 %v1692, %v1686
    %v1694 = vrot.slane %v1693, 4
    %v1695 = vmax.f32 %v1693, %v1694
    %v1696 = vrot.slane %v1695, 2
    %v1697 = vmax.f32 %v1695, %v1696
    %v1698 = vrot.slane %v1697, 1
    %v1699 = vmax.f32 %v1697, %v1698
    %v1700 = vmax.f32 %v1684, %v1690
    %v1701 = vmax.f32 %v1700, %v1687
    %v1702 = vrot.slane %v1701, 4
    %v1703 = vmax.f32 %v1701, %v1702
    %v1704 = vrot.slane %v1703, 2
    %v1705 = vmax.f32 %v1703, %v1704
    %v1706 = vrot.slane %v1705, 1
    %v1707 = vmax.f32 %v1705, %v1706
    %v1708 = vmax.f32 %v1685, %v1691
    %v1709 = vmax.f32 %v1708, %v1688
    %v1710 = vrot.slane %v1709, 4
    %v1711 = vmax.f32 %v1709, %v1710
    %v1712 = vrot.slane %v1711, 2
    %v1713 = vmax.f32 %v1711, %v1712
    %v1714 = vrot.slane %v1713, 1
    %v1715 = vmax.f32 %v1713, %v1714
    %vm1716 = vcmask 1040384
    %v1717 = vsel %vm1716, %v1654, %v1699
    %v1718 = vsel %vm1716, %v1662, %v1707
    %v1719 = vsel %vm1716, %v1670, %v1715
    %v1720 = vld [vmem:[#allocation16] sm:$0xff]
    %v1721 = vld [vmem:[#allocation16 + $0x8] sm:$0xff]
    %v1722 = vld [vmem:[#allocation16 + $0x10] sm:$0xff]
    %v1723 = vld [vmem:[#allocation16 + $0x18] sm:$0xff]
    %v1724 = vld [vmem:[#allocation16 + $0x20] sm:$0xff]
    %v1725 = vld [vmem:[#allocation16 + $0x28] sm:$0xff]
    %v1726 = vld [vmem:[#allocation16 + $0x30] sm:$0xff]
    %v1727 = vld [vmem:[#allocation16 + $0x38] sm:$0xff]
    %v1728 = vld [vmem:[#allocation16 + $0x40] sm:$0xff]
    %v1729 = vld [vmem:[#allocation16 + $0x48] sm:$0xff]
    %v1730 = vld [vmem:[#allocation16 + $0x50] sm:$0xff]
    %v1731 = vld [vmem:[#allocation16 + $0x58] sm:$0xff]
    %v1732 = vld [vmem:[#allocation16 + $0x60] sm:$0xff]
    %v1733 = vld [vmem:[#allocation16 + $0x68] sm:$0xff]
    %v1734 = vld [vmem:[#allocation16 + $0x70] sm:$0xff]
    %v1735 = vld [vmem:[#allocation16 + $0x78] sm:$0xff]
    %v1736 = vld [vmem:[#allocation16 + $0x80] sm:$0xff]
    %v1737 = vld [vmem:[#allocation16 + $0x88] sm:$0xff]
    %v1738 = vld [vmem:[#allocation16 + $0x90] sm:$0xff]
    %v1739 = vld [vmem:[#allocation16 + $0x98] sm:$0xff]
    %v1740 = vld [vmem:[#allocation16 + $0xa0] sm:$0xff]
    %v1741 = vld [vmem:[#allocation16 + $0xa8] sm:$0xff]
    %v1742 = vld [vmem:[#allocation16 + $0xb0] sm:$0xff]
    %v1743 = vld [vmem:[#allocation16 + $0xb8] sm:$0xff]
    %v1744 = vld [vmem:[#allocation16 + $0xc0] sm:$0xff]
    %v1745 = vld [vmem:[#allocation16 + $0xc8] sm:$0xff]
    %v1746 = vld [vmem:[#allocation16 + $0xd0] sm:$0xff]
    %v1747 = vld [vmem:[#allocation16 + $0xd8] sm:$0xff]
    %v1748 = vld [vmem:[#allocation16 + $0xe0] sm:$0xff]
    %v1749 = vld [vmem:[#allocation16 + $0xe8] sm:$0xff]
    %v1750 = vld [vmem:[#allocation16 + $0xf0] sm:$0xff]
    %v1751 = vld [vmem:[#allocation16 + $0xf8] sm:$0xff]
    %v1752 = vld [vmem:[#allocation16 + $0x100] sm:$0xff]
    %v1753 = vld [vmem:[#allocation16 + $0x108] sm:$0xff]
    %v1754 = vld [vmem:[#allocation16 + $0x110] sm:$0xff]
    %v1755 = vld [vmem:[#allocation16 + $0x118] sm:$0xff]
    %v1756 = vld [vmem:[#allocation16 + $0x120] sm:$0xff]
    %v1757 = vld [vmem:[#allocation16 + $0x128] sm:$0xff]
    %v1758 = vld [vmem:[#allocation16 + $0x130] sm:$0xff]
    %v1759 = vld [vmem:[#allocation16 + $0x138] sm:$0xff]
    %v1760 = vld [vmem:[#allocation16 + $0x140] sm:$0xff]
    %v1761 = vld [vmem:[#allocation16 + $0x148] sm:$0xff]
    %v1762 = vld [vmem:[#allocation16 + $0x150] sm:$0xff]
    %v1763 = vld [vmem:[#allocation16 + $0x158] sm:$0xff]
    %v1764 = vld [vmem:[#allocation16 + $0x160] sm:$0xff]
    %v1765 = vld [vmem:[#allocation16 + $0x168] sm:$0xff]
    %v1766 = vld [vmem:[#allocation16 + $0x170] sm:$0xff]
    %v1767 = vld [vmem:[#allocation16 + $0x178] sm:$0xff]
    %v1768 = vld [vmem:[#allocation18] sm:$0x1]
    %v1770 = vlaneseq
    %v1771 = vshrl.u32 %v1770, 7
    %v1772 = vsub.s32 0, %v1771
    %v1773 = vrot.slane %v1768, %v1772
    %1775 = vmatprep.subr.mxu0 0.0
    %1776 = vmatpush1.msra.mxu0 %v1735
    %1777 = vmatprep.subr.mxu0 0.0
    %1778 = vmatpush1.msra.mxu0 %v1734
    %1779 = vmatprep.subr.mxu0 0.0
    %1780 = vmatpush1.msra.mxu0 %v1733
    %1781 = vmatprep.subr.mxu0 0.0
    %1782 = vmatpush1.msra.mxu0 %v1732
    %1783 = vmatprep.subr.mxu0 0.0
    %1784 = vmatpush1.msra.mxu0 %v1731
    %1785 = vmatprep.subr.mxu0 0.0
    %1786 = vmatpush1.msra.mxu0 %v1730
    %1787 = vmatprep.subr.mxu0 0.0
    %1788 = vmatpush1.msra.mxu0 %v1729
    %1789 = vmatprep.subr.mxu0 0.0
    %1790 = vmatpush1.msra.mxu0 %v1728
    %1791 = vmatprep.subr.mxu0 0.0
    %1792 = vmatpush1.msra.mxu0 %v1727
    %1793 = vmatprep.subr.mxu0 0.0
    %1794 = vmatpush1.msra.mxu0 %v1726
    %1795 = vmatprep.subr.mxu0 0.0
    %1796 = vmatpush1.msra.mxu0 %v1725
    %1797 = vmatprep.subr.mxu0 0.0
    %1798 = vmatpush1.msra.mxu0 %v1724
    %1799 = vmatprep.subr.mxu0 0.0
    %1800 = vmatpush1.msra.mxu0 %v1723
    %1801 = vmatprep.subr.mxu0 0.0
    %1802 = vmatpush1.msra.mxu0 %v1722
    %1803 = vmatprep.subr.mxu0 0.0
    %1804 = vmatpush1.msra.mxu0 %v1721
    %1805 = vmatprep.subr.mxu0 0.0
    %1806 = vmatpush1.msra.mxu0 %v1720
    %1807 = vmatprep.subr.mxu0 0.0
    %1808 = vmatpush2.msra.mxu0 %v1751
    %1809 = vmatprep.subr.mxu0 0.0
    %1810 = vmatpush2.msra.mxu0 %v1750
    %1811 = vmatprep.subr.mxu0 0.0
    %1812 = vmatpush2.msra.mxu0 %v1749
    %1813 = vmatprep.subr.mxu0 0.0
    %1814 = vmatpush2.msra.mxu0 %v1748
    %1815 = vmatprep.subr.mxu0 0.0
    %1816 = vmatpush2.msra.mxu0 %v1747
    %1817 = vmatprep.subr.mxu0 0.0
    %1818 = vmatpush2.msra.mxu0 %v1746
    %1819 = vmatprep.subr.mxu0 0.0
    %1820 = vmatpush2.msra.mxu0 %v1745
    %1821 = vmatprep.subr.mxu0 0.0
    %1822 = vmatpush2.msra.mxu0 %v1744
    %1823 = vmatprep.subr.mxu0 0.0
    %1824 = vmatpush2.msra.mxu0 %v1743
    %1825 = vmatprep.subr.mxu0 0.0
    %1826 = vmatpush2.msra.mxu0 %v1742
    %1827 = vmatprep.subr.mxu0 0.0
    %1828 = vmatpush2.msra.mxu0 %v1741
    %1829 = vmatprep.subr.mxu0 0.0
    %1830 = vmatpush2.msra.mxu0 %v1740
    %1831 = vmatprep.subr.mxu0 0.0
    %1832 = vmatpush2.msra.mxu0 %v1739
    %1833 = vmatprep.subr.mxu0 0.0
    %1834 = vmatpush2.msra.mxu0 %v1738
    %1835 = vmatprep.subr.mxu0 0.0
    %1836 = vmatpush2.msra.mxu0 %v1737
    %1837 = vmatprep.subr.mxu0 0.0
    %1838 = vmatpush2.msra.mxu0 %v1736
    %1839 = vmatprep.mubr.f32.mxu0 %v1718
    %1840 = vmatmul.mubr.f32.gmra.mxu0 %v1717
    %v1841 = vpop.f32.mrf.mxu0
    %v1842 = vadd.f32 %v1773, %v1841
    %v1843 = vpop.f32.mrf.mxu0
    %1844 = vdwg.mxu0
    %1845 = vmatprep.subr.mxu0 0.0
    %1846 = vmatpush1.msra.mxu0 %v1767
    %1847 = vmatprep.subr.mxu0 0.0
    %1848 = vmatpush1.msra.mxu0 %v1766
    %1849 = vmatprep.subr.mxu0 0.0
    %1850 = vmatpush1.msra.mxu0 %v1765
    %1851 = vmatprep.subr.mxu0 0.0
    %1852 = vmatpush1.msra.mxu0 %v1764
    %1853 = vmatprep.subr.mxu0 0.0
    %1854 = vmatpush1.msra.mxu0 %v1763
    %1855 = vmatprep.subr.mxu0 0.0
    %1856 = vmatpush1.msra.mxu0 %v1762
    %1857 = vmatprep.subr.mxu0 0.0
    %1858 = vmatpush1.msra.mxu0 %v1761
    %1859 = vmatprep.subr.mxu0 0.0
    %1860 = vmatpush1.msra.mxu0 %v1760
    %1861 = vmatprep.subr.mxu0 0.0
    %1862 = vmatpush1.msra.mxu0 %v1759
    %1863 = vmatprep.subr.mxu0 0.0
    %1864 = vmatpush1.msra.mxu0 %v1758
    %1865 = vmatprep.subr.mxu0 0.0
    %1866 = vmatpush1.msra.mxu0 %v1757
    %1867 = vmatprep.subr.mxu0 0.0
    %1868 = vmatpush1.msra.mxu0 %v1756
    %1869 = vmatprep.subr.mxu0 0.0
    %1870 = vmatpush1.msra.mxu0 %v1755
    %1871 = vmatprep.subr.mxu0 0.0
    %1872 = vmatpush1.msra.mxu0 %v1754
    %1873 = vmatprep.subr.mxu0 0.0
    %1874 = vmatpush1.msra.mxu0 %v1753
    %1875 = vmatprep.subr.mxu0 0.0
    %1876 = vmatpush1.msra.mxu0 %v1752
    %1877 = vmatprep.subr.mxu0 0.0
    %1878 = vmatpush2.msra.mxu0 0.0
    %1879 = vmatprep.subr.mxu0 0.0
    %1880 = vmatpush2.msra.mxu0 0.0
    %1881 = vmatprep.subr.mxu0 0.0
    %1882 = vmatpush2.msra.mxu0 0.0
    %1883 = vmatprep.subr.mxu0 0.0
    %1884 = vmatpush2.msra.mxu0 0.0
    %1885 = vmatprep.subr.mxu0 0.0
    %1886 = vmatpush2.msra.mxu0 0.0
    %1887 = vmatprep.subr.mxu0 0.0
    %1888 = vmatpush2.msra.mxu0 0.0
    %1889 = vmatprep.subr.mxu0 0.0
    %1890 = vmatpush2.msra.mxu0 0.0
    %1891 = vmatprep.subr.mxu0 0.0
    %1892 = vmatpush2.msra.mxu0 0.0
    %1893 = vmatprep.subr.mxu0 0.0
    %1894 = vmatpush2.msra.mxu0 0.0
    %1895 = vmatprep.subr.mxu0 0.0
    %1896 = vmatpush2.msra.mxu0 0.0
    %1897 = vmatprep.subr.mxu0 0.0
    %1898 = vmatpush2.msra.mxu0 0.0
    %1899 = vmatprep.subr.mxu0 0.0
    %1900 = vmatpush2.msra.mxu0 0.0
    %1901 = vmatprep.subr.mxu0 0.0
    %1902 = vmatpush2.msra.mxu0 0.0
    %1903 = vmatprep.subr.mxu0 0.0
    %1904 = vmatpush2.msra.mxu0 0.0
    %1905 = vmatprep.subr.mxu0 0.0
    %1906 = vmatpush2.msra.mxu0 0.0
    %1907 = vmatprep.subr.mxu0 0.0
    %1908 = vmatpush2.msra.mxu0 0.0
    %1909 = vmatprep.mubr.f32.mxu0 0.0
    %1910 = vmatmul.mubr.f32.gmra.mxu0 %v1719
    %v1911 = vpop.f32.mrf.mxu0
    %v1912 = vadd.f32 %v1842, %v1911
    %v1913 = vpop.f32.mrf.mxu0
    %1914 = vdwg.mxu0
    %1915 = vst [vmem:[%s14] sm:$0x3] %v1912
    // Predicated region
    $region102: #{cpi_regression_forward.6} parent=1 // pred_check
      _
    $region103: #{cpi_regression_forward.6} parent=1 // pred_check_branch
      %1917 = sbr.rel (0) target = $region105
    $region104: #{cpi_regression_forward.6} parent=1 // pred_region
      _
    $region105: #{cpi_regression_forward.6} parent=1 // pred_fallthru
      _
    // Predicated region
    $region106: #{cpi_regression_forward.6} parent=1 // pred_check
      _
    $region107: #{cpi_regression_forward.6} parent=1 // pred_check_branch
      %1919 = sbr.rel (0) target = $region109
    $region108: #{cpi_regression_forward.6} parent=1 // pred_region
      _
    $region109: #{cpi_regression_forward.6} parent=1 // pred_fallthru
      _
    %1920 = vsyncpa [#allocation3], 1
    %1921 = vsyncpa [#allocation5], 1
    %1922 = vsyncpa [#allocation8], 1
    %1923 = vsyncpa [#allocation11], 1
    %1924 = vsyncpa [#allocation14], 1
    %1925 = vsyncpa [#allocation17], 1

// kernel: cpi_regression_forward.11
$region0: #{cpi_regression_forward.11}
  #allocation0 [shape = 'u32[]', space=smem, size = 0x4, offset = 0x4, fixed_abs, tag = 'smem constant byte address 0x4 - core index']
  #allocation1 [shape = 'u32[144,128]{1,0:T(1,128)}', space=vmem, size = 0x12000, scoped, tag = 'internal scratch']
  #allocation2 [shape = 'f32[16,128]{1,0:T(8,128)}', space=vmem, size = 0x2000, scoped, tag = 'scratch operand']
  %s0 = inlined_call_operand.vmem [shape: f32[16,512], index: 0, kind: input, shape index: {}]
  %s1 = inlined_call_operand.vmem [shape: f32[512,128], index: 1, kind: input, shape index: {}]
  %s2 = inlined_call_operand.vmem [shape: f32[1,128], index: 2, kind: input, shape index: {}]
  %s3 = inlined_call_operand.vmem [shape: f32[16,128], index: 3, kind: output, shape index: {}]
  %s4 = sld [smem:[#allocation0]]
  $region30: #{cpi_regression_forward.11} parent=0
    _
  %s6 = ssub.s32 1, %s4
  %s7 = scalar_select 0, %s6, %s4
  // Predicated region
  $region2: #{cpi_regression_forward.11} parent=0 // pred_check
    _
  $region3: #{cpi_regression_forward.11} parent=0 // pred_check_branch
    %9 = sbr.rel (0) target = $region5
  $region4: #{cpi_regression_forward.11} parent=0 // pred_region
    _
  $region5: #{cpi_regression_forward.11} parent=0 // pred_fallthru
    _
  // Predicated region
  $region6: #{cpi_regression_forward.11} parent=0 // pred_check
    _
  $region7: #{cpi_regression_forward.11} parent=0 // pred_check_branch
    %11 = sbr.rel (0) target = $region9
  $region8: #{cpi_regression_forward.11} parent=0 // pred_region
    _
  $region9: #{cpi_regression_forward.11} parent=0 // pred_fallthru
    _
  // Predicated region
  $region10: #{cpi_regression_forward.11} parent=0 // pred_check
    _
  $region11: #{cpi_regression_forward.11} parent=0 // pred_check_branch
    %13 = sbr.rel (0) target = $region13
  $region12: #{cpi_regression_forward.11} parent=0 // pred_region
    _
  $region13: #{cpi_regression_forward.11} parent=0 // pred_fallthru
    _
  %p14 = scmp.eq.s32.totalorder 0, 0
  // Predicated region
  $region14: #{cpi_regression_forward.11} parent=0 // pred_check
    %p15 = pneg %p14
  $region15: #{cpi_regression_forward.11} parent=0 // pred_check_branch
    %17 = sbr.rel (%p15) target = $region17
  $region16: #{cpi_regression_forward.11} parent=0 // pred_region
    %18 = vst [vmem:[#allocation2] sm:$0xff] 0.0
    %19 = vst [vmem:[#allocation2 + $0x8] sm:$0xff] 0.0
  $region17: #{cpi_regression_forward.11} parent=0 // pred_fallthru
    _
  %v20 = vld [vmem:[#allocation2] sm:$0xff]
  %v21 = vld [vmem:[#allocation2 + $0x8] sm:$0xff]
  %v22 = vld [vmem:[%s0] sm:$0xff]
  %v23 = vld [vmem:[%s0 + $0x8] sm:$0xff]
  %v24 = vld [vmem:[%s0 + $0x10] sm:$0xff]
  %v25 = vld [vmem:[%s0 + $0x18] sm:$0xff]
  %v26 = vld [vmem:[%s0 + $0x20] sm:$0xff]
  %v27 = vld [vmem:[%s0 + $0x28] sm:$0xff]
  %v28 = vld [vmem:[%s0 + $0x30] sm:$0xff]
  %v29 = vld [vmem:[%s0 + $0x38] sm:$0xff]
  %v30 = vld [vmem:[%s1] sm:$0xff]
  %v31 = vld [vmem:[%s1 + $0x8] sm:$0xff]
  %v32 = vld [vmem:[%s1 + $0x10] sm:$0xff]
  %v33 = vld [vmem:[%s1 + $0x18] sm:$0xff]
  %v34 = vld [vmem:[%s1 + $0x20] sm:$0xff]
  %v35 = vld [vmem:[%s1 + $0x28] sm:$0xff]
  %v36 = vld [vmem:[%s1 + $0x30] sm:$0xff]
  %v37 = vld [vmem:[%s1 + $0x38] sm:$0xff]
  %v38 = vld [vmem:[%s1 + $0x40] sm:$0xff]
  %v39 = vld [vmem:[%s1 + $0x48] sm:$0xff]
  %v40 = vld [vmem:[%s1 + $0x50] sm:$0xff]
  %v41 = vld [vmem:[%s1 + $0x58] sm:$0xff]
  %v42 = vld [vmem:[%s1 + $0x60] sm:$0xff]
  %v43 = vld [vmem:[%s1 + $0x68] sm:$0xff]
  %v44 = vld [vmem:[%s1 + $0x70] sm:$0xff]
  %v45 = vld [vmem:[%s1 + $0x78] sm:$0xff]
  %v46 = vld [vmem:[%s1 + $0x80] sm:$0xff]
  %v47 = vld [vmem:[%s1 + $0x88] sm:$0xff]
  %v48 = vld [vmem:[%s1 + $0x90] sm:$0xff]
  %v49 = vld [vmem:[%s1 + $0x98] sm:$0xff]
  %v50 = vld [vmem:[%s1 + $0xa0] sm:$0xff]
  %v51 = vld [vmem:[%s1 + $0xa8] sm:$0xff]
  %v52 = vld [vmem:[%s1 + $0xb0] sm:$0xff]
  %v53 = vld [vmem:[%s1 + $0xb8] sm:$0xff]
  %v54 = vld [vmem:[%s1 + $0xc0] sm:$0xff]
  %v55 = vld [vmem:[%s1 + $0xc8] sm:$0xff]
  %v56 = vld [vmem:[%s1 + $0xd0] sm:$0xff]
  %v57 = vld [vmem:[%s1 + $0xd8] sm:$0xff]
  %v58 = vld [vmem:[%s1 + $0xe0] sm:$0xff]
  %v59 = vld [vmem:[%s1 + $0xe8] sm:$0xff]
  %v60 = vld [vmem:[%s1 + $0xf0] sm:$0xff]
  %v61 = vld [vmem:[%s1 + $0xf8] sm:$0xff]
  %v62 = vld [vmem:[%s1 + $0x100] sm:$0xff]
  %v63 = vld [vmem:[%s1 + $0x108] sm:$0xff]
  %v64 = vld [vmem:[%s1 + $0x110] sm:$0xff]
  %v65 = vld [vmem:[%s1 + $0x118] sm:$0xff]
  %v66 = vld [vmem:[%s1 + $0x120] sm:$0xff]
  %v67 = vld [vmem:[%s1 + $0x128] sm:$0xff]
  %v68 = vld [vmem:[%s1 + $0x130] sm:$0xff]
  %v69 = vld [vmem:[%s1 + $0x138] sm:$0xff]
  %v70 = vld [vmem:[%s1 + $0x140] sm:$0xff]
  %v71 = vld [vmem:[%s1 + $0x148] sm:$0xff]
  %v72 = vld [vmem:[%s1 + $0x150] sm:$0xff]
  %v73 = vld [vmem:[%s1 + $0x158] sm:$0xff]
  %v74 = vld [vmem:[%s1 + $0x160] sm:$0xff]
  %v75 = vld [vmem:[%s1 + $0x168] sm:$0xff]
  %v76 = vld [vmem:[%s1 + $0x170] sm:$0xff]
  %v77 = vld [vmem:[%s1 + $0x178] sm:$0xff]
  %v78 = vld [vmem:[%s1 + $0x180] sm:$0xff]
  %v79 = vld [vmem:[%s1 + $0x188] sm:$0xff]
  %v80 = vld [vmem:[%s1 + $0x190] sm:$0xff]
  %v81 = vld [vmem:[%s1 + $0x198] sm:$0xff]
  %v82 = vld [vmem:[%s1 + $0x1a0] sm:$0xff]
  %v83 = vld [vmem:[%s1 + $0x1a8] sm:$0xff]
  %v84 = vld [vmem:[%s1 + $0x1b0] sm:$0xff]
  %v85 = vld [vmem:[%s1 + $0x1b8] sm:$0xff]
  %v86 = vld [vmem:[%s1 + $0x1c0] sm:$0xff]
  %v87 = vld [vmem:[%s1 + $0x1c8] sm:$0xff]
  %v88 = vld [vmem:[%s1 + $0x1d0] sm:$0xff]
  %v89 = vld [vmem:[%s1 + $0x1d8] sm:$0xff]
  %v90 = vld [vmem:[%s1 + $0x1e0] sm:$0xff]
  %v91 = vld [vmem:[%s1 + $0x1e8] sm:$0xff]
  %v92 = vld [vmem:[%s1 + $0x1f0] sm:$0xff]
  %v93 = vld [vmem:[%s1 + $0x1f8] sm:$0xff]
  %94 = vmatprep.subr.mxu0 0.0
  %95 = vmatpush1.msra.mxu0 %v45
  %96 = vmatprep.subr.mxu0 0.0
  %97 = vmatpush1.msra.mxu0 %v44
  %98 = vmatprep.subr.mxu0 0.0
  %99 = vmatpush1.msra.mxu0 %v43
  %100 = vmatprep.subr.mxu0 0.0
  %101 = vmatpush1.msra.mxu0 %v42
  %102 = vmatprep.subr.mxu0 0.0
  %103 = vmatpush1.msra.mxu0 %v41
  %104 = vmatprep.subr.mxu0 0.0
  %105 = vmatpush1.msra.mxu0 %v40
  %106 = vmatprep.subr.mxu0 0.0
  %107 = vmatpush1.msra.mxu0 %v39
  %108 = vmatprep.subr.mxu0 0.0
  %109 = vmatpush1.msra.mxu0 %v38
  %110 = vmatprep.subr.mxu0 0.0
  %111 = vmatpush1.msra.mxu0 %v37
  %112 = vmatprep.subr.mxu0 0.0
  %113 = vmatpush1.msra.mxu0 %v36
  %114 = vmatprep.subr.mxu0 0.0
  %115 = vmatpush1.msra.mxu0 %v35
  %116 = vmatprep.subr.mxu0 0.0
  %117 = vmatpush1.msra.mxu0 %v34
  %118 = vmatprep.subr.mxu0 0.0
  %119 = vmatpush1.msra.mxu0 %v33
  %120 = vmatprep.subr.mxu0 0.0
  %121 = vmatpush1.msra.mxu0 %v32
  %122 = vmatprep.subr.mxu0 0.0
  %123 = vmatpush1.msra.mxu0 %v31
  %124 = vmatprep.subr.mxu0 0.0
  %125 = vmatpush1.msra.mxu0 %v30
  %126 = vmatprep.subr.mxu0 0.0
  %127 = vmatpush2.msra.mxu0 %v61
  %128 = vmatprep.subr.mxu0 0.0
  %129 = vmatpush2.msra.mxu0 %v60
  %130 = vmatprep.subr.mxu0 0.0
  %131 = vmatpush2.msra.mxu0 %v59
  %132 = vmatprep.subr.mxu0 0.0
  %133 = vmatpush2.msra.mxu0 %v58
  %134 = vmatprep.subr.mxu0 0.0
  %135 = vmatpush2.msra.mxu0 %v57
  %136 = vmatprep.subr.mxu0 0.0
  %137 = vmatpush2.msra.mxu0 %v56
  %138 = vmatprep.subr.mxu0 0.0
  %139 = vmatpush2.msra.mxu0 %v55
  %140 = vmatprep.subr.mxu0 0.0
  %141 = vmatpush2.msra.mxu0 %v54
  %142 = vmatprep.subr.mxu0 0.0
  %143 = vmatpush2.msra.mxu0 %v53
  %144 = vmatprep.subr.mxu0 0.0
  %145 = vmatpush2.msra.mxu0 %v52
  %146 = vmatprep.subr.mxu0 0.0
  %147 = vmatpush2.msra.mxu0 %v51
  %148 = vmatprep.subr.mxu0 0.0
  %149 = vmatpush2.msra.mxu0 %v50
  %150 = vmatprep.subr.mxu0 0.0
  %151 = vmatpush2.msra.mxu0 %v49
  %152 = vmatprep.subr.mxu0 0.0
  %153 = vmatpush2.msra.mxu0 %v48
  %154 = vmatprep.subr.mxu0 0.0
  %155 = vmatpush2.msra.mxu0 %v47
  %156 = vmatprep.subr.mxu0 0.0
  %157 = vmatpush2.msra.mxu0 %v46
  %158 = vmatprep.mubr.f32.mxu0 %v23
  %159 = vmatmul.mubr.f32.gmra.mxu0 %v22
  %v160 = vpop.f32.mrf.mxu0
  %v161 = vadd.f32 0.0, %v160
  %v162 = vpop.f32.mrf.mxu0
  %163 = vmatprep.mubr.f32.mxu0 %v27
  %164 = vmatmul.mubr.f32.gmra.mxu0 %v26
  %v165 = vpop.f32.mrf.mxu0
  %v166 = vadd.f32 0.0, %v165
  %v167 = vpop.f32.mrf.mxu0
  %168 = vdwg.mxu0
  %169 = vmatprep.subr.mxu0 0.0
  %170 = vmatpush1.msra.mxu0 %v77
  %171 = vmatprep.subr.mxu0 0.0
  %172 = vmatpush1.msra.mxu0 %v76
  %173 = vmatprep.subr.mxu0 0.0
  %174 = vmatpush1.msra.mxu0 %v75
  %175 = vmatprep.subr.mxu0 0.0
  %176 = vmatpush1.msra.mxu0 %v74
  %177 = vmatprep.subr.mxu0 0.0
  %178 = vmatpush1.msra.mxu0 %v73
  %179 = vmatprep.subr.mxu0 0.0
  %180 = vmatpush1.msra.mxu0 %v72
  %181 = vmatprep.subr.mxu0 0.0
  %182 = vmatpush1.msra.mxu0 %v71
  %183 = vmatprep.subr.mxu0 0.0
  %184 = vmatpush1.msra.mxu0 %v70
  %185 = vmatprep.subr.mxu0 0.0
  %186 = vmatpush1.msra.mxu0 %v69
  %187 = vmatprep.subr.mxu0 0.0
  %188 = vmatpush1.msra.mxu0 %v68
  %189 = vmatprep.subr.mxu0 0.0
  %190 = vmatpush1.msra.mxu0 %v67
  %191 = vmatprep.subr.mxu0 0.0
  %192 = vmatpush1.msra.mxu0 %v66
  %193 = vmatprep.subr.mxu0 0.0
  %194 = vmatpush1.msra.mxu0 %v65
  %195 = vmatprep.subr.mxu0 0.0
  %196 = vmatpush1.msra.mxu0 %v64
  %197 = vmatprep.subr.mxu0 0.0
  %198 = vmatpush1.msra.mxu0 %v63
  %199 = vmatprep.subr.mxu0 0.0
  %200 = vmatpush1.msra.mxu0 %v62
  %201 = vmatprep.subr.mxu0 0.0
  %202 = vmatpush2.msra.mxu0 %v93
  %203 = vmatprep.subr.mxu0 0.0
  %204 = vmatpush2.msra.mxu0 %v92
  %205 = vmatprep.subr.mxu0 0.0
  %206 = vmatpush2.msra.mxu0 %v91
  %207 = vmatprep.subr.mxu0 0.0
  %208 = vmatpush2.msra.mxu0 %v90
  %209 = vmatprep.subr.mxu0 0.0
  %210 = vmatpush2.msra.mxu0 %v89
  %211 = vmatprep.subr.mxu0 0.0
  %212 = vmatpush2.msra.mxu0 %v88
  %213 = vmatprep.subr.mxu0 0.0
  %214 = vmatpush2.msra.mxu0 %v87
  %215 = vmatprep.subr.mxu0 0.0
  %216 = vmatpush2.msra.mxu0 %v86
  %217 = vmatprep.subr.mxu0 0.0
  %218 = vmatpush2.msra.mxu0 %v85
  %219 = vmatprep.subr.mxu0 0.0
  %220 = vmatpush2.msra.mxu0 %v84
  %221 = vmatprep.subr.mxu0 0.0
  %222 = vmatpush2.msra.mxu0 %v83
  %223 = vmatprep.subr.mxu0 0.0
  %224 = vmatpush2.msra.mxu0 %v82
  %225 = vmatprep.subr.mxu0 0.0
  %226 = vmatpush2.msra.mxu0 %v81
  %227 = vmatprep.subr.mxu0 0.0
  %228 = vmatpush2.msra.mxu0 %v80
  %229 = vmatprep.subr.mxu0 0.0
  %230 = vmatpush2.msra.mxu0 %v79
  %231 = vmatprep.subr.mxu0 0.0
  %232 = vmatpush2.msra.mxu0 %v78
  %233 = vmatprep.mubr.f32.mxu0 %v25
  %234 = vmatmul.mubr.f32.gmra.mxu0 %v24
  %v235 = vpop.f32.mrf.mxu0
  %v236 = vadd.f32 %v161, %v235
  %v237 = vpop.f32.mrf.mxu0
  %238 = vmatprep.mubr.f32.mxu0 %v29
  %239 = vmatmul.mubr.f32.gmra.mxu0 %v28
  %v240 = vpop.f32.mrf.mxu0
  %v241 = vadd.f32 %v166, %v240
  %v242 = vpop.f32.mrf.mxu0
  %243 = vdwg.mxu0
  %v244 = vadd.f32 %v20, %v236
  %v245 = vadd.f32 %v21, %v241
  %246 = vst [vmem:[#allocation2] sm:$0xff] %v244
  %247 = vst [vmem:[#allocation2 + $0x8] sm:$0xff] %v245
  // Predicated region
  $region18: #{cpi_regression_forward.11} parent=0 // pred_check
    %p248 = pneg %p14
  $region19: #{cpi_regression_forward.11} parent=0 // pred_check_branch
    %250 = sbr.rel (%p248) target = $region21
  $region20: #{cpi_regression_forward.11} parent=0 // pred_region
    %v251 = vld [vmem:[#allocation2] sm:$0xff]
    %v252 = vld [vmem:[#allocation2 + $0x8] sm:$0xff]
    %v253 = vld [vmem:[%s2] sm:$0x1]
    %v255 = vlaneseq
    %v256 = vshrl.u32 %v255, 7
    %v257 = vsub.s32 0, %v256
    %v258 = vrot.slane %v253, %v257
    %v260 = vadd.f32 %v251, %v258
    %v261 = vadd.f32 %v252, %v258
    %262 = vst [vmem:[%s3] sm:$0xff] %v260
    %263 = vst [vmem:[%s3 + $0x8] sm:$0xff] %v261
  $region21: #{cpi_regression_forward.11} parent=0 // pred_fallthru
    _
  // Predicated region
  $region22: #{cpi_regression_forward.11} parent=0 // pred_check
    _
  $region23: #{cpi_regression_forward.11} parent=0 // pred_check_branch
    %265 = sbr.rel (0) target = $region25
  $region24: #{cpi_regression_forward.11} parent=0 // pred_region
    _
  $region25: #{cpi_regression_forward.11} parent=0 // pred_fallthru
    _
  // Predicated region
  $region26: #{cpi_regression_forward.11} parent=0 // pred_check
    _
  $region27: #{cpi_regression_forward.11} parent=0 // pred_check_branch
    %267 = sbr.rel (0) target = $region29
  $region28: #{cpi_regression_forward.11} parent=0 // pred_region
    _
  $region29: #{cpi_regression_forward.11} parent=0 // pred_fallthru
    _

// kernel: cpi_regression_forward.10
$region0: #{cpi_regression_forward.10}
  #allocation0 [shape = 'u32[]', space=smem, size = 0x4, offset = 0x4, fixed_abs, tag = 'smem constant byte address 0x4 - core index']
  #allocation1 [shape = 'u32[144,128]{1,0:T(1,128)}', space=vmem, size = 0x12000, scoped, tag = 'internal scratch']
  #allocation2 [shape = 'f32[16,512]{1,0:T(8,128)}', space=vmem, size = 0x8000, scoped, tag = 'scratch operand']
  %s0 = inlined_call_operand.vmem [shape: bf16[16,1408], index: 0, kind: input, shape index: {}]
  %s1 = inlined_call_operand.vmem [shape: bf16[1408,512], index: 1, kind: input, shape index: {}]
  %s2 = inlined_call_operand.vmem [shape: f32[1,512], index: 2, kind: input, shape index: {}]
  %s3 = inlined_call_operand.vmem [shape: f32[16,512], index: 3, kind: output, shape index: {}]
  %s4 = sld [smem:[#allocation0]]
  $region30: #{cpi_regression_forward.10} parent=0
    _
  %s6 = ssub.s32 1, %s4
  %s7 = scalar_select 0, %s6, %s4
  // Predicated region
  $region2: #{cpi_regression_forward.10} parent=0 // pred_check
    _
  $region3: #{cpi_regression_forward.10} parent=0 // pred_check_branch
    %9 = sbr.rel (0) target = $region5
  $region4: #{cpi_regression_forward.10} parent=0 // pred_region
    _
  $region5: #{cpi_regression_forward.10} parent=0 // pred_fallthru
    _
  // Predicated region
  $region6: #{cpi_regression_forward.10} parent=0 // pred_check
    _
  $region7: #{cpi_regression_forward.10} parent=0 // pred_check_branch
    %11 = sbr.rel (0) target = $region9
  $region8: #{cpi_regression_forward.10} parent=0 // pred_region
    _
  $region9: #{cpi_regression_forward.10} parent=0 // pred_fallthru
    _
  // Predicated region
  $region10: #{cpi_regression_forward.10} parent=0 // pred_check
    _
  $region11: #{cpi_regression_forward.10} parent=0 // pred_check_branch
    %13 = sbr.rel (0) target = $region13
  $region12: #{cpi_regression_forward.10} parent=0 // pred_region
    _
  $region13: #{cpi_regression_forward.10} parent=0 // pred_fallthru
    _
  %p15 = scmp.eq.s32.totalorder 0, 0
  // Predicated region
  $region14: #{cpi_regression_forward.10} parent=0 // pred_check
    %p16 = pneg %p15
  $region15: #{cpi_regression_forward.10} parent=0 // pred_check_branch
    %18 = sbr.rel (%p16) target = $region17
  $region16: #{cpi_regression_forward.10} parent=0 // pred_region
    %19 = vst [vmem:[#allocation2] sm:$0xff] 0.0
    %20 = vst [vmem:[#allocation2 + $0x8] sm:$0xff] 0.0
    %21 = vst [vmem:[#allocation2 + $0x10] sm:$0xff] 0.0
    %22 = vst [vmem:[#allocation2 + $0x18] sm:$0xff] 0.0
    %23 = vst [vmem:[#allocation2 + $0x20] sm:$0xff] 0.0
    %24 = vst [vmem:[#allocation2 + $0x28] sm:$0xff] 0.0
    %25 = vst [vmem:[#allocation2 + $0x30] sm:$0xff] 0.0
    %26 = vst [vmem:[#allocation2 + $0x38] sm:$0xff] 0.0
  $region17: #{cpi_regression_forward.10} parent=0 // pred_fallthru
    _
  %v27 = vld [vmem:[#allocation2] sm:$0xff]
  %v28 = vld [vmem:[#allocation2 + $0x8] sm:$0xff]
  %v29 = vld [vmem:[#allocation2 + $0x10] sm:$0xff]
  %v30 = vld [vmem:[#allocation2 + $0x18] sm:$0xff]
  %v31 = vld [vmem:[#allocation2 + $0x20] sm:$0xff]
  %v32 = vld [vmem:[#allocation2 + $0x28] sm:$0xff]
  %v33 = vld [vmem:[#allocation2 + $0x30] sm:$0xff]
  %v34 = vld [vmem:[#allocation2 + $0x38] sm:$0xff]
  %v35 = vld [vmem:[%s0] sm:$0xff]
  %v36 = vld [vmem:[%s0 + $0x8] sm:$0xff]
  %v37 = vld [vmem:[%s0 + $0x10] sm:$0xff]
  %v38 = vld [vmem:[%s0 + $0x18] sm:$0xff]
  %v39 = vld [vmem:[%s0 + $0x20] sm:$0xff]
  %v40 = vld [vmem:[%s0 + $0x28] sm:$0xf]
  %v41 = vld [vmem:[%s0 + $0x2c] sm:$0xff]
  %v42 = vld [vmem:[%s0 + $0x34] sm:$0xff]
  %v43 = vld [vmem:[%s0 + $0x3c] sm:$0xff]
  %v44 = vld [vmem:[%s0 + $0x44] sm:$0xff]
  %v45 = vld [vmem:[%s0 + $0x4c] sm:$0xff]
  %v46 = vld [vmem:[%s0 + $0x54] sm:$0xf]
  %v47 = vld [vmem:[%s1] sm:$0xff]
  %v48 = vld [vmem:[%s1 + $0x8] sm:$0xff]
  %v49 = vld [vmem:[%s1 + $0x10] sm:$0xff]
  %v50 = vld [vmem:[%s1 + $0x18] sm:$0xff]
  %v51 = vld [vmem:[%s1 + $0x20] sm:$0xff]
  %v52 = vld [vmem:[%s1 + $0x28] sm:$0xff]
  %v53 = vld [vmem:[%s1 + $0x30] sm:$0xff]
  %v54 = vld [vmem:[%s1 + $0x38] sm:$0xff]
  %v55 = vld [vmem:[%s1 + $0x40] sm:$0xff]
  %v56 = vld [vmem:[%s1 + $0x48] sm:$0xff]
  %v57 = vld [vmem:[%s1 + $0x50] sm:$0xff]
  %v58 = vld [vmem:[%s1 + $0x58] sm:$0xff]
  %v59 = vld [vmem:[%s1 + $0x60] sm:$0xff]
  %v60 = vld [vmem:[%s1 + $0x68] sm:$0xff]
  %v61 = vld [vmem:[%s1 + $0x70] sm:$0xff]
  %v62 = vld [vmem:[%s1 + $0x78] sm:$0xff]
  %v63 = vld [vmem:[%s1 + $0x80] sm:$0xff]
  %v64 = vld [vmem:[%s1 + $0x88] sm:$0xff]
  %v65 = vld [vmem:[%s1 + $0x90] sm:$0xff]
  %v66 = vld [vmem:[%s1 + $0x98] sm:$0xff]
  %v67 = vld [vmem:[%s1 + $0xa0] sm:$0xff]
  %v68 = vld [vmem:[%s1 + $0xa8] sm:$0xff]
  %v69 = vld [vmem:[%s1 + $0xb0] sm:$0xff]
  %v70 = vld [vmem:[%s1 + $0xb8] sm:$0xff]
  %v71 = vld [vmem:[%s1 + $0xc0] sm:$0xff]
  %v72 = vld [vmem:[%s1 + $0xc8] sm:$0xff]
  %v73 = vld [vmem:[%s1 + $0xd0] sm:$0xff]
  %v74 = vld [vmem:[%s1 + $0xd8] sm:$0xff]
  %v75 = vld [vmem:[%s1 + $0xe0] sm:$0xff]
  %v76 = vld [vmem:[%s1 + $0xe8] sm:$0xff]
  %v77 = vld [vmem:[%s1 + $0xf0] sm:$0xff]
  %v78 = vld [vmem:[%s1 + $0xf8] sm:$0xff]
  %v79 = vld [vmem:[%s1 + $0x100] sm:$0xff]
  %v80 = vld [vmem:[%s1 + $0x108] sm:$0xff]
  %v81 = vld [vmem:[%s1 + $0x110] sm:$0xff]
  %v82 = vld [vmem:[%s1 + $0x118] sm:$0xff]
  %v83 = vld [vmem:[%s1 + $0x120] sm:$0xff]
  %v84 = vld [vmem:[%s1 + $0x128] sm:$0xff]
  %v85 = vld [vmem:[%s1 + $0x130] sm:$0xff]
  %v86 = vld [vmem:[%s1 + $0x138] sm:$0xff]
  %v87 = vld [vmem:[%s1 + $0x140] sm:$0xff]
  %v88 = vld [vmem:[%s1 + $0x148] sm:$0xff]
  %v89 = vld [vmem:[%s1 + $0x150] sm:$0xff]
  %v90 = vld [vmem:[%s1 + $0x158] sm:$0xff]
  %v91 = vld [vmem:[%s1 + $0x160] sm:$0xff]
  %v92 = vld [vmem:[%s1 + $0x168] sm:$0xff]
  %v93 = vld [vmem:[%s1 + $0x170] sm:$0xff]
  %v94 = vld [vmem:[%s1 + $0x178] sm:$0xff]
  %v95 = vld [vmem:[%s1 + $0x180] sm:$0xff]
  %v96 = vld [vmem:[%s1 + $0x188] sm:$0xff]
  %v97 = vld [vmem:[%s1 + $0x190] sm:$0xff]
  %v98 = vld [vmem:[%s1 + $0x198] sm:$0xff]
  %v99 = vld [vmem:[%s1 + $0x1a0] sm:$0xff]
  %v100 = vld [vmem:[%s1 + $0x1a8] sm:$0xff]
  %v101 = vld [vmem:[%s1 + $0x1b0] sm:$0xff]
  %v102 = vld [vmem:[%s1 + $0x1b8] sm:$0xff]
  %v103 = vld [vmem:[%s1 + $0x1c0] sm:$0xff]
  %v104 = vld [vmem:[%s1 + $0x1c8] sm:$0xff]
  %v105 = vld [vmem:[%s1 + $0x1d0] sm:$0xff]
  %v106 = vld [vmem:[%s1 + $0x1d8] sm:$0xff]
  %v107 = vld [vmem:[%s1 + $0x1e0] sm:$0xff]
  %v108 = vld [vmem:[%s1 + $0x1e8] sm:$0xff]
  %v109 = vld [vmem:[%s1 + $0x1f0] sm:$0xff]
  %v110 = vld [vmem:[%s1 + $0x1f8] sm:$0xff]
  %v111 = vld [vmem:[%s1 + $0x200] sm:$0xff]
  %v112 = vld [vmem:[%s1 + $0x208] sm:$0xff]
  %v113 = vld [vmem:[%s1 + $0x210] sm:$0xff]
  %v114 = vld [vmem:[%s1 + $0x218] sm:$0xff]
  %v115 = vld [vmem:[%s1 + $0x220] sm:$0xff]
  %v116 = vld [vmem:[%s1 + $0x228] sm:$0xff]
  %v117 = vld [vmem:[%s1 + $0x230] sm:$0xff]
  %v118 = vld [vmem:[%s1 + $0x238] sm:$0xff]
  %v119 = vld [vmem:[%s1 + $0x240] sm:$0xff]
  %v120 = vld [vmem:[%s1 + $0x248] sm:$0xff]
  %v121 = vld [vmem:[%s1 + $0x250] sm:$0xff]
  %v122 = vld [vmem:[%s1 + $0x258] sm:$0xff]
  %v123 = vld [vmem:[%s1 + $0x260] sm:$0xff]
  %v124 = vld [vmem:[%s1 + $0x268] sm:$0xff]
  %v125 = vld [vmem:[%s1 + $0x270] sm:$0xff]
  %v126 = vld [vmem:[%s1 + $0x278] sm:$0xff]
  %v127 = vld [vmem:[%s1 + $0x280] sm:$0xff]
  %v128 = vld [vmem:[%s1 + $0x288] sm:$0xff]
  %v129 = vld [vmem:[%s1 + $0x290] sm:$0xff]
  %v130 = vld [vmem:[%s1 + $0x298] sm:$0xff]
  %v131 = vld [vmem:[%s1 + $0x2a0] sm:$0xff]
  %v132 = vld [vmem:[%s1 + $0x2a8] sm:$0xff]
  %v133 = vld [vmem:[%s1 + $0x2b0] sm:$0xff]
  %v134 = vld [vmem:[%s1 + $0x2b8] sm:$0xff]
  %v135 = vld [vmem:[%s1 + $0x2c0] sm:$0xff]
  %v136 = vld [vmem:[%s1 + $0x2c8] sm:$0xff]
  %v137 = vld [vmem:[%s1 + $0x2d0] sm:$0xff]
  %v138 = vld [vmem:[%s1 + $0x2d8] sm:$0xff]
  %v139 = vld [vmem:[%s1 + $0x2e0] sm:$0xff]
  %v140 = vld [vmem:[%s1 + $0x2e8] sm:$0xff]
  %v141 = vld [vmem:[%s1 + $0x2f0] sm:$0xff]
  %v142 = vld [vmem:[%s1 + $0x2f8] sm:$0xff]
  %v143 = vld [vmem:[%s1 + $0x300] sm:$0xff]
  %v144 = vld [vmem:[%s1 + $0x308] sm:$0xff]
  %v145 = vld [vmem:[%s1 + $0x310] sm:$0xff]
  %v146 = vld [vmem:[%s1 + $0x318] sm:$0xff]
  %v147 = vld [vmem:[%s1 + $0x320] sm:$0xff]
  %v148 = vld [vmem:[%s1 + $0x328] sm:$0xff]
  %v149 = vld [vmem:[%s1 + $0x330] sm:$0xff]
  %v150 = vld [vmem:[%s1 + $0x338] sm:$0xff]
  %v151 = vld [vmem:[%s1 + $0x340] sm:$0xff]
  %v152 = vld [vmem:[%s1 + $0x348] sm:$0xff]
  %v153 = vld [vmem:[%s1 + $0x350] sm:$0xff]
  %v154 = vld [vmem:[%s1 + $0x358] sm:$0xff]
  %v155 = vld [vmem:[%s1 + $0x360] sm:$0xff]
  %v156 = vld [vmem:[%s1 + $0x368] sm:$0xff]
  %v157 = vld [vmem:[%s1 + $0x370] sm:$0xff]
  %v158 = vld [vmem:[%s1 + $0x378] sm:$0xff]
  %v159 = vld [vmem:[%s1 + $0x380] sm:$0xff]
  %v160 = vld [vmem:[%s1 + $0x388] sm:$0xff]
  %v161 = vld [vmem:[%s1 + $0x390] sm:$0xff]
  %v162 = vld [vmem:[%s1 + $0x398] sm:$0xff]
  %v163 = vld [vmem:[%s1 + $0x3a0] sm:$0xff]
  %v164 = vld [vmem:[%s1 + $0x3a8] sm:$0xff]
  %v165 = vld [vmem:[%s1 + $0x3b0] sm:$0xff]
  %v166 = vld [vmem:[%s1 + $0x3b8] sm:$0xff]
  %v167 = vld [vmem:[%s1 + $0x3c0] sm:$0xff]
  %v168 = vld [vmem:[%s1 + $0x3c8] sm:$0xff]
  %v169 = vld [vmem:[%s1 + $0x3d0] sm:$0xff]
  %v170 = vld [vmem:[%s1 + $0x3d8] sm:$0xff]
  %v171 = vld [vmem:[%s1 + $0x3e0] sm:$0xff]
  %v172 = vld [vmem:[%s1 + $0x3e8] sm:$0xff]
  %v173 = vld [vmem:[%s1 + $0x3f0] sm:$0xff]
  %v174 = vld [vmem:[%s1 + $0x3f8] sm:$0xff]
  %v175 = vld [vmem:[%s1 + $0x400] sm:$0xff]
  %v176 = vld [vmem:[%s1 + $0x408] sm:$0xff]
  %v177 = vld [vmem:[%s1 + $0x410] sm:$0xff]
  %v178 = vld [vmem:[%s1 + $0x418] sm:$0xff]
  %v179 = vld [vmem:[%s1 + $0x420] sm:$0xff]
  %v180 = vld [vmem:[%s1 + $0x428] sm:$0xff]
  %v181 = vld [vmem:[%s1 + $0x430] sm:$0xff]
  %v182 = vld [vmem:[%s1 + $0x438] sm:$0xff]
  %v183 = vld [vmem:[%s1 + $0x440] sm:$0xff]
  %v184 = vld [vmem:[%s1 + $0x448] sm:$0xff]
  %v185 = vld [vmem:[%s1 + $0x450] sm:$0xff]
  %v186 = vld [vmem:[%s1 + $0x458] sm:$0xff]
  %v187 = vld [vmem:[%s1 + $0x460] sm:$0xff]
  %v188 = vld [vmem:[%s1 + $0x468] sm:$0xff]
  %v189 = vld [vmem:[%s1 + $0x470] sm:$0xff]
  %v190 = vld [vmem:[%s1 + $0x478] sm:$0xff]
  %v191 = vld [vmem:[%s1 + $0x480] sm:$0xff]
  %v192 = vld [vmem:[%s1 + $0x488] sm:$0xff]
  %v193 = vld [vmem:[%s1 + $0x490] sm:$0xff]
  %v194 = vld [vmem:[%s1 + $0x498] sm:$0xff]
  %v195 = vld [vmem:[%s1 + $0x4a0] sm:$0xff]
  %v196 = vld [vmem:[%s1 + $0x4a8] sm:$0xff]
  %v197 = vld [vmem:[%s1 + $0x4b0] sm:$0xff]
  %v198 = vld [vmem:[%s1 + $0x4b8] sm:$0xff]
  %v199 = vld [vmem:[%s1 + $0x4c0] sm:$0xff]
  %v200 = vld [vmem:[%s1 + $0x4c8] sm:$0xff]
  %v201 = vld [vmem:[%s1 + $0x4d0] sm:$0xff]
  %v202 = vld [vmem:[%s1 + $0x4d8] sm:$0xff]
  %v203 = vld [vmem:[%s1 + $0x4e0] sm:$0xff]
  %v204 = vld [vmem:[%s1 + $0x4e8] sm:$0xff]
  %v205 = vld [vmem:[%s1 + $0x4f0] sm:$0xff]
  %v206 = vld [vmem:[%s1 + $0x4f8] sm:$0xff]
  %v207 = vld [vmem:[%s1 + $0x500] sm:$0xff]
  %v208 = vld [vmem:[%s1 + $0x508] sm:$0xff]
  %v209 = vld [vmem:[%s1 + $0x510] sm:$0xff]
  %v210 = vld [vmem:[%s1 + $0x518] sm:$0xff]
  %v211 = vld [vmem:[%s1 + $0x520] sm:$0xff]
  %v212 = vld [vmem:[%s1 + $0x528] sm:$0xff]
  %v213 = vld [vmem:[%s1 + $0x530] sm:$0xff]
  %v214 = vld [vmem:[%s1 + $0x538] sm:$0xff]
  %v215 = vld [vmem:[%s1 + $0x540] sm:$0xff]
  %v216 = vld [vmem:[%s1 + $0x548] sm:$0xff]
  %v217 = vld [vmem:[%s1 + $0x550] sm:$0xff]
  %v218 = vld [vmem:[%s1 + $0x558] sm:$0xff]
  %v219 = vld [vmem:[%s1 + $0x560] sm:$0xff]
  %v220 = vld [vmem:[%s1 + $0x568] sm:$0xff]
  %v221 = vld [vmem:[%s1 + $0x570] sm:$0xff]
  %v222 = vld [vmem:[%s1 + $0x578] sm:$0xff]
  %v223 = vld [vmem:[%s1 + $0x580] sm:$0xff]
  %v224 = vld [vmem:[%s1 + $0x588] sm:$0xff]
  %v225 = vld [vmem:[%s1 + $0x590] sm:$0xff]
  %v226 = vld [vmem:[%s1 + $0x598] sm:$0xff]
  %v227 = vld [vmem:[%s1 + $0x5a0] sm:$0xff]
  %v228 = vld [vmem:[%s1 + $0x5a8] sm:$0xff]
  %v229 = vld [vmem:[%s1 + $0x5b0] sm:$0xff]
  %v230 = vld [vmem:[%s1 + $0x5b8] sm:$0xff]
  %v231 = vld [vmem:[%s1 + $0x5c0] sm:$0xff]
  %v232 = vld [vmem:[%s1 + $0x5c8] sm:$0xff]
  %v233 = vld [vmem:[%s1 + $0x5d0] sm:$0xff]
  %v234 = vld [vmem:[%s1 + $0x5d8] sm:$0xff]
  %v235 = vld [vmem:[%s1 + $0x5e0] sm:$0xff]
  %v236 = vld [vmem:[%s1 + $0x5e8] sm:$0xff]
  %v237 = vld [vmem:[%s1 + $0x5f0] sm:$0xff]
  %v238 = vld [vmem:[%s1 + $0x5f8] sm:$0xff]
  %v239 = vld [vmem:[%s1 + $0x600] sm:$0xff]
  %v240 = vld [vmem:[%s1 + $0x608] sm:$0xff]
  %v241 = vld [vmem:[%s1 + $0x610] sm:$0xff]
  %v242 = vld [vmem:[%s1 + $0x618] sm:$0xff]
  %v243 = vld [vmem:[%s1 + $0x620] sm:$0xff]
  %v244 = vld [vmem:[%s1 + $0x628] sm:$0xff]
  %v245 = vld [vmem:[%s1 + $0x630] sm:$0xff]
  %v246 = vld [vmem:[%s1 + $0x638] sm:$0xff]
  %v247 = vld [vmem:[%s1 + $0x640] sm:$0xff]
  %v248 = vld [vmem:[%s1 + $0x648] sm:$0xff]
  %v249 = vld [vmem:[%s1 + $0x650] sm:$0xff]
  %v250 = vld [vmem:[%s1 + $0x658] sm:$0xff]
  %v251 = vld [vmem:[%s1 + $0x660] sm:$0xff]
  %v252 = vld [vmem:[%s1 + $0x668] sm:$0xff]
  %v253 = vld [vmem:[%s1 + $0x670] sm:$0xff]
  %v254 = vld [vmem:[%s1 + $0x678] sm:$0xff]
  %v255 = vld [vmem:[%s1 + $0x680] sm:$0xff]
  %v256 = vld [vmem:[%s1 + $0x688] sm:$0xff]
  %v257 = vld [vmem:[%s1 + $0x690] sm:$0xff]
  %v258 = vld [vmem:[%s1 + $0x698] sm:$0xff]
  %v259 = vld [vmem:[%s1 + $0x6a0] sm:$0xff]
  %v260 = vld [vmem:[%s1 + $0x6a8] sm:$0xff]
  %v261 = vld [vmem:[%s1 + $0x6b0] sm:$0xff]
  %v262 = vld [vmem:[%s1 + $0x6b8] sm:$0xff]
  %v263 = vld [vmem:[%s1 + $0x6c0] sm:$0xff]
  %v264 = vld [vmem:[%s1 + $0x6c8] sm:$0xff]
  %v265 = vld [vmem:[%s1 + $0x6d0] sm:$0xff]
  %v266 = vld [vmem:[%s1 + $0x6d8] sm:$0xff]
  %v267 = vld [vmem:[%s1 + $0x6e0] sm:$0xff]
  %v268 = vld [vmem:[%s1 + $0x6e8] sm:$0xff]
  %v269 = vld [vmem:[%s1 + $0x6f0] sm:$0xff]
  %v270 = vld [vmem:[%s1 + $0x6f8] sm:$0xff]
  %v271 = vld [vmem:[%s1 + $0x700] sm:$0xff]
  %v272 = vld [vmem:[%s1 + $0x708] sm:$0xff]
  %v273 = vld [vmem:[%s1 + $0x710] sm:$0xff]
  %v274 = vld [vmem:[%s1 + $0x718] sm:$0xff]
  %v275 = vld [vmem:[%s1 + $0x720] sm:$0xff]
  %v276 = vld [vmem:[%s1 + $0x728] sm:$0xff]
  %v277 = vld [vmem:[%s1 + $0x730] sm:$0xff]
  %v278 = vld [vmem:[%s1 + $0x738] sm:$0xff]
  %v279 = vld [vmem:[%s1 + $0x740] sm:$0xff]
  %v280 = vld [vmem:[%s1 + $0x748] sm:$0xff]
  %v281 = vld [vmem:[%s1 + $0x750] sm:$0xff]
  %v282 = vld [vmem:[%s1 + $0x758] sm:$0xff]
  %v283 = vld [vmem:[%s1 + $0x760] sm:$0xff]
  %v284 = vld [vmem:[%s1 + $0x768] sm:$0xff]
  %v285 = vld [vmem:[%s1 + $0x770] sm:$0xff]
  %v286 = vld [vmem:[%s1 + $0x778] sm:$0xff]
  %v287 = vld [vmem:[%s1 + $0x780] sm:$0xff]
  %v288 = vld [vmem:[%s1 + $0x788] sm:$0xff]
  %v289 = vld [vmem:[%s1 + $0x790] sm:$0xff]
  %v290 = vld [vmem:[%s1 + $0x798] sm:$0xff]
  %v291 = vld [vmem:[%s1 + $0x7a0] sm:$0xff]
  %v292 = vld [vmem:[%s1 + $0x7a8] sm:$0xff]
  %v293 = vld [vmem:[%s1 + $0x7b0] sm:$0xff]
  %v294 = vld [vmem:[%s1 + $0x7b8] sm:$0xff]
  %v295 = vld [vmem:[%s1 + $0x7c0] sm:$0xff]
  %v296 = vld [vmem:[%s1 + $0x7c8] sm:$0xff]
  %v297 = vld [vmem:[%s1 + $0x7d0] sm:$0xff]
  %v298 = vld [vmem:[%s1 + $0x7d8] sm:$0xff]
  %v299 = vld [vmem:[%s1 + $0x7e0] sm:$0xff]
  %v300 = vld [vmem:[%s1 + $0x7e8] sm:$0xff]
  %v301 = vld [vmem:[%s1 + $0x7f0] sm:$0xff]
  %v302 = vld [vmem:[%s1 + $0x7f8] sm:$0xff]
  %v303 = vld [vmem:[%s1 + $0x800] sm:$0xff]
  %v304 = vld [vmem:[%s1 + $0x808] sm:$0xff]
  %v305 = vld [vmem:[%s1 + $0x810] sm:$0xff]
  %v306 = vld [vmem:[%s1 + $0x818] sm:$0xff]
  %v307 = vld [vmem:[%s1 + $0x820] sm:$0xff]
  %v308 = vld [vmem:[%s1 + $0x828] sm:$0xff]
  %v309 = vld [vmem:[%s1 + $0x830] sm:$0xff]
  %v310 = vld [vmem:[%s1 + $0x838] sm:$0xff]
  %v311 = vld [vmem:[%s1 + $0x840] sm:$0xff]
  %v312 = vld [vmem:[%s1 + $0x848] sm:$0xff]
  %v313 = vld [vmem:[%s1 + $0x850] sm:$0xff]
  %v314 = vld [vmem:[%s1 + $0x858] sm:$0xff]
  %v315 = vld [vmem:[%s1 + $0x860] sm:$0xff]
  %v316 = vld [vmem:[%s1 + $0x868] sm:$0xff]
  %v317 = vld [vmem:[%s1 + $0x870] sm:$0xff]
  %v318 = vld [vmem:[%s1 + $0x878] sm:$0xff]
  %v319 = vld [vmem:[%s1 + $0x880] sm:$0xff]
  %v320 = vld [vmem:[%s1 + $0x888] sm:$0xff]
  %v321 = vld [vmem:[%s1 + $0x890] sm:$0xff]
  %v322 = vld [vmem:[%s1 + $0x898] sm:$0xff]
  %v323 = vld [vmem:[%s1 + $0x8a0] sm:$0xff]
  %v324 = vld [vmem:[%s1 + $0x8a8] sm:$0xff]
  %v325 = vld [vmem:[%s1 + $0x8b0] sm:$0xff]
  %v326 = vld [vmem:[%s1 + $0x8b8] sm:$0xff]
  %v327 = vld [vmem:[%s1 + $0x8c0] sm:$0xff]
  %v328 = vld [vmem:[%s1 + $0x8c8] sm:$0xff]
  %v329 = vld [vmem:[%s1 + $0x8d0] sm:$0xff]
  %v330 = vld [vmem:[%s1 + $0x8d8] sm:$0xff]
  %v331 = vld [vmem:[%s1 + $0x8e0] sm:$0xff]
  %v332 = vld [vmem:[%s1 + $0x8e8] sm:$0xff]
  %v333 = vld [vmem:[%s1 + $0x8f0] sm:$0xff]
  %v334 = vld [vmem:[%s1 + $0x8f8] sm:$0xff]
  %v335 = vld [vmem:[%s1 + $0x900] sm:$0xff]
  %v336 = vld [vmem:[%s1 + $0x908] sm:$0xff]
  %v337 = vld [vmem:[%s1 + $0x910] sm:$0xff]
  %v338 = vld [vmem:[%s1 + $0x918] sm:$0xff]
  %v339 = vld [vmem:[%s1 + $0x920] sm:$0xff]
  %v340 = vld [vmem:[%s1 + $0x928] sm:$0xff]
  %v341 = vld [vmem:[%s1 + $0x930] sm:$0xff]
  %v342 = vld [vmem:[%s1 + $0x938] sm:$0xff]
  %v343 = vld [vmem:[%s1 + $0x940] sm:$0xff]
  %v344 = vld [vmem:[%s1 + $0x948] sm:$0xff]
  %v345 = vld [vmem:[%s1 + $0x950] sm:$0xff]
  %v346 = vld [vmem:[%s1 + $0x958] sm:$0xff]
  %v347 = vld [vmem:[%s1 + $0x960] sm:$0xff]
  %v348 = vld [vmem:[%s1 + $0x968] sm:$0xff]
  %v349 = vld [vmem:[%s1 + $0x970] sm:$0xff]
  %v350 = vld [vmem:[%s1 + $0x978] sm:$0xff]
  %v351 = vld [vmem:[%s1 + $0x980] sm:$0xff]
  %v352 = vld [vmem:[%s1 + $0x988] sm:$0xff]
  %v353 = vld [vmem:[%s1 + $0x990] sm:$0xff]
  %v354 = vld [vmem:[%s1 + $0x998] sm:$0xff]
  %v355 = vld [vmem:[%s1 + $0x9a0] sm:$0xff]
  %v356 = vld [vmem:[%s1 + $0x9a8] sm:$0xff]
  %v357 = vld [vmem:[%s1 + $0x9b0] sm:$0xff]
  %v358 = vld [vmem:[%s1 + $0x9b8] sm:$0xff]
  %v359 = vld [vmem:[%s1 + $0x9c0] sm:$0xff]
  %v360 = vld [vmem:[%s1 + $0x9c8] sm:$0xff]
  %v361 = vld [vmem:[%s1 + $0x9d0] sm:$0xff]
  %v362 = vld [vmem:[%s1 + $0x9d8] sm:$0xff]
  %v363 = vld [vmem:[%s1 + $0x9e0] sm:$0xff]
  %v364 = vld [vmem:[%s1 + $0x9e8] sm:$0xff]
  %v365 = vld [vmem:[%s1 + $0x9f0] sm:$0xff]
  %v366 = vld [vmem:[%s1 + $0x9f8] sm:$0xff]
  %v367 = vld [vmem:[%s1 + $0xa00] sm:$0xff]
  %v368 = vld [vmem:[%s1 + $0xa08] sm:$0xff]
  %v369 = vld [vmem:[%s1 + $0xa10] sm:$0xff]
  %v370 = vld [vmem:[%s1 + $0xa18] sm:$0xff]
  %v371 = vld [vmem:[%s1 + $0xa20] sm:$0xff]
  %v372 = vld [vmem:[%s1 + $0xa28] sm:$0xff]
  %v373 = vld [vmem:[%s1 + $0xa30] sm:$0xff]
  %v374 = vld [vmem:[%s1 + $0xa38] sm:$0xff]
  %v375 = vld [vmem:[%s1 + $0xa40] sm:$0xff]
  %v376 = vld [vmem:[%s1 + $0xa48] sm:$0xff]
  %v377 = vld [vmem:[%s1 + $0xa50] sm:$0xff]
  %v378 = vld [vmem:[%s1 + $0xa58] sm:$0xff]
  %v379 = vld [vmem:[%s1 + $0xa60] sm:$0xff]
  %v380 = vld [vmem:[%s1 + $0xa68] sm:$0xff]
  %v381 = vld [vmem:[%s1 + $0xa70] sm:$0xff]
  %v382 = vld [vmem:[%s1 + $0xa78] sm:$0xff]
  %v383 = vld [vmem:[%s1 + $0xa80] sm:$0xff]
  %v384 = vld [vmem:[%s1 + $0xa88] sm:$0xff]
  %v385 = vld [vmem:[%s1 + $0xa90] sm:$0xff]
  %v386 = vld [vmem:[%s1 + $0xa98] sm:$0xff]
  %v387 = vld [vmem:[%s1 + $0xaa0] sm:$0xff]
  %v388 = vld [vmem:[%s1 + $0xaa8] sm:$0xff]
  %v389 = vld [vmem:[%s1 + $0xab0] sm:$0xff]
  %v390 = vld [vmem:[%s1 + $0xab8] sm:$0xff]
  %v391 = vld [vmem:[%s1 + $0xac0] sm:$0xff]
  %v392 = vld [vmem:[%s1 + $0xac8] sm:$0xff]
  %v393 = vld [vmem:[%s1 + $0xad0] sm:$0xff]
  %v394 = vld [vmem:[%s1 + $0xad8] sm:$0xff]
  %v395 = vld [vmem:[%s1 + $0xae0] sm:$0xff]
  %v396 = vld [vmem:[%s1 + $0xae8] sm:$0xff]
  %v397 = vld [vmem:[%s1 + $0xaf0] sm:$0xff]
  %v398 = vld [vmem:[%s1 + $0xaf8] sm:$0xff]
  %v411 = vunpack.c.l.b16 %v35
  %v412 = vunpack.c.h.b16 %v35
  %v413 = vunpack.c.l.b16 %v36
  %v414 = vunpack.c.h.b16 %v36
  %v415 = vunpack.c.l.b16 %v37
  %v416 = vunpack.c.h.b16 %v37
  %v417 = vunpack.c.l.b16 %v38
  %v418 = vunpack.c.h.b16 %v38
  %v419 = vunpack.c.l.b16 %v39
  %v420 = vunpack.c.h.b16 %v39
  %v421 = vunpack.c.l.b16 %v40
  %v422 = vunpack.c.l.b16 %v41
  %v423 = vunpack.c.h.b16 %v41
  %v424 = vunpack.c.l.b16 %v42
  %v425 = vunpack.c.h.b16 %v42
  %v426 = vunpack.c.l.b16 %v43
  %v427 = vunpack.c.h.b16 %v43
  %v428 = vunpack.c.l.b16 %v44
  %v429 = vunpack.c.h.b16 %v44
  %v430 = vunpack.c.l.b16 %v45
  %v431 = vunpack.c.h.b16 %v45
  %v432 = vunpack.c.l.b16 %v46
  %v433 = vpack.c.b16 %v422, %v411
  %v434 = vpack.c.b16 %v423, %v412
  %v435 = vpack.c.b16 %v424, %v413
  %v436 = vpack.c.b16 %v425, %v414
  %v437 = vpack.c.b16 %v426, %v415
  %v438 = vpack.c.b16 %v427, %v416
  %v439 = vpack.c.b16 %v428, %v417
  %v440 = vpack.c.b16 %v429, %v418
  %v441 = vpack.c.b16 %v430, %v419
  %v442 = vpack.c.b16 %v431, %v420
  %v443 = vpack.c.b16 %v432, %v421
  %v807 = vunpack.c.l.b16 %v47
  %v808 = vunpack.c.h.b16 %v47
  %v809 = vunpack.c.l.b16 %v48
  %v810 = vunpack.c.h.b16 %v48
  %v811 = vunpack.c.l.b16 %v49
  %v812 = vunpack.c.h.b16 %v49
  %v813 = vunpack.c.l.b16 %v50
  %v814 = vunpack.c.h.b16 %v50
  %v815 = vunpack.c.l.b16 %v51
  %v816 = vunpack.c.h.b16 %v51
  %v817 = vunpack.c.l.b16 %v52
  %v818 = vunpack.c.h.b16 %v52
  %v819 = vunpack.c.l.b16 %v53
  %v820 = vunpack.c.h.b16 %v53
  %v821 = vunpack.c.l.b16 %v54
  %v822 = vunpack.c.h.b16 %v54
  %v823 = vunpack.c.l.b16 %v55
  %v824 = vunpack.c.h.b16 %v55
  %v825 = vunpack.c.l.b16 %v56
  %v826 = vunpack.c.h.b16 %v56
  %v827 = vunpack.c.l.b16 %v57
  %v828 = vunpack.c.h.b16 %v57
  %v829 = vunpack.c.l.b16 %v58
  %v830 = vunpack.c.h.b16 %v58
  %v831 = vunpack.c.l.b16 %v59
  %v832 = vunpack.c.h.b16 %v59
  %v833 = vunpack.c.l.b16 %v60
  %v834 = vunpack.c.h.b16 %v60
  %v835 = vunpack.c.l.b16 %v61
  %v836 = vunpack.c.h.b16 %v61
  %v837 = vunpack.c.l.b16 %v62
  %v838 = vunpack.c.h.b16 %v62
  %v839 = vunpack.c.l.b16 %v63
  %v840 = vunpack.c.h.b16 %v63
  %v841 = vunpack.c.l.b16 %v64
  %v842 = vunpack.c.h.b16 %v64
  %v843 = vunpack.c.l.b16 %v65
  %v844 = vunpack.c.h.b16 %v65
  %v845 = vunpack.c.l.b16 %v66
  %v846 = vunpack.c.h.b16 %v66
  %v847 = vunpack.c.l.b16 %v67
  %v848 = vunpack.c.h.b16 %v67
  %v849 = vunpack.c.l.b16 %v68
  %v850 = vunpack.c.h.b16 %v68
  %v851 = vunpack.c.l.b16 %v69
  %v852 = vunpack.c.h.b16 %v69
  %v853 = vunpack.c.l.b16 %v70
  %v854 = vunpack.c.h.b16 %v70
  %v855 = vunpack.c.l.b16 %v71
  %v856 = vunpack.c.h.b16 %v71
  %v857 = vunpack.c.l.b16 %v72
  %v858 = vunpack.c.h.b16 %v72
  %v859 = vunpack.c.l.b16 %v73
  %v860 = vunpack.c.h.b16 %v73
  %v861 = vunpack.c.l.b16 %v74
  %v862 = vunpack.c.h.b16 %v74
  %v863 = vunpack.c.l.b16 %v75
  %v864 = vunpack.c.h.b16 %v75
  %v865 = vunpack.c.l.b16 %v76
  %v866 = vunpack.c.h.b16 %v76
  %v867 = vunpack.c.l.b16 %v77
  %v868 = vunpack.c.h.b16 %v77
  %v869 = vunpack.c.l.b16 %v78
  %v870 = vunpack.c.h.b16 %v78
  %v871 = vunpack.c.l.b16 %v79
  %v872 = vunpack.c.h.b16 %v79
  %v873 = vunpack.c.l.b16 %v80
  %v874 = vunpack.c.h.b16 %v80
  %v875 = vunpack.c.l.b16 %v81
  %v876 = vunpack.c.h.b16 %v81
  %v877 = vunpack.c.l.b16 %v82
  %v878 = vunpack.c.h.b16 %v82
  %v879 = vunpack.c.l.b16 %v83
  %v880 = vunpack.c.h.b16 %v83
  %v881 = vunpack.c.l.b16 %v84
  %v882 = vunpack.c.h.b16 %v84
  %v883 = vunpack.c.l.b16 %v85
  %v884 = vunpack.c.h.b16 %v85
  %v885 = vunpack.c.l.b16 %v86
  %v886 = vunpack.c.h.b16 %v86
  %v887 = vunpack.c.l.b16 %v87
  %v888 = vunpack.c.h.b16 %v87
  %v889 = vunpack.c.l.b16 %v88
  %v890 = vunpack.c.h.b16 %v88
  %v891 = vunpack.c.l.b16 %v89
  %v892 = vunpack.c.h.b16 %v89
  %v893 = vunpack.c.l.b16 %v90
  %v894 = vunpack.c.h.b16 %v90
  %v895 = vunpack.c.l.b16 %v91
  %v896 = vunpack.c.h.b16 %v91
  %v897 = vunpack.c.l.b16 %v92
  %v898 = vunpack.c.h.b16 %v92
  %v899 = vunpack.c.l.b16 %v93
  %v900 = vunpack.c.h.b16 %v93
  %v901 = vunpack.c.l.b16 %v94
  %v902 = vunpack.c.h.b16 %v94
  %v903 = vunpack.c.l.b16 %v95
  %v904 = vunpack.c.h.b16 %v95
  %v905 = vunpack.c.l.b16 %v96
  %v906 = vunpack.c.h.b16 %v96
  %v907 = vunpack.c.l.b16 %v97
  %v908 = vunpack.c.h.b16 %v97
  %v909 = vunpack.c.l.b16 %v98
  %v910 = vunpack.c.h.b16 %v98
  %v911 = vunpack.c.l.b16 %v99
  %v912 = vunpack.c.h.b16 %v99
  %v913 = vunpack.c.l.b16 %v100
  %v914 = vunpack.c.h.b16 %v100
  %v915 = vunpack.c.l.b16 %v101
  %v916 = vunpack.c.h.b16 %v101
  %v917 = vunpack.c.l.b16 %v102
  %v918 = vunpack.c.h.b16 %v102
  %v919 = vunpack.c.l.b16 %v103
  %v920 = vunpack.c.h.b16 %v103
  %v921 = vunpack.c.l.b16 %v104
  %v922 = vunpack.c.h.b16 %v104
  %v923 = vunpack.c.l.b16 %v105
  %v924 = vunpack.c.h.b16 %v105
  %v925 = vunpack.c.l.b16 %v106
  %v926 = vunpack.c.h.b16 %v106
  %v927 = vunpack.c.l.b16 %v107
  %v928 = vunpack.c.h.b16 %v107
  %v929 = vunpack.c.l.b16 %v108
  %v930 = vunpack.c.h.b16 %v108
  %v931 = vunpack.c.l.b16 %v109
  %v932 = vunpack.c.h.b16 %v109
  %v933 = vunpack.c.l.b16 %v110
  %v934 = vunpack.c.h.b16 %v110
  %v935 = vunpack.c.l.b16 %v111
  %v936 = vunpack.c.h.b16 %v111
  %v937 = vunpack.c.l.b16 %v112
  %v938 = vunpack.c.h.b16 %v112
  %v939 = vunpack.c.l.b16 %v113
  %v940 = vunpack.c.h.b16 %v113
  %v941 = vunpack.c.l.b16 %v114
  %v942 = vunpack.c.h.b16 %v114
  %v943 = vunpack.c.l.b16 %v115
  %v944 = vunpack.c.h.b16 %v115
  %v945 = vunpack.c.l.b16 %v116
  %v946 = vunpack.c.h.b16 %v116
  %v947 = vunpack.c.l.b16 %v117
  %v948 = vunpack.c.h.b16 %v117
  %v949 = vunpack.c.l.b16 %v118
  %v950 = vunpack.c.h.b16 %v118
  %v951 = vunpack.c.l.b16 %v119
  %v952 = vunpack.c.h.b16 %v119
  %v953 = vunpack.c.l.b16 %v120
  %v954 = vunpack.c.h.b16 %v120
  %v955 = vunpack.c.l.b16 %v121
  %v956 = vunpack.c.h.b16 %v121
  %v957 = vunpack.c.l.b16 %v122
  %v958 = vunpack.c.h.b16 %v122
  %v959 = vunpack.c.l.b16 %v123
  %v960 = vunpack.c.h.b16 %v123
  %v961 = vunpack.c.l.b16 %v124
  %v962 = vunpack.c.h.b16 %v124
  %v963 = vunpack.c.l.b16 %v125
  %v964 = vunpack.c.h.b16 %v125
  %v965 = vunpack.c.l.b16 %v126
  %v966 = vunpack.c.h.b16 %v126
  %v967 = vunpack.c.l.b16 %v127
  %v968 = vunpack.c.h.b16 %v127
  %v969 = vunpack.c.l.b16 %v128
  %v970 = vunpack.c.h.b16 %v128
  %v971 = vunpack.c.l.b16 %v129
  %v972 = vunpack.c.h.b16 %v129
  %v973 = vunpack.c.l.b16 %v130
  %v974 = vunpack.c.h.b16 %v130
  %v975 = vunpack.c.l.b16 %v131
  %v976 = vunpack.c.h.b16 %v131
  %v977 = vunpack.c.l.b16 %v132
  %v978 = vunpack.c.h.b16 %v132
  %v979 = vunpack.c.l.b16 %v133
  %v980 = vunpack.c.h.b16 %v133
  %v981 = vunpack.c.l.b16 %v134
  %v982 = vunpack.c.h.b16 %v134
  %v983 = vunpack.c.l.b16 %v135
  %v984 = vunpack.c.h.b16 %v135
  %v985 = vunpack.c.l.b16 %v136
  %v986 = vunpack.c.h.b16 %v136
  %v987 = vunpack.c.l.b16 %v137
  %v988 = vunpack.c.h.b16 %v137
  %v989 = vunpack.c.l.b16 %v138
  %v990 = vunpack.c.h.b16 %v138
  %v991 = vunpack.c.l.b16 %v139
  %v992 = vunpack.c.h.b16 %v139
  %v993 = vunpack.c.l.b16 %v140
  %v994 = vunpack.c.h.b16 %v140
  %v995 = vunpack.c.l.b16 %v141
  %v996 = vunpack.c.h.b16 %v141
  %v997 = vunpack.c.l.b16 %v142
  %v998 = vunpack.c.h.b16 %v142
  %v999 = vunpack.c.l.b16 %v143
  %v1000 = vunpack.c.h.b16 %v143
  %v1001 = vunpack.c.l.b16 %v144
  %v1002 = vunpack.c.h.b16 %v144
  %v1003 = vunpack.c.l.b16 %v145
  %v1004 = vunpack.c.h.b16 %v145
  %v1005 = vunpack.c.l.b16 %v146
  %v1006 = vunpack.c.h.b16 %v146
  %v1007 = vunpack.c.l.b16 %v147
  %v1008 = vunpack.c.h.b16 %v147
  %v1009 = vunpack.c.l.b16 %v148
  %v1010 = vunpack.c.h.b16 %v148
  %v1011 = vunpack.c.l.b16 %v149
  %v1012 = vunpack.c.h.b16 %v149
  %v1013 = vunpack.c.l.b16 %v150
  %v1014 = vunpack.c.h.b16 %v150
  %v1015 = vunpack.c.l.b16 %v151
  %v1016 = vunpack.c.h.b16 %v151
  %v1017 = vunpack.c.l.b16 %v152
  %v1018 = vunpack.c.h.b16 %v152
  %v1019 = vunpack.c.l.b16 %v153
  %v1020 = vunpack.c.h.b16 %v153
  %v1021 = vunpack.c.l.b16 %v154
  %v1022 = vunpack.c.h.b16 %v154
  %v1023 = vunpack.c.l.b16 %v155
  %v1024 = vunpack.c.h.b16 %v155
  %v1025 = vunpack.c.l.b16 %v156
  %v1026 = vunpack.c.h.b16 %v156
  %v1027 = vunpack.c.l.b16 %v157
  %v1028 = vunpack.c.h.b16 %v157
  %v1029 = vunpack.c.l.b16 %v158
  %v1030 = vunpack.c.h.b16 %v158
  %v1031 = vunpack.c.l.b16 %v159
  %v1032 = vunpack.c.h.b16 %v159
  %v1033 = vunpack.c.l.b16 %v160
  %v1034 = vunpack.c.h.b16 %v160
  %v1035 = vunpack.c.l.b16 %v161
  %v1036 = vunpack.c.h.b16 %v161
  %v1037 = vunpack.c.l.b16 %v162
  %v1038 = vunpack.c.h.b16 %v162
  %v1039 = vunpack.c.l.b16 %v163
  %v1040 = vunpack.c.h.b16 %v163
  %v1041 = vunpack.c.l.b16 %v164
  %v1042 = vunpack.c.h.b16 %v164
  %v1043 = vunpack.c.l.b16 %v165
  %v1044 = vunpack.c.h.b16 %v165
  %v1045 = vunpack.c.l.b16 %v166
  %v1046 = vunpack.c.h.b16 %v166
  %v1047 = vunpack.c.l.b16 %v167
  %v1048 = vunpack.c.h.b16 %v167
  %v1049 = vunpack.c.l.b16 %v168
  %v1050 = vunpack.c.h.b16 %v168
  %v1051 = vunpack.c.l.b16 %v169
  %v1052 = vunpack.c.h.b16 %v169
  %v1053 = vunpack.c.l.b16 %v170
  %v1054 = vunpack.c.h.b16 %v170
  %v1055 = vunpack.c.l.b16 %v171
  %v1056 = vunpack.c.h.b16 %v171
  %v1057 = vunpack.c.l.b16 %v172
  %v1058 = vunpack.c.h.b16 %v172
  %v1059 = vunpack.c.l.b16 %v173
  %v1060 = vunpack.c.h.b16 %v173
  %v1061 = vunpack.c.l.b16 %v174
  %v1062 = vunpack.c.h.b16 %v174
  %v1063 = vunpack.c.l.b16 %v175
  %v1064 = vunpack.c.h.b16 %v175
  %v1065 = vunpack.c.l.b16 %v176
  %v1066 = vunpack.c.h.b16 %v176
  %v1067 = vunpack.c.l.b16 %v177
  %v1068 = vunpack.c.h.b16 %v177
  %v1069 = vunpack.c.l.b16 %v178
  %v1070 = vunpack.c.h.b16 %v178
  %v1071 = vunpack.c.l.b16 %v179
  %v1072 = vunpack.c.h.b16 %v179
  %v1073 = vunpack.c.l.b16 %v180
  %v1074 = vunpack.c.h.b16 %v180
  %v1075 = vunpack.c.l.b16 %v181
  %v1076 = vunpack.c.h.b16 %v181
  %v1077 = vunpack.c.l.b16 %v182
  %v1078 = vunpack.c.h.b16 %v182
  %v1079 = vunpack.c.l.b16 %v183
  %v1080 = vunpack.c.h.b16 %v183
  %v1081 = vunpack.c.l.b16 %v184
  %v1082 = vunpack.c.h.b16 %v184
  %v1083 = vunpack.c.l.b16 %v185
  %v1084 = vunpack.c.h.b16 %v185
  %v1085 = vunpack.c.l.b16 %v186
  %v1086 = vunpack.c.h.b16 %v186
  %v1087 = vunpack.c.l.b16 %v187
  %v1088 = vunpack.c.h.b16 %v187
  %v1089 = vunpack.c.l.b16 %v188
  %v1090 = vunpack.c.h.b16 %v188
  %v1091 = vunpack.c.l.b16 %v189
  %v1092 = vunpack.c.h.b16 %v189
  %v1093 = vunpack.c.l.b16 %v190
  %v1094 = vunpack.c.h.b16 %v190
  %v1095 = vunpack.c.l.b16 %v191
  %v1096 = vunpack.c.h.b16 %v191
  %v1097 = vunpack.c.l.b16 %v192
  %v1098 = vunpack.c.h.b16 %v192
  %v1099 = vunpack.c.l.b16 %v193
  %v1100 = vunpack.c.h.b16 %v193
  %v1101 = vunpack.c.l.b16 %v194
  %v1102 = vunpack.c.h.b16 %v194
  %v1103 = vunpack.c.l.b16 %v195
  %v1104 = vunpack.c.h.b16 %v195
  %v1105 = vunpack.c.l.b16 %v196
  %v1106 = vunpack.c.h.b16 %v196
  %v1107 = vunpack.c.l.b16 %v197
  %v1108 = vunpack.c.h.b16 %v197
  %v1109 = vunpack.c.l.b16 %v198
  %v1110 = vunpack.c.h.b16 %v198
  %v1111 = vunpack.c.l.b16 %v199
  %v1112 = vunpack.c.h.b16 %v199
  %v1113 = vunpack.c.l.b16 %v200
  %v1114 = vunpack.c.h.b16 %v200
  %v1115 = vunpack.c.l.b16 %v201
  %v1116 = vunpack.c.h.b16 %v201
  %v1117 = vunpack.c.l.b16 %v202
  %v1118 = vunpack.c.h.b16 %v202
  %v1119 = vunpack.c.l.b16 %v203
  %v1120 = vunpack.c.h.b16 %v203
  %v1121 = vunpack.c.l.b16 %v204
  %v1122 = vunpack.c.h.b16 %v204
  %v1123 = vunpack.c.l.b16 %v205
  %v1124 = vunpack.c.h.b16 %v205
  %v1125 = vunpack.c.l.b16 %v206
  %v1126 = vunpack.c.h.b16 %v206
  %v1127 = vunpack.c.l.b16 %v207
  %v1128 = vunpack.c.h.b16 %v207
  %v1129 = vunpack.c.l.b16 %v208
  %v1130 = vunpack.c.h.b16 %v208
  %v1131 = vunpack.c.l.b16 %v209
  %v1132 = vunpack.c.h.b16 %v209
  %v1133 = vunpack.c.l.b16 %v210
  %v1134 = vunpack.c.h.b16 %v210
  %v1135 = vunpack.c.l.b16 %v211
  %v1136 = vunpack.c.h.b16 %v211
  %v1137 = vunpack.c.l.b16 %v212
  %v1138 = vunpack.c.h.b16 %v212
  %v1139 = vunpack.c.l.b16 %v213
  %v1140 = vunpack.c.h.b16 %v213
  %v1141 = vunpack.c.l.b16 %v214
  %v1142 = vunpack.c.h.b16 %v214
  %v1143 = vunpack.c.l.b16 %v215
  %v1144 = vunpack.c.h.b16 %v215
  %v1145 = vunpack.c.l.b16 %v216
  %v1146 = vunpack.c.h.b16 %v216
  %v1147 = vunpack.c.l.b16 %v217
  %v1148 = vunpack.c.h.b16 %v217
  %v1149 = vunpack.c.l.b16 %v218
  %v1150 = vunpack.c.h.b16 %v218
  %v1151 = vunpack.c.l.b16 %v219
  %v1152 = vunpack.c.h.b16 %v219
  %v1153 = vunpack.c.l.b16 %v220
  %v1154 = vunpack.c.h.b16 %v220
  %v1155 = vunpack.c.l.b16 %v221
  %v1156 = vunpack.c.h.b16 %v221
  %v1157 = vunpack.c.l.b16 %v222
  %v1158 = vunpack.c.h.b16 %v222
  %v1159 = vunpack.c.l.b16 %v223
  %v1160 = vunpack.c.h.b16 %v223
  %v1161 = vunpack.c.l.b16 %v224
  %v1162 = vunpack.c.h.b16 %v224
  %v1163 = vunpack.c.l.b16 %v225
  %v1164 = vunpack.c.h.b16 %v225
  %v1165 = vunpack.c.l.b16 %v226
  %v1166 = vunpack.c.h.b16 %v226
  %v1167 = vunpack.c.l.b16 %v227
  %v1168 = vunpack.c.h.b16 %v227
  %v1169 = vunpack.c.l.b16 %v228
  %v1170 = vunpack.c.h.b16 %v228
  %v1171 = vunpack.c.l.b16 %v229
  %v1172 = vunpack.c.h.b16 %v229
  %v1173 = vunpack.c.l.b16 %v230
  %v1174 = vunpack.c.h.b16 %v230
  %v1175 = vunpack.c.l.b16 %v231
  %v1176 = vunpack.c.h.b16 %v231
  %v1177 = vunpack.c.l.b16 %v232
  %v1178 = vunpack.c.h.b16 %v232
  %v1179 = vunpack.c.l.b16 %v233
  %v1180 = vunpack.c.h.b16 %v233
  %v1181 = vunpack.c.l.b16 %v234
  %v1182 = vunpack.c.h.b16 %v234
  %v1183 = vunpack.c.l.b16 %v235
  %v1184 = vunpack.c.h.b16 %v235
  %v1185 = vunpack.c.l.b16 %v236
  %v1186 = vunpack.c.h.b16 %v236
  %v1187 = vunpack.c.l.b16 %v237
  %v1188 = vunpack.c.h.b16 %v237
  %v1189 = vunpack.c.l.b16 %v238
  %v1190 = vunpack.c.h.b16 %v238
  %v1191 = vunpack.c.l.b16 %v239
  %v1192 = vunpack.c.h.b16 %v239
  %v1193 = vunpack.c.l.b16 %v240
  %v1194 = vunpack.c.h.b16 %v240
  %v1195 = vunpack.c.l.b16 %v241
  %v1196 = vunpack.c.h.b16 %v241
  %v1197 = vunpack.c.l.b16 %v242
  %v1198 = vunpack.c.h.b16 %v242
  %v1199 = vunpack.c.l.b16 %v243
  %v1200 = vunpack.c.h.b16 %v243
  %v1201 = vunpack.c.l.b16 %v244
  %v1202 = vunpack.c.h.b16 %v244
  %v1203 = vunpack.c.l.b16 %v245
  %v1204 = vunpack.c.h.b16 %v245
  %v1205 = vunpack.c.l.b16 %v246
  %v1206 = vunpack.c.h.b16 %v246
  %v1207 = vunpack.c.l.b16 %v247
  %v1208 = vunpack.c.h.b16 %v247
  %v1209 = vunpack.c.l.b16 %v248
  %v1210 = vunpack.c.h.b16 %v248
  %v1211 = vunpack.c.l.b16 %v249
  %v1212 = vunpack.c.h.b16 %v249
  %v1213 = vunpack.c.l.b16 %v250
  %v1214 = vunpack.c.h.b16 %v250
  %v1215 = vunpack.c.l.b16 %v251
  %v1216 = vunpack.c.h.b16 %v251
  %v1217 = vunpack.c.l.b16 %v252
  %v1218 = vunpack.c.h.b16 %v252
  %v1219 = vunpack.c.l.b16 %v253
  %v1220 = vunpack.c.h.b16 %v253
  %v1221 = vunpack.c.l.b16 %v254
  %v1222 = vunpack.c.h.b16 %v254
  %v1223 = vunpack.c.l.b16 %v255
  %v1224 = vunpack.c.h.b16 %v255
  %v1225 = vunpack.c.l.b16 %v256
  %v1226 = vunpack.c.h.b16 %v256
  %v1227 = vunpack.c.l.b16 %v257
  %v1228 = vunpack.c.h.b16 %v257
  %v1229 = vunpack.c.l.b16 %v258
  %v1230 = vunpack.c.h.b16 %v258
  %v1231 = vunpack.c.l.b16 %v259
  %v1232 = vunpack.c.h.b16 %v259
  %v1233 = vunpack.c.l.b16 %v260
  %v1234 = vunpack.c.h.b16 %v260
  %v1235 = vunpack.c.l.b16 %v261
  %v1236 = vunpack.c.h.b16 %v261
  %v1237 = vunpack.c.l.b16 %v262
  %v1238 = vunpack.c.h.b16 %v262
  %v1239 = vunpack.c.l.b16 %v263
  %v1240 = vunpack.c.h.b16 %v263
  %v1241 = vunpack.c.l.b16 %v264
  %v1242 = vunpack.c.h.b16 %v264
  %v1243 = vunpack.c.l.b16 %v265
  %v1244 = vunpack.c.h.b16 %v265
  %v1245 = vunpack.c.l.b16 %v266
  %v1246 = vunpack.c.h.b16 %v266
  %v1247 = vunpack.c.l.b16 %v267
  %v1248 = vunpack.c.h.b16 %v267
  %v1249 = vunpack.c.l.b16 %v268
  %v1250 = vunpack.c.h.b16 %v268
  %v1251 = vunpack.c.l.b16 %v269
  %v1252 = vunpack.c.h.b16 %v269
  %v1253 = vunpack.c.l.b16 %v270
  %v1254 = vunpack.c.h.b16 %v270
  %v1255 = vunpack.c.l.b16 %v271
  %v1256 = vunpack.c.h.b16 %v271
  %v1257 = vunpack.c.l.b16 %v272
  %v1258 = vunpack.c.h.b16 %v272
  %v1259 = vunpack.c.l.b16 %v273
  %v1260 = vunpack.c.h.b16 %v273
  %v1261 = vunpack.c.l.b16 %v274
  %v1262 = vunpack.c.h.b16 %v274
  %v1263 = vunpack.c.l.b16 %v275
  %v1264 = vunpack.c.h.b16 %v275
  %v1265 = vunpack.c.l.b16 %v276
  %v1266 = vunpack.c.h.b16 %v276
  %v1267 = vunpack.c.l.b16 %v277
  %v1268 = vunpack.c.h.b16 %v277
  %v1269 = vunpack.c.l.b16 %v278
  %v1270 = vunpack.c.h.b16 %v278
  %v1271 = vunpack.c.l.b16 %v279
  %v1272 = vunpack.c.h.b16 %v279
  %v1273 = vunpack.c.l.b16 %v280
  %v1274 = vunpack.c.h.b16 %v280
  %v1275 = vunpack.c.l.b16 %v281
  %v1276 = vunpack.c.h.b16 %v281
  %v1277 = vunpack.c.l.b16 %v282
  %v1278 = vunpack.c.h.b16 %v282
  %v1279 = vunpack.c.l.b16 %v283
  %v1280 = vunpack.c.h.b16 %v283
  %v1281 = vunpack.c.l.b16 %v284
  %v1282 = vunpack.c.h.b16 %v284
  %v1283 = vunpack.c.l.b16 %v285
  %v1284 = vunpack.c.h.b16 %v285
  %v1285 = vunpack.c.l.b16 %v286
  %v1286 = vunpack.c.h.b16 %v286
  %v1287 = vunpack.c.l.b16 %v287
  %v1288 = vunpack.c.h.b16 %v287
  %v1289 = vunpack.c.l.b16 %v288
  %v1290 = vunpack.c.h.b16 %v288
  %v1291 = vunpack.c.l.b16 %v289
  %v1292 = vunpack.c.h.b16 %v289
  %v1293 = vunpack.c.l.b16 %v290
  %v1294 = vunpack.c.h.b16 %v290
  %v1295 = vunpack.c.l.b16 %v291
  %v1296 = vunpack.c.h.b16 %v291
  %v1297 = vunpack.c.l.b16 %v292
  %v1298 = vunpack.c.h.b16 %v292
  %v1299 = vunpack.c.l.b16 %v293
  %v1300 = vunpack.c.h.b16 %v293
  %v1301 = vunpack.c.l.b16 %v294
  %v1302 = vunpack.c.h.b16 %v294
  %v1303 = vunpack.c.l.b16 %v295
  %v1304 = vunpack.c.h.b16 %v295
  %v1305 = vunpack.c.l.b16 %v296
  %v1306 = vunpack.c.h.b16 %v296
  %v1307 = vunpack.c.l.b16 %v297
  %v1308 = vunpack.c.h.b16 %v297
  %v1309 = vunpack.c.l.b16 %v298
  %v1310 = vunpack.c.h.b16 %v298
  %v1311 = vunpack.c.l.b16 %v299
  %v1312 = vunpack.c.h.b16 %v299
  %v1313 = vunpack.c.l.b16 %v300
  %v1314 = vunpack.c.h.b16 %v300
  %v1315 = vunpack.c.l.b16 %v301
  %v1316 = vunpack.c.h.b16 %v301
  %v1317 = vunpack.c.l.b16 %v302
  %v1318 = vunpack.c.h.b16 %v302
  %v1319 = vunpack.c.l.b16 %v303
  %v1320 = vunpack.c.h.b16 %v303
  %v1321 = vunpack.c.l.b16 %v304
  %v1322 = vunpack.c.h.b16 %v304
  %v1323 = vunpack.c.l.b16 %v305
  %v1324 = vunpack.c.h.b16 %v305
  %v1325 = vunpack.c.l.b16 %v306
  %v1326 = vunpack.c.h.b16 %v306
  %v1327 = vunpack.c.l.b16 %v307
  %v1328 = vunpack.c.h.b16 %v307
  %v1329 = vunpack.c.l.b16 %v308
  %v1330 = vunpack.c.h.b16 %v308
  %v1331 = vunpack.c.l.b16 %v309
  %v1332 = vunpack.c.h.b16 %v309
  %v1333 = vunpack.c.l.b16 %v310
  %v1334 = vunpack.c.h.b16 %v310
  %v1335 = vunpack.c.l.b16 %v311
  %v1336 = vunpack.c.h.b16 %v311
  %v1337 = vunpack.c.l.b16 %v312
  %v1338 = vunpack.c.h.b16 %v312
  %v1339 = vunpack.c.l.b16 %v313
  %v1340 = vunpack.c.h.b16 %v313
  %v1341 = vunpack.c.l.b16 %v314
  %v1342 = vunpack.c.h.b16 %v314
  %v1343 = vunpack.c.l.b16 %v315
  %v1344 = vunpack.c.h.b16 %v315
  %v1345 = vunpack.c.l.b16 %v316
  %v1346 = vunpack.c.h.b16 %v316
  %v1347 = vunpack.c.l.b16 %v317
  %v1348 = vunpack.c.h.b16 %v317
  %v1349 = vunpack.c.l.b16 %v318
  %v1350 = vunpack.c.h.b16 %v318
  %v1351 = vunpack.c.l.b16 %v319
  %v1352 = vunpack.c.h.b16 %v319
  %v1353 = vunpack.c.l.b16 %v320
  %v1354 = vunpack.c.h.b16 %v320
  %v1355 = vunpack.c.l.b16 %v321
  %v1356 = vunpack.c.h.b16 %v321
  %v1357 = vunpack.c.l.b16 %v322
  %v1358 = vunpack.c.h.b16 %v322
  %v1359 = vunpack.c.l.b16 %v323
  %v1360 = vunpack.c.h.b16 %v323
  %v1361 = vunpack.c.l.b16 %v324
  %v1362 = vunpack.c.h.b16 %v324
  %v1363 = vunpack.c.l.b16 %v325
  %v1364 = vunpack.c.h.b16 %v325
  %v1365 = vunpack.c.l.b16 %v326
  %v1366 = vunpack.c.h.b16 %v326
  %v1367 = vunpack.c.l.b16 %v327
  %v1368 = vunpack.c.h.b16 %v327
  %v1369 = vunpack.c.l.b16 %v328
  %v1370 = vunpack.c.h.b16 %v328
  %v1371 = vunpack.c.l.b16 %v329
  %v1372 = vunpack.c.h.b16 %v329
  %v1373 = vunpack.c.l.b16 %v330
  %v1374 = vunpack.c.h.b16 %v330
  %v1375 = vunpack.c.l.b16 %v331
  %v1376 = vunpack.c.h.b16 %v331
  %v1377 = vunpack.c.l.b16 %v332
  %v1378 = vunpack.c.h.b16 %v332
  %v1379 = vunpack.c.l.b16 %v333
  %v1380 = vunpack.c.h.b16 %v333
  %v1381 = vunpack.c.l.b16 %v334
  %v1382 = vunpack.c.h.b16 %v334
  %v1383 = vunpack.c.l.b16 %v335
  %v1384 = vunpack.c.h.b16 %v335
  %v1385 = vunpack.c.l.b16 %v336
  %v1386 = vunpack.c.h.b16 %v336
  %v1387 = vunpack.c.l.b16 %v337
  %v1388 = vunpack.c.h.b16 %v337
  %v1389 = vunpack.c.l.b16 %v338
  %v1390 = vunpack.c.h.b16 %v338
  %v1391 = vunpack.c.l.b16 %v339
  %v1392 = vunpack.c.h.b16 %v339
  %v1393 = vunpack.c.l.b16 %v340
  %v1394 = vunpack.c.h.b16 %v340
  %v1395 = vunpack.c.l.b16 %v341
  %v1396 = vunpack.c.h.b16 %v341
  %v1397 = vunpack.c.l.b16 %v342
  %v1398 = vunpack.c.h.b16 %v342
  %v1399 = vunpack.c.l.b16 %v343
  %v1400 = vunpack.c.h.b16 %v343
  %v1401 = vunpack.c.l.b16 %v344
  %v1402 = vunpack.c.h.b16 %v344
  %v1403 = vunpack.c.l.b16 %v345
  %v1404 = vunpack.c.h.b16 %v345
  %v1405 = vunpack.c.l.b16 %v346
  %v1406 = vunpack.c.h.b16 %v346
  %v1407 = vunpack.c.l.b16 %v347
  %v1408 = vunpack.c.h.b16 %v347
  %v1409 = vunpack.c.l.b16 %v348
  %v1410 = vunpack.c.h.b16 %v348
  %v1411 = vunpack.c.l.b16 %v349
  %v1412 = vunpack.c.h.b16 %v349
  %v1413 = vunpack.c.l.b16 %v350
  %v1414 = vunpack.c.h.b16 %v350
  %v1415 = vunpack.c.l.b16 %v351
  %v1416 = vunpack.c.h.b16 %v351
  %v1417 = vunpack.c.l.b16 %v352
  %v1418 = vunpack.c.h.b16 %v352
  %v1419 = vunpack.c.l.b16 %v353
  %v1420 = vunpack.c.h.b16 %v353
  %v1421 = vunpack.c.l.b16 %v354
  %v1422 = vunpack.c.h.b16 %v354
  %v1423 = vunpack.c.l.b16 %v355
  %v1424 = vunpack.c.h.b16 %v355
  %v1425 = vunpack.c.l.b16 %v356
  %v1426 = vunpack.c.h.b16 %v356
  %v1427 = vunpack.c.l.b16 %v357
  %v1428 = vunpack.c.h.b16 %v357
  %v1429 = vunpack.c.l.b16 %v358
  %v1430 = vunpack.c.h.b16 %v358
  %v1431 = vunpack.c.l.b16 %v359
  %v1432 = vunpack.c.h.b16 %v359
  %v1433 = vunpack.c.l.b16 %v360
  %v1434 = vunpack.c.h.b16 %v360
  %v1435 = vunpack.c.l.b16 %v361
  %v1436 = vunpack.c.h.b16 %v361
  %v1437 = vunpack.c.l.b16 %v362
  %v1438 = vunpack.c.h.b16 %v362
  %v1439 = vunpack.c.l.b16 %v363
  %v1440 = vunpack.c.h.b16 %v363
  %v1441 = vunpack.c.l.b16 %v364
  %v1442 = vunpack.c.h.b16 %v364
  %v1443 = vunpack.c.l.b16 %v365
  %v1444 = vunpack.c.h.b16 %v365
  %v1445 = vunpack.c.l.b16 %v366
  %v1446 = vunpack.c.h.b16 %v366
  %v1447 = vunpack.c.l.b16 %v367
  %v1448 = vunpack.c.h.b16 %v367
  %v1449 = vunpack.c.l.b16 %v368
  %v1450 = vunpack.c.h.b16 %v368
  %v1451 = vunpack.c.l.b16 %v369
  %v1452 = vunpack.c.h.b16 %v369
  %v1453 = vunpack.c.l.b16 %v370
  %v1454 = vunpack.c.h.b16 %v370
  %v1455 = vunpack.c.l.b16 %v371
  %v1456 = vunpack.c.h.b16 %v371
  %v1457 = vunpack.c.l.b16 %v372
  %v1458 = vunpack.c.h.b16 %v372
  %v1459 = vunpack.c.l.b16 %v373
  %v1460 = vunpack.c.h.b16 %v373
  %v1461 = vunpack.c.l.b16 %v374
  %v1462 = vunpack.c.h.b16 %v374
  %v1463 = vunpack.c.l.b16 %v375
  %v1464 = vunpack.c.h.b16 %v375
  %v1465 = vunpack.c.l.b16 %v376
  %v1466 = vunpack.c.h.b16 %v376
  %v1467 = vunpack.c.l.b16 %v377
  %v1468 = vunpack.c.h.b16 %v377
  %v1469 = vunpack.c.l.b16 %v378
  %v1470 = vunpack.c.h.b16 %v378
  %v1471 = vunpack.c.l.b16 %v379
  %v1472 = vunpack.c.h.b16 %v379
  %v1473 = vunpack.c.l.b16 %v380
  %v1474 = vunpack.c.h.b16 %v380
  %v1475 = vunpack.c.l.b16 %v381
  %v1476 = vunpack.c.h.b16 %v381
  %v1477 = vunpack.c.l.b16 %v382
  %v1478 = vunpack.c.h.b16 %v382
  %v1479 = vunpack.c.l.b16 %v383
  %v1480 = vunpack.c.h.b16 %v383
  %v1481 = vunpack.c.l.b16 %v384
  %v1482 = vunpack.c.h.b16 %v384
  %v1483 = vunpack.c.l.b16 %v385
  %v1484 = vunpack.c.h.b16 %v385
  %v1485 = vunpack.c.l.b16 %v386
  %v1486 = vunpack.c.h.b16 %v386
  %v1487 = vunpack.c.l.b16 %v387
  %v1488 = vunpack.c.h.b16 %v387
  %v1489 = vunpack.c.l.b16 %v388
  %v1490 = vunpack.c.h.b16 %v388
  %v1491 = vunpack.c.l.b16 %v389
  %v1492 = vunpack.c.h.b16 %v389
  %v1493 = vunpack.c.l.b16 %v390
  %v1494 = vunpack.c.h.b16 %v390
  %v1495 = vunpack.c.l.b16 %v391
  %v1496 = vunpack.c.h.b16 %v391
  %v1497 = vunpack.c.l.b16 %v392
  %v1498 = vunpack.c.h.b16 %v392
  %v1499 = vunpack.c.l.b16 %v393
  %v1500 = vunpack.c.h.b16 %v393
  %v1501 = vunpack.c.l.b16 %v394
  %v1502 = vunpack.c.h.b16 %v394
  %v1503 = vunpack.c.l.b16 %v395
  %v1504 = vunpack.c.h.b16 %v395
  %v1505 = vunpack.c.l.b16 %v396
  %v1506 = vunpack.c.h.b16 %v396
  %v1507 = vunpack.c.l.b16 %v397
  %v1508 = vunpack.c.h.b16 %v397
  %v1509 = vunpack.c.l.b16 %v398
  %v1510 = vunpack.c.h.b16 %v398
  %v1511 = vpack.c.b16 %v811, %v807
  %v1512 = vpack.c.b16 %v812, %v808
  %v1513 = vpack.c.b16 %v813, %v809
  %v1514 = vpack.c.b16 %v814, %v810
  %v1515 = vpack.c.b16 %v819, %v815
  %v1516 = vpack.c.b16 %v820, %v816
  %v1517 = vpack.c.b16 %v821, %v817
  %v1518 = vpack.c.b16 %v822, %v818
  %v1519 = vpack.c.b16 %v827, %v823
  %v1520 = vpack.c.b16 %v828, %v824
  %v1521 = vpack.c.b16 %v829, %v825
  %v1522 = vpack.c.b16 %v830, %v826
  %v1523 = vpack.c.b16 %v835, %v831
  %v1524 = vpack.c.b16 %v836, %v832
  %v1525 = vpack.c.b16 %v837, %v833
  %v1526 = vpack.c.b16 %v838, %v834
  %v1527 = vpack.c.b16 %v843, %v839
  %v1528 = vpack.c.b16 %v844, %v840
  %v1529 = vpack.c.b16 %v845, %v841
  %v1530 = vpack.c.b16 %v846, %v842
  %v1531 = vpack.c.b16 %v851, %v847
  %v1532 = vpack.c.b16 %v852, %v848
  %v1533 = vpack.c.b16 %v853, %v849
  %v1534 = vpack.c.b16 %v854, %v850
  %v1535 = vpack.c.b16 %v859, %v855
  %v1536 = vpack.c.b16 %v860, %v856
  %v1537 = vpack.c.b16 %v861, %v857
  %v1538 = vpack.c.b16 %v862, %v858
  %v1539 = vpack.c.b16 %v867, %v863
  %v1540 = vpack.c.b16 %v868, %v864
  %v1541 = vpack.c.b16 %v869, %v865
  %v1542 = vpack.c.b16 %v870, %v866
  %v1543 = vpack.c.b16 %v875, %v871
  %v1544 = vpack.c.b16 %v876, %v872
  %v1545 = vpack.c.b16 %v877, %v873
  %v1546 = vpack.c.b16 %v878, %v874
  %v1547 = vpack.c.b16 %v883, %v879
  %v1548 = vpack.c.b16 %v884, %v880
  %v1549 = vpack.c.b16 %v885, %v881
  %v1550 = vpack.c.b16 %v886, %v882
  %v1551 = vpack.c.b16 %v891, %v887
  %v1552 = vpack.c.b16 %v892, %v888
  %v1553 = vpack.c.b16 %v893, %v889
  %v1554 = vpack.c.b16 %v894, %v890
  %v1555 = vpack.c.b16 %v899, %v895
  %v1556 = vpack.c.b16 %v900, %v896
  %v1557 = vpack.c.b16 %v901, %v897
  %v1558 = vpack.c.b16 %v902, %v898
  %v1559 = vpack.c.b16 %v907, %v903
  %v1560 = vpack.c.b16 %v908, %v904
  %v1561 = vpack.c.b16 %v909, %v905
  %v1562 = vpack.c.b16 %v910, %v906
  %v1563 = vpack.c.b16 %v915, %v911
  %v1564 = vpack.c.b16 %v916, %v912
  %v1565 = vpack.c.b16 %v917, %v913
  %v1566 = vpack.c.b16 %v918, %v914
  %v1567 = vpack.c.b16 %v923, %v919
  %v1568 = vpack.c.b16 %v924, %v920
  %v1569 = vpack.c.b16 %v925, %v921
  %v1570 = vpack.c.b16 %v926, %v922
  %v1571 = vpack.c.b16 %v931, %v927
  %v1572 = vpack.c.b16 %v932, %v928
  %v1573 = vpack.c.b16 %v933, %v929
  %v1574 = vpack.c.b16 %v934, %v930
  %v1575 = vpack.c.b16 %v939, %v935
  %v1576 = vpack.c.b16 %v940, %v936
  %v1577 = vpack.c.b16 %v941, %v937
  %v1578 = vpack.c.b16 %v942, %v938
  %v1579 = vpack.c.b16 %v947, %v943
  %v1580 = vpack.c.b16 %v948, %v944
  %v1581 = vpack.c.b16 %v949, %v945
  %v1582 = vpack.c.b16 %v950, %v946
  %v1583 = vpack.c.b16 %v955, %v951
  %v1584 = vpack.c.b16 %v956, %v952
  %v1585 = vpack.c.b16 %v957, %v953
  %v1586 = vpack.c.b16 %v958, %v954
  %v1587 = vpack.c.b16 %v963, %v959
  %v1588 = vpack.c.b16 %v964, %v960
  %v1589 = vpack.c.b16 %v965, %v961
  %v1590 = vpack.c.b16 %v966, %v962
  %v1591 = vpack.c.b16 %v971, %v967
  %v1592 = vpack.c.b16 %v972, %v968
  %v1593 = vpack.c.b16 %v973, %v969
  %v1594 = vpack.c.b16 %v974, %v970
  %v1595 = vpack.c.b16 %v979, %v975
  %v1596 = vpack.c.b16 %v980, %v976
  %v1597 = vpack.c.b16 %v981, %v977
  %v1598 = vpack.c.b16 %v982, %v978
  %v1599 = vpack.c.b16 %v987, %v983
  %v1600 = vpack.c.b16 %v988, %v984
  %v1601 = vpack.c.b16 %v989, %v985
  %v1602 = vpack.c.b16 %v990, %v986
  %v1603 = vpack.c.b16 %v995, %v991
  %v1604 = vpack.c.b16 %v996, %v992
  %v1605 = vpack.c.b16 %v997, %v993
  %v1606 = vpack.c.b16 %v998, %v994
  %v1607 = vpack.c.b16 %v1003, %v999
  %v1608 = vpack.c.b16 %v1004, %v1000
  %v1609 = vpack.c.b16 %v1005, %v1001
  %v1610 = vpack.c.b16 %v1006, %v1002
  %v1611 = vpack.c.b16 %v1011, %v1007
  %v1612 = vpack.c.b16 %v1012, %v1008
  %v1613 = vpack.c.b16 %v1013, %v1009
  %v1614 = vpack.c.b16 %v1014, %v1010
  %v1615 = vpack.c.b16 %v1019, %v1015
  %v1616 = vpack.c.b16 %v1020, %v1016
  %v1617 = vpack.c.b16 %v1021, %v1017
  %v1618 = vpack.c.b16 %v1022, %v1018
  %v1619 = vpack.c.b16 %v1027, %v1023
  %v1620 = vpack.c.b16 %v1028, %v1024
  %v1621 = vpack.c.b16 %v1029, %v1025
  %v1622 = vpack.c.b16 %v1030, %v1026
  %v1623 = vpack.c.b16 %v1035, %v1031
  %v1624 = vpack.c.b16 %v1036, %v1032
  %v1625 = vpack.c.b16 %v1037, %v1033
  %v1626 = vpack.c.b16 %v1038, %v1034
  %v1627 = vpack.c.b16 %v1043, %v1039
  %v1628 = vpack.c.b16 %v1044, %v1040
  %v1629 = vpack.c.b16 %v1045, %v1041
  %v1630 = vpack.c.b16 %v1046, %v1042
  %v1631 = vpack.c.b16 %v1051, %v1047
  %v1632 = vpack.c.b16 %v1052, %v1048
  %v1633 = vpack.c.b16 %v1053, %v1049
  %v1634 = vpack.c.b16 %v1054, %v1050
  %v1635 = vpack.c.b16 %v1059, %v1055
  %v1636 = vpack.c.b16 %v1060, %v1056
  %v1637 = vpack.c.b16 %v1061, %v1057
  %v1638 = vpack.c.b16 %v1062, %v1058
  %v1639 = vpack.c.b16 %v1067, %v1063
  %v1640 = vpack.c.b16 %v1068, %v1064
  %v1641 = vpack.c.b16 %v1069, %v1065
  %v1642 = vpack.c.b16 %v1070, %v1066
  %v1643 = vpack.c.b16 %v1075, %v1071
  %v1644 = vpack.c.b16 %v1076, %v1072
  %v1645 = vpack.c.b16 %v1077, %v1073
  %v1646 = vpack.c.b16 %v1078, %v1074
  %v1647 = vpack.c.b16 %v1083, %v1079
  %v1648 = vpack.c.b16 %v1084, %v1080
  %v1649 = vpack.c.b16 %v1085, %v1081
  %v1650 = vpack.c.b16 %v1086, %v1082
  %v1651 = vpack.c.b16 %v1091, %v1087
  %v1652 = vpack.c.b16 %v1092, %v1088
  %v1653 = vpack.c.b16 %v1093, %v1089
  %v1654 = vpack.c.b16 %v1094, %v1090
  %v1655 = vpack.c.b16 %v1099, %v1095
  %v1656 = vpack.c.b16 %v1100, %v1096
  %v1657 = vpack.c.b16 %v1101, %v1097
  %v1658 = vpack.c.b16 %v1102, %v1098
  %v1659 = vpack.c.b16 %v1107, %v1103
  %v1660 = vpack.c.b16 %v1108, %v1104
  %v1661 = vpack.c.b16 %v1109, %v1105
  %v1662 = vpack.c.b16 %v1110, %v1106
  %v1663 = vpack.c.b16 %v1115, %v1111
  %v1664 = vpack.c.b16 %v1116, %v1112
  %v1665 = vpack.c.b16 %v1117, %v1113
  %v1666 = vpack.c.b16 %v1118, %v1114
  %v1667 = vpack.c.b16 %v1123, %v1119
  %v1668 = vpack.c.b16 %v1124, %v1120
  %v1669 = vpack.c.b16 %v1125, %v1121
  %v1670 = vpack.c.b16 %v1126, %v1122
  %v1671 = vpack.c.b16 %v1131, %v1127
  %v1672 = vpack.c.b16 %v1132, %v1128
  %v1673 = vpack.c.b16 %v1133, %v1129
  %v1674 = vpack.c.b16 %v1134, %v1130
  %v1675 = vpack.c.b16 %v1139, %v1135
  %v1676 = vpack.c.b16 %v1140, %v1136
  %v1677 = vpack.c.b16 %v1141, %v1137
  %v1678 = vpack.c.b16 %v1142, %v1138
  %v1679 = vpack.c.b16 %v1147, %v1143
  %v1680 = vpack.c.b16 %v1148, %v1144
  %v1681 = vpack.c.b16 %v1149, %v1145
  %v1682 = vpack.c.b16 %v1150, %v1146
  %v1683 = vpack.c.b16 %v1155, %v1151
  %v1684 = vpack.c.b16 %v1156, %v1152
  %v1685 = vpack.c.b16 %v1157, %v1153
  %v1686 = vpack.c.b16 %v1158, %v1154
  %v1687 = vpack.c.b16 %v1163, %v1159
  %v1688 = vpack.c.b16 %v1164, %v1160
  %v1689 = vpack.c.b16 %v1165, %v1161
  %v1690 = vpack.c.b16 %v1166, %v1162
  %v1691 = vpack.c.b16 %v1171, %v1167
  %v1692 = vpack.c.b16 %v1172, %v1168
  %v1693 = vpack.c.b16 %v1173, %v1169
  %v1694 = vpack.c.b16 %v1174, %v1170
  %v1695 = vpack.c.b16 %v1179, %v1175
  %v1696 = vpack.c.b16 %v1180, %v1176
  %v1697 = vpack.c.b16 %v1181, %v1177
  %v1698 = vpack.c.b16 %v1182, %v1178
  %v1699 = vpack.c.b16 %v1187, %v1183
  %v1700 = vpack.c.b16 %v1188, %v1184
  %v1701 = vpack.c.b16 %v1189, %v1185
  %v1702 = vpack.c.b16 %v1190, %v1186
  %v1703 = vpack.c.b16 %v1195, %v1191
  %v1704 = vpack.c.b16 %v1196, %v1192
  %v1705 = vpack.c.b16 %v1197, %v1193
  %v1706 = vpack.c.b16 %v1198, %v1194
  %v1707 = vpack.c.b16 %v1203, %v1199
  %v1708 = vpack.c.b16 %v1204, %v1200
  %v1709 = vpack.c.b16 %v1205, %v1201
  %v1710 = vpack.c.b16 %v1206, %v1202
  %v1711 = vpack.c.b16 %v1211, %v1207
  %v1712 = vpack.c.b16 %v1212, %v1208
  %v1713 = vpack.c.b16 %v1213, %v1209
  %v1714 = vpack.c.b16 %v1214, %v1210
  %v1715 = vpack.c.b16 %v1219, %v1215
  %v1716 = vpack.c.b16 %v1220, %v1216
  %v1717 = vpack.c.b16 %v1221, %v1217
  %v1718 = vpack.c.b16 %v1222, %v1218
  %v1719 = vpack.c.b16 %v1227, %v1223
  %v1720 = vpack.c.b16 %v1228, %v1224
  %v1721 = vpack.c.b16 %v1229, %v1225
  %v1722 = vpack.c.b16 %v1230, %v1226
  %v1723 = vpack.c.b16 %v1235, %v1231
  %v1724 = vpack.c.b16 %v1236, %v1232
  %v1725 = vpack.c.b16 %v1237, %v1233
  %v1726 = vpack.c.b16 %v1238, %v1234
  %v1727 = vpack.c.b16 %v1243, %v1239
  %v1728 = vpack.c.b16 %v1244, %v1240
  %v1729 = vpack.c.b16 %v1245, %v1241
  %v1730 = vpack.c.b16 %v1246, %v1242
  %v1731 = vpack.c.b16 %v1251, %v1247
  %v1732 = vpack.c.b16 %v1252, %v1248
  %v1733 = vpack.c.b16 %v1253, %v1249
  %v1734 = vpack.c.b16 %v1254, %v1250
  %v1735 = vpack.c.b16 %v1259, %v1255
  %v1736 = vpack.c.b16 %v1260, %v1256
  %v1737 = vpack.c.b16 %v1261, %v1257
  %v1738 = vpack.c.b16 %v1262, %v1258
  %v1739 = vpack.c.b16 %v1267, %v1263
  %v1740 = vpack.c.b16 %v1268, %v1264
  %v1741 = vpack.c.b16 %v1269, %v1265
  %v1742 = vpack.c.b16 %v1270, %v1266
  %v1743 = vpack.c.b16 %v1275, %v1271
  %v1744 = vpack.c.b16 %v1276, %v1272
  %v1745 = vpack.c.b16 %v1277, %v1273
  %v1746 = vpack.c.b16 %v1278, %v1274
  %v1747 = vpack.c.b16 %v1283, %v1279
  %v1748 = vpack.c.b16 %v1284, %v1280
  %v1749 = vpack.c.b16 %v1285, %v1281
  %v1750 = vpack.c.b16 %v1286, %v1282
  %v1751 = vpack.c.b16 %v1291, %v1287
  %v1752 = vpack.c.b16 %v1292, %v1288
  %v1753 = vpack.c.b16 %v1293, %v1289
  %v1754 = vpack.c.b16 %v1294, %v1290
  %v1755 = vpack.c.b16 %v1299, %v1295
  %v1756 = vpack.c.b16 %v1300, %v1296
  %v1757 = vpack.c.b16 %v1301, %v1297
  %v1758 = vpack.c.b16 %v1302, %v1298
  %v1759 = vpack.c.b16 %v1307, %v1303
  %v1760 = vpack.c.b16 %v1308, %v1304
  %v1761 = vpack.c.b16 %v1309, %v1305
  %v1762 = vpack.c.b16 %v1310, %v1306
  %v1763 = vpack.c.b16 %v1315, %v1311
  %v1764 = vpack.c.b16 %v1316, %v1312
  %v1765 = vpack.c.b16 %v1317, %v1313
  %v1766 = vpack.c.b16 %v1318, %v1314
  %v1767 = vpack.c.b16 %v1323, %v1319
  %v1768 = vpack.c.b16 %v1324, %v1320
  %v1769 = vpack.c.b16 %v1325, %v1321
  %v1770 = vpack.c.b16 %v1326, %v1322
  %v1771 = vpack.c.b16 %v1331, %v1327
  %v1772 = vpack.c.b16 %v1332, %v1328
  %v1773 = vpack.c.b16 %v1333, %v1329
  %v1774 = vpack.c.b16 %v1334, %v1330
  %v1775 = vpack.c.b16 %v1339, %v1335
  %v1776 = vpack.c.b16 %v1340, %v1336
  %v1777 = vpack.c.b16 %v1341, %v1337
  %v1778 = vpack.c.b16 %v1342, %v1338
  %v1779 = vpack.c.b16 %v1347, %v1343
  %v1780 = vpack.c.b16 %v1348, %v1344
  %v1781 = vpack.c.b16 %v1349, %v1345
  %v1782 = vpack.c.b16 %v1350, %v1346
  %v1783 = vpack.c.b16 %v1355, %v1351
  %v1784 = vpack.c.b16 %v1356, %v1352
  %v1785 = vpack.c.b16 %v1357, %v1353
  %v1786 = vpack.c.b16 %v1358, %v1354
  %v1787 = vpack.c.b16 %v1363, %v1359
  %v1788 = vpack.c.b16 %v1364, %v1360
  %v1789 = vpack.c.b16 %v1365, %v1361
  %v1790 = vpack.c.b16 %v1366, %v1362
  %v1791 = vpack.c.b16 %v1371, %v1367
  %v1792 = vpack.c.b16 %v1372, %v1368
  %v1793 = vpack.c.b16 %v1373, %v1369
  %v1794 = vpack.c.b16 %v1374, %v1370
  %v1795 = vpack.c.b16 %v1379, %v1375
  %v1796 = vpack.c.b16 %v1380, %v1376
  %v1797 = vpack.c.b16 %v1381, %v1377
  %v1798 = vpack.c.b16 %v1382, %v1378
  %v1799 = vpack.c.b16 %v1387, %v1383
  %v1800 = vpack.c.b16 %v1388, %v1384
  %v1801 = vpack.c.b16 %v1389, %v1385
  %v1802 = vpack.c.b16 %v1390, %v1386
  %v1803 = vpack.c.b16 %v1395, %v1391
  %v1804 = vpack.c.b16 %v1396, %v1392
  %v1805 = vpack.c.b16 %v1397, %v1393
  %v1806 = vpack.c.b16 %v1398, %v1394
  %v1807 = vpack.c.b16 %v1403, %v1399
  %v1808 = vpack.c.b16 %v1404, %v1400
  %v1809 = vpack.c.b16 %v1405, %v1401
  %v1810 = vpack.c.b16 %v1406, %v1402
  %v1811 = vpack.c.b16 %v1411, %v1407
  %v1812 = vpack.c.b16 %v1412, %v1408
  %v1813 = vpack.c.b16 %v1413, %v1409
  %v1814 = vpack.c.b16 %v1414, %v1410
  %v1815 = vpack.c.b16 %v1419, %v1415
  %v1816 = vpack.c.b16 %v1420, %v1416
  %v1817 = vpack.c.b16 %v1421, %v1417
  %v1818 = vpack.c.b16 %v1422, %v1418
  %v1819 = vpack.c.b16 %v1427, %v1423
  %v1820 = vpack.c.b16 %v1428, %v1424
  %v1821 = vpack.c.b16 %v1429, %v1425
  %v1822 = vpack.c.b16 %v1430, %v1426
  %v1823 = vpack.c.b16 %v1435, %v1431
  %v1824 = vpack.c.b16 %v1436, %v1432
  %v1825 = vpack.c.b16 %v1437, %v1433
  %v1826 = vpack.c.b16 %v1438, %v1434
  %v1827 = vpack.c.b16 %v1443, %v1439
  %v1828 = vpack.c.b16 %v1444, %v1440
  %v1829 = vpack.c.b16 %v1445, %v1441
  %v1830 = vpack.c.b16 %v1446, %v1442
  %v1831 = vpack.c.b16 %v1451, %v1447
  %v1832 = vpack.c.b16 %v1452, %v1448
  %v1833 = vpack.c.b16 %v1453, %v1449
  %v1834 = vpack.c.b16 %v1454, %v1450
  %v1835 = vpack.c.b16 %v1459, %v1455
  %v1836 = vpack.c.b16 %v1460, %v1456
  %v1837 = vpack.c.b16 %v1461, %v1457
  %v1838 = vpack.c.b16 %v1462, %v1458
  %v1839 = vpack.c.b16 %v1467, %v1463
  %v1840 = vpack.c.b16 %v1468, %v1464
  %v1841 = vpack.c.b16 %v1469, %v1465
  %v1842 = vpack.c.b16 %v1470, %v1466
  %v1843 = vpack.c.b16 %v1475, %v1471
  %v1844 = vpack.c.b16 %v1476, %v1472
  %v1845 = vpack.c.b16 %v1477, %v1473
  %v1846 = vpack.c.b16 %v1478, %v1474
  %v1847 = vpack.c.b16 %v1483, %v1479
  %v1848 = vpack.c.b16 %v1484, %v1480
  %v1849 = vpack.c.b16 %v1485, %v1481
  %v1850 = vpack.c.b16 %v1486, %v1482
  %v1851 = vpack.c.b16 %v1491, %v1487
  %v1852 = vpack.c.b16 %v1492, %v1488
  %v1853 = vpack.c.b16 %v1493, %v1489
  %v1854 = vpack.c.b16 %v1494, %v1490
  %v1855 = vpack.c.b16 %v1499, %v1495
  %v1856 = vpack.c.b16 %v1500, %v1496
  %v1857 = vpack.c.b16 %v1501, %v1497
  %v1858 = vpack.c.b16 %v1502, %v1498
  %v1859 = vpack.c.b16 %v1507, %v1503
  %v1860 = vpack.c.b16 %v1508, %v1504
  %v1861 = vpack.c.b16 %v1509, %v1505
  %v1862 = vpack.c.b16 %v1510, %v1506
  %2215 = vmatprep.subr.bf16.mxu0 %v1540
  %2216 = vmatpush1.bf16.msra.mxu0 %v1539
  %2217 = vmatprep.subr.bf16.mxu0 %v1536
  %2218 = vmatpush1.bf16.msra.mxu0 %v1535
  %2219 = vmatprep.subr.bf16.mxu0 %v1532
  %2220 = vmatpush1.bf16.msra.mxu0 %v1531
  %2221 = vmatprep.subr.bf16.mxu0 %v1528
  %2222 = vmatpush1.bf16.msra.mxu0 %v1527
  %2223 = vmatprep.subr.bf16.mxu0 %v1524
  %2224 = vmatpush1.bf16.msra.mxu0 %v1523
  %2225 = vmatprep.subr.bf16.mxu0 %v1520
  %2226 = vmatpush1.bf16.msra.mxu0 %v1519
  %2227 = vmatprep.subr.bf16.mxu0 %v1516
  %2228 = vmatpush1.bf16.msra.mxu0 %v1515
  %2229 = vmatprep.subr.bf16.mxu0 %v1512
  %2230 = vmatpush1.bf16.msra.mxu0 %v1511
  %2231 = vmatprep.subr.bf16.mxu0 %v1572
  %2232 = vmatpush2.bf16.msra.mxu0 %v1571
  %2233 = vmatprep.subr.bf16.mxu0 %v1568
  %2234 = vmatpush2.bf16.msra.mxu0 %v1567
  %2235 = vmatprep.subr.bf16.mxu0 %v1564
  %2236 = vmatpush2.bf16.msra.mxu0 %v1563
  %2237 = vmatprep.subr.bf16.mxu0 %v1560
  %2238 = vmatpush2.bf16.msra.mxu0 %v1559
  %2239 = vmatprep.subr.bf16.mxu0 %v1556
  %2240 = vmatpush2.bf16.msra.mxu0 %v1555
  %2241 = vmatprep.subr.bf16.mxu0 %v1552
  %2242 = vmatpush2.bf16.msra.mxu0 %v1551
  %2243 = vmatprep.subr.bf16.mxu0 %v1548
  %2244 = vmatpush2.bf16.msra.mxu0 %v1547
  %2245 = vmatprep.subr.bf16.mxu0 %v1544
  %2246 = vmatpush2.bf16.msra.mxu0 %v1543
  %2247 = vmatprep.mubr.bf16.mxu0 %v434
  %2248 = vmatmul.mubr.bf16.gmra.mxu0 %v433
  %v2249 = vpop.f32.mrf.mxu0
  %v2250 = vadd.f32 0.0, %v2249
  %v2251 = vpop.f32.mrf.mxu0
  %v2252 = vadd.f32 0.0, %v2251
  %v2253 = vpop.f32.mrf.mxu0
  %v2254 = vadd.f32 0.0, %v2253
  %v2255 = vpop.f32.mrf.mxu0
  %v2256 = vadd.f32 0.0, %v2255
  %2257 = vdwg.mxu0
  %2258 = vmatprep.subr.bf16.mxu0 %v1604
  %2259 = vmatpush1.bf16.msra.mxu0 %v1603
  %2260 = vmatprep.subr.bf16.mxu0 %v1600
  %2261 = vmatpush1.bf16.msra.mxu0 %v1599
  %2262 = vmatprep.subr.bf16.mxu0 %v1596
  %2263 = vmatpush1.bf16.msra.mxu0 %v1595
  %2264 = vmatprep.subr.bf16.mxu0 %v1592
  %2265 = vmatpush1.bf16.msra.mxu0 %v1591
  %2266 = vmatprep.subr.bf16.mxu0 %v1588
  %2267 = vmatpush1.bf16.msra.mxu0 %v1587
  %2268 = vmatprep.subr.bf16.mxu0 %v1584
  %2269 = vmatpush1.bf16.msra.mxu0 %v1583
  %2270 = vmatprep.subr.bf16.mxu0 %v1580
  %2271 = vmatpush1.bf16.msra.mxu0 %v1579
  %2272 = vmatprep.subr.bf16.mxu0 %v1576
  %2273 = vmatpush1.bf16.msra.mxu0 %v1575
  %2274 = vmatprep.subr.bf16.mxu0 %v1636
  %2275 = vmatpush2.bf16.msra.mxu0 %v1635
  %2276 = vmatprep.subr.bf16.mxu0 %v1632
  %2277 = vmatpush2.bf16.msra.mxu0 %v1631
  %2278 = vmatprep.subr.bf16.mxu0 %v1628
  %2279 = vmatpush2.bf16.msra.mxu0 %v1627
  %2280 = vmatprep.subr.bf16.mxu0 %v1624
  %2281 = vmatpush2.bf16.msra.mxu0 %v1623
  %2282 = vmatprep.subr.bf16.mxu0 %v1620
  %2283 = vmatpush2.bf16.msra.mxu0 %v1619
  %2284 = vmatprep.subr.bf16.mxu0 %v1616
  %2285 = vmatpush2.bf16.msra.mxu0 %v1615
  %2286 = vmatprep.subr.bf16.mxu0 %v1612
  %2287 = vmatpush2.bf16.msra.mxu0 %v1611
  %2288 = vmatprep.subr.bf16.mxu0 %v1608
  %2289 = vmatpush2.bf16.msra.mxu0 %v1607
  %2290 = vmatprep.mubr.bf16.mxu0 %v436
  %2291 = vmatmul.mubr.bf16.gmra.mxu0 %v435
  %v2292 = vpop.f32.mrf.mxu0
  %v2293 = vadd.f32 %v2250, %v2292
  %v2294 = vpop.f32.mrf.mxu0
  %v2295 = vadd.f32 %v2252, %v2294
  %v2296 = vpop.f32.mrf.mxu0
  %v2297 = vadd.f32 %v2254, %v2296
  %v2298 = vpop.f32.mrf.mxu0
  %v2299 = vadd.f32 %v2256, %v2298
  %2300 = vdwg.mxu0
  %2301 = vmatprep.subr.bf16.mxu0 %v1668
  %2302 = vmatpush1.bf16.msra.mxu0 %v1667
  %2303 = vmatprep.subr.bf16.mxu0 %v1664
  %2304 = vmatpush1.bf16.msra.mxu0 %v1663
  %2305 = vmatprep.subr.bf16.mxu0 %v1660
  %2306 = vmatpush1.bf16.msra.mxu0 %v1659
  %2307 = vmatprep.subr.bf16.mxu0 %v1656
  %2308 = vmatpush1.bf16.msra.mxu0 %v1655
  %2309 = vmatprep.subr.bf16.mxu0 %v1652
  %2310 = vmatpush1.bf16.msra.mxu0 %v1651
  %2311 = vmatprep.subr.bf16.mxu0 %v1648
  %2312 = vmatpush1.bf16.msra.mxu0 %v1647
  %2313 = vmatprep.subr.bf16.mxu0 %v1644
  %2314 = vmatpush1.bf16.msra.mxu0 %v1643
  %2315 = vmatprep.subr.bf16.mxu0 %v1640
  %2316 = vmatpush1.bf16.msra.mxu0 %v1639
  %2317 = vmatprep.subr.bf16.mxu0 %v1700
  %2318 = vmatpush2.bf16.msra.mxu0 %v1699
  %2319 = vmatprep.subr.bf16.mxu0 %v1696
  %2320 = vmatpush2.bf16.msra.mxu0 %v1695
  %2321 = vmatprep.subr.bf16.mxu0 %v1692
  %2322 = vmatpush2.bf16.msra.mxu0 %v1691
  %2323 = vmatprep.subr.bf16.mxu0 %v1688
  %2324 = vmatpush2.bf16.msra.mxu0 %v1687
  %2325 = vmatprep.subr.bf16.mxu0 %v1684
  %2326 = vmatpush2.bf16.msra.mxu0 %v1683
  %2327 = vmatprep.subr.bf16.mxu0 %v1680
  %2328 = vmatpush2.bf16.msra.mxu0 %v1679
  %2329 = vmatprep.subr.bf16.mxu0 %v1676
  %2330 = vmatpush2.bf16.msra.mxu0 %v1675
  %2331 = vmatprep.subr.bf16.mxu0 %v1672
  %2332 = vmatpush2.bf16.msra.mxu0 %v1671
  %2333 = vmatprep.mubr.bf16.mxu0 %v438
  %2334 = vmatmul.mubr.bf16.gmra.mxu0 %v437
  %v2335 = vpop.f32.mrf.mxu0
  %v2336 = vadd.f32 %v2293, %v2335
  %v2337 = vpop.f32.mrf.mxu0
  %v2338 = vadd.f32 %v2295, %v2337
  %v2339 = vpop.f32.mrf.mxu0
  %v2340 = vadd.f32 %v2297, %v2339
  %v2341 = vpop.f32.mrf.mxu0
  %v2342 = vadd.f32 %v2299, %v2341
  %2343 = vdwg.mxu0
  %2344 = vmatprep.subr.bf16.mxu0 %v1732
  %2345 = vmatpush1.bf16.msra.mxu0 %v1731
  %2346 = vmatprep.subr.bf16.mxu0 %v1728
  %2347 = vmatpush1.bf16.msra.mxu0 %v1727
  %2348 = vmatprep.subr.bf16.mxu0 %v1724
  %2349 = vmatpush1.bf16.msra.mxu0 %v1723
  %2350 = vmatprep.subr.bf16.mxu0 %v1720
  %2351 = vmatpush1.bf16.msra.mxu0 %v1719
  %2352 = vmatprep.subr.bf16.mxu0 %v1716
  %2353 = vmatpush1.bf16.msra.mxu0 %v1715
  %2354 = vmatprep.subr.bf16.mxu0 %v1712
  %2355 = vmatpush1.bf16.msra.mxu0 %v1711
  %2356 = vmatprep.subr.bf16.mxu0 %v1708
  %2357 = vmatpush1.bf16.msra.mxu0 %v1707
  %2358 = vmatprep.subr.bf16.mxu0 %v1704
  %2359 = vmatpush1.bf16.msra.mxu0 %v1703
  %2360 = vmatprep.subr.bf16.mxu0 %v1764
  %2361 = vmatpush2.bf16.msra.mxu0 %v1763
  %2362 = vmatprep.subr.bf16.mxu0 %v1760
  %2363 = vmatpush2.bf16.msra.mxu0 %v1759
  %2364 = vmatprep.subr.bf16.mxu0 %v1756
  %2365 = vmatpush2.bf16.msra.mxu0 %v1755
  %2366 = vmatprep.subr.bf16.mxu0 %v1752
  %2367 = vmatpush2.bf16.msra.mxu0 %v1751
  %2368 = vmatprep.subr.bf16.mxu0 %v1748
  %2369 = vmatpush2.bf16.msra.mxu0 %v1747
  %2370 = vmatprep.subr.bf16.mxu0 %v1744
  %2371 = vmatpush2.bf16.msra.mxu0 %v1743
  %2372 = vmatprep.subr.bf16.mxu0 %v1740
  %2373 = vmatpush2.bf16.msra.mxu0 %v1739
  %2374 = vmatprep.subr.bf16.mxu0 %v1736
  %2375 = vmatpush2.bf16.msra.mxu0 %v1735
  %2376 = vmatprep.mubr.bf16.mxu0 %v440
  %2377 = vmatmul.mubr.bf16.gmra.mxu0 %v439
  %v2378 = vpop.f32.mrf.mxu0
  %v2379 = vadd.f32 %v2336, %v2378
  %v2380 = vpop.f32.mrf.mxu0
  %v2381 = vadd.f32 %v2338, %v2380
  %v2382 = vpop.f32.mrf.mxu0
  %v2383 = vadd.f32 %v2340, %v2382
  %v2384 = vpop.f32.mrf.mxu0
  %v2385 = vadd.f32 %v2342, %v2384
  %2386 = vdwg.mxu0
  %2387 = vmatprep.subr.bf16.mxu0 %v1796
  %2388 = vmatpush1.bf16.msra.mxu0 %v1795
  %2389 = vmatprep.subr.bf16.mxu0 %v1792
  %2390 = vmatpush1.bf16.msra.mxu0 %v1791
  %2391 = vmatprep.subr.bf16.mxu0 %v1788
  %2392 = vmatpush1.bf16.msra.mxu0 %v1787
  %2393 = vmatprep.subr.bf16.mxu0 %v1784
  %2394 = vmatpush1.bf16.msra.mxu0 %v1783
  %2395 = vmatprep.subr.bf16.mxu0 %v1780
  %2396 = vmatpush1.bf16.msra.mxu0 %v1779
  %2397 = vmatprep.subr.bf16.mxu0 %v1776
  %2398 = vmatpush1.bf16.msra.mxu0 %v1775
  %2399 = vmatprep.subr.bf16.mxu0 %v1772
  %2400 = vmatpush1.bf16.msra.mxu0 %v1771
  %2401 = vmatprep.subr.bf16.mxu0 %v1768
  %2402 = vmatpush1.bf16.msra.mxu0 %v1767
  %2403 = vmatprep.subr.bf16.mxu0 %v1828
  %2404 = vmatpush2.bf16.msra.mxu0 %v1827
  %2405 = vmatprep.subr.bf16.mxu0 %v1824
  %2406 = vmatpush2.bf16.msra.mxu0 %v1823
  %2407 = vmatprep.subr.bf16.mxu0 %v1820
  %2408 = vmatpush2.bf16.msra.mxu0 %v1819
  %2409 = vmatprep.subr.bf16.mxu0 %v1816
  %2410 = vmatpush2.bf16.msra.mxu0 %v1815
  %2411 = vmatprep.subr.bf16.mxu0 %v1812
  %2412 = vmatpush2.bf16.msra.mxu0 %v1811
  %2413 = vmatprep.subr.bf16.mxu0 %v1808
  %2414 = vmatpush2.bf16.msra.mxu0 %v1807
  %2415 = vmatprep.subr.bf16.mxu0 %v1804
  %2416 = vmatpush2.bf16.msra.mxu0 %v1803
  %2417 = vmatprep.subr.bf16.mxu0 %v1800
  %2418 = vmatpush2.bf16.msra.mxu0 %v1799
  %2419 = vmatprep.mubr.bf16.mxu0 %v442
  %2420 = vmatmul.mubr.bf16.gmra.mxu0 %v441
  %v2421 = vpop.f32.mrf.mxu0
  %v2422 = vadd.f32 %v2379, %v2421
  %v2423 = vpop.f32.mrf.mxu0
  %v2424 = vadd.f32 %v2381, %v2423
  %v2425 = vpop.f32.mrf.mxu0
  %v2426 = vadd.f32 %v2383, %v2425
  %v2427 = vpop.f32.mrf.mxu0
  %v2428 = vadd.f32 %v2385, %v2427
  %2429 = vdwg.mxu0
  %2430 = vmatprep.subr.bf16.mxu0 %v1860
  %2431 = vmatpush1.bf16.msra.mxu0 %v1859
  %2432 = vmatprep.subr.bf16.mxu0 %v1856
  %2433 = vmatpush1.bf16.msra.mxu0 %v1855
  %2434 = vmatprep.subr.bf16.mxu0 %v1852
  %2435 = vmatpush1.bf16.msra.mxu0 %v1851
  %2436 = vmatprep.subr.bf16.mxu0 %v1848
  %2437 = vmatpush1.bf16.msra.mxu0 %v1847
  %2438 = vmatprep.subr.bf16.mxu0 %v1844
  %2439 = vmatpush1.bf16.msra.mxu0 %v1843
  %2440 = vmatprep.subr.bf16.mxu0 %v1840
  %2441 = vmatpush1.bf16.msra.mxu0 %v1839
  %2442 = vmatprep.subr.bf16.mxu0 %v1836
  %2443 = vmatpush1.bf16.msra.mxu0 %v1835
  %2444 = vmatprep.subr.bf16.mxu0 %v1832
  %2445 = vmatpush1.bf16.msra.mxu0 %v1831
  %2446 = vmatprep.subr.bf16.mxu0 0
  %2447 = vmatpush2.bf16.msra.mxu0 0
  %2448 = vmatprep.subr.bf16.mxu0 0
  %2449 = vmatpush2.bf16.msra.mxu0 0
  %2450 = vmatprep.subr.bf16.mxu0 0
  %2451 = vmatpush2.bf16.msra.mxu0 0
  %2452 = vmatprep.subr.bf16.mxu0 0
  %2453 = vmatpush2.bf16.msra.mxu0 0
  %2454 = vmatprep.subr.bf16.mxu0 0
  %2455 = vmatpush2.bf16.msra.mxu0 0
  %2456 = vmatprep.subr.bf16.mxu0 0
  %2457 = vmatpush2.bf16.msra.mxu0 0
  %2458 = vmatprep.subr.bf16.mxu0 0
  %2459 = vmatpush2.bf16.msra.mxu0 0
  %2460 = vmatprep.subr.bf16.mxu0 0
  %2461 = vmatpush2.bf16.msra.mxu0 0
  %2462 = vmatprep.mubr.bf16.mxu0 0
  %2463 = vmatmul.mubr.bf16.gmra.mxu0 %v443
  %v2464 = vpop.f32.mrf.mxu0
  %v2465 = vadd.f32 %v2422, %v2464
  %v2466 = vpop.f32.mrf.mxu0
  %v2467 = vadd.f32 %v2424, %v2466
  %v2468 = vpop.f32.mrf.mxu0
  %v2469 = vadd.f32 %v2426, %v2468
  %v2470 = vpop.f32.mrf.mxu0
  %v2471 = vadd.f32 %v2428, %v2470
  %2472 = vdwg.mxu0
  %2473 = vmatprep.subr.bf16.mxu0 %v1542
  %2474 = vmatpush1.bf16.msra.mxu0 %v1541
  %2475 = vmatprep.subr.bf16.mxu0 %v1538
  %2476 = vmatpush1.bf16.msra.mxu0 %v1537
  %2477 = vmatprep.subr.bf16.mxu0 %v1534
  %2478 = vmatpush1.bf16.msra.mxu0 %v1533
  %2479 = vmatprep.subr.bf16.mxu0 %v1530
  %2480 = vmatpush1.bf16.msra.mxu0 %v1529
  %2481 = vmatprep.subr.bf16.mxu0 %v1526
  %2482 = vmatpush1.bf16.msra.mxu0 %v1525
  %2483 = vmatprep.subr.bf16.mxu0 %v1522
  %2484 = vmatpush1.bf16.msra.mxu0 %v1521
  %2485 = vmatprep.subr.bf16.mxu0 %v1518
  %2486 = vmatpush1.bf16.msra.mxu0 %v1517
  %2487 = vmatprep.subr.bf16.mxu0 %v1514
  %2488 = vmatpush1.bf16.msra.mxu0 %v1513
  %2489 = vmatprep.subr.bf16.mxu0 %v1574
  %2490 = vmatpush2.bf16.msra.mxu0 %v1573
  %2491 = vmatprep.subr.bf16.mxu0 %v1570
  %2492 = vmatpush2.bf16.msra.mxu0 %v1569
  %2493 = vmatprep.subr.bf16.mxu0 %v1566
  %2494 = vmatpush2.bf16.msra.mxu0 %v1565
  %2495 = vmatprep.subr.bf16.mxu0 %v1562
  %2496 = vmatpush2.bf16.msra.mxu0 %v1561
  %2497 = vmatprep.subr.bf16.mxu0 %v1558
  %2498 = vmatpush2.bf16.msra.mxu0 %v1557
  %2499 = vmatprep.subr.bf16.mxu0 %v1554
  %2500 = vmatpush2.bf16.msra.mxu0 %v1553
  %2501 = vmatprep.subr.bf16.mxu0 %v1550
  %2502 = vmatpush2.bf16.msra.mxu0 %v1549
  %2503 = vmatprep.subr.bf16.mxu0 %v1546
  %2504 = vmatpush2.bf16.msra.mxu0 %v1545
  %2505 = vmatprep.mubr.bf16.mxu0 %v434
  %2506 = vmatmul.mubr.bf16.gmra.mxu0 %v433
  %v2507 = vpop.f32.mrf.mxu0
  %v2508 = vadd.f32 0.0, %v2507
  %v2509 = vpop.f32.mrf.mxu0
  %v2510 = vadd.f32 0.0, %v2509
  %v2511 = vpop.f32.mrf.mxu0
  %v2512 = vadd.f32 0.0, %v2511
  %v2513 = vpop.f32.mrf.mxu0
  %v2514 = vadd.f32 0.0, %v2513
  %2515 = vdwg.mxu0
  %2516 = vmatprep.subr.bf16.mxu0 %v1606
  %2517 = vmatpush1.bf16.msra.mxu0 %v1605
  %2518 = vmatprep.subr.bf16.mxu0 %v1602
  %2519 = vmatpush1.bf16.msra.mxu0 %v1601
  %2520 = vmatprep.subr.bf16.mxu0 %v1598
  %2521 = vmatpush1.bf16.msra.mxu0 %v1597
  %2522 = vmatprep.subr.bf16.mxu0 %v1594
  %2523 = vmatpush1.bf16.msra.mxu0 %v1593
  %2524 = vmatprep.subr.bf16.mxu0 %v1590
  %2525 = vmatpush1.bf16.msra.mxu0 %v1589
  %2526 = vmatprep.subr.bf16.mxu0 %v1586
  %2527 = vmatpush1.bf16.msra.mxu0 %v1585
  %2528 = vmatprep.subr.bf16.mxu0 %v1582
  %2529 = vmatpush1.bf16.msra.mxu0 %v1581
  %2530 = vmatprep.subr.bf16.mxu0 %v1578
  %2531 = vmatpush1.bf16.msra.mxu0 %v1577
  %2532 = vmatprep.subr.bf16.mxu0 %v1638
  %2533 = vmatpush2.bf16.msra.mxu0 %v1637
  %2534 = vmatprep.subr.bf16.mxu0 %v1634
  %2535 = vmatpush2.bf16.msra.mxu0 %v1633
  %2536 = vmatprep.subr.bf16.mxu0 %v1630
  %2537 = vmatpush2.bf16.msra.mxu0 %v1629
  %2538 = vmatprep.subr.bf16.mxu0 %v1626
  %2539 = vmatpush2.bf16.msra.mxu0 %v1625
  %2540 = vmatprep.subr.bf16.mxu0 %v1622
  %2541 = vmatpush2.bf16.msra.mxu0 %v1621
  %2542 = vmatprep.subr.bf16.mxu0 %v1618
  %2543 = vmatpush2.bf16.msra.mxu0 %v1617
  %2544 = vmatprep.subr.bf16.mxu0 %v1614
  %2545 = vmatpush2.bf16.msra.mxu0 %v1613
  %2546 = vmatprep.subr.bf16.mxu0 %v1610
  %2547 = vmatpush2.bf16.msra.mxu0 %v1609
  %2548 = vmatprep.mubr.bf16.mxu0 %v436
  %2549 = vmatmul.mubr.bf16.gmra.mxu0 %v435
  %v2550 = vpop.f32.mrf.mxu0
  %v2551 = vadd.f32 %v2508, %v2550
  %v2552 = vpop.f32.mrf.mxu0
  %v2553 = vadd.f32 %v2510, %v2552
  %v2554 = vpop.f32.mrf.mxu0
  %v2555 = vadd.f32 %v2512, %v2554
  %v2556 = vpop.f32.mrf.mxu0
  %v2557 = vadd.f32 %v2514, %v2556
  %2558 = vdwg.mxu0
  %2559 = vmatprep.subr.bf16.mxu0 %v1670
  %2560 = vmatpush1.bf16.msra.mxu0 %v1669
  %2561 = vmatprep.subr.bf16.mxu0 %v1666
  %2562 = vmatpush1.bf16.msra.mxu0 %v1665
  %2563 = vmatprep.subr.bf16.mxu0 %v1662
  %2564 = vmatpush1.bf16.msra.mxu0 %v1661
  %2565 = vmatprep.subr.bf16.mxu0 %v1658
  %2566 = vmatpush1.bf16.msra.mxu0 %v1657
  %2567 = vmatprep.subr.bf16.mxu0 %v1654
  %2568 = vmatpush1.bf16.msra.mxu0 %v1653
  %2569 = vmatprep.subr.bf16.mxu0 %v1650
  %2570 = vmatpush1.bf16.msra.mxu0 %v1649
  %2571 = vmatprep.subr.bf16.mxu0 %v1646
  %2572 = vmatpush1.bf16.msra.mxu0 %v1645
  %2573 = vmatprep.subr.bf16.mxu0 %v1642
  %2574 = vmatpush1.bf16.msra.mxu0 %v1641
  %2575 = vmatprep.subr.bf16.mxu0 %v1702
  %2576 = vmatpush2.bf16.msra.mxu0 %v1701
  %2577 = vmatprep.subr.bf16.mxu0 %v1698
  %2578 = vmatpush2.bf16.msra.mxu0 %v1697
  %2579 = vmatprep.subr.bf16.mxu0 %v1694
  %2580 = vmatpush2.bf16.msra.mxu0 %v1693
  %2581 = vmatprep.subr.bf16.mxu0 %v1690
  %2582 = vmatpush2.bf16.msra.mxu0 %v1689
  %2583 = vmatprep.subr.bf16.mxu0 %v1686
  %2584 = vmatpush2.bf16.msra.mxu0 %v1685
  %2585 = vmatprep.subr.bf16.mxu0 %v1682
  %2586 = vmatpush2.bf16.msra.mxu0 %v1681
  %2587 = vmatprep.subr.bf16.mxu0 %v1678
  %2588 = vmatpush2.bf16.msra.mxu0 %v1677
  %2589 = vmatprep.subr.bf16.mxu0 %v1674
  %2590 = vmatpush2.bf16.msra.mxu0 %v1673
  %2591 = vmatprep.mubr.bf16.mxu0 %v438
  %2592 = vmatmul.mubr.bf16.gmra.mxu0 %v437
  %v2593 = vpop.f32.mrf.mxu0
  %v2594 = vadd.f32 %v2551, %v2593
  %v2595 = vpop.f32.mrf.mxu0
  %v2596 = vadd.f32 %v2553, %v2595
  %v2597 = vpop.f32.mrf.mxu0
  %v2598 = vadd.f32 %v2555, %v2597
  %v2599 = vpop.f32.mrf.mxu0
  %v2600 = vadd.f32 %v2557, %v2599
  %2601 = vdwg.mxu0
  %2602 = vmatprep.subr.bf16.mxu0 %v1734
  %2603 = vmatpush1.bf16.msra.mxu0 %v1733
  %2604 = vmatprep.subr.bf16.mxu0 %v1730
  %2605 = vmatpush1.bf16.msra.mxu0 %v1729
  %2606 = vmatprep.subr.bf16.mxu0 %v1726
  %2607 = vmatpush1.bf16.msra.mxu0 %v1725
  %2608 = vmatprep.subr.bf16.mxu0 %v1722
  %2609 = vmatpush1.bf16.msra.mxu0 %v1721
  %2610 = vmatprep.subr.bf16.mxu0 %v1718
  %2611 = vmatpush1.bf16.msra.mxu0 %v1717
  %2612 = vmatprep.subr.bf16.mxu0 %v1714
  %2613 = vmatpush1.bf16.msra.mxu0 %v1713
  %2614 = vmatprep.subr.bf16.mxu0 %v1710
  %2615 = vmatpush1.bf16.msra.mxu0 %v1709
  %2616 = vmatprep.subr.bf16.mxu0 %v1706
  %2617 = vmatpush1.bf16.msra.mxu0 %v1705
  %2618 = vmatprep.subr.bf16.mxu0 %v1766
  %2619 = vmatpush2.bf16.msra.mxu0 %v1765
  %2620 = vmatprep.subr.bf16.mxu0 %v1762
  %2621 = vmatpush2.bf16.msra.mxu0 %v1761
  %2622 = vmatprep.subr.bf16.mxu0 %v1758
  %2623 = vmatpush2.bf16.msra.mxu0 %v1757
  %2624 = vmatprep.subr.bf16.mxu0 %v1754
  %2625 = vmatpush2.bf16.msra.mxu0 %v1753
  %2626 = vmatprep.subr.bf16.mxu0 %v1750
  %2627 = vmatpush2.bf16.msra.mxu0 %v1749
  %2628 = vmatprep.subr.bf16.mxu0 %v1746
  %2629 = vmatpush2.bf16.msra.mxu0 %v1745
  %2630 = vmatprep.subr.bf16.mxu0 %v1742
  %2631 = vmatpush2.bf16.msra.mxu0 %v1741
  %2632 = vmatprep.subr.bf16.mxu0 %v1738
  %2633 = vmatpush2.bf16.msra.mxu0 %v1737
  %2634 = vmatprep.mubr.bf16.mxu0 %v440
  %2635 = vmatmul.mubr.bf16.gmra.mxu0 %v439
  %v2636 = vpop.f32.mrf.mxu0
  %v2637 = vadd.f32 %v2594, %v2636
  %v2638 = vpop.f32.mrf.mxu0
  %v2639 = vadd.f32 %v2596, %v2638
  %v2640 = vpop.f32.mrf.mxu0
  %v2641 = vadd.f32 %v2598, %v2640
  %v2642 = vpop.f32.mrf.mxu0
  %v2643 = vadd.f32 %v2600, %v2642
  %2644 = vdwg.mxu0
  %2645 = vmatprep.subr.bf16.mxu0 %v1798
  %2646 = vmatpush1.bf16.msra.mxu0 %v1797
  %2647 = vmatprep.subr.bf16.mxu0 %v1794
  %2648 = vmatpush1.bf16.msra.mxu0 %v1793
  %2649 = vmatprep.subr.bf16.mxu0 %v1790
  %2650 = vmatpush1.bf16.msra.mxu0 %v1789
  %2651 = vmatprep.subr.bf16.mxu0 %v1786
  %2652 = vmatpush1.bf16.msra.mxu0 %v1785
  %2653 = vmatprep.subr.bf16.mxu0 %v1782
  %2654 = vmatpush1.bf16.msra.mxu0 %v1781
  %2655 = vmatprep.subr.bf16.mxu0 %v1778
  %2656 = vmatpush1.bf16.msra.mxu0 %v1777
  %2657 = vmatprep.subr.bf16.mxu0 %v1774
  %2658 = vmatpush1.bf16.msra.mxu0 %v1773
  %2659 = vmatprep.subr.bf16.mxu0 %v1770
  %2660 = vmatpush1.bf16.msra.mxu0 %v1769
  %2661 = vmatprep.subr.bf16.mxu0 %v1830
  %2662 = vmatpush2.bf16.msra.mxu0 %v1829
  %2663 = vmatprep.subr.bf16.mxu0 %v1826
  %2664 = vmatpush2.bf16.msra.mxu0 %v1825
  %2665 = vmatprep.subr.bf16.mxu0 %v1822
  %2666 = vmatpush2.bf16.msra.mxu0 %v1821
  %2667 = vmatprep.subr.bf16.mxu0 %v1818
  %2668 = vmatpush2.bf16.msra.mxu0 %v1817
  %2669 = vmatprep.subr.bf16.mxu0 %v1814
  %2670 = vmatpush2.bf16.msra.mxu0 %v1813
  %2671 = vmatprep.subr.bf16.mxu0 %v1810
  %2672 = vmatpush2.bf16.msra.mxu0 %v1809
  %2673 = vmatprep.subr.bf16.mxu0 %v1806
  %2674 = vmatpush2.bf16.msra.mxu0 %v1805
  %2675 = vmatprep.subr.bf16.mxu0 %v1802
  %2676 = vmatpush2.bf16.msra.mxu0 %v1801
  %2677 = vmatprep.mubr.bf16.mxu0 %v442
  %2678 = vmatmul.mubr.bf16.gmra.mxu0 %v441
  %v2679 = vpop.f32.mrf.mxu0
  %v2680 = vadd.f32 %v2637, %v2679
  %v2681 = vpop.f32.mrf.mxu0
  %v2682 = vadd.f32 %v2639, %v2681
  %v2683 = vpop.f32.mrf.mxu0
  %v2684 = vadd.f32 %v2641, %v2683
  %v2685 = vpop.f32.mrf.mxu0
  %v2686 = vadd.f32 %v2643, %v2685
  %2687 = vdwg.mxu0
  %2688 = vmatprep.subr.bf16.mxu0 %v1862
  %2689 = vmatpush1.bf16.msra.mxu0 %v1861
  %2690 = vmatprep.subr.bf16.mxu0 %v1858
  %2691 = vmatpush1.bf16.msra.mxu0 %v1857
  %2692 = vmatprep.subr.bf16.mxu0 %v1854
  %2693 = vmatpush1.bf16.msra.mxu0 %v1853
  %2694 = vmatprep.subr.bf16.mxu0 %v1850
  %2695 = vmatpush1.bf16.msra.mxu0 %v1849
  %2696 = vmatprep.subr.bf16.mxu0 %v1846
  %2697 = vmatpush1.bf16.msra.mxu0 %v1845
  %2698 = vmatprep.subr.bf16.mxu0 %v1842
  %2699 = vmatpush1.bf16.msra.mxu0 %v1841
  %2700 = vmatprep.subr.bf16.mxu0 %v1838
  %2701 = vmatpush1.bf16.msra.mxu0 %v1837
  %2702 = vmatprep.subr.bf16.mxu0 %v1834
  %2703 = vmatpush1.bf16.msra.mxu0 %v1833
  %2704 = vmatprep.subr.bf16.mxu0 0
  %2705 = vmatpush2.bf16.msra.mxu0 0
  %2706 = vmatprep.subr.bf16.mxu0 0
  %2707 = vmatpush2.bf16.msra.mxu0 0
  %2708 = vmatprep.subr.bf16.mxu0 0
  %2709 = vmatpush2.bf16.msra.mxu0 0
  %2710 = vmatprep.subr.bf16.mxu0 0
  %2711 = vmatpush2.bf16.msra.mxu0 0
  %2712 = vmatprep.subr.bf16.mxu0 0
  %2713 = vmatpush2.bf16.msra.mxu0 0
  %2714 = vmatprep.subr.bf16.mxu0 0
  %2715 = vmatpush2.bf16.msra.mxu0 0
  %2716 = vmatprep.subr.bf16.mxu0 0
  %2717 = vmatpush2.bf16.msra.mxu0 0
  %2718 = vmatprep.subr.bf16.mxu0 0
  %2719 = vmatpush2.bf16.msra.mxu0 0
  %2720 = vmatprep.mubr.bf16.mxu0 0
  %2721 = vmatmul.mubr.bf16.gmra.mxu0 %v443
  %v2722 = vpop.f32.mrf.mxu0
  %v2723 = vadd.f32 %v2680, %v2722
  %v2724 = vpop.f32.mrf.mxu0
  %v2725 = vadd.f32 %v2682, %v2724
  %v2726 = vpop.f32.mrf.mxu0
  %v2727 = vadd.f32 %v2684, %v2726
  %v2728 = vpop.f32.mrf.mxu0
  %v2729 = vadd.f32 %v2686, %v2728
  %2730 = vdwg.mxu0
  %v2731 = vadd.f32 %v27, %v2465
  %v2732 = vadd.f32 %v28, %v2467
  %v2733 = vadd.f32 %v29, %v2723
  %v2734 = vadd.f32 %v30, %v2725
  %v2735 = vadd.f32 %v31, %v2469
  %v2736 = vadd.f32 %v32, %v2471
  %v2737 = vadd.f32 %v33, %v2727
  %v2738 = vadd.f32 %v34, %v2729
  %2739 = vst [vmem:[#allocation2] sm:$0xff] %v2731
  %2740 = vst [vmem:[#allocation2 + $0x8] sm:$0xff] %v2732
  %2741 = vst [vmem:[#allocation2 + $0x10] sm:$0xff] %v2733
  %2742 = vst [vmem:[#allocation2 + $0x18] sm:$0xff] %v2734
  %2743 = vst [vmem:[#allocation2 + $0x20] sm:$0xff] %v2735
  %2744 = vst [vmem:[#allocation2 + $0x28] sm:$0xff] %v2736
  %2745 = vst [vmem:[#allocation2 + $0x30] sm:$0xff] %v2737
  %2746 = vst [vmem:[#allocation2 + $0x38] sm:$0xff] %v2738
  // Predicated region
  $region18: #{cpi_regression_forward.10} parent=0 // pred_check
    %p2747 = pneg %p15
  $region19: #{cpi_regression_forward.10} parent=0 // pred_check_branch
    %2749 = sbr.rel (%p2747) target = $region21
  $region20: #{cpi_regression_forward.10} parent=0 // pred_region
    %v2750 = vld [vmem:[#allocation2] sm:$0xff]
    %v2751 = vld [vmem:[#allocation2 + $0x8] sm:$0xff]
    %v2752 = vld [vmem:[#allocation2 + $0x10] sm:$0xff]
    %v2753 = vld [vmem:[#allocation2 + $0x18] sm:$0xff]
    %v2754 = vld [vmem:[#allocation2 + $0x20] sm:$0xff]
    %v2755 = vld [vmem:[#allocation2 + $0x28] sm:$0xff]
    %v2756 = vld [vmem:[#allocation2 + $0x30] sm:$0xff]
    %v2757 = vld [vmem:[#allocation2 + $0x38] sm:$0xff]
    %v2758 = vld [vmem:[%s2] sm:$0xf]
    %v2760 = vlaneseq
    %v2761 = vshrl.u32 %v2760, 7
    %v2762 = vsub.s32 0, %v2761
    %v2763 = vrot.slane %v2758, %v2762
    %v2764 = vlaneseq
    %v2765 = vshrl.u32 %v2764, 7
    %v2766 = vsub.s32 1, %v2765
    %v2767 = vrot.slane %v2758, %v2766
    %v2768 = vlaneseq
    %v2769 = vshrl.u32 %v2768, 7
    %v2770 = vsub.s32 2, %v2769
    %v2771 = vrot.slane %v2758, %v2770
    %v2772 = vlaneseq
    %v2773 = vshrl.u32 %v2772, 7
    %v2774 = vsub.s32 3, %v2773
    %v2775 = vrot.slane %v2758, %v2774
    %v2780 = vadd.f32 %v2750, %v2763
    %v2781 = vadd.f32 %v2751, %v2767
    %v2782 = vadd.f32 %v2752, %v2771
    %v2783 = vadd.f32 %v2753, %v2775
    %v2784 = vadd.f32 %v2754, %v2763
    %v2785 = vadd.f32 %v2755, %v2767
    %v2786 = vadd.f32 %v2756, %v2771
    %v2787 = vadd.f32 %v2757, %v2775
    %vm2788 = vcmp.gt.f32.partialorder %v2780, 0.0
    %vm2789 = vcmp.gt.f32.partialorder %v2781, 0.0
    %vm2790 = vcmp.gt.f32.partialorder %v2782, 0.0
    %vm2791 = vcmp.gt.f32.partialorder %v2783, 0.0
    %vm2792 = vcmp.gt.f32.partialorder %v2784, 0.0
    %vm2793 = vcmp.gt.f32.partialorder %v2785, 0.0
    %vm2794 = vcmp.gt.f32.partialorder %v2786, 0.0
    %vm2795 = vcmp.gt.f32.partialorder %v2787, 0.0
    %v2796 = vmul.f32 %v2780, 0.01
    %v2797 = vmul.f32 %v2781, 0.01
    %v2798 = vmul.f32 %v2782, 0.01
    %v2799 = vmul.f32 %v2783, 0.01
    %v2800 = vmul.f32 %v2784, 0.01
    %v2801 = vmul.f32 %v2785, 0.01
    %v2802 = vmul.f32 %v2786, 0.01
    %v2803 = vmul.f32 %v2787, 0.01
    %v2804 = vsel %vm2788, %v2780, %v2796
    %v2805 = vsel %vm2789, %v2781, %v2797
    %v2806 = vsel %vm2790, %v2782, %v2798
    %v2807 = vsel %vm2791, %v2783, %v2799
    %v2808 = vsel %vm2792, %v2784, %v2800
    %v2809 = vsel %vm2793, %v2785, %v2801
    %v2810 = vsel %vm2794, %v2786, %v2802
    %v2811 = vsel %vm2795, %v2787, %v2803
    %2812 = vst [vmem:[%s3] sm:$0xff] %v2804
    %2813 = vst [vmem:[%s3 + $0x8] sm:$0xff] %v2805
    %2814 = vst [vmem:[%s3 + $0x10] sm:$0xff] %v2806
    %2815 = vst [vmem:[%s3 + $0x18] sm:$0xff] %v2807
    %2816 = vst [vmem:[%s3 + $0x20] sm:$0xff] %v2808
    %2817 = vst [vmem:[%s3 + $0x28] sm:$0xff] %v2809
    %2818 = vst [vmem:[%s3 + $0x30] sm:$0xff] %v2810
    %2819 = vst [vmem:[%s3 + $0x38] sm:$0xff] %v2811
  $region21: #{cpi_regression_forward.10} parent=0 // pred_fallthru
    _
  // Predicated region
  $region22: #{cpi_regression_forward.10} parent=0 // pred_check
    _
  $region23: #{cpi_regression_forward.10} parent=0 // pred_check_branch
    %2821 = sbr.rel (0) target = $region25
  $region24: #{cpi_regression_forward.10} parent=0 // pred_region
    _
  $region25: #{cpi_regression_forward.10} parent=0 // pred_fallthru
    _
  // Predicated region
  $region26: #{cpi_regression_forward.10} parent=0 // pred_check
    _
  $region27: #{cpi_regression_forward.10} parent=0 // pred_check_branch
    %2823 = sbr.rel (0) target = $region29
  $region28: #{cpi_regression_forward.10} parent=0 // pred_region
    _
  $region29: #{cpi_regression_forward.10} parent=0 // pred_fallthru
    _

// kernel: cpi_regression_forward.9
$region0: #{cpi_regression_forward.9}
  #allocation0 [shape = 'u32[]', space=smem, size = 0x4, offset = 0x4, fixed_abs, tag = 'smem constant byte address 0x4 - core index']
  #allocation1 [shape = 'u32[144,128]{1,0:T(1,128)}', space=vmem, size = 0x12000, scoped, tag = 'internal scratch']
  #allocation2 [shape = 'f32[16,512]{1,0:T(8,128)}', space=vmem, size = 0x8000, scoped, tag = 'scratch operand']
  %s0 = inlined_call_operand.vmem [shape: bf16[16,18432], index: 0, kind: input, shape index: {}]
  %s1 = inlined_call_operand.hbm [shape: bf16[18432,1024], index: 1, kind: input, shape index: {}]
  %s2 = inlined_call_operand.hbm [shape: f32[1,1024], index: 2, kind: input, shape index: {}]
  %s3 = inlined_call_operand.vmem [shape: f32[16,1024], index: 3, kind: output, shape index: {}]
  %s4 = sld [smem:[#allocation0]]
  $region103: #{cpi_regression_forward.9} parent=0
    _
  %s6 = ssub.s32 1, %s4
  %s7 = scalar_select 0, %s6, %s4
  $region1: #{cpi_regression_forward.9} parent=0
    #allocation3 [shape = 'u8[131072]{0}', space=vmem, size = 0x20000, scoped, tag = 'input window, operand 0']
    #allocation4 [shape = 'u8[4194304]{0}', space=vmem, size = 0x400000, scoped, tag = 'input window, operand 1']
    #allocation5 [shape = 's32[2]{0}', space=sflag, size = 0x8, scoped, tag = 'scoped memory for cpi_regression_forward.9']
    #allocation6 [shape = 'u8[4096]{0}', space=vmem, size = 0x1000, scoped, tag = 'input window, operand 2']
    #allocation7 [shape = 's32[2]{0}', space=sflag, size = 0x8, scoped, tag = 'scoped memory for cpi_regression_forward.9']
    #allocation8 [shape = 'u8[65536]{0}', space=vmem, size = 0x10000, scoped, tag = 'output window, operand 0']
    %8 = vsyncpa [#allocation5], 0
    %s9 = scalar_lea.sflag [#allocation5], 1
    %10 = vsyncpa %s9, 0
    %11 = vsyncpa [#allocation7], 0
    %s12 = scalar_lea.sflag [#allocation7], 1
    %13 = vsyncpa %s12, 0
    loop: start=0, step=1, limit=20
    $region2: #{cpi_regression_forward.9} parent=1 // loop_pre_header
      _
    $region3: #{cpi_regression_forward.9} parent=1 // loop_header
      %s15 = sphi 0, %s19
      %p16 = scmp.ge.s32.totalorder %s15, 20
      %s22 = sphi 0, %s41
      %s23 = sphi 0, %s37
      %s24 = sphi 0, %s33
      %s25 = sphi 0, %s22
      %s26 = sphi 0, %s23
      %s27 = sphi 0, %s24
      %s28 = sphi 0, %s25
      %s29 = sphi 0, %s26
      %s30 = sphi 0, %s27
      %s46 = sphi 0, %s48
      %s49 = sphi 0, %s46
      %s50 = sphi 0, %s49
      %s66 = sphi 0, %s50
      %s74 = sphi 0, %s76
      %s77 = sphi 0, %s74
      %s78 = sphi 0, %s77
      %s94 = sphi 0, %s78
      %s100 = sphi 0, %s102
      %s103 = sphi 0, %s100
      %s104 = sphi 0, %s103
      %s120 = sphi 0, %s104
      %s128 = sphi 0, %s130
      %s131 = sphi 0, %s128
      %s132 = sphi 0, %s131
      %s148 = sphi 0, %s132
    $region4: #{cpi_regression_forward.9} parent=1 // loop_header_branch
      %18 = sbr.rel (%p16) target = $region8
    $region5: #{cpi_regression_forward.9} parent=1 // loop_body
      %s20 = ssub.s32 %s15, 1
      %s21 = ssub.s32 %s15, 2
      %s31 = sadd.s32 1, %s24
      %p32 = scmp.ge.s32.totalorder %s31, 9
      %s33 = scalar_select %p32, 0, %s31
      %s34 = sadd.s32 1, %s23
      %s35 = scalar_select %p32, %s34, %s23
      %p36 = scmp.ge.s32.totalorder %s35, 2
      %s37 = scalar_select %p36, 0, %s35
      %s38 = sadd.s32 1, %s22
      %s39 = scalar_select %p36, %s38, %s22
      %p40 = scmp.ge.s32.totalorder %s39, 1
      %s41 = scalar_select %p40, 0, %s39
      %s42 = ssub.s32 %s22, %s41
      %s43 = ssub.s32 %s24, %s33
      %s44 = sor.u32 %s42, %s43
      %p45 = scmp.eq.s32.totalorder %s44, 0
      %s47 = sadd.s32 %s46, 1
      %s48 = scalar_select %p45, %s46, %s47
      %p51 = pneg %p45
      %p52 = scmp.eq.s32.totalorder %s15, 17
      %p53 = por %p51, %p52
      %p54 = scmp.ne.s32.totalorder %s46, %s49
      %p55 = scmp.eq.s32.totalorder %s15, 0
      %p56 = por %p54, %p55
      %p57 = scmp.ne.s32.totalorder %s46, %s49
      %p58 = scmp.eq.s32.totalorder %s20, 17
      %p59 = por %p57, %p58
      %p60 = scmp.ne.s32.totalorder %s49, %s50
      %p61 = scmp.eq.s32.totalorder %s20, 0
      %p62 = por %p60, %p61
      %p63 = scmp.ne.s32.totalorder %s49, %s50
      %p64 = scmp.eq.s32.totalorder %s21, 17
      %p65 = por %p63, %p64
      %p67 = scmp.ne.s32.totalorder %s50, %s66
      %p68 = scmp.eq.s32.totalorder %s21, 0
      %p69 = por %p67, %p68
      %s70 = ssub.s32 %s24, %s33
      %s71 = ssub.s32 %s23, %s37
      %s72 = sor.u32 %s70, %s71
      %p73 = scmp.eq.s32.totalorder %s72, 0
      %s75 = sadd.s32 %s74, 1
      %s76 = scalar_select %p73, %s74, %s75
      %p79 = pneg %p73
      %p80 = scmp.eq.s32.totalorder %s15, 17
      %p81 = por %p79, %p80
      %p82 = scmp.ne.s32.totalorder %s74, %s77
      %p83 = scmp.eq.s32.totalorder %s15, 0
      %p84 = por %p82, %p83
      %p85 = scmp.ne.s32.totalorder %s74, %s77
      %p86 = scmp.eq.s32.totalorder %s20, 17
      %p87 = por %p85, %p86
      %p88 = scmp.ne.s32.totalorder %s77, %s78
      %p89 = scmp.eq.s32.totalorder %s20, 0
      %p90 = por %p88, %p89
      %p91 = scmp.ne.s32.totalorder %s77, %s78
      %p92 = scmp.eq.s32.totalorder %s21, 17
      %p93 = por %p91, %p92
      %p95 = scmp.ne.s32.totalorder %s78, %s94
      %p96 = scmp.eq.s32.totalorder %s21, 0
      %p97 = por %p95, %p96
      %s98 = ssub.s32 %s23, %s37
      %p99 = scmp.eq.s32.totalorder %s98, 0
      %s101 = sadd.s32 %s100, 1
      %s102 = scalar_select %p99, %s100, %s101
      %p105 = pneg %p99
      %p106 = scmp.eq.s32.totalorder %s15, 17
      %p107 = por %p105, %p106
      %p108 = scmp.ne.s32.totalorder %s100, %s103
      %p109 = scmp.eq.s32.totalorder %s15, 0
      %p110 = por %p108, %p109
      %p111 = scmp.ne.s32.totalorder %s100, %s103
      %p112 = scmp.eq.s32.totalorder %s20, 17
      %p113 = por %p111, %p112
      %p114 = scmp.ne.s32.totalorder %s103, %s104
      %p115 = scmp.eq.s32.totalorder %s20, 0
      %p116 = por %p114, %p115
      %p117 = scmp.ne.s32.totalorder %s103, %s104
      %p118 = scmp.eq.s32.totalorder %s21, 17
      %p119 = por %p117, %p118
      %p121 = scmp.ne.s32.totalorder %s104, %s120
      %p122 = scmp.eq.s32.totalorder %s21, 0
      %p123 = por %p121, %p122
      %s124 = ssub.s32 %s22, %s41
      %s125 = ssub.s32 %s23, %s37
      %s126 = sor.u32 %s124, %s125
      %p127 = scmp.eq.s32.totalorder %s126, 0
      %s129 = sadd.s32 %s128, 1
      %s130 = scalar_select %p127, %s128, %s129
      %p133 = pneg %p127
      %p134 = scmp.eq.s32.totalorder %s15, 17
      %p135 = por %p133, %p134
      %p136 = scmp.ne.s32.totalorder %s128, %s131
      %p137 = scmp.eq.s32.totalorder %s15, 0
      %p138 = por %p136, %p137
      %p139 = scmp.ne.s32.totalorder %s128, %s131
      %p140 = scmp.eq.s32.totalorder %s20, 17
      %p141 = por %p139, %p140
      %p142 = scmp.ne.s32.totalorder %s131, %s132
      %p143 = scmp.eq.s32.totalorder %s20, 0
      %p144 = por %p142, %p143
      %p145 = scmp.ne.s32.totalorder %s131, %s132
      %p146 = scmp.eq.s32.totalorder %s21, 17
      %p147 = por %p145, %p146
      %p149 = scmp.ne.s32.totalorder %s132, %s148
      %p150 = scmp.eq.s32.totalorder %s21, 0
      %p151 = por %p149, %p150
      %p152 = scmp.le.s32.totalorder 1, %s15
      %p153 = scmp.lt.s32.totalorder %s15, 19
      %p154 = pnand %p152, %p153
      %p155 = pneg %p154
      // Predicated region
      $region9: #{cpi_regression_forward.9} parent=5 // pred_check
        _
      $region10: #{cpi_regression_forward.9} parent=5 // pred_check_branch
        %157 = sbr.rel (%p154) target = $region12
      $region11: #{cpi_regression_forward.9} parent=5 // pred_region
        %s158 = ssub.s32 %s15, 1
      $region12: #{cpi_regression_forward.9} parent=5 // pred_fallthru
        _
      %p159 = scmp.lt.s32.totalorder %s15, 18
      // Predicated region
      $region13: #{cpi_regression_forward.9} parent=5 // pred_check
        %p160 = pneg %p159
      $region14: #{cpi_regression_forward.9} parent=5 // pred_check_branch
        %162 = sbr.rel (%p160) target = $region16
      $region15: #{cpi_regression_forward.9} parent=5 // pred_region
        // Predicated region
        $region17: #{cpi_regression_forward.9} parent=15 // pred_check
          %p163 = pneg %p56
        $region18: #{cpi_regression_forward.9} parent=15 // pred_check_branch
          %165 = sbr.rel (%p163) target = $region20
        $region19: #{cpi_regression_forward.9} parent=15 // pred_region
          %s166 = sand.u32 %s46, 1
          %s167 = sand.u32 %s46, 1
          %s168 = smul.addr %s167, 128
          %s169 = scalar_lea.vmem [#allocation3], %s168
          %s170 = smul.u32 2, %s22
          %s171 = smul.u32 16, %s24
          %s172 = smul.addr %s170, 144
          %s173 = sadd.s32 %s171, %s172
          %s174 = smul.addr %s173, 4
          %s175 = scalar_lea.vmem %s0, %s174
          // Predicated region
          $region21: #{cpi_regression_forward.9} parent=19 // pred_check
            _
          $region22: #{cpi_regression_forward.9} parent=19 // pred_check_branch
            %177 = sbr.rel (0) target = $region24
          $region23: #{cpi_regression_forward.9} parent=19 // pred_region
            // Predicated region
            $region25: #{cpi_regression_forward.9} parent=23 // pred_check
              _
            $region26: #{cpi_regression_forward.9} parent=23 // pred_check_branch
              %179 = sbr.rel (0) target = $region28
            $region27: #{cpi_regression_forward.9} parent=23 // pred_region
              loop: start=0, step=1, limit=1
              $region29: #{cpi_regression_forward.9} parent=27 // loop_pre_header
                _
              $region30: #{cpi_regression_forward.9} parent=27 // loop_header
                %s181 = sphi 0, %s185
                %p182 = scmp.ge.s32.totalorder %s181, 1
                %s186 = sphi %s175, %s175
                %s187 = sphi %s169, %s169
              $region31: #{cpi_regression_forward.9} parent=27 // loop_header_branch
                %184 = sbr.rel (%p182) target = $region35
              $region32: #{cpi_regression_forward.9} parent=27 // loop_body
                %v188 = vld [vmem:[%s186] sm:$0xff]
                %189 = vst [vmem:[%s187] sm:$0xff] %v188
                %v190 = vld [vmem:[%s186 + $0x8] sm:$0xff]
                %191 = vst [vmem:[%s187 + $0x8] sm:$0xff] %v190
                %v192 = vld [vmem:[%s186 + $0x10] sm:$0xff]
                %193 = vst [vmem:[%s187 + $0x10] sm:$0xff] %v192
                %v194 = vld [vmem:[%s186 + $0x18] sm:$0xff]
                %195 = vst [vmem:[%s187 + $0x18] sm:$0xff] %v194
                %v196 = vld [vmem:[%s186 + $0x20] sm:$0xff]
                %197 = vst [vmem:[%s187 + $0x20] sm:$0xff] %v196
                %v198 = vld [vmem:[%s186 + $0x28] sm:$0xff]
                %199 = vst [vmem:[%s187 + $0x28] sm:$0xff] %v198
                %v200 = vld [vmem:[%s186 + $0x30] sm:$0xff]
                %201 = vst [vmem:[%s187 + $0x30] sm:$0xff] %v200
                %v202 = vld [vmem:[%s186 + $0x38] sm:$0xff]
                %203 = vst [vmem:[%s187 + $0x38] sm:$0xff] %v202
                %v204 = vld [vmem:[%s186 + $0x240] sm:$0xff]
                %205 = vst [vmem:[%s187 + $0x40] sm:$0xff] %v204
                %v206 = vld [vmem:[%s186 + $0x248] sm:$0xff]
                %207 = vst [vmem:[%s187 + $0x48] sm:$0xff] %v206
                %v208 = vld [vmem:[%s186 + $0x250] sm:$0xff]
                %209 = vst [vmem:[%s187 + $0x50] sm:$0xff] %v208
                %v210 = vld [vmem:[%s186 + $0x258] sm:$0xff]
                %211 = vst [vmem:[%s187 + $0x58] sm:$0xff] %v210
                %v212 = vld [vmem:[%s186 + $0x260] sm:$0xff]
                %213 = vst [vmem:[%s187 + $0x60] sm:$0xff] %v212
                %v214 = vld [vmem:[%s186 + $0x268] sm:$0xff]
                %215 = vst [vmem:[%s187 + $0x68] sm:$0xff] %v214
                %v216 = vld [vmem:[%s186 + $0x270] sm:$0xff]
                %217 = vst [vmem:[%s187 + $0x70] sm:$0xff] %v216
                %v218 = vld [vmem:[%s186 + $0x278] sm:$0xff]
                %219 = vst [vmem:[%s187 + $0x78] sm:$0xff] %v218
              $region33: #{cpi_regression_forward.9} parent=27 // loop_footer
                %s185 = sadd.s32 1, %s181
              $region34: #{cpi_regression_forward.9} parent=27 // loop_footer_branch
                %180 = sbr.rel target = $region30
              $region35: #{cpi_regression_forward.9} parent=27 // loop_exit
                _
            $region28: #{cpi_regression_forward.9} parent=23 // pred_fallthru
              _
            // Predicated region
            $region36: #{cpi_regression_forward.9} parent=23 // pred_check
              _
            $region37: #{cpi_regression_forward.9} parent=23 // pred_check_branch
              %221 = sbr.rel target = $region39
            $region38: #{cpi_regression_forward.9} parent=23 // pred_region
              _
            $region39: #{cpi_regression_forward.9} parent=23 // pred_fallthru
              _
          $region24: #{cpi_regression_forward.9} parent=19 // pred_fallthru
            _
          %222 = vnop
        $region20: #{cpi_regression_forward.9} parent=15 // pred_fallthru
          _
        // Predicated region
        $region40: #{cpi_regression_forward.9} parent=15 // pred_check
          %p223 = pneg %p84
        $region41: #{cpi_regression_forward.9} parent=15 // pred_check_branch
          %225 = sbr.rel (%p223) target = $region43
        $region42: #{cpi_regression_forward.9} parent=15 // pred_region
          %s226 = sand.u32 %s74, 1
          %s227 = scalar_lea.sflag [#allocation5], %s226
          %s228 = sand.u32 %s74, 1
          %s229 = smul.addr %s228, 4096
          %s230 = scalar_lea.vmem [#allocation4], %s229
          %s231 = smul.u32 256, %s24
          %s232 = smul.u32 4, %s23
          %s234 = ssub.s32 65536, 65536
          %235 = vsyncadd %s227, %s234
          %s236 = smul.addr %s231, 8
          %s237 = sadd.s32 %s232, %s236
          %s238 = smul.addr %s237, 64
          %s239 = scalar_lea.hbm %s1, %s238
          %s240 = sshll.u32 %s230, 4
          %s241 = int_to_ptr.vmem [resolvable:$true] %s240
          %246 = dma.hbm_to_vmem [thread:$0]  %s239, 65536, %s241, %s227, 512, 256, 16
        $region43: #{cpi_regression_forward.9} parent=15 // pred_fallthru
          _
        // Predicated region
        $region44: #{cpi_regression_forward.9} parent=15 // pred_check
          %p247 = pneg %p110
        $region45: #{cpi_regression_forward.9} parent=15 // pred_check_branch
          %249 = sbr.rel (%p247) target = $region47
        $region46: #{cpi_regression_forward.9} parent=15 // pred_region
          %s250 = sand.u32 %s100, 1
          %s251 = scalar_lea.sflag [#allocation7], %s250
          %s252 = sand.u32 %s100, 1
          %s253 = smul.addr %s252, 4
          %s254 = scalar_lea.vmem [#allocation6], %s253
          %s255 = smul.u32 4, %s23
          %s257 = ssub.s32 64, 64
          %258 = vsyncadd %s251, %s257
          %s259 = smul.addr %s255, 16
          %s260 = scalar_lea.hbm %s2, %s259
          %s262 = sshll.u32 %s254, 4
          %s263 = int_to_ptr.vmem [resolvable:$true] %s262
          %265 = dma.hbm_to_vmem [thread:$0]  %s260, 64, %s263, %s251
        $region47: #{cpi_regression_forward.9} parent=15 // pred_fallthru
          _
      $region16: #{cpi_regression_forward.9} parent=5 // pred_fallthru
        _
      %p266 = scmp.le.s32.totalorder 1, %s15
      %p267 = scmp.lt.s32.totalorder %s15, 19
      %p268 = pnand %p266, %p267
      %p269 = pneg %p268
      // Predicated region
      $region48: #{cpi_regression_forward.9} parent=5 // pred_check
        _
      $region49: #{cpi_regression_forward.9} parent=5 // pred_check_branch
        %271 = sbr.rel (%p268) target = $region51
      $region50: #{cpi_regression_forward.9} parent=5 // pred_region
        %s272 = ssub.s32 %s15, 1
        %s273 = sand.u32 %s49, 1
        %s274 = sand.u32 %s49, 1
        %s275 = smul.addr %s274, 128
        %s276 = scalar_lea.vmem [#allocation3], %s275
        // Predicated region
        $region52: #{cpi_regression_forward.9} parent=50 // pred_check
          %p277 = pneg %p62
        $region53: #{cpi_regression_forward.9} parent=50 // pred_check_branch
          %279 = sbr.rel (%p277) target = $region55
        $region54: #{cpi_regression_forward.9} parent=50 // pred_region
          _
        $region55: #{cpi_regression_forward.9} parent=50 // pred_fallthru
          _
        %s280 = sand.u32 %s77, 1
        %s281 = scalar_lea.sflag [#allocation5], %s280
        %s282 = sand.u32 %s77, 1
        %s283 = smul.addr %s282, 4096
        %s284 = scalar_lea.vmem [#allocation4], %s283
        // Predicated region
        $region56: #{cpi_regression_forward.9} parent=50 // pred_check
          %p285 = pneg %p90
        $region57: #{cpi_regression_forward.9} parent=50 // pred_check_branch
          %287 = sbr.rel (%p285) target = $region59
        $region58: #{cpi_regression_forward.9} parent=50 // pred_region
          %288 = dma.done %s281, 65536
        $region59: #{cpi_regression_forward.9} parent=50 // pred_fallthru
          _
        %s289 = sand.u32 %s103, 1
        %s290 = scalar_lea.sflag [#allocation7], %s289
        %s291 = sand.u32 %s103, 1
        %s292 = smul.addr %s291, 4
        %s293 = scalar_lea.vmem [#allocation6], %s292
        // Predicated region
        $region60: #{cpi_regression_forward.9} parent=50 // pred_check
          %p294 = pneg %p116
        $region61: #{cpi_regression_forward.9} parent=50 // pred_check_branch
          %296 = sbr.rel (%p294) target = $region63
        $region62: #{cpi_regression_forward.9} parent=50 // pred_region
          %297 = dma.done %s290, 64
        $region63: #{cpi_regression_forward.9} parent=50 // pred_fallthru
          _
        %s298 = sand.u32 %s49, 1
        %s299 = sand.u32 %s49, 1
        %s300 = smul.addr %s299, 128
        %s301 = scalar_lea.vmem [#allocation3], %s300
        %p302 = pneg %p62
        %p303 = pneg %p59
        %s304 = sand.u32 %s77, 1
        %s305 = scalar_lea.sflag [#allocation5], %s304
        %s306 = sand.u32 %s77, 1
        %s307 = smul.addr %s306, 4096
        %s308 = scalar_lea.vmem [#allocation4], %s307
        %p309 = pneg %p90
        %p310 = pneg %p87
        %s311 = sand.u32 %s103, 1
        %s312 = scalar_lea.sflag [#allocation7], %s311
        %s313 = sand.u32 %s103, 1
        %s314 = smul.addr %s313, 4
        %s315 = scalar_lea.vmem [#allocation6], %s314
        %p316 = pneg %p116
        %p317 = pneg %p113
        %p318 = pneg %p144
        %p319 = pneg %p141
        %s320 = sand.u32 %s131, 1
        %s321 = sand.u32 %s131, 1
        %s322 = smul.addr %s321, 64
        %s323 = scalar_lea.vmem [#allocation8], %s322
        %s324 = smul.u32 2, %s25
        %s325 = smul.u32 16, %s27
        %s326 = smul.u32 256, %s27
        %s327 = smul.u32 4, %s26
        %s328 = smul.u32 4, %s26
        %s329 = smul.u32 2, %s25
        %s330 = smul.u32 4, %s26
        %p331 = scmp.eq.s32.totalorder %s27, 0
        // Predicated region
        $region64: #{cpi_regression_forward.9} parent=50 // pred_check
          %p332 = pneg %p331
        $region65: #{cpi_regression_forward.9} parent=50 // pred_check_branch
          %334 = sbr.rel (%p332) target = $region67
        $region66: #{cpi_regression_forward.9} parent=50 // pred_region
          %335 = vst [vmem:[#allocation2] sm:$0xff] 0.0
          %336 = vst [vmem:[#allocation2 + $0x8] sm:$0xff] 0.0
          %337 = vst [vmem:[#allocation2 + $0x10] sm:$0xff] 0.0
          %338 = vst [vmem:[#allocation2 + $0x18] sm:$0xff] 0.0
          %339 = vst [vmem:[#allocation2 + $0x20] sm:$0xff] 0.0
          %340 = vst [vmem:[#allocation2 + $0x28] sm:$0xff] 0.0
          %341 = vst [vmem:[#allocation2 + $0x30] sm:$0xff] 0.0
          %342 = vst [vmem:[#allocation2 + $0x38] sm:$0xff] 0.0
        $region67: #{cpi_regression_forward.9} parent=50 // pred_fallthru
          _
        %v343 = vld [vmem:[#allocation2] sm:$0xff]
        %v344 = vld [vmem:[#allocation2 + $0x8] sm:$0xff]
        %v345 = vld [vmem:[#allocation2 + $0x10] sm:$0xff]
        %v346 = vld [vmem:[#allocation2 + $0x18] sm:$0xff]
        %v347 = vld [vmem:[#allocation2 + $0x20] sm:$0xff]
        %v348 = vld [vmem:[#allocation2 + $0x28] sm:$0xff]
        %v349 = vld [vmem:[#allocation2 + $0x30] sm:$0xff]
        %v350 = vld [vmem:[#allocation2 + $0x38] sm:$0xff]
        %v351 = vld [vmem:[%s276] sm:$0xff]
        %v352 = vld [vmem:[%s276 + $0x8] sm:$0xff]
        %v353 = vld [vmem:[%s276 + $0x10] sm:$0xff]
        %v354 = vld [vmem:[%s276 + $0x18] sm:$0xff]
        %v355 = vld [vmem:[%s276 + $0x20] sm:$0xff]
        %v356 = vld [vmem:[%s276 + $0x28] sm:$0xff]
        %v357 = vld [vmem:[%s276 + $0x30] sm:$0xff]
        %v358 = vld [vmem:[%s276 + $0x38] sm:$0xff]
        %v359 = vld [vmem:[%s276 + $0x40] sm:$0xff]
        %v360 = vld [vmem:[%s276 + $0x48] sm:$0xff]
        %v361 = vld [vmem:[%s276 + $0x50] sm:$0xff]
        %v362 = vld [vmem:[%s276 + $0x58] sm:$0xff]
        %v363 = vld [vmem:[%s276 + $0x60] sm:$0xff]
        %v364 = vld [vmem:[%s276 + $0x68] sm:$0xff]
        %v365 = vld [vmem:[%s276 + $0x70] sm:$0xff]
        %v366 = vld [vmem:[%s276 + $0x78] sm:$0xff]
        %v367 = vld [vmem:[%s284] sm:$0xff]
        %v368 = vld [vmem:[%s284 + $0x8] sm:$0xff]
        %v369 = vld [vmem:[%s284 + $0x10] sm:$0xff]
        %v370 = vld [vmem:[%s284 + $0x18] sm:$0xff]
        %v371 = vld [vmem:[%s284 + $0x20] sm:$0xff]
        %v372 = vld [vmem:[%s284 + $0x28] sm:$0xff]
        %v373 = vld [vmem:[%s284 + $0x30] sm:$0xff]
        %v374 = vld [vmem:[%s284 + $0x38] sm:$0xff]
        %v375 = vld [vmem:[%s284 + $0x40] sm:$0xff]
        %v376 = vld [vmem:[%s284 + $0x48] sm:$0xff]
        %v377 = vld [vmem:[%s284 + $0x50] sm:$0xff]
        %v378 = vld [vmem:[%s284 + $0x58] sm:$0xff]
        %v379 = vld [vmem:[%s284 + $0x60] sm:$0xff]
        %v380 = vld [vmem:[%s284 + $0x68] sm:$0xff]
        %v381 = vld [vmem:[%s284 + $0x70] sm:$0xff]
        %v382 = vld [vmem:[%s284 + $0x78] sm:$0xff]
        %v383 = vld [vmem:[%s284 + $0x80] sm:$0xff]
        %v384 = vld [vmem:[%s284 + $0x88] sm:$0xff]
        %v385 = vld [vmem:[%s284 + $0x90] sm:$0xff]
        %v386 = vld [vmem:[%s284 + $0x98] sm:$0xff]
        %v387 = vld [vmem:[%s284 + $0xa0] sm:$0xff]
        %v388 = vld [vmem:[%s284 + $0xa8] sm:$0xff]
        %v389 = vld [vmem:[%s284 + $0xb0] sm:$0xff]
        %v390 = vld [vmem:[%s284 + $0xb8] sm:$0xff]
        %v391 = vld [vmem:[%s284 + $0xc0] sm:$0xff]
        %v392 = vld [vmem:[%s284 + $0xc8] sm:$0xff]
        %v393 = vld [vmem:[%s284 + $0xd0] sm:$0xff]
        %v394 = vld [vmem:[%s284 + $0xd8] sm:$0xff]
        %v395 = vld [vmem:[%s284 + $0xe0] sm:$0xff]
        %v396 = vld [vmem:[%s284 + $0xe8] sm:$0xff]
        %v397 = vld [vmem:[%s284 + $0xf0] sm:$0xff]
        %v398 = vld [vmem:[%s284 + $0xf8] sm:$0xff]
        %v399 = vld [vmem:[%s284 + $0x100] sm:$0xff]
        %v400 = vld [vmem:[%s284 + $0x108] sm:$0xff]
        %v401 = vld [vmem:[%s284 + $0x110] sm:$0xff]
        %v402 = vld [vmem:[%s284 + $0x118] sm:$0xff]
        %v403 = vld [vmem:[%s284 + $0x120] sm:$0xff]
        %v404 = vld [vmem:[%s284 + $0x128] sm:$0xff]
        %v405 = vld [vmem:[%s284 + $0x130] sm:$0xff]
        %v406 = vld [vmem:[%s284 + $0x138] sm:$0xff]
        %v407 = vld [vmem:[%s284 + $0x140] sm:$0xff]
        %v408 = vld [vmem:[%s284 + $0x148] sm:$0xff]
        %v409 = vld [vmem:[%s284 + $0x150] sm:$0xff]
        %v410 = vld [vmem:[%s284 + $0x158] sm:$0xff]
        %v411 = vld [vmem:[%s284 + $0x160] sm:$0xff]
        %v412 = vld [vmem:[%s284 + $0x168] sm:$0xff]
        %v413 = vld [vmem:[%s284 + $0x170] sm:$0xff]
        %v414 = vld [vmem:[%s284 + $0x178] sm:$0xff]
        %v415 = vld [vmem:[%s284 + $0x180] sm:$0xff]
        %v416 = vld [vmem:[%s284 + $0x188] sm:$0xff]
        %v417 = vld [vmem:[%s284 + $0x190] sm:$0xff]
        %v418 = vld [vmem:[%s284 + $0x198] sm:$0xff]
        %v419 = vld [vmem:[%s284 + $0x1a0] sm:$0xff]
        %v420 = vld [vmem:[%s284 + $0x1a8] sm:$0xff]
        %v421 = vld [vmem:[%s284 + $0x1b0] sm:$0xff]
        %v422 = vld [vmem:[%s284 + $0x1b8] sm:$0xff]
        %v423 = vld [vmem:[%s284 + $0x1c0] sm:$0xff]
        %v424 = vld [vmem:[%s284 + $0x1c8] sm:$0xff]
        %v425 = vld [vmem:[%s284 + $0x1d0] sm:$0xff]
        %v426 = vld [vmem:[%s284 + $0x1d8] sm:$0xff]
        %v427 = vld [vmem:[%s284 + $0x1e0] sm:$0xff]
        %v428 = vld [vmem:[%s284 + $0x1e8] sm:$0xff]
        %v429 = vld [vmem:[%s284 + $0x1f0] sm:$0xff]
        %v430 = vld [vmem:[%s284 + $0x1f8] sm:$0xff]
        %v431 = vld [vmem:[%s284 + $0x200] sm:$0xff]
        %v432 = vld [vmem:[%s284 + $0x208] sm:$0xff]
        %v433 = vld [vmem:[%s284 + $0x210] sm:$0xff]
        %v434 = vld [vmem:[%s284 + $0x218] sm:$0xff]
        %v435 = vld [vmem:[%s284 + $0x220] sm:$0xff]
        %v436 = vld [vmem:[%s284 + $0x228] sm:$0xff]
        %v437 = vld [vmem:[%s284 + $0x230] sm:$0xff]
        %v438 = vld [vmem:[%s284 + $0x238] sm:$0xff]
        %v439 = vld [vmem:[%s284 + $0x240] sm:$0xff]
        %v440 = vld [vmem:[%s284 + $0x248] sm:$0xff]
        %v441 = vld [vmem:[%s284 + $0x250] sm:$0xff]
        %v442 = vld [vmem:[%s284 + $0x258] sm:$0xff]
        %v443 = vld [vmem:[%s284 + $0x260] sm:$0xff]
        %v444 = vld [vmem:[%s284 + $0x268] sm:$0xff]
        %v445 = vld [vmem:[%s284 + $0x270] sm:$0xff]
        %v446 = vld [vmem:[%s284 + $0x278] sm:$0xff]
        %v447 = vld [vmem:[%s284 + $0x280] sm:$0xff]
        %v448 = vld [vmem:[%s284 + $0x288] sm:$0xff]
        %v449 = vld [vmem:[%s284 + $0x290] sm:$0xff]
        %v450 = vld [vmem:[%s284 + $0x298] sm:$0xff]
        %v451 = vld [vmem:[%s284 + $0x2a0] sm:$0xff]
        %v452 = vld [vmem:[%s284 + $0x2a8] sm:$0xff]
        %v453 = vld [vmem:[%s284 + $0x2b0] sm:$0xff]
        %v454 = vld [vmem:[%s284 + $0x2b8] sm:$0xff]
        %v455 = vld [vmem:[%s284 + $0x2c0] sm:$0xff]
        %v456 = vld [vmem:[%s284 + $0x2c8] sm:$0xff]
        %v457 = vld [vmem:[%s284 + $0x2d0] sm:$0xff]
        %v458 = vld [vmem:[%s284 + $0x2d8] sm:$0xff]
        %v459 = vld [vmem:[%s284 + $0x2e0] sm:$0xff]
        %v460 = vld [vmem:[%s284 + $0x2e8] sm:$0xff]
        %v461 = vld [vmem:[%s284 + $0x2f0] sm:$0xff]
        %v462 = vld [vmem:[%s284 + $0x2f8] sm:$0xff]
        %v463 = vld [vmem:[%s284 + $0x300] sm:$0xff]
        %v464 = vld [vmem:[%s284 + $0x308] sm:$0xff]
        %v465 = vld [vmem:[%s284 + $0x310] sm:$0xff]
        %v466 = vld [vmem:[%s284 + $0x318] sm:$0xff]
        %v467 = vld [vmem:[%s284 + $0x320] sm:$0xff]
        %v468 = vld [vmem:[%s284 + $0x328] sm:$0xff]
        %v469 = vld [vmem:[%s284 + $0x330] sm:$0xff]
        %v470 = vld [vmem:[%s284 + $0x338] sm:$0xff]
        %v471 = vld [vmem:[%s284 + $0x340] sm:$0xff]
        %v472 = vld [vmem:[%s284 + $0x348] sm:$0xff]
        %v473 = vld [vmem:[%s284 + $0x350] sm:$0xff]
        %v474 = vld [vmem:[%s284 + $0x358] sm:$0xff]
        %v475 = vld [vmem:[%s284 + $0x360] sm:$0xff]
        %v476 = vld [vmem:[%s284 + $0x368] sm:$0xff]
        %v477 = vld [vmem:[%s284 + $0x370] sm:$0xff]
        %v478 = vld [vmem:[%s284 + $0x378] sm:$0xff]
        %v479 = vld [vmem:[%s284 + $0x380] sm:$0xff]
        %v480 = vld [vmem:[%s284 + $0x388] sm:$0xff]
        %v481 = vld [vmem:[%s284 + $0x390] sm:$0xff]
        %v482 = vld [vmem:[%s284 + $0x398] sm:$0xff]
        %v483 = vld [vmem:[%s284 + $0x3a0] sm:$0xff]
        %v484 = vld [vmem:[%s284 + $0x3a8] sm:$0xff]
        %v485 = vld [vmem:[%s284 + $0x3b0] sm:$0xff]
        %v486 = vld [vmem:[%s284 + $0x3b8] sm:$0xff]
        %v487 = vld [vmem:[%s284 + $0x3c0] sm:$0xff]
        %v488 = vld [vmem:[%s284 + $0x3c8] sm:$0xff]
        %v489 = vld [vmem:[%s284 + $0x3d0] sm:$0xff]
        %v490 = vld [vmem:[%s284 + $0x3d8] sm:$0xff]
        %v491 = vld [vmem:[%s284 + $0x3e0] sm:$0xff]
        %v492 = vld [vmem:[%s284 + $0x3e8] sm:$0xff]
        %v493 = vld [vmem:[%s284 + $0x3f0] sm:$0xff]
        %v494 = vld [vmem:[%s284 + $0x3f8] sm:$0xff]
        %v495 = vld [vmem:[%s284 + $0x400] sm:$0xff]
        %v496 = vld [vmem:[%s284 + $0x408] sm:$0xff]
        %v497 = vld [vmem:[%s284 + $0x410] sm:$0xff]
        %v498 = vld [vmem:[%s284 + $0x418] sm:$0xff]
        %v499 = vld [vmem:[%s284 + $0x420] sm:$0xff]
        %v500 = vld [vmem:[%s284 + $0x428] sm:$0xff]
        %v501 = vld [vmem:[%s284 + $0x430] sm:$0xff]
        %v502 = vld [vmem:[%s284 + $0x438] sm:$0xff]
        %v503 = vld [vmem:[%s284 + $0x440] sm:$0xff]
        %v504 = vld [vmem:[%s284 + $0x448] sm:$0xff]
        %v505 = vld [vmem:[%s284 + $0x450] sm:$0xff]
        %v506 = vld [vmem:[%s284 + $0x458] sm:$0xff]
        %v507 = vld [vmem:[%s284 + $0x460] sm:$0xff]
        %v508 = vld [vmem:[%s284 + $0x468] sm:$0xff]
        %v509 = vld [vmem:[%s284 + $0x470] sm:$0xff]
        %v510 = vld [vmem:[%s284 + $0x478] sm:$0xff]
        %v511 = vld [vmem:[%s284 + $0x480] sm:$0xff]
        %v512 = vld [vmem:[%s284 + $0x488] sm:$0xff]
        %v513 = vld [vmem:[%s284 + $0x490] sm:$0xff]
        %v514 = vld [vmem:[%s284 + $0x498] sm:$0xff]
        %v515 = vld [vmem:[%s284 + $0x4a0] sm:$0xff]
        %v516 = vld [vmem:[%s284 + $0x4a8] sm:$0xff]
        %v517 = vld [vmem:[%s284 + $0x4b0] sm:$0xff]
        %v518 = vld [vmem:[%s284 + $0x4b8] sm:$0xff]
        %v519 = vld [vmem:[%s284 + $0x4c0] sm:$0xff]
        %v520 = vld [vmem:[%s284 + $0x4c8] sm:$0xff]
        %v521 = vld [vmem:[%s284 + $0x4d0] sm:$0xff]
        %v522 = vld [vmem:[%s284 + $0x4d8] sm:$0xff]
        %v523 = vld [vmem:[%s284 + $0x4e0] sm:$0xff]
        %v524 = vld [vmem:[%s284 + $0x4e8] sm:$0xff]
        %v525 = vld [vmem:[%s284 + $0x4f0] sm:$0xff]
        %v526 = vld [vmem:[%s284 + $0x4f8] sm:$0xff]
        %v527 = vld [vmem:[%s284 + $0x500] sm:$0xff]
        %v528 = vld [vmem:[%s284 + $0x508] sm:$0xff]
        %v529 = vld [vmem:[%s284 + $0x510] sm:$0xff]
        %v530 = vld [vmem:[%s284 + $0x518] sm:$0xff]
        %v531 = vld [vmem:[%s284 + $0x520] sm:$0xff]
        %v532 = vld [vmem:[%s284 + $0x528] sm:$0xff]
        %v533 = vld [vmem:[%s284 + $0x530] sm:$0xff]
        %v534 = vld [vmem:[%s284 + $0x538] sm:$0xff]
        %v535 = vld [vmem:[%s284 + $0x540] sm:$0xff]
        %v536 = vld [vmem:[%s284 + $0x548] sm:$0xff]
        %v537 = vld [vmem:[%s284 + $0x550] sm:$0xff]
        %v538 = vld [vmem:[%s284 + $0x558] sm:$0xff]
        %v539 = vld [vmem:[%s284 + $0x560] sm:$0xff]
        %v540 = vld [vmem:[%s284 + $0x568] sm:$0xff]
        %v541 = vld [vmem:[%s284 + $0x570] sm:$0xff]
        %v542 = vld [vmem:[%s284 + $0x578] sm:$0xff]
        %v543 = vld [vmem:[%s284 + $0x580] sm:$0xff]
        %v544 = vld [vmem:[%s284 + $0x588] sm:$0xff]
        %v545 = vld [vmem:[%s284 + $0x590] sm:$0xff]
        %v546 = vld [vmem:[%s284 + $0x598] sm:$0xff]
        %v547 = vld [vmem:[%s284 + $0x5a0] sm:$0xff]
        %v548 = vld [vmem:[%s284 + $0x5a8] sm:$0xff]
        %v549 = vld [vmem:[%s284 + $0x5b0] sm:$0xff]
        %v550 = vld [vmem:[%s284 + $0x5b8] sm:$0xff]
        %v551 = vld [vmem:[%s284 + $0x5c0] sm:$0xff]
        %v552 = vld [vmem:[%s284 + $0x5c8] sm:$0xff]
        %v553 = vld [vmem:[%s284 + $0x5d0] sm:$0xff]
        %v554 = vld [vmem:[%s284 + $0x5d8] sm:$0xff]
        %v555 = vld [vmem:[%s284 + $0x5e0] sm:$0xff]
        %v556 = vld [vmem:[%s284 + $0x5e8] sm:$0xff]
        %v557 = vld [vmem:[%s284 + $0x5f0] sm:$0xff]
        %v558 = vld [vmem:[%s284 + $0x5f8] sm:$0xff]
        %v559 = vld [vmem:[%s284 + $0x600] sm:$0xff]
        %v560 = vld [vmem:[%s284 + $0x608] sm:$0xff]
        %v561 = vld [vmem:[%s284 + $0x610] sm:$0xff]
        %v562 = vld [vmem:[%s284 + $0x618] sm:$0xff]
        %v563 = vld [vmem:[%s284 + $0x620] sm:$0xff]
        %v564 = vld [vmem:[%s284 + $0x628] sm:$0xff]
        %v565 = vld [vmem:[%s284 + $0x630] sm:$0xff]
        %v566 = vld [vmem:[%s284 + $0x638] sm:$0xff]
        %v567 = vld [vmem:[%s284 + $0x640] sm:$0xff]
        %v568 = vld [vmem:[%s284 + $0x648] sm:$0xff]
        %v569 = vld [vmem:[%s284 + $0x650] sm:$0xff]
        %v570 = vld [vmem:[%s284 + $0x658] sm:$0xff]
        %v571 = vld [vmem:[%s284 + $0x660] sm:$0xff]
        %v572 = vld [vmem:[%s284 + $0x668] sm:$0xff]
        %v573 = vld [vmem:[%s284 + $0x670] sm:$0xff]
        %v574 = vld [vmem:[%s284 + $0x678] sm:$0xff]
        %v575 = vld [vmem:[%s284 + $0x680] sm:$0xff]
        %v576 = vld [vmem:[%s284 + $0x688] sm:$0xff]
        %v577 = vld [vmem:[%s284 + $0x690] sm:$0xff]
        %v578 = vld [vmem:[%s284 + $0x698] sm:$0xff]
        %v579 = vld [vmem:[%s284 + $0x6a0] sm:$0xff]
        %v580 = vld [vmem:[%s284 + $0x6a8] sm:$0xff]
        %v581 = vld [vmem:[%s284 + $0x6b0] sm:$0xff]
        %v582 = vld [vmem:[%s284 + $0x6b8] sm:$0xff]
        %v583 = vld [vmem:[%s284 + $0x6c0] sm:$0xff]
        %v584 = vld [vmem:[%s284 + $0x6c8] sm:$0xff]
        %v585 = vld [vmem:[%s284 + $0x6d0] sm:$0xff]
        %v586 = vld [vmem:[%s284 + $0x6d8] sm:$0xff]
        %v587 = vld [vmem:[%s284 + $0x6e0] sm:$0xff]
        %v588 = vld [vmem:[%s284 + $0x6e8] sm:$0xff]
        %v589 = vld [vmem:[%s284 + $0x6f0] sm:$0xff]
        %v590 = vld [vmem:[%s284 + $0x6f8] sm:$0xff]
        %v591 = vld [vmem:[%s284 + $0x700] sm:$0xff]
        %v592 = vld [vmem:[%s284 + $0x708] sm:$0xff]
        %v593 = vld [vmem:[%s284 + $0x710] sm:$0xff]
        %v594 = vld [vmem:[%s284 + $0x718] sm:$0xff]
        %v595 = vld [vmem:[%s284 + $0x720] sm:$0xff]
        %v596 = vld [vmem:[%s284 + $0x728] sm:$0xff]
        %v597 = vld [vmem:[%s284 + $0x730] sm:$0xff]
        %v598 = vld [vmem:[%s284 + $0x738] sm:$0xff]
        %v599 = vld [vmem:[%s284 + $0x740] sm:$0xff]
        %v600 = vld [vmem:[%s284 + $0x748] sm:$0xff]
        %v601 = vld [vmem:[%s284 + $0x750] sm:$0xff]
        %v602 = vld [vmem:[%s284 + $0x758] sm:$0xff]
        %v603 = vld [vmem:[%s284 + $0x760] sm:$0xff]
        %v604 = vld [vmem:[%s284 + $0x768] sm:$0xff]
        %v605 = vld [vmem:[%s284 + $0x770] sm:$0xff]
        %v606 = vld [vmem:[%s284 + $0x778] sm:$0xff]
        %v607 = vld [vmem:[%s284 + $0x780] sm:$0xff]
        %v608 = vld [vmem:[%s284 + $0x788] sm:$0xff]
        %v609 = vld [vmem:[%s284 + $0x790] sm:$0xff]
        %v610 = vld [vmem:[%s284 + $0x798] sm:$0xff]
        %v611 = vld [vmem:[%s284 + $0x7a0] sm:$0xff]
        %v612 = vld [vmem:[%s284 + $0x7a8] sm:$0xff]
        %v613 = vld [vmem:[%s284 + $0x7b0] sm:$0xff]
        %v614 = vld [vmem:[%s284 + $0x7b8] sm:$0xff]
        %v615 = vld [vmem:[%s284 + $0x7c0] sm:$0xff]
        %v616 = vld [vmem:[%s284 + $0x7c8] sm:$0xff]
        %v617 = vld [vmem:[%s284 + $0x7d0] sm:$0xff]
        %v618 = vld [vmem:[%s284 + $0x7d8] sm:$0xff]
        %v619 = vld [vmem:[%s284 + $0x7e0] sm:$0xff]
        %v620 = vld [vmem:[%s284 + $0x7e8] sm:$0xff]
        %v621 = vld [vmem:[%s284 + $0x7f0] sm:$0xff]
        %v622 = vld [vmem:[%s284 + $0x7f8] sm:$0xff]
        %v623 = vld [vmem:[%s284 + $0x800] sm:$0xff]
        %v624 = vld [vmem:[%s284 + $0x808] sm:$0xff]
        %v625 = vld [vmem:[%s284 + $0x810] sm:$0xff]
        %v626 = vld [vmem:[%s284 + $0x818] sm:$0xff]
        %v627 = vld [vmem:[%s284 + $0x820] sm:$0xff]
        %v628 = vld [vmem:[%s284 + $0x828] sm:$0xff]
        %v629 = vld [vmem:[%s284 + $0x830] sm:$0xff]
        %v630 = vld [vmem:[%s284 + $0x838] sm:$0xff]
        %v631 = vld [vmem:[%s284 + $0x840] sm:$0xff]
        %v632 = vld [vmem:[%s284 + $0x848] sm:$0xff]
        %v633 = vld [vmem:[%s284 + $0x850] sm:$0xff]
        %v634 = vld [vmem:[%s284 + $0x858] sm:$0xff]
        %v635 = vld [vmem:[%s284 + $0x860] sm:$0xff]
        %v636 = vld [vmem:[%s284 + $0x868] sm:$0xff]
        %v637 = vld [vmem:[%s284 + $0x870] sm:$0xff]
        %v638 = vld [vmem:[%s284 + $0x878] sm:$0xff]
        %v639 = vld [vmem:[%s284 + $0x880] sm:$0xff]
        %v640 = vld [vmem:[%s284 + $0x888] sm:$0xff]
        %v641 = vld [vmem:[%s284 + $0x890] sm:$0xff]
        %v642 = vld [vmem:[%s284 + $0x898] sm:$0xff]
        %v643 = vld [vmem:[%s284 + $0x8a0] sm:$0xff]
        %v644 = vld [vmem:[%s284 + $0x8a8] sm:$0xff]
        %v645 = vld [vmem:[%s284 + $0x8b0] sm:$0xff]
        %v646 = vld [vmem:[%s284 + $0x8b8] sm:$0xff]
        %v647 = vld [vmem:[%s284 + $0x8c0] sm:$0xff]
        %v648 = vld [vmem:[%s284 + $0x8c8] sm:$0xff]
        %v649 = vld [vmem:[%s284 + $0x8d0] sm:$0xff]
        %v650 = vld [vmem:[%s284 + $0x8d8] sm:$0xff]
        %v651 = vld [vmem:[%s284 + $0x8e0] sm:$0xff]
        %v652 = vld [vmem:[%s284 + $0x8e8] sm:$0xff]
        %v653 = vld [vmem:[%s284 + $0x8f0] sm:$0xff]
        %v654 = vld [vmem:[%s284 + $0x8f8] sm:$0xff]
        %v655 = vld [vmem:[%s284 + $0x900] sm:$0xff]
        %v656 = vld [vmem:[%s284 + $0x908] sm:$0xff]
        %v657 = vld [vmem:[%s284 + $0x910] sm:$0xff]
        %v658 = vld [vmem:[%s284 + $0x918] sm:$0xff]
        %v659 = vld [vmem:[%s284 + $0x920] sm:$0xff]
        %v660 = vld [vmem:[%s284 + $0x928] sm:$0xff]
        %v661 = vld [vmem:[%s284 + $0x930] sm:$0xff]
        %v662 = vld [vmem:[%s284 + $0x938] sm:$0xff]
        %v663 = vld [vmem:[%s284 + $0x940] sm:$0xff]
        %v664 = vld [vmem:[%s284 + $0x948] sm:$0xff]
        %v665 = vld [vmem:[%s284 + $0x950] sm:$0xff]
        %v666 = vld [vmem:[%s284 + $0x958] sm:$0xff]
        %v667 = vld [vmem:[%s284 + $0x960] sm:$0xff]
        %v668 = vld [vmem:[%s284 + $0x968] sm:$0xff]
        %v669 = vld [vmem:[%s284 + $0x970] sm:$0xff]
        %v670 = vld [vmem:[%s284 + $0x978] sm:$0xff]
        %v671 = vld [vmem:[%s284 + $0x980] sm:$0xff]
        %v672 = vld [vmem:[%s284 + $0x988] sm:$0xff]
        %v673 = vld [vmem:[%s284 + $0x990] sm:$0xff]
        %v674 = vld [vmem:[%s284 + $0x998] sm:$0xff]
        %v675 = vld [vmem:[%s284 + $0x9a0] sm:$0xff]
        %v676 = vld [vmem:[%s284 + $0x9a8] sm:$0xff]
        %v677 = vld [vmem:[%s284 + $0x9b0] sm:$0xff]
        %v678 = vld [vmem:[%s284 + $0x9b8] sm:$0xff]
        %v679 = vld [vmem:[%s284 + $0x9c0] sm:$0xff]
        %v680 = vld [vmem:[%s284 + $0x9c8] sm:$0xff]
        %v681 = vld [vmem:[%s284 + $0x9d0] sm:$0xff]
        %v682 = vld [vmem:[%s284 + $0x9d8] sm:$0xff]
        %v683 = vld [vmem:[%s284 + $0x9e0] sm:$0xff]
        %v684 = vld [vmem:[%s284 + $0x9e8] sm:$0xff]
        %v685 = vld [vmem:[%s284 + $0x9f0] sm:$0xff]
        %v686 = vld [vmem:[%s284 + $0x9f8] sm:$0xff]
        %v687 = vld [vmem:[%s284 + $0xa00] sm:$0xff]
        %v688 = vld [vmem:[%s284 + $0xa08] sm:$0xff]
        %v689 = vld [vmem:[%s284 + $0xa10] sm:$0xff]
        %v690 = vld [vmem:[%s284 + $0xa18] sm:$0xff]
        %v691 = vld [vmem:[%s284 + $0xa20] sm:$0xff]
        %v692 = vld [vmem:[%s284 + $0xa28] sm:$0xff]
        %v693 = vld [vmem:[%s284 + $0xa30] sm:$0xff]
        %v694 = vld [vmem:[%s284 + $0xa38] sm:$0xff]
        %v695 = vld [vmem:[%s284 + $0xa40] sm:$0xff]
        %v696 = vld [vmem:[%s284 + $0xa48] sm:$0xff]
        %v697 = vld [vmem:[%s284 + $0xa50] sm:$0xff]
        %v698 = vld [vmem:[%s284 + $0xa58] sm:$0xff]
        %v699 = vld [vmem:[%s284 + $0xa60] sm:$0xff]
        %v700 = vld [vmem:[%s284 + $0xa68] sm:$0xff]
        %v701 = vld [vmem:[%s284 + $0xa70] sm:$0xff]
        %v702 = vld [vmem:[%s284 + $0xa78] sm:$0xff]
        %v703 = vld [vmem:[%s284 + $0xa80] sm:$0xff]
        %v704 = vld [vmem:[%s284 + $0xa88] sm:$0xff]
        %v705 = vld [vmem:[%s284 + $0xa90] sm:$0xff]
        %v706 = vld [vmem:[%s284 + $0xa98] sm:$0xff]
        %v707 = vld [vmem:[%s284 + $0xaa0] sm:$0xff]
        %v708 = vld [vmem:[%s284 + $0xaa8] sm:$0xff]
        %v709 = vld [vmem:[%s284 + $0xab0] sm:$0xff]
        %v710 = vld [vmem:[%s284 + $0xab8] sm:$0xff]
        %v711 = vld [vmem:[%s284 + $0xac0] sm:$0xff]
        %v712 = vld [vmem:[%s284 + $0xac8] sm:$0xff]
        %v713 = vld [vmem:[%s284 + $0xad0] sm:$0xff]
        %v714 = vld [vmem:[%s284 + $0xad8] sm:$0xff]
        %v715 = vld [vmem:[%s284 + $0xae0] sm:$0xff]
        %v716 = vld [vmem:[%s284 + $0xae8] sm:$0xff]
        %v717 = vld [vmem:[%s284 + $0xaf0] sm:$0xff]
        %v718 = vld [vmem:[%s284 + $0xaf8] sm:$0xff]
        %v719 = vld [vmem:[%s284 + $0xb00] sm:$0xff]
        %v720 = vld [vmem:[%s284 + $0xb08] sm:$0xff]
        %v721 = vld [vmem:[%s284 + $0xb10] sm:$0xff]
        %v722 = vld [vmem:[%s284 + $0xb18] sm:$0xff]
        %v723 = vld [vmem:[%s284 + $0xb20] sm:$0xff]
        %v724 = vld [vmem:[%s284 + $0xb28] sm:$0xff]
        %v725 = vld [vmem:[%s284 + $0xb30] sm:$0xff]
        %v726 = vld [vmem:[%s284 + $0xb38] sm:$0xff]
        %v727 = vld [vmem:[%s284 + $0xb40] sm:$0xff]
        %v728 = vld [vmem:[%s284 + $0xb48] sm:$0xff]
        %v729 = vld [vmem:[%s284 + $0xb50] sm:$0xff]
        %v730 = vld [vmem:[%s284 + $0xb58] sm:$0xff]
        %v731 = vld [vmem:[%s284 + $0xb60] sm:$0xff]
        %v732 = vld [vmem:[%s284 + $0xb68] sm:$0xff]
        %v733 = vld [vmem:[%s284 + $0xb70] sm:$0xff]
        %v734 = vld [vmem:[%s284 + $0xb78] sm:$0xff]
        %v735 = vld [vmem:[%s284 + $0xb80] sm:$0xff]
        %v736 = vld [vmem:[%s284 + $0xb88] sm:$0xff]
        %v737 = vld [vmem:[%s284 + $0xb90] sm:$0xff]
        %v738 = vld [vmem:[%s284 + $0xb98] sm:$0xff]
        %v739 = vld [vmem:[%s284 + $0xba0] sm:$0xff]
        %v740 = vld [vmem:[%s284 + $0xba8] sm:$0xff]
        %v741 = vld [vmem:[%s284 + $0xbb0] sm:$0xff]
        %v742 = vld [vmem:[%s284 + $0xbb8] sm:$0xff]
        %v743 = vld [vmem:[%s284 + $0xbc0] sm:$0xff]
        %v744 = vld [vmem:[%s284 + $0xbc8] sm:$0xff]
        %v745 = vld [vmem:[%s284 + $0xbd0] sm:$0xff]
        %v746 = vld [vmem:[%s284 + $0xbd8] sm:$0xff]
        %v747 = vld [vmem:[%s284 + $0xbe0] sm:$0xff]
        %v748 = vld [vmem:[%s284 + $0xbe8] sm:$0xff]
        %v749 = vld [vmem:[%s284 + $0xbf0] sm:$0xff]
        %v750 = vld [vmem:[%s284 + $0xbf8] sm:$0xff]
        %v751 = vld [vmem:[%s284 + $0xc00] sm:$0xff]
        %v752 = vld [vmem:[%s284 + $0xc08] sm:$0xff]
        %v753 = vld [vmem:[%s284 + $0xc10] sm:$0xff]
        %v754 = vld [vmem:[%s284 + $0xc18] sm:$0xff]
        %v755 = vld [vmem:[%s284 + $0xc20] sm:$0xff]
        %v756 = vld [vmem:[%s284 + $0xc28] sm:$0xff]
        %v757 = vld [vmem:[%s284 + $0xc30] sm:$0xff]
        %v758 = vld [vmem:[%s284 + $0xc38] sm:$0xff]
        %v759 = vld [vmem:[%s284 + $0xc40] sm:$0xff]
        %v760 = vld [vmem:[%s284 + $0xc48] sm:$0xff]
        %v761 = vld [vmem:[%s284 + $0xc50] sm:$0xff]
        %v762 = vld [vmem:[%s284 + $0xc58] sm:$0xff]
        %v763 = vld [vmem:[%s284 + $0xc60] sm:$0xff]
        %v764 = vld [vmem:[%s284 + $0xc68] sm:$0xff]
        %v765 = vld [vmem:[%s284 + $0xc70] sm:$0xff]
        %v766 = vld [vmem:[%s284 + $0xc78] sm:$0xff]
        %v767 = vld [vmem:[%s284 + $0xc80] sm:$0xff]
        %v768 = vld [vmem:[%s284 + $0xc88] sm:$0xff]
        %v769 = vld [vmem:[%s284 + $0xc90] sm:$0xff]
        %v770 = vld [vmem:[%s284 + $0xc98] sm:$0xff]
        %v771 = vld [vmem:[%s284 + $0xca0] sm:$0xff]
        %v772 = vld [vmem:[%s284 + $0xca8] sm:$0xff]
        %v773 = vld [vmem:[%s284 + $0xcb0] sm:$0xff]
        %v774 = vld [vmem:[%s284 + $0xcb8] sm:$0xff]
        %v775 = vld [vmem:[%s284 + $0xcc0] sm:$0xff]
        %v776 = vld [vmem:[%s284 + $0xcc8] sm:$0xff]
        %v777 = vld [vmem:[%s284 + $0xcd0] sm:$0xff]
        %v778 = vld [vmem:[%s284 + $0xcd8] sm:$0xff]
        %v779 = vld [vmem:[%s284 + $0xce0] sm:$0xff]
        %v780 = vld [vmem:[%s284 + $0xce8] sm:$0xff]
        %v781 = vld [vmem:[%s284 + $0xcf0] sm:$0xff]
        %v782 = vld [vmem:[%s284 + $0xcf8] sm:$0xff]
        %v783 = vld [vmem:[%s284 + $0xd00] sm:$0xff]
        %v784 = vld [vmem:[%s284 + $0xd08] sm:$0xff]
        %v785 = vld [vmem:[%s284 + $0xd10] sm:$0xff]
        %v786 = vld [vmem:[%s284 + $0xd18] sm:$0xff]
        %v787 = vld [vmem:[%s284 + $0xd20] sm:$0xff]
        %v788 = vld [vmem:[%s284 + $0xd28] sm:$0xff]
        %v789 = vld [vmem:[%s284 + $0xd30] sm:$0xff]
        %v790 = vld [vmem:[%s284 + $0xd38] sm:$0xff]
        %v791 = vld [vmem:[%s284 + $0xd40] sm:$0xff]
        %v792 = vld [vmem:[%s284 + $0xd48] sm:$0xff]
        %v793 = vld [vmem:[%s284 + $0xd50] sm:$0xff]
        %v794 = vld [vmem:[%s284 + $0xd58] sm:$0xff]
        %v795 = vld [vmem:[%s284 + $0xd60] sm:$0xff]
        %v796 = vld [vmem:[%s284 + $0xd68] sm:$0xff]
        %v797 = vld [vmem:[%s284 + $0xd70] sm:$0xff]
        %v798 = vld [vmem:[%s284 + $0xd78] sm:$0xff]
        %v799 = vld [vmem:[%s284 + $0xd80] sm:$0xff]
        %v800 = vld [vmem:[%s284 + $0xd88] sm:$0xff]
        %v801 = vld [vmem:[%s284 + $0xd90] sm:$0xff]
        %v802 = vld [vmem:[%s284 + $0xd98] sm:$0xff]
        %v803 = vld [vmem:[%s284 + $0xda0] sm:$0xff]
        %v804 = vld [vmem:[%s284 + $0xda8] sm:$0xff]
        %v805 = vld [vmem:[%s284 + $0xdb0] sm:$0xff]
        %v806 = vld [vmem:[%s284 + $0xdb8] sm:$0xff]
        %v807 = vld [vmem:[%s284 + $0xdc0] sm:$0xff]
        %v808 = vld [vmem:[%s284 + $0xdc8] sm:$0xff]
        %v809 = vld [vmem:[%s284 + $0xdd0] sm:$0xff]
        %v810 = vld [vmem:[%s284 + $0xdd8] sm:$0xff]
        %v811 = vld [vmem:[%s284 + $0xde0] sm:$0xff]
        %v812 = vld [vmem:[%s284 + $0xde8] sm:$0xff]
        %v813 = vld [vmem:[%s284 + $0xdf0] sm:$0xff]
        %v814 = vld [vmem:[%s284 + $0xdf8] sm:$0xff]
        %v815 = vld [vmem:[%s284 + $0xe00] sm:$0xff]
        %v816 = vld [vmem:[%s284 + $0xe08] sm:$0xff]
        %v817 = vld [vmem:[%s284 + $0xe10] sm:$0xff]
        %v818 = vld [vmem:[%s284 + $0xe18] sm:$0xff]
        %v819 = vld [vmem:[%s284 + $0xe20] sm:$0xff]
        %v820 = vld [vmem:[%s284 + $0xe28] sm:$0xff]
        %v821 = vld [vmem:[%s284 + $0xe30] sm:$0xff]
        %v822 = vld [vmem:[%s284 + $0xe38] sm:$0xff]
        %v823 = vld [vmem:[%s284 + $0xe40] sm:$0xff]
        %v824 = vld [vmem:[%s284 + $0xe48] sm:$0xff]
        %v825 = vld [vmem:[%s284 + $0xe50] sm:$0xff]
        %v826 = vld [vmem:[%s284 + $0xe58] sm:$0xff]
        %v827 = vld [vmem:[%s284 + $0xe60] sm:$0xff]
        %v828 = vld [vmem:[%s284 + $0xe68] sm:$0xff]
        %v829 = vld [vmem:[%s284 + $0xe70] sm:$0xff]
        %v830 = vld [vmem:[%s284 + $0xe78] sm:$0xff]
        %v831 = vld [vmem:[%s284 + $0xe80] sm:$0xff]
        %v832 = vld [vmem:[%s284 + $0xe88] sm:$0xff]
        %v833 = vld [vmem:[%s284 + $0xe90] sm:$0xff]
        %v834 = vld [vmem:[%s284 + $0xe98] sm:$0xff]
        %v835 = vld [vmem:[%s284 + $0xea0] sm:$0xff]
        %v836 = vld [vmem:[%s284 + $0xea8] sm:$0xff]
        %v837 = vld [vmem:[%s284 + $0xeb0] sm:$0xff]
        %v838 = vld [vmem:[%s284 + $0xeb8] sm:$0xff]
        %v839 = vld [vmem:[%s284 + $0xec0] sm:$0xff]
        %v840 = vld [vmem:[%s284 + $0xec8] sm:$0xff]
        %v841 = vld [vmem:[%s284 + $0xed0] sm:$0xff]
        %v842 = vld [vmem:[%s284 + $0xed8] sm:$0xff]
        %v843 = vld [vmem:[%s284 + $0xee0] sm:$0xff]
        %v844 = vld [vmem:[%s284 + $0xee8] sm:$0xff]
        %v845 = vld [vmem:[%s284 + $0xef0] sm:$0xff]
        %v846 = vld [vmem:[%s284 + $0xef8] sm:$0xff]
        %v847 = vld [vmem:[%s284 + $0xf00] sm:$0xff]
        %v848 = vld [vmem:[%s284 + $0xf08] sm:$0xff]
        %v849 = vld [vmem:[%s284 + $0xf10] sm:$0xff]
        %v850 = vld [vmem:[%s284 + $0xf18] sm:$0xff]
        %v851 = vld [vmem:[%s284 + $0xf20] sm:$0xff]
        %v852 = vld [vmem:[%s284 + $0xf28] sm:$0xff]
        %v853 = vld [vmem:[%s284 + $0xf30] sm:$0xff]
        %v854 = vld [vmem:[%s284 + $0xf38] sm:$0xff]
        %v855 = vld [vmem:[%s284 + $0xf40] sm:$0xff]
        %v856 = vld [vmem:[%s284 + $0xf48] sm:$0xff]
        %v857 = vld [vmem:[%s284 + $0xf50] sm:$0xff]
        %v858 = vld [vmem:[%s284 + $0xf58] sm:$0xff]
        %v859 = vld [vmem:[%s284 + $0xf60] sm:$0xff]
        %v860 = vld [vmem:[%s284 + $0xf68] sm:$0xff]
        %v861 = vld [vmem:[%s284 + $0xf70] sm:$0xff]
        %v862 = vld [vmem:[%s284 + $0xf78] sm:$0xff]
        %v863 = vld [vmem:[%s284 + $0xf80] sm:$0xff]
        %v864 = vld [vmem:[%s284 + $0xf88] sm:$0xff]
        %v865 = vld [vmem:[%s284 + $0xf90] sm:$0xff]
        %v866 = vld [vmem:[%s284 + $0xf98] sm:$0xff]
        %v867 = vld [vmem:[%s284 + $0xfa0] sm:$0xff]
        %v868 = vld [vmem:[%s284 + $0xfa8] sm:$0xff]
        %v869 = vld [vmem:[%s284 + $0xfb0] sm:$0xff]
        %v870 = vld [vmem:[%s284 + $0xfb8] sm:$0xff]
        %v871 = vld [vmem:[%s284 + $0xfc0] sm:$0xff]
        %v872 = vld [vmem:[%s284 + $0xfc8] sm:$0xff]
        %v873 = vld [vmem:[%s284 + $0xfd0] sm:$0xff]
        %v874 = vld [vmem:[%s284 + $0xfd8] sm:$0xff]
        %v875 = vld [vmem:[%s284 + $0xfe0] sm:$0xff]
        %v876 = vld [vmem:[%s284 + $0xfe8] sm:$0xff]
        %v877 = vld [vmem:[%s284 + $0xff0] sm:$0xff]
        %v878 = vld [vmem:[%s284 + $0xff8] sm:$0xff]
        %v895 = vunpack.c.l.b16 %v351
        %v896 = vunpack.c.h.b16 %v351
        %v897 = vunpack.c.l.b16 %v352
        %v898 = vunpack.c.h.b16 %v352
        %v899 = vunpack.c.l.b16 %v353
        %v900 = vunpack.c.h.b16 %v353
        %v901 = vunpack.c.l.b16 %v354
        %v902 = vunpack.c.h.b16 %v354
        %v903 = vunpack.c.l.b16 %v355
        %v904 = vunpack.c.h.b16 %v355
        %v905 = vunpack.c.l.b16 %v356
        %v906 = vunpack.c.h.b16 %v356
        %v907 = vunpack.c.l.b16 %v357
        %v908 = vunpack.c.h.b16 %v357
        %v909 = vunpack.c.l.b16 %v358
        %v910 = vunpack.c.h.b16 %v358
        %v911 = vunpack.c.l.b16 %v359
        %v912 = vunpack.c.h.b16 %v359
        %v913 = vunpack.c.l.b16 %v360
        %v914 = vunpack.c.h.b16 %v360
        %v915 = vunpack.c.l.b16 %v361
        %v916 = vunpack.c.h.b16 %v361
        %v917 = vunpack.c.l.b16 %v362
        %v918 = vunpack.c.h.b16 %v362
        %v919 = vunpack.c.l.b16 %v363
        %v920 = vunpack.c.h.b16 %v363
        %v921 = vunpack.c.l.b16 %v364
        %v922 = vunpack.c.h.b16 %v364
        %v923 = vunpack.c.l.b16 %v365
        %v924 = vunpack.c.h.b16 %v365
        %v925 = vunpack.c.l.b16 %v366
        %v926 = vunpack.c.h.b16 %v366
        %v927 = vpack.c.b16 %v911, %v895
        %v928 = vpack.c.b16 %v912, %v896
        %v929 = vpack.c.b16 %v913, %v897
        %v930 = vpack.c.b16 %v914, %v898
        %v931 = vpack.c.b16 %v915, %v899
        %v932 = vpack.c.b16 %v916, %v900
        %v933 = vpack.c.b16 %v917, %v901
        %v934 = vpack.c.b16 %v918, %v902
        %v935 = vpack.c.b16 %v919, %v903
        %v936 = vpack.c.b16 %v920, %v904
        %v937 = vpack.c.b16 %v921, %v905
        %v938 = vpack.c.b16 %v922, %v906
        %v939 = vpack.c.b16 %v923, %v907
        %v940 = vpack.c.b16 %v924, %v908
        %v941 = vpack.c.b16 %v925, %v909
        %v942 = vpack.c.b16 %v926, %v910
        %v1471 = vunpack.c.l.b16 %v367
        %v1472 = vunpack.c.h.b16 %v367
        %v1473 = vunpack.c.l.b16 %v368
        %v1474 = vunpack.c.h.b16 %v368
        %v1475 = vunpack.c.l.b16 %v369
        %v1476 = vunpack.c.h.b16 %v369
        %v1477 = vunpack.c.l.b16 %v370
        %v1478 = vunpack.c.h.b16 %v370
        %v1479 = vunpack.c.l.b16 %v371
        %v1480 = vunpack.c.h.b16 %v371
        %v1481 = vunpack.c.l.b16 %v372
        %v1482 = vunpack.c.h.b16 %v372
        %v1483 = vunpack.c.l.b16 %v373
        %v1484 = vunpack.c.h.b16 %v373
        %v1485 = vunpack.c.l.b16 %v374
        %v1486 = vunpack.c.h.b16 %v374
        %v1487 = vunpack.c.l.b16 %v375
        %v1488 = vunpack.c.h.b16 %v375
        %v1489 = vunpack.c.l.b16 %v376
        %v1490 = vunpack.c.h.b16 %v376
        %v1491 = vunpack.c.l.b16 %v377
        %v1492 = vunpack.c.h.b16 %v377
        %v1493 = vunpack.c.l.b16 %v378
        %v1494 = vunpack.c.h.b16 %v378
        %v1495 = vunpack.c.l.b16 %v379
        %v1496 = vunpack.c.h.b16 %v379
        %v1497 = vunpack.c.l.b16 %v380
        %v1498 = vunpack.c.h.b16 %v380
        %v1499 = vunpack.c.l.b16 %v381
        %v1500 = vunpack.c.h.b16 %v381
        %v1501 = vunpack.c.l.b16 %v382
        %v1502 = vunpack.c.h.b16 %v382
        %v1503 = vunpack.c.l.b16 %v383
        %v1504 = vunpack.c.h.b16 %v383
        %v1505 = vunpack.c.l.b16 %v384
        %v1506 = vunpack.c.h.b16 %v384
        %v1507 = vunpack.c.l.b16 %v385
        %v1508 = vunpack.c.h.b16 %v385
        %v1509 = vunpack.c.l.b16 %v386
        %v1510 = vunpack.c.h.b16 %v386
        %v1511 = vunpack.c.l.b16 %v387
        %v1512 = vunpack.c.h.b16 %v387
        %v1513 = vunpack.c.l.b16 %v388
        %v1514 = vunpack.c.h.b16 %v388
        %v1515 = vunpack.c.l.b16 %v389
        %v1516 = vunpack.c.h.b16 %v389
        %v1517 = vunpack.c.l.b16 %v390
        %v1518 = vunpack.c.h.b16 %v390
        %v1519 = vunpack.c.l.b16 %v391
        %v1520 = vunpack.c.h.b16 %v391
        %v1521 = vunpack.c.l.b16 %v392
        %v1522 = vunpack.c.h.b16 %v392
        %v1523 = vunpack.c.l.b16 %v393
        %v1524 = vunpack.c.h.b16 %v393
        %v1525 = vunpack.c.l.b16 %v394
        %v1526 = vunpack.c.h.b16 %v394
        %v1527 = vunpack.c.l.b16 %v395
        %v1528 = vunpack.c.h.b16 %v395
        %v1529 = vunpack.c.l.b16 %v396
        %v1530 = vunpack.c.h.b16 %v396
        %v1531 = vunpack.c.l.b16 %v397
        %v1532 = vunpack.c.h.b16 %v397
        %v1533 = vunpack.c.l.b16 %v398
        %v1534 = vunpack.c.h.b16 %v398
        %v1535 = vunpack.c.l.b16 %v399
        %v1536 = vunpack.c.h.b16 %v399
        %v1537 = vunpack.c.l.b16 %v400
        %v1538 = vunpack.c.h.b16 %v400
        %v1539 = vunpack.c.l.b16 %v401
        %v1540 = vunpack.c.h.b16 %v401
        %v1541 = vunpack.c.l.b16 %v402
        %v1542 = vunpack.c.h.b16 %v402
        %v1543 = vunpack.c.l.b16 %v403
        %v1544 = vunpack.c.h.b16 %v403
        %v1545 = vunpack.c.l.b16 %v404
        %v1546 = vunpack.c.h.b16 %v404
        %v1547 = vunpack.c.l.b16 %v405
        %v1548 = vunpack.c.h.b16 %v405
        %v1549 = vunpack.c.l.b16 %v406
        %v1550 = vunpack.c.h.b16 %v406
        %v1551 = vunpack.c.l.b16 %v407
        %v1552 = vunpack.c.h.b16 %v407
        %v1553 = vunpack.c.l.b16 %v408
        %v1554 = vunpack.c.h.b16 %v408
        %v1555 = vunpack.c.l.b16 %v409
        %v1556 = vunpack.c.h.b16 %v409
        %v1557 = vunpack.c.l.b16 %v410
        %v1558 = vunpack.c.h.b16 %v410
        %v1559 = vunpack.c.l.b16 %v411
        %v1560 = vunpack.c.h.b16 %v411
        %v1561 = vunpack.c.l.b16 %v412
        %v1562 = vunpack.c.h.b16 %v412
        %v1563 = vunpack.c.l.b16 %v413
        %v1564 = vunpack.c.h.b16 %v413
        %v1565 = vunpack.c.l.b16 %v414
        %v1566 = vunpack.c.h.b16 %v414
        %v1567 = vunpack.c.l.b16 %v415
        %v1568 = vunpack.c.h.b16 %v415
        %v1569 = vunpack.c.l.b16 %v416
        %v1570 = vunpack.c.h.b16 %v416
        %v1571 = vunpack.c.l.b16 %v417
        %v1572 = vunpack.c.h.b16 %v417
        %v1573 = vunpack.c.l.b16 %v418
        %v1574 = vunpack.c.h.b16 %v418
        %v1575 = vunpack.c.l.b16 %v419
        %v1576 = vunpack.c.h.b16 %v419
        %v1577 = vunpack.c.l.b16 %v420
        %v1578 = vunpack.c.h.b16 %v420
        %v1579 = vunpack.c.l.b16 %v421
        %v1580 = vunpack.c.h.b16 %v421
        %v1581 = vunpack.c.l.b16 %v422
        %v1582 = vunpack.c.h.b16 %v422
        %v1583 = vunpack.c.l.b16 %v423
        %v1584 = vunpack.c.h.b16 %v423
        %v1585 = vunpack.c.l.b16 %v424
        %v1586 = vunpack.c.h.b16 %v424
        %v1587 = vunpack.c.l.b16 %v425
        %v1588 = vunpack.c.h.b16 %v425
        %v1589 = vunpack.c.l.b16 %v426
        %v1590 = vunpack.c.h.b16 %v426
        %v1591 = vunpack.c.l.b16 %v427
        %v1592 = vunpack.c.h.b16 %v427
        %v1593 = vunpack.c.l.b16 %v428
        %v1594 = vunpack.c.h.b16 %v428
        %v1595 = vunpack.c.l.b16 %v429
        %v1596 = vunpack.c.h.b16 %v429
        %v1597 = vunpack.c.l.b16 %v430
        %v1598 = vunpack.c.h.b16 %v430
        %v1599 = vunpack.c.l.b16 %v431
        %v1600 = vunpack.c.h.b16 %v431
        %v1601 = vunpack.c.l.b16 %v432
        %v1602 = vunpack.c.h.b16 %v432
        %v1603 = vunpack.c.l.b16 %v433
        %v1604 = vunpack.c.h.b16 %v433
        %v1605 = vunpack.c.l.b16 %v434
        %v1606 = vunpack.c.h.b16 %v434
        %v1607 = vunpack.c.l.b16 %v435
        %v1608 = vunpack.c.h.b16 %v435
        %v1609 = vunpack.c.l.b16 %v436
        %v1610 = vunpack.c.h.b16 %v436
        %v1611 = vunpack.c.l.b16 %v437
        %v1612 = vunpack.c.h.b16 %v437
        %v1613 = vunpack.c.l.b16 %v438
        %v1614 = vunpack.c.h.b16 %v438
        %v1615 = vunpack.c.l.b16 %v439
        %v1616 = vunpack.c.h.b16 %v439
        %v1617 = vunpack.c.l.b16 %v440
        %v1618 = vunpack.c.h.b16 %v440
        %v1619 = vunpack.c.l.b16 %v441
        %v1620 = vunpack.c.h.b16 %v441
        %v1621 = vunpack.c.l.b16 %v442
        %v1622 = vunpack.c.h.b16 %v442
        %v1623 = vunpack.c.l.b16 %v443
        %v1624 = vunpack.c.h.b16 %v443
        %v1625 = vunpack.c.l.b16 %v444
        %v1626 = vunpack.c.h.b16 %v444
        %v1627 = vunpack.c.l.b16 %v445
        %v1628 = vunpack.c.h.b16 %v445
        %v1629 = vunpack.c.l.b16 %v446
        %v1630 = vunpack.c.h.b16 %v446
        %v1631 = vunpack.c.l.b16 %v447
        %v1632 = vunpack.c.h.b16 %v447
        %v1633 = vunpack.c.l.b16 %v448
        %v1634 = vunpack.c.h.b16 %v448
        %v1635 = vunpack.c.l.b16 %v449
        %v1636 = vunpack.c.h.b16 %v449
        %v1637 = vunpack.c.l.b16 %v450
        %v1638 = vunpack.c.h.b16 %v450
        %v1639 = vunpack.c.l.b16 %v451
        %v1640 = vunpack.c.h.b16 %v451
        %v1641 = vunpack.c.l.b16 %v452
        %v1642 = vunpack.c.h.b16 %v452
        %v1643 = vunpack.c.l.b16 %v453
        %v1644 = vunpack.c.h.b16 %v453
        %v1645 = vunpack.c.l.b16 %v454
        %v1646 = vunpack.c.h.b16 %v454
        %v1647 = vunpack.c.l.b16 %v455
        %v1648 = vunpack.c.h.b16 %v455
        %v1649 = vunpack.c.l.b16 %v456
        %v1650 = vunpack.c.h.b16 %v456
        %v1651 = vunpack.c.l.b16 %v457
        %v1652 = vunpack.c.h.b16 %v457
        %v1653 = vunpack.c.l.b16 %v458
        %v1654 = vunpack.c.h.b16 %v458
        %v1655 = vunpack.c.l.b16 %v459
        %v1656 = vunpack.c.h.b16 %v459
        %v1657 = vunpack.c.l.b16 %v460
        %v1658 = vunpack.c.h.b16 %v460
        %v1659 = vunpack.c.l.b16 %v461
        %v1660 = vunpack.c.h.b16 %v461
        %v1661 = vunpack.c.l.b16 %v462
        %v1662 = vunpack.c.h.b16 %v462
        %v1663 = vunpack.c.l.b16 %v463
        %v1664 = vunpack.c.h.b16 %v463
        %v1665 = vunpack.c.l.b16 %v464
        %v1666 = vunpack.c.h.b16 %v464
        %v1667 = vunpack.c.l.b16 %v465
        %v1668 = vunpack.c.h.b16 %v465
        %v1669 = vunpack.c.l.b16 %v466
        %v1670 = vunpack.c.h.b16 %v466
        %v1671 = vunpack.c.l.b16 %v467
        %v1672 = vunpack.c.h.b16 %v467
        %v1673 = vunpack.c.l.b16 %v468
        %v1674 = vunpack.c.h.b16 %v468
        %v1675 = vunpack.c.l.b16 %v469
        %v1676 = vunpack.c.h.b16 %v469
        %v1677 = vunpack.c.l.b16 %v470
        %v1678 = vunpack.c.h.b16 %v470
        %v1679 = vunpack.c.l.b16 %v471
        %v1680 = vunpack.c.h.b16 %v471
        %v1681 = vunpack.c.l.b16 %v472
        %v1682 = vunpack.c.h.b16 %v472
        %v1683 = vunpack.c.l.b16 %v473
        %v1684 = vunpack.c.h.b16 %v473
        %v1685 = vunpack.c.l.b16 %v474
        %v1686 = vunpack.c.h.b16 %v474
        %v1687 = vunpack.c.l.b16 %v475
        %v1688 = vunpack.c.h.b16 %v475
        %v1689 = vunpack.c.l.b16 %v476
        %v1690 = vunpack.c.h.b16 %v476
        %v1691 = vunpack.c.l.b16 %v477
        %v1692 = vunpack.c.h.b16 %v477
        %v1693 = vunpack.c.l.b16 %v478
        %v1694 = vunpack.c.h.b16 %v478
        %v1695 = vunpack.c.l.b16 %v479
        %v1696 = vunpack.c.h.b16 %v479
        %v1697 = vunpack.c.l.b16 %v480
        %v1698 = vunpack.c.h.b16 %v480
        %v1699 = vunpack.c.l.b16 %v481
        %v1700 = vunpack.c.h.b16 %v481
        %v1701 = vunpack.c.l.b16 %v482
        %v1702 = vunpack.c.h.b16 %v482
        %v1703 = vunpack.c.l.b16 %v483
        %v1704 = vunpack.c.h.b16 %v483
        %v1705 = vunpack.c.l.b16 %v484
        %v1706 = vunpack.c.h.b16 %v484
        %v1707 = vunpack.c.l.b16 %v485
        %v1708 = vunpack.c.h.b16 %v485
        %v1709 = vunpack.c.l.b16 %v486
        %v1710 = vunpack.c.h.b16 %v486
        %v1711 = vunpack.c.l.b16 %v487
        %v1712 = vunpack.c.h.b16 %v487
        %v1713 = vunpack.c.l.b16 %v488
        %v1714 = vunpack.c.h.b16 %v488
        %v1715 = vunpack.c.l.b16 %v489
        %v1716 = vunpack.c.h.b16 %v489
        %v1717 = vunpack.c.l.b16 %v490
        %v1718 = vunpack.c.h.b16 %v490
        %v1719 = vunpack.c.l.b16 %v491
        %v1720 = vunpack.c.h.b16 %v491
        %v1721 = vunpack.c.l.b16 %v492
        %v1722 = vunpack.c.h.b16 %v492
        %v1723 = vunpack.c.l.b16 %v493
        %v1724 = vunpack.c.h.b16 %v493
        %v1725 = vunpack.c.l.b16 %v494
        %v1726 = vunpack.c.h.b16 %v494
        %v1727 = vunpack.c.l.b16 %v495
        %v1728 = vunpack.c.h.b16 %v495
        %v1729 = vunpack.c.l.b16 %v496
        %v1730 = vunpack.c.h.b16 %v496
        %v1731 = vunpack.c.l.b16 %v497
        %v1732 = vunpack.c.h.b16 %v497
        %v1733 = vunpack.c.l.b16 %v498
        %v1734 = vunpack.c.h.b16 %v498
        %v1735 = vunpack.c.l.b16 %v499
        %v1736 = vunpack.c.h.b16 %v499
        %v1737 = vunpack.c.l.b16 %v500
        %v1738 = vunpack.c.h.b16 %v500
        %v1739 = vunpack.c.l.b16 %v501
        %v1740 = vunpack.c.h.b16 %v501
        %v1741 = vunpack.c.l.b16 %v502
        %v1742 = vunpack.c.h.b16 %v502
        %v1743 = vunpack.c.l.b16 %v503
        %v1744 = vunpack.c.h.b16 %v503
        %v1745 = vunpack.c.l.b16 %v504
        %v1746 = vunpack.c.h.b16 %v504
        %v1747 = vunpack.c.l.b16 %v505
        %v1748 = vunpack.c.h.b16 %v505
        %v1749 = vunpack.c.l.b16 %v506
        %v1750 = vunpack.c.h.b16 %v506
        %v1751 = vunpack.c.l.b16 %v507
        %v1752 = vunpack.c.h.b16 %v507
        %v1753 = vunpack.c.l.b16 %v508
        %v1754 = vunpack.c.h.b16 %v508
        %v1755 = vunpack.c.l.b16 %v509
        %v1756 = vunpack.c.h.b16 %v509
        %v1757 = vunpack.c.l.b16 %v510
        %v1758 = vunpack.c.h.b16 %v510
        %v1759 = vunpack.c.l.b16 %v511
        %v1760 = vunpack.c.h.b16 %v511
        %v1761 = vunpack.c.l.b16 %v512
        %v1762 = vunpack.c.h.b16 %v512
        %v1763 = vunpack.c.l.b16 %v513
        %v1764 = vunpack.c.h.b16 %v513
        %v1765 = vunpack.c.l.b16 %v514
        %v1766 = vunpack.c.h.b16 %v514
        %v1767 = vunpack.c.l.b16 %v515
        %v1768 = vunpack.c.h.b16 %v515
        %v1769 = vunpack.c.l.b16 %v516
        %v1770 = vunpack.c.h.b16 %v516
        %v1771 = vunpack.c.l.b16 %v517
        %v1772 = vunpack.c.h.b16 %v517
        %v1773 = vunpack.c.l.b16 %v518
        %v1774 = vunpack.c.h.b16 %v518
        %v1775 = vunpack.c.l.b16 %v519
        %v1776 = vunpack.c.h.b16 %v519
        %v1777 = vunpack.c.l.b16 %v520
        %v1778 = vunpack.c.h.b16 %v520
        %v1779 = vunpack.c.l.b16 %v521
        %v1780 = vunpack.c.h.b16 %v521
        %v1781 = vunpack.c.l.b16 %v522
        %v1782 = vunpack.c.h.b16 %v522
        %v1783 = vunpack.c.l.b16 %v523
        %v1784 = vunpack.c.h.b16 %v523
        %v1785 = vunpack.c.l.b16 %v524
        %v1786 = vunpack.c.h.b16 %v524
        %v1787 = vunpack.c.l.b16 %v525
        %v1788 = vunpack.c.h.b16 %v525
        %v1789 = vunpack.c.l.b16 %v526
        %v1790 = vunpack.c.h.b16 %v526
        %v1791 = vunpack.c.l.b16 %v527
        %v1792 = vunpack.c.h.b16 %v527
        %v1793 = vunpack.c.l.b16 %v528
        %v1794 = vunpack.c.h.b16 %v528
        %v1795 = vunpack.c.l.b16 %v529
        %v1796 = vunpack.c.h.b16 %v529
        %v1797 = vunpack.c.l.b16 %v530
        %v1798 = vunpack.c.h.b16 %v530
        %v1799 = vunpack.c.l.b16 %v531
        %v1800 = vunpack.c.h.b16 %v531
        %v1801 = vunpack.c.l.b16 %v532
        %v1802 = vunpack.c.h.b16 %v532
        %v1803 = vunpack.c.l.b16 %v533
        %v1804 = vunpack.c.h.b16 %v533
        %v1805 = vunpack.c.l.b16 %v534
        %v1806 = vunpack.c.h.b16 %v534
        %v1807 = vunpack.c.l.b16 %v535
        %v1808 = vunpack.c.h.b16 %v535
        %v1809 = vunpack.c.l.b16 %v536
        %v1810 = vunpack.c.h.b16 %v536
        %v1811 = vunpack.c.l.b16 %v537
        %v1812 = vunpack.c.h.b16 %v537
        %v1813 = vunpack.c.l.b16 %v538
        %v1814 = vunpack.c.h.b16 %v538
        %v1815 = vunpack.c.l.b16 %v539
        %v1816 = vunpack.c.h.b16 %v539
        %v1817 = vunpack.c.l.b16 %v540
        %v1818 = vunpack.c.h.b16 %v540
        %v1819 = vunpack.c.l.b16 %v541
        %v1820 = vunpack.c.h.b16 %v541
        %v1821 = vunpack.c.l.b16 %v542
        %v1822 = vunpack.c.h.b16 %v542
        %v1823 = vunpack.c.l.b16 %v543
        %v1824 = vunpack.c.h.b16 %v543
        %v1825 = vunpack.c.l.b16 %v544
        %v1826 = vunpack.c.h.b16 %v544
        %v1827 = vunpack.c.l.b16 %v545
        %v1828 = vunpack.c.h.b16 %v545
        %v1829 = vunpack.c.l.b16 %v546
        %v1830 = vunpack.c.h.b16 %v546
        %v1831 = vunpack.c.l.b16 %v547
        %v1832 = vunpack.c.h.b16 %v547
        %v1833 = vunpack.c.l.b16 %v548
        %v1834 = vunpack.c.h.b16 %v548
        %v1835 = vunpack.c.l.b16 %v549
        %v1836 = vunpack.c.h.b16 %v549
        %v1837 = vunpack.c.l.b16 %v550
        %v1838 = vunpack.c.h.b16 %v550
        %v1839 = vunpack.c.l.b16 %v551
        %v1840 = vunpack.c.h.b16 %v551
        %v1841 = vunpack.c.l.b16 %v552
        %v1842 = vunpack.c.h.b16 %v552
        %v1843 = vunpack.c.l.b16 %v553
        %v1844 = vunpack.c.h.b16 %v553
        %v1845 = vunpack.c.l.b16 %v554
        %v1846 = vunpack.c.h.b16 %v554
        %v1847 = vunpack.c.l.b16 %v555
        %v1848 = vunpack.c.h.b16 %v555
        %v1849 = vunpack.c.l.b16 %v556
        %v1850 = vunpack.c.h.b16 %v556
        %v1851 = vunpack.c.l.b16 %v557
        %v1852 = vunpack.c.h.b16 %v557
        %v1853 = vunpack.c.l.b16 %v558
        %v1854 = vunpack.c.h.b16 %v558
        %v1855 = vunpack.c.l.b16 %v559
        %v1856 = vunpack.c.h.b16 %v559
        %v1857 = vunpack.c.l.b16 %v560
        %v1858 = vunpack.c.h.b16 %v560
        %v1859 = vunpack.c.l.b16 %v561
        %v1860 = vunpack.c.h.b16 %v561
        %v1861 = vunpack.c.l.b16 %v562
        %v1862 = vunpack.c.h.b16 %v562
        %v1863 = vunpack.c.l.b16 %v563
        %v1864 = vunpack.c.h.b16 %v563
        %v1865 = vunpack.c.l.b16 %v564
        %v1866 = vunpack.c.h.b16 %v564
        %v1867 = vunpack.c.l.b16 %v565
        %v1868 = vunpack.c.h.b16 %v565
        %v1869 = vunpack.c.l.b16 %v566
        %v1870 = vunpack.c.h.b16 %v566
        %v1871 = vunpack.c.l.b16 %v567
        %v1872 = vunpack.c.h.b16 %v567
        %v1873 = vunpack.c.l.b16 %v568
        %v1874 = vunpack.c.h.b16 %v568
        %v1875 = vunpack.c.l.b16 %v569
        %v1876 = vunpack.c.h.b16 %v569
        %v1877 = vunpack.c.l.b16 %v570
        %v1878 = vunpack.c.h.b16 %v570
        %v1879 = vunpack.c.l.b16 %v571
        %v1880 = vunpack.c.h.b16 %v571
        %v1881 = vunpack.c.l.b16 %v572
        %v1882 = vunpack.c.h.b16 %v572
        %v1883 = vunpack.c.l.b16 %v573
        %v1884 = vunpack.c.h.b16 %v573
        %v1885 = vunpack.c.l.b16 %v574
        %v1886 = vunpack.c.h.b16 %v574
        %v1887 = vunpack.c.l.b16 %v575
        %v1888 = vunpack.c.h.b16 %v575
        %v1889 = vunpack.c.l.b16 %v576
        %v1890 = vunpack.c.h.b16 %v576
        %v1891 = vunpack.c.l.b16 %v577
        %v1892 = vunpack.c.h.b16 %v577
        %v1893 = vunpack.c.l.b16 %v578
        %v1894 = vunpack.c.h.b16 %v578
        %v1895 = vunpack.c.l.b16 %v579
        %v1896 = vunpack.c.h.b16 %v579
        %v1897 = vunpack.c.l.b16 %v580
        %v1898 = vunpack.c.h.b16 %v580
        %v1899 = vunpack.c.l.b16 %v581
        %v1900 = vunpack.c.h.b16 %v581
        %v1901 = vunpack.c.l.b16 %v582
        %v1902 = vunpack.c.h.b16 %v582
        %v1903 = vunpack.c.l.b16 %v583
        %v1904 = vunpack.c.h.b16 %v583
        %v1905 = vunpack.c.l.b16 %v584
        %v1906 = vunpack.c.h.b16 %v584
        %v1907 = vunpack.c.l.b16 %v585
        %v1908 = vunpack.c.h.b16 %v585
        %v1909 = vunpack.c.l.b16 %v586
        %v1910 = vunpack.c.h.b16 %v586
        %v1911 = vunpack.c.l.b16 %v587
        %v1912 = vunpack.c.h.b16 %v587
        %v1913 = vunpack.c.l.b16 %v588
        %v1914 = vunpack.c.h.b16 %v588
        %v1915 = vunpack.c.l.b16 %v589
        %v1916 = vunpack.c.h.b16 %v589
        %v1917 = vunpack.c.l.b16 %v590
        %v1918 = vunpack.c.h.b16 %v590
        %v1919 = vunpack.c.l.b16 %v591
        %v1920 = vunpack.c.h.b16 %v591
        %v1921 = vunpack.c.l.b16 %v592
        %v1922 = vunpack.c.h.b16 %v592
        %v1923 = vunpack.c.l.b16 %v593
        %v1924 = vunpack.c.h.b16 %v593
        %v1925 = vunpack.c.l.b16 %v594
        %v1926 = vunpack.c.h.b16 %v594
        %v1927 = vunpack.c.l.b16 %v595
        %v1928 = vunpack.c.h.b16 %v595
        %v1929 = vunpack.c.l.b16 %v596
        %v1930 = vunpack.c.h.b16 %v596
        %v1931 = vunpack.c.l.b16 %v597
        %v1932 = vunpack.c.h.b16 %v597
        %v1933 = vunpack.c.l.b16 %v598
        %v1934 = vunpack.c.h.b16 %v598
        %v1935 = vunpack.c.l.b16 %v599
        %v1936 = vunpack.c.h.b16 %v599
        %v1937 = vunpack.c.l.b16 %v600
        %v1938 = vunpack.c.h.b16 %v600
        %v1939 = vunpack.c.l.b16 %v601
        %v1940 = vunpack.c.h.b16 %v601
        %v1941 = vunpack.c.l.b16 %v602
        %v1942 = vunpack.c.h.b16 %v602
        %v1943 = vunpack.c.l.b16 %v603
        %v1944 = vunpack.c.h.b16 %v603
        %v1945 = vunpack.c.l.b16 %v604
        %v1946 = vunpack.c.h.b16 %v604
        %v1947 = vunpack.c.l.b16 %v605
        %v1948 = vunpack.c.h.b16 %v605
        %v1949 = vunpack.c.l.b16 %v606
        %v1950 = vunpack.c.h.b16 %v606
        %v1951 = vunpack.c.l.b16 %v607
        %v1952 = vunpack.c.h.b16 %v607
        %v1953 = vunpack.c.l.b16 %v608
        %v1954 = vunpack.c.h.b16 %v608
        %v1955 = vunpack.c.l.b16 %v609
        %v1956 = vunpack.c.h.b16 %v609
        %v1957 = vunpack.c.l.b16 %v610
        %v1958 = vunpack.c.h.b16 %v610
        %v1959 = vunpack.c.l.b16 %v611
        %v1960 = vunpack.c.h.b16 %v611
        %v1961 = vunpack.c.l.b16 %v612
        %v1962 = vunpack.c.h.b16 %v612
        %v1963 = vunpack.c.l.b16 %v613
        %v1964 = vunpack.c.h.b16 %v613
        %v1965 = vunpack.c.l.b16 %v614
        %v1966 = vunpack.c.h.b16 %v614
        %v1967 = vunpack.c.l.b16 %v615
        %v1968 = vunpack.c.h.b16 %v615
        %v1969 = vunpack.c.l.b16 %v616
        %v1970 = vunpack.c.h.b16 %v616
        %v1971 = vunpack.c.l.b16 %v617
        %v1972 = vunpack.c.h.b16 %v617
        %v1973 = vunpack.c.l.b16 %v618
        %v1974 = vunpack.c.h.b16 %v618
        %v1975 = vunpack.c.l.b16 %v619
        %v1976 = vunpack.c.h.b16 %v619
        %v1977 = vunpack.c.l.b16 %v620
        %v1978 = vunpack.c.h.b16 %v620
        %v1979 = vunpack.c.l.b16 %v621
        %v1980 = vunpack.c.h.b16 %v621
        %v1981 = vunpack.c.l.b16 %v622
        %v1982 = vunpack.c.h.b16 %v622
        %v1983 = vunpack.c.l.b16 %v623
        %v1984 = vunpack.c.h.b16 %v623
        %v1985 = vunpack.c.l.b16 %v624
        %v1986 = vunpack.c.h.b16 %v624
        %v1987 = vunpack.c.l.b16 %v625
        %v1988 = vunpack.c.h.b16 %v625
        %v1989 = vunpack.c.l.b16 %v626
        %v1990 = vunpack.c.h.b16 %v626
        %v1991 = vunpack.c.l.b16 %v627
        %v1992 = vunpack.c.h.b16 %v627
        %v1993 = vunpack.c.l.b16 %v628
        %v1994 = vunpack.c.h.b16 %v628
        %v1995 = vunpack.c.l.b16 %v629
        %v1996 = vunpack.c.h.b16 %v629
        %v1997 = vunpack.c.l.b16 %v630
        %v1998 = vunpack.c.h.b16 %v630
        %v1999 = vunpack.c.l.b16 %v631
        %v2000 = vunpack.c.h.b16 %v631
        %v2001 = vunpack.c.l.b16 %v632
        %v2002 = vunpack.c.h.b16 %v632
        %v2003 = vunpack.c.l.b16 %v633
        %v2004 = vunpack.c.h.b16 %v633
        %v2005 = vunpack.c.l.b16 %v634
        %v2006 = vunpack.c.h.b16 %v634
        %v2007 = vunpack.c.l.b16 %v635
        %v2008 = vunpack.c.h.b16 %v635
        %v2009 = vunpack.c.l.b16 %v636
        %v2010 = vunpack.c.h.b16 %v636
        %v2011 = vunpack.c.l.b16 %v637
        %v2012 = vunpack.c.h.b16 %v637
        %v2013 = vunpack.c.l.b16 %v638
        %v2014 = vunpack.c.h.b16 %v638
        %v2015 = vunpack.c.l.b16 %v639
        %v2016 = vunpack.c.h.b16 %v639
        %v2017 = vunpack.c.l.b16 %v640
        %v2018 = vunpack.c.h.b16 %v640
        %v2019 = vunpack.c.l.b16 %v641
        %v2020 = vunpack.c.h.b16 %v641
        %v2021 = vunpack.c.l.b16 %v642
        %v2022 = vunpack.c.h.b16 %v642
        %v2023 = vunpack.c.l.b16 %v643
        %v2024 = vunpack.c.h.b16 %v643
        %v2025 = vunpack.c.l.b16 %v644
        %v2026 = vunpack.c.h.b16 %v644
        %v2027 = vunpack.c.l.b16 %v645
        %v2028 = vunpack.c.h.b16 %v645
        %v2029 = vunpack.c.l.b16 %v646
        %v2030 = vunpack.c.h.b16 %v646
        %v2031 = vunpack.c.l.b16 %v647
        %v2032 = vunpack.c.h.b16 %v647
        %v2033 = vunpack.c.l.b16 %v648
        %v2034 = vunpack.c.h.b16 %v648
        %v2035 = vunpack.c.l.b16 %v649
        %v2036 = vunpack.c.h.b16 %v649
        %v2037 = vunpack.c.l.b16 %v650
        %v2038 = vunpack.c.h.b16 %v650
        %v2039 = vunpack.c.l.b16 %v651
        %v2040 = vunpack.c.h.b16 %v651
        %v2041 = vunpack.c.l.b16 %v652
        %v2042 = vunpack.c.h.b16 %v652
        %v2043 = vunpack.c.l.b16 %v653
        %v2044 = vunpack.c.h.b16 %v653
        %v2045 = vunpack.c.l.b16 %v654
        %v2046 = vunpack.c.h.b16 %v654
        %v2047 = vunpack.c.l.b16 %v655
        %v2048 = vunpack.c.h.b16 %v655
        %v2049 = vunpack.c.l.b16 %v656
        %v2050 = vunpack.c.h.b16 %v656
        %v2051 = vunpack.c.l.b16 %v657
        %v2052 = vunpack.c.h.b16 %v657
        %v2053 = vunpack.c.l.b16 %v658
        %v2054 = vunpack.c.h.b16 %v658
        %v2055 = vunpack.c.l.b16 %v659
        %v2056 = vunpack.c.h.b16 %v659
        %v2057 = vunpack.c.l.b16 %v660
        %v2058 = vunpack.c.h.b16 %v660
        %v2059 = vunpack.c.l.b16 %v661
        %v2060 = vunpack.c.h.b16 %v661
        %v2061 = vunpack.c.l.b16 %v662
        %v2062 = vunpack.c.h.b16 %v662
        %v2063 = vunpack.c.l.b16 %v663
        %v2064 = vunpack.c.h.b16 %v663
        %v2065 = vunpack.c.l.b16 %v664
        %v2066 = vunpack.c.h.b16 %v664
        %v2067 = vunpack.c.l.b16 %v665
        %v2068 = vunpack.c.h.b16 %v665
        %v2069 = vunpack.c.l.b16 %v666
        %v2070 = vunpack.c.h.b16 %v666
        %v2071 = vunpack.c.l.b16 %v667
        %v2072 = vunpack.c.h.b16 %v667
        %v2073 = vunpack.c.l.b16 %v668
        %v2074 = vunpack.c.h.b16 %v668
        %v2075 = vunpack.c.l.b16 %v669
        %v2076 = vunpack.c.h.b16 %v669
        %v2077 = vunpack.c.l.b16 %v670
        %v2078 = vunpack.c.h.b16 %v670
        %v2079 = vunpack.c.l.b16 %v671
        %v2080 = vunpack.c.h.b16 %v671
        %v2081 = vunpack.c.l.b16 %v672
        %v2082 = vunpack.c.h.b16 %v672
        %v2083 = vunpack.c.l.b16 %v673
        %v2084 = vunpack.c.h.b16 %v673
        %v2085 = vunpack.c.l.b16 %v674
        %v2086 = vunpack.c.h.b16 %v674
        %v2087 = vunpack.c.l.b16 %v675
        %v2088 = vunpack.c.h.b16 %v675
        %v2089 = vunpack.c.l.b16 %v676
        %v2090 = vunpack.c.h.b16 %v676
        %v2091 = vunpack.c.l.b16 %v677
        %v2092 = vunpack.c.h.b16 %v677
        %v2093 = vunpack.c.l.b16 %v678
        %v2094 = vunpack.c.h.b16 %v678
        %v2095 = vunpack.c.l.b16 %v679
        %v2096 = vunpack.c.h.b16 %v679
        %v2097 = vunpack.c.l.b16 %v680
        %v2098 = vunpack.c.h.b16 %v680
        %v2099 = vunpack.c.l.b16 %v681
        %v2100 = vunpack.c.h.b16 %v681
        %v2101 = vunpack.c.l.b16 %v682
        %v2102 = vunpack.c.h.b16 %v682
        %v2103 = vunpack.c.l.b16 %v683
        %v2104 = vunpack.c.h.b16 %v683
        %v2105 = vunpack.c.l.b16 %v684
        %v2106 = vunpack.c.h.b16 %v684
        %v2107 = vunpack.c.l.b16 %v685
        %v2108 = vunpack.c.h.b16 %v685
        %v2109 = vunpack.c.l.b16 %v686
        %v2110 = vunpack.c.h.b16 %v686
        %v2111 = vunpack.c.l.b16 %v687
        %v2112 = vunpack.c.h.b16 %v687
        %v2113 = vunpack.c.l.b16 %v688
        %v2114 = vunpack.c.h.b16 %v688
        %v2115 = vunpack.c.l.b16 %v689
        %v2116 = vunpack.c.h.b16 %v689
        %v2117 = vunpack.c.l.b16 %v690
        %v2118 = vunpack.c.h.b16 %v690
        %v2119 = vunpack.c.l.b16 %v691
        %v2120 = vunpack.c.h.b16 %v691
        %v2121 = vunpack.c.l.b16 %v692
        %v2122 = vunpack.c.h.b16 %v692
        %v2123 = vunpack.c.l.b16 %v693
        %v2124 = vunpack.c.h.b16 %v693
        %v2125 = vunpack.c.l.b16 %v694
        %v2126 = vunpack.c.h.b16 %v694
        %v2127 = vunpack.c.l.b16 %v695
        %v2128 = vunpack.c.h.b16 %v695
        %v2129 = vunpack.c.l.b16 %v696
        %v2130 = vunpack.c.h.b16 %v696
        %v2131 = vunpack.c.l.b16 %v697
        %v2132 = vunpack.c.h.b16 %v697
        %v2133 = vunpack.c.l.b16 %v698
        %v2134 = vunpack.c.h.b16 %v698
        %v2135 = vunpack.c.l.b16 %v699
        %v2136 = vunpack.c.h.b16 %v699
        %v2137 = vunpack.c.l.b16 %v700
        %v2138 = vunpack.c.h.b16 %v700
        %v2139 = vunpack.c.l.b16 %v701
        %v2140 = vunpack.c.h.b16 %v701
        %v2141 = vunpack.c.l.b16 %v702
        %v2142 = vunpack.c.h.b16 %v702
        %v2143 = vunpack.c.l.b16 %v703
        %v2144 = vunpack.c.h.b16 %v703
        %v2145 = vunpack.c.l.b16 %v704
        %v2146 = vunpack.c.h.b16 %v704
        %v2147 = vunpack.c.l.b16 %v705
        %v2148 = vunpack.c.h.b16 %v705
        %v2149 = vunpack.c.l.b16 %v706
        %v2150 = vunpack.c.h.b16 %v706
        %v2151 = vunpack.c.l.b16 %v707
        %v2152 = vunpack.c.h.b16 %v707
        %v2153 = vunpack.c.l.b16 %v708
        %v2154 = vunpack.c.h.b16 %v708
        %v2155 = vunpack.c.l.b16 %v709
        %v2156 = vunpack.c.h.b16 %v709
        %v2157 = vunpack.c.l.b16 %v710
        %v2158 = vunpack.c.h.b16 %v710
        %v2159 = vunpack.c.l.b16 %v711
        %v2160 = vunpack.c.h.b16 %v711
        %v2161 = vunpack.c.l.b16 %v712
        %v2162 = vunpack.c.h.b16 %v712
        %v2163 = vunpack.c.l.b16 %v713
        %v2164 = vunpack.c.h.b16 %v713
        %v2165 = vunpack.c.l.b16 %v714
        %v2166 = vunpack.c.h.b16 %v714
        %v2167 = vunpack.c.l.b16 %v715
        %v2168 = vunpack.c.h.b16 %v715
        %v2169 = vunpack.c.l.b16 %v716
        %v2170 = vunpack.c.h.b16 %v716
        %v2171 = vunpack.c.l.b16 %v717
        %v2172 = vunpack.c.h.b16 %v717
        %v2173 = vunpack.c.l.b16 %v718
        %v2174 = vunpack.c.h.b16 %v718
        %v2175 = vunpack.c.l.b16 %v719
        %v2176 = vunpack.c.h.b16 %v719
        %v2177 = vunpack.c.l.b16 %v720
        %v2178 = vunpack.c.h.b16 %v720
        %v2179 = vunpack.c.l.b16 %v721
        %v2180 = vunpack.c.h.b16 %v721
        %v2181 = vunpack.c.l.b16 %v722
        %v2182 = vunpack.c.h.b16 %v722
        %v2183 = vunpack.c.l.b16 %v723
        %v2184 = vunpack.c.h.b16 %v723
        %v2185 = vunpack.c.l.b16 %v724
        %v2186 = vunpack.c.h.b16 %v724
        %v2187 = vunpack.c.l.b16 %v725
        %v2188 = vunpack.c.h.b16 %v725
        %v2189 = vunpack.c.l.b16 %v726
        %v2190 = vunpack.c.h.b16 %v726
        %v2191 = vunpack.c.l.b16 %v727
        %v2192 = vunpack.c.h.b16 %v727
        %v2193 = vunpack.c.l.b16 %v728
        %v2194 = vunpack.c.h.b16 %v728
        %v2195 = vunpack.c.l.b16 %v729
        %v2196 = vunpack.c.h.b16 %v729
        %v2197 = vunpack.c.l.b16 %v730
        %v2198 = vunpack.c.h.b16 %v730
        %v2199 = vunpack.c.l.b16 %v731
        %v2200 = vunpack.c.h.b16 %v731
        %v2201 = vunpack.c.l.b16 %v732
        %v2202 = vunpack.c.h.b16 %v732
        %v2203 = vunpack.c.l.b16 %v733
        %v2204 = vunpack.c.h.b16 %v733
        %v2205 = vunpack.c.l.b16 %v734
        %v2206 = vunpack.c.h.b16 %v734
        %v2207 = vunpack.c.l.b16 %v735
        %v2208 = vunpack.c.h.b16 %v735
        %v2209 = vunpack.c.l.b16 %v736
        %v2210 = vunpack.c.h.b16 %v736
        %v2211 = vunpack.c.l.b16 %v737
        %v2212 = vunpack.c.h.b16 %v737
        %v2213 = vunpack.c.l.b16 %v738
        %v2214 = vunpack.c.h.b16 %v738
        %v2215 = vunpack.c.l.b16 %v739
        %v2216 = vunpack.c.h.b16 %v739
        %v2217 = vunpack.c.l.b16 %v740
        %v2218 = vunpack.c.h.b16 %v740
        %v2219 = vunpack.c.l.b16 %v741
        %v2220 = vunpack.c.h.b16 %v741
        %v2221 = vunpack.c.l.b16 %v742
        %v2222 = vunpack.c.h.b16 %v742
        %v2223 = vunpack.c.l.b16 %v743
        %v2224 = vunpack.c.h.b16 %v743
        %v2225 = vunpack.c.l.b16 %v744
        %v2226 = vunpack.c.h.b16 %v744
        %v2227 = vunpack.c.l.b16 %v745
        %v2228 = vunpack.c.h.b16 %v745
        %v2229 = vunpack.c.l.b16 %v746
        %v2230 = vunpack.c.h.b16 %v746
        %v2231 = vunpack.c.l.b16 %v747
        %v2232 = vunpack.c.h.b16 %v747
        %v2233 = vunpack.c.l.b16 %v748
        %v2234 = vunpack.c.h.b16 %v748
        %v2235 = vunpack.c.l.b16 %v749
        %v2236 = vunpack.c.h.b16 %v749
        %v2237 = vunpack.c.l.b16 %v750
        %v2238 = vunpack.c.h.b16 %v750
        %v2239 = vunpack.c.l.b16 %v751
        %v2240 = vunpack.c.h.b16 %v751
        %v2241 = vunpack.c.l.b16 %v752
        %v2242 = vunpack.c.h.b16 %v752
        %v2243 = vunpack.c.l.b16 %v753
        %v2244 = vunpack.c.h.b16 %v753
        %v2245 = vunpack.c.l.b16 %v754
        %v2246 = vunpack.c.h.b16 %v754
        %v2247 = vunpack.c.l.b16 %v755
        %v2248 = vunpack.c.h.b16 %v755
        %v2249 = vunpack.c.l.b16 %v756
        %v2250 = vunpack.c.h.b16 %v756
        %v2251 = vunpack.c.l.b16 %v757
        %v2252 = vunpack.c.h.b16 %v757
        %v2253 = vunpack.c.l.b16 %v758
        %v2254 = vunpack.c.h.b16 %v758
        %v2255 = vunpack.c.l.b16 %v759
        %v2256 = vunpack.c.h.b16 %v759
        %v2257 = vunpack.c.l.b16 %v760
        %v2258 = vunpack.c.h.b16 %v760
        %v2259 = vunpack.c.l.b16 %v761
        %v2260 = vunpack.c.h.b16 %v761
        %v2261 = vunpack.c.l.b16 %v762
        %v2262 = vunpack.c.h.b16 %v762
        %v2263 = vunpack.c.l.b16 %v763
        %v2264 = vunpack.c.h.b16 %v763
        %v2265 = vunpack.c.l.b16 %v764
        %v2266 = vunpack.c.h.b16 %v764
        %v2267 = vunpack.c.l.b16 %v765
        %v2268 = vunpack.c.h.b16 %v765
        %v2269 = vunpack.c.l.b16 %v766
        %v2270 = vunpack.c.h.b16 %v766
        %v2271 = vunpack.c.l.b16 %v767
        %v2272 = vunpack.c.h.b16 %v767
        %v2273 = vunpack.c.l.b16 %v768
        %v2274 = vunpack.c.h.b16 %v768
        %v2275 = vunpack.c.l.b16 %v769
        %v2276 = vunpack.c.h.b16 %v769
        %v2277 = vunpack.c.l.b16 %v770
        %v2278 = vunpack.c.h.b16 %v770
        %v2279 = vunpack.c.l.b16 %v771
        %v2280 = vunpack.c.h.b16 %v771
        %v2281 = vunpack.c.l.b16 %v772
        %v2282 = vunpack.c.h.b16 %v772
        %v2283 = vunpack.c.l.b16 %v773
        %v2284 = vunpack.c.h.b16 %v773
        %v2285 = vunpack.c.l.b16 %v774
        %v2286 = vunpack.c.h.b16 %v774
        %v2287 = vunpack.c.l.b16 %v775
        %v2288 = vunpack.c.h.b16 %v775
        %v2289 = vunpack.c.l.b16 %v776
        %v2290 = vunpack.c.h.b16 %v776
        %v2291 = vunpack.c.l.b16 %v777
        %v2292 = vunpack.c.h.b16 %v777
        %v2293 = vunpack.c.l.b16 %v778
        %v2294 = vunpack.c.h.b16 %v778
        %v2295 = vunpack.c.l.b16 %v779
        %v2296 = vunpack.c.h.b16 %v779
        %v2297 = vunpack.c.l.b16 %v780
        %v2298 = vunpack.c.h.b16 %v780
        %v2299 = vunpack.c.l.b16 %v781
        %v2300 = vunpack.c.h.b16 %v781
        %v2301 = vunpack.c.l.b16 %v782
        %v2302 = vunpack.c.h.b16 %v782
        %v2303 = vunpack.c.l.b16 %v783
        %v2304 = vunpack.c.h.b16 %v783
        %v2305 = vunpack.c.l.b16 %v784
        %v2306 = vunpack.c.h.b16 %v784
        %v2307 = vunpack.c.l.b16 %v785
        %v2308 = vunpack.c.h.b16 %v785
        %v2309 = vunpack.c.l.b16 %v786
        %v2310 = vunpack.c.h.b16 %v786
        %v2311 = vunpack.c.l.b16 %v787
        %v2312 = vunpack.c.h.b16 %v787
        %v2313 = vunpack.c.l.b16 %v788
        %v2314 = vunpack.c.h.b16 %v788
        %v2315 = vunpack.c.l.b16 %v789
        %v2316 = vunpack.c.h.b16 %v789
        %v2317 = vunpack.c.l.b16 %v790
        %v2318 = vunpack.c.h.b16 %v790
        %v2319 = vunpack.c.l.b16 %v791
        %v2320 = vunpack.c.h.b16 %v791
        %v2321 = vunpack.c.l.b16 %v792
        %v2322 = vunpack.c.h.b16 %v792
        %v2323 = vunpack.c.l.b16 %v793
        %v2324 = vunpack.c.h.b16 %v793
        %v2325 = vunpack.c.l.b16 %v794
        %v2326 = vunpack.c.h.b16 %v794
        %v2327 = vunpack.c.l.b16 %v795
        %v2328 = vunpack.c.h.b16 %v795
        %v2329 = vunpack.c.l.b16 %v796
        %v2330 = vunpack.c.h.b16 %v796
        %v2331 = vunpack.c.l.b16 %v797
        %v2332 = vunpack.c.h.b16 %v797
        %v2333 = vunpack.c.l.b16 %v798
        %v2334 = vunpack.c.h.b16 %v798
        %v2335 = vunpack.c.l.b16 %v799
        %v2336 = vunpack.c.h.b16 %v799
        %v2337 = vunpack.c.l.b16 %v800
        %v2338 = vunpack.c.h.b16 %v800
        %v2339 = vunpack.c.l.b16 %v801
        %v2340 = vunpack.c.h.b16 %v801
        %v2341 = vunpack.c.l.b16 %v802
        %v2342 = vunpack.c.h.b16 %v802
        %v2343 = vunpack.c.l.b16 %v803
        %v2344 = vunpack.c.h.b16 %v803
        %v2345 = vunpack.c.l.b16 %v804
        %v2346 = vunpack.c.h.b16 %v804
        %v2347 = vunpack.c.l.b16 %v805
        %v2348 = vunpack.c.h.b16 %v805
        %v2349 = vunpack.c.l.b16 %v806
        %v2350 = vunpack.c.h.b16 %v806
        %v2351 = vunpack.c.l.b16 %v807
        %v2352 = vunpack.c.h.b16 %v807
        %v2353 = vunpack.c.l.b16 %v808
        %v2354 = vunpack.c.h.b16 %v808
        %v2355 = vunpack.c.l.b16 %v809
        %v2356 = vunpack.c.h.b16 %v809
        %v2357 = vunpack.c.l.b16 %v810
        %v2358 = vunpack.c.h.b16 %v810
        %v2359 = vunpack.c.l.b16 %v811
        %v2360 = vunpack.c.h.b16 %v811
        %v2361 = vunpack.c.l.b16 %v812
        %v2362 = vunpack.c.h.b16 %v812
        %v2363 = vunpack.c.l.b16 %v813
        %v2364 = vunpack.c.h.b16 %v813
        %v2365 = vunpack.c.l.b16 %v814
        %v2366 = vunpack.c.h.b16 %v814
        %v2367 = vunpack.c.l.b16 %v815
        %v2368 = vunpack.c.h.b16 %v815
        %v2369 = vunpack.c.l.b16 %v816
        %v2370 = vunpack.c.h.b16 %v816
        %v2371 = vunpack.c.l.b16 %v817
        %v2372 = vunpack.c.h.b16 %v817
        %v2373 = vunpack.c.l.b16 %v818
        %v2374 = vunpack.c.h.b16 %v818
        %v2375 = vunpack.c.l.b16 %v819
        %v2376 = vunpack.c.h.b16 %v819
        %v2377 = vunpack.c.l.b16 %v820
        %v2378 = vunpack.c.h.b16 %v820
        %v2379 = vunpack.c.l.b16 %v821
        %v2380 = vunpack.c.h.b16 %v821
        %v2381 = vunpack.c.l.b16 %v822
        %v2382 = vunpack.c.h.b16 %v822
        %v2383 = vunpack.c.l.b16 %v823
        %v2384 = vunpack.c.h.b16 %v823
        %v2385 = vunpack.c.l.b16 %v824
        %v2386 = vunpack.c.h.b16 %v824
        %v2387 = vunpack.c.l.b16 %v825
        %v2388 = vunpack.c.h.b16 %v825
        %v2389 = vunpack.c.l.b16 %v826
        %v2390 = vunpack.c.h.b16 %v826
        %v2391 = vunpack.c.l.b16 %v827
        %v2392 = vunpack.c.h.b16 %v827
        %v2393 = vunpack.c.l.b16 %v828
        %v2394 = vunpack.c.h.b16 %v828
        %v2395 = vunpack.c.l.b16 %v829
        %v2396 = vunpack.c.h.b16 %v829
        %v2397 = vunpack.c.l.b16 %v830
        %v2398 = vunpack.c.h.b16 %v830
        %v2399 = vunpack.c.l.b16 %v831
        %v2400 = vunpack.c.h.b16 %v831
        %v2401 = vunpack.c.l.b16 %v832
        %v2402 = vunpack.c.h.b16 %v832
        %v2403 = vunpack.c.l.b16 %v833
        %v2404 = vunpack.c.h.b16 %v833
        %v2405 = vunpack.c.l.b16 %v834
        %v2406 = vunpack.c.h.b16 %v834
        %v2407 = vunpack.c.l.b16 %v835
        %v2408 = vunpack.c.h.b16 %v835
        %v2409 = vunpack.c.l.b16 %v836
        %v2410 = vunpack.c.h.b16 %v836
        %v2411 = vunpack.c.l.b16 %v837
        %v2412 = vunpack.c.h.b16 %v837
        %v2413 = vunpack.c.l.b16 %v838
        %v2414 = vunpack.c.h.b16 %v838
        %v2415 = vunpack.c.l.b16 %v839
        %v2416 = vunpack.c.h.b16 %v839
        %v2417 = vunpack.c.l.b16 %v840
        %v2418 = vunpack.c.h.b16 %v840
        %v2419 = vunpack.c.l.b16 %v841
        %v2420 = vunpack.c.h.b16 %v841
        %v2421 = vunpack.c.l.b16 %v842
        %v2422 = vunpack.c.h.b16 %v842
        %v2423 = vunpack.c.l.b16 %v843
        %v2424 = vunpack.c.h.b16 %v843
        %v2425 = vunpack.c.l.b16 %v844
        %v2426 = vunpack.c.h.b16 %v844
        %v2427 = vunpack.c.l.b16 %v845
        %v2428 = vunpack.c.h.b16 %v845
        %v2429 = vunpack.c.l.b16 %v846
        %v2430 = vunpack.c.h.b16 %v846
        %v2431 = vunpack.c.l.b16 %v847
        %v2432 = vunpack.c.h.b16 %v847
        %v2433 = vunpack.c.l.b16 %v848
        %v2434 = vunpack.c.h.b16 %v848
        %v2435 = vunpack.c.l.b16 %v849
        %v2436 = vunpack.c.h.b16 %v849
        %v2437 = vunpack.c.l.b16 %v850
        %v2438 = vunpack.c.h.b16 %v850
        %v2439 = vunpack.c.l.b16 %v851
        %v2440 = vunpack.c.h.b16 %v851
        %v2441 = vunpack.c.l.b16 %v852
        %v2442 = vunpack.c.h.b16 %v852
        %v2443 = vunpack.c.l.b16 %v853
        %v2444 = vunpack.c.h.b16 %v853
        %v2445 = vunpack.c.l.b16 %v854
        %v2446 = vunpack.c.h.b16 %v854
        %v2447 = vunpack.c.l.b16 %v855
        %v2448 = vunpack.c.h.b16 %v855
        %v2449 = vunpack.c.l.b16 %v856
        %v2450 = vunpack.c.h.b16 %v856
        %v2451 = vunpack.c.l.b16 %v857
        %v2452 = vunpack.c.h.b16 %v857
        %v2453 = vunpack.c.l.b16 %v858
        %v2454 = vunpack.c.h.b16 %v858
        %v2455 = vunpack.c.l.b16 %v859
        %v2456 = vunpack.c.h.b16 %v859
        %v2457 = vunpack.c.l.b16 %v860
        %v2458 = vunpack.c.h.b16 %v860
        %v2459 = vunpack.c.l.b16 %v861
        %v2460 = vunpack.c.h.b16 %v861
        %v2461 = vunpack.c.l.b16 %v862
        %v2462 = vunpack.c.h.b16 %v862
        %v2463 = vunpack.c.l.b16 %v863
        %v2464 = vunpack.c.h.b16 %v863
        %v2465 = vunpack.c.l.b16 %v864
        %v2466 = vunpack.c.h.b16 %v864
        %v2467 = vunpack.c.l.b16 %v865
        %v2468 = vunpack.c.h.b16 %v865
        %v2469 = vunpack.c.l.b16 %v866
        %v2470 = vunpack.c.h.b16 %v866
        %v2471 = vunpack.c.l.b16 %v867
        %v2472 = vunpack.c.h.b16 %v867
        %v2473 = vunpack.c.l.b16 %v868
        %v2474 = vunpack.c.h.b16 %v868
        %v2475 = vunpack.c.l.b16 %v869
        %v2476 = vunpack.c.h.b16 %v869
        %v2477 = vunpack.c.l.b16 %v870
        %v2478 = vunpack.c.h.b16 %v870
        %v2479 = vunpack.c.l.b16 %v871
        %v2480 = vunpack.c.h.b16 %v871
        %v2481 = vunpack.c.l.b16 %v872
        %v2482 = vunpack.c.h.b16 %v872
        %v2483 = vunpack.c.l.b16 %v873
        %v2484 = vunpack.c.h.b16 %v873
        %v2485 = vunpack.c.l.b16 %v874
        %v2486 = vunpack.c.h.b16 %v874
        %v2487 = vunpack.c.l.b16 %v875
        %v2488 = vunpack.c.h.b16 %v875
        %v2489 = vunpack.c.l.b16 %v876
        %v2490 = vunpack.c.h.b16 %v876
        %v2491 = vunpack.c.l.b16 %v877
        %v2492 = vunpack.c.h.b16 %v877
        %v2493 = vunpack.c.l.b16 %v878
        %v2494 = vunpack.c.h.b16 %v878
        %v2495 = vpack.c.b16 %v1475, %v1471
        %v2496 = vpack.c.b16 %v1476, %v1472
        %v2497 = vpack.c.b16 %v1477, %v1473
        %v2498 = vpack.c.b16 %v1478, %v1474
        %v2499 = vpack.c.b16 %v1483, %v1479
        %v2500 = vpack.c.b16 %v1484, %v1480
        %v2501 = vpack.c.b16 %v1485, %v1481
        %v2502 = vpack.c.b16 %v1486, %v1482
        %v2503 = vpack.c.b16 %v1491, %v1487
        %v2504 = vpack.c.b16 %v1492, %v1488
        %v2505 = vpack.c.b16 %v1493, %v1489
        %v2506 = vpack.c.b16 %v1494, %v1490
        %v2507 = vpack.c.b16 %v1499, %v1495
        %v2508 = vpack.c.b16 %v1500, %v1496
        %v2509 = vpack.c.b16 %v1501, %v1497
        %v2510 = vpack.c.b16 %v1502, %v1498
        %v2511 = vpack.c.b16 %v1507, %v1503
        %v2512 = vpack.c.b16 %v1508, %v1504
        %v2513 = vpack.c.b16 %v1509, %v1505
        %v2514 = vpack.c.b16 %v1510, %v1506
        %v2515 = vpack.c.b16 %v1515, %v1511
        %v2516 = vpack.c.b16 %v1516, %v1512
        %v2517 = vpack.c.b16 %v1517, %v1513
        %v2518 = vpack.c.b16 %v1518, %v1514
        %v2519 = vpack.c.b16 %v1523, %v1519
        %v2520 = vpack.c.b16 %v1524, %v1520
        %v2521 = vpack.c.b16 %v1525, %v1521
        %v2522 = vpack.c.b16 %v1526, %v1522
        %v2523 = vpack.c.b16 %v1531, %v1527
        %v2524 = vpack.c.b16 %v1532, %v1528
        %v2525 = vpack.c.b16 %v1533, %v1529
        %v2526 = vpack.c.b16 %v1534, %v1530
        %v2527 = vpack.c.b16 %v1539, %v1535
        %v2528 = vpack.c.b16 %v1540, %v1536
        %v2529 = vpack.c.b16 %v1541, %v1537
        %v2530 = vpack.c.b16 %v1542, %v1538
        %v2531 = vpack.c.b16 %v1547, %v1543
        %v2532 = vpack.c.b16 %v1548, %v1544
        %v2533 = vpack.c.b16 %v1549, %v1545
        %v2534 = vpack.c.b16 %v1550, %v1546
        %v2535 = vpack.c.b16 %v1555, %v1551
        %v2536 = vpack.c.b16 %v1556, %v1552
        %v2537 = vpack.c.b16 %v1557, %v1553
        %v2538 = vpack.c.b16 %v1558, %v1554
        %v2539 = vpack.c.b16 %v1563, %v1559
        %v2540 = vpack.c.b16 %v1564, %v1560
        %v2541 = vpack.c.b16 %v1565, %v1561
        %v2542 = vpack.c.b16 %v1566, %v1562
        %v2543 = vpack.c.b16 %v1571, %v1567
        %v2544 = vpack.c.b16 %v1572, %v1568
        %v2545 = vpack.c.b16 %v1573, %v1569
        %v2546 = vpack.c.b16 %v1574, %v1570
        %v2547 = vpack.c.b16 %v1579, %v1575
        %v2548 = vpack.c.b16 %v1580, %v1576
        %v2549 = vpack.c.b16 %v1581, %v1577
        %v2550 = vpack.c.b16 %v1582, %v1578
        %v2551 = vpack.c.b16 %v1587, %v1583
        %v2552 = vpack.c.b16 %v1588, %v1584
        %v2553 = vpack.c.b16 %v1589, %v1585
        %v2554 = vpack.c.b16 %v1590, %v1586
        %v2555 = vpack.c.b16 %v1595, %v1591
        %v2556 = vpack.c.b16 %v1596, %v1592
        %v2557 = vpack.c.b16 %v1597, %v1593
        %v2558 = vpack.c.b16 %v1598, %v1594
        %v2559 = vpack.c.b16 %v1603, %v1599
        %v2560 = vpack.c.b16 %v1604, %v1600
        %v2561 = vpack.c.b16 %v1605, %v1601
        %v2562 = vpack.c.b16 %v1606, %v1602
        %v2563 = vpack.c.b16 %v1611, %v1607
        %v2564 = vpack.c.b16 %v1612, %v1608
        %v2565 = vpack.c.b16 %v1613, %v1609
        %v2566 = vpack.c.b16 %v1614, %v1610
        %v2567 = vpack.c.b16 %v1619, %v1615
        %v2568 = vpack.c.b16 %v1620, %v1616
        %v2569 = vpack.c.b16 %v1621, %v1617
        %v2570 = vpack.c.b16 %v1622, %v1618
        %v2571 = vpack.c.b16 %v1627, %v1623
        %v2572 = vpack.c.b16 %v1628, %v1624
        %v2573 = vpack.c.b16 %v1629, %v1625
        %v2574 = vpack.c.b16 %v1630, %v1626
        %v2575 = vpack.c.b16 %v1635, %v1631
        %v2576 = vpack.c.b16 %v1636, %v1632
        %v2577 = vpack.c.b16 %v1637, %v1633
        %v2578 = vpack.c.b16 %v1638, %v1634
        %v2579 = vpack.c.b16 %v1643, %v1639
        %v2580 = vpack.c.b16 %v1644, %v1640
        %v2581 = vpack.c.b16 %v1645, %v1641
        %v2582 = vpack.c.b16 %v1646, %v1642
        %v2583 = vpack.c.b16 %v1651, %v1647
        %v2584 = vpack.c.b16 %v1652, %v1648
        %v2585 = vpack.c.b16 %v1653, %v1649
        %v2586 = vpack.c.b16 %v1654, %v1650
        %v2587 = vpack.c.b16 %v1659, %v1655
        %v2588 = vpack.c.b16 %v1660, %v1656
        %v2589 = vpack.c.b16 %v1661, %v1657
        %v2590 = vpack.c.b16 %v1662, %v1658
        %v2591 = vpack.c.b16 %v1667, %v1663
        %v2592 = vpack.c.b16 %v1668, %v1664
        %v2593 = vpack.c.b16 %v1669, %v1665
        %v2594 = vpack.c.b16 %v1670, %v1666
        %v2595 = vpack.c.b16 %v1675, %v1671
        %v2596 = vpack.c.b16 %v1676, %v1672
        %v2597 = vpack.c.b16 %v1677, %v1673
        %v2598 = vpack.c.b16 %v1678, %v1674
        %v2599 = vpack.c.b16 %v1683, %v1679
        %v2600 = vpack.c.b16 %v1684, %v1680
        %v2601 = vpack.c.b16 %v1685, %v1681
        %v2602 = vpack.c.b16 %v1686, %v1682
        %v2603 = vpack.c.b16 %v1691, %v1687
        %v2604 = vpack.c.b16 %v1692, %v1688
        %v2605 = vpack.c.b16 %v1693, %v1689
        %v2606 = vpack.c.b16 %v1694, %v1690
        %v2607 = vpack.c.b16 %v1699, %v1695
        %v2608 = vpack.c.b16 %v1700, %v1696
        %v2609 = vpack.c.b16 %v1701, %v1697
        %v2610 = vpack.c.b16 %v1702, %v1698
        %v2611 = vpack.c.b16 %v1707, %v1703
        %v2612 = vpack.c.b16 %v1708, %v1704
        %v2613 = vpack.c.b16 %v1709, %v1705
        %v2614 = vpack.c.b16 %v1710, %v1706
        %v2615 = vpack.c.b16 %v1715, %v1711
        %v2616 = vpack.c.b16 %v1716, %v1712
        %v2617 = vpack.c.b16 %v1717, %v1713
        %v2618 = vpack.c.b16 %v1718, %v1714
        %v2619 = vpack.c.b16 %v1723, %v1719
        %v2620 = vpack.c.b16 %v1724, %v1720
        %v2621 = vpack.c.b16 %v1725, %v1721
        %v2622 = vpack.c.b16 %v1726, %v1722
        %v2623 = vpack.c.b16 %v1731, %v1727
        %v2624 = vpack.c.b16 %v1732, %v1728
        %v2625 = vpack.c.b16 %v1733, %v1729
        %v2626 = vpack.c.b16 %v1734, %v1730
        %v2627 = vpack.c.b16 %v1739, %v1735
        %v2628 = vpack.c.b16 %v1740, %v1736
        %v2629 = vpack.c.b16 %v1741, %v1737
        %v2630 = vpack.c.b16 %v1742, %v1738
        %v2631 = vpack.c.b16 %v1747, %v1743
        %v2632 = vpack.c.b16 %v1748, %v1744
        %v2633 = vpack.c.b16 %v1749, %v1745
        %v2634 = vpack.c.b16 %v1750, %v1746
        %v2635 = vpack.c.b16 %v1755, %v1751
        %v2636 = vpack.c.b16 %v1756, %v1752
        %v2637 = vpack.c.b16 %v1757, %v1753
        %v2638 = vpack.c.b16 %v1758, %v1754
        %v2639 = vpack.c.b16 %v1763, %v1759
        %v2640 = vpack.c.b16 %v1764, %v1760
        %v2641 = vpack.c.b16 %v1765, %v1761
        %v2642 = vpack.c.b16 %v1766, %v1762
        %v2643 = vpack.c.b16 %v1771, %v1767
        %v2644 = vpack.c.b16 %v1772, %v1768
        %v2645 = vpack.c.b16 %v1773, %v1769
        %v2646 = vpack.c.b16 %v1774, %v1770
        %v2647 = vpack.c.b16 %v1779, %v1775
        %v2648 = vpack.c.b16 %v1780, %v1776
        %v2649 = vpack.c.b16 %v1781, %v1777
        %v2650 = vpack.c.b16 %v1782, %v1778
        %v2651 = vpack.c.b16 %v1787, %v1783
        %v2652 = vpack.c.b16 %v1788, %v1784
        %v2653 = vpack.c.b16 %v1789, %v1785
        %v2654 = vpack.c.b16 %v1790, %v1786
        %v2655 = vpack.c.b16 %v1795, %v1791
        %v2656 = vpack.c.b16 %v1796, %v1792
        %v2657 = vpack.c.b16 %v1797, %v1793
        %v2658 = vpack.c.b16 %v1798, %v1794
        %v2659 = vpack.c.b16 %v1803, %v1799
        %v2660 = vpack.c.b16 %v1804, %v1800
        %v2661 = vpack.c.b16 %v1805, %v1801
        %v2662 = vpack.c.b16 %v1806, %v1802
        %v2663 = vpack.c.b16 %v1811, %v1807
        %v2664 = vpack.c.b16 %v1812, %v1808
        %v2665 = vpack.c.b16 %v1813, %v1809
        %v2666 = vpack.c.b16 %v1814, %v1810
        %v2667 = vpack.c.b16 %v1819, %v1815
        %v2668 = vpack.c.b16 %v1820, %v1816
        %v2669 = vpack.c.b16 %v1821, %v1817
        %v2670 = vpack.c.b16 %v1822, %v1818
        %v2671 = vpack.c.b16 %v1827, %v1823
        %v2672 = vpack.c.b16 %v1828, %v1824
        %v2673 = vpack.c.b16 %v1829, %v1825
        %v2674 = vpack.c.b16 %v1830, %v1826
        %v2675 = vpack.c.b16 %v1835, %v1831
        %v2676 = vpack.c.b16 %v1836, %v1832
        %v2677 = vpack.c.b16 %v1837, %v1833
        %v2678 = vpack.c.b16 %v1838, %v1834
        %v2679 = vpack.c.b16 %v1843, %v1839
        %v2680 = vpack.c.b16 %v1844, %v1840
        %v2681 = vpack.c.b16 %v1845, %v1841
        %v2682 = vpack.c.b16 %v1846, %v1842
        %v2683 = vpack.c.b16 %v1851, %v1847
        %v2684 = vpack.c.b16 %v1852, %v1848
        %v2685 = vpack.c.b16 %v1853, %v1849
        %v2686 = vpack.c.b16 %v1854, %v1850
        %v2687 = vpack.c.b16 %v1859, %v1855
        %v2688 = vpack.c.b16 %v1860, %v1856
        %v2689 = vpack.c.b16 %v1861, %v1857
        %v2690 = vpack.c.b16 %v1862, %v1858
        %v2691 = vpack.c.b16 %v1867, %v1863
        %v2692 = vpack.c.b16 %v1868, %v1864
        %v2693 = vpack.c.b16 %v1869, %v1865
        %v2694 = vpack.c.b16 %v1870, %v1866
        %v2695 = vpack.c.b16 %v1875, %v1871
        %v2696 = vpack.c.b16 %v1876, %v1872
        %v2697 = vpack.c.b16 %v1877, %v1873
        %v2698 = vpack.c.b16 %v1878, %v1874
        %v2699 = vpack.c.b16 %v1883, %v1879
        %v2700 = vpack.c.b16 %v1884, %v1880
        %v2701 = vpack.c.b16 %v1885, %v1881
        %v2702 = vpack.c.b16 %v1886, %v1882
        %v2703 = vpack.c.b16 %v1891, %v1887
        %v2704 = vpack.c.b16 %v1892, %v1888
        %v2705 = vpack.c.b16 %v1893, %v1889
        %v2706 = vpack.c.b16 %v1894, %v1890
        %v2707 = vpack.c.b16 %v1899, %v1895
        %v2708 = vpack.c.b16 %v1900, %v1896
        %v2709 = vpack.c.b16 %v1901, %v1897
        %v2710 = vpack.c.b16 %v1902, %v1898
        %v2711 = vpack.c.b16 %v1907, %v1903
        %v2712 = vpack.c.b16 %v1908, %v1904
        %v2713 = vpack.c.b16 %v1909, %v1905
        %v2714 = vpack.c.b16 %v1910, %v1906
        %v2715 = vpack.c.b16 %v1915, %v1911
        %v2716 = vpack.c.b16 %v1916, %v1912
        %v2717 = vpack.c.b16 %v1917, %v1913
        %v2718 = vpack.c.b16 %v1918, %v1914
        %v2719 = vpack.c.b16 %v1923, %v1919
        %v2720 = vpack.c.b16 %v1924, %v1920
        %v2721 = vpack.c.b16 %v1925, %v1921
        %v2722 = vpack.c.b16 %v1926, %v1922
        %v2723 = vpack.c.b16 %v1931, %v1927
        %v2724 = vpack.c.b16 %v1932, %v1928
        %v2725 = vpack.c.b16 %v1933, %v1929
        %v2726 = vpack.c.b16 %v1934, %v1930
        %v2727 = vpack.c.b16 %v1939, %v1935
        %v2728 = vpack.c.b16 %v1940, %v1936
        %v2729 = vpack.c.b16 %v1941, %v1937
        %v2730 = vpack.c.b16 %v1942, %v1938
        %v2731 = vpack.c.b16 %v1947, %v1943
        %v2732 = vpack.c.b16 %v1948, %v1944
        %v2733 = vpack.c.b16 %v1949, %v1945
        %v2734 = vpack.c.b16 %v1950, %v1946
        %v2735 = vpack.c.b16 %v1955, %v1951
        %v2736 = vpack.c.b16 %v1956, %v1952
        %v2737 = vpack.c.b16 %v1957, %v1953
        %v2738 = vpack.c.b16 %v1958, %v1954
        %v2739 = vpack.c.b16 %v1963, %v1959
        %v2740 = vpack.c.b16 %v1964, %v1960
        %v2741 = vpack.c.b16 %v1965, %v1961
        %v2742 = vpack.c.b16 %v1966, %v1962
        %v2743 = vpack.c.b16 %v1971, %v1967
        %v2744 = vpack.c.b16 %v1972, %v1968
        %v2745 = vpack.c.b16 %v1973, %v1969
        %v2746 = vpack.c.b16 %v1974, %v1970
        %v2747 = vpack.c.b16 %v1979, %v1975
        %v2748 = vpack.c.b16 %v1980, %v1976
        %v2749 = vpack.c.b16 %v1981, %v1977
        %v2750 = vpack.c.b16 %v1982, %v1978
        %v2751 = vpack.c.b16 %v1987, %v1983
        %v2752 = vpack.c.b16 %v1988, %v1984
        %v2753 = vpack.c.b16 %v1989, %v1985
        %v2754 = vpack.c.b16 %v1990, %v1986
        %v2755 = vpack.c.b16 %v1995, %v1991
        %v2756 = vpack.c.b16 %v1996, %v1992
        %v2757 = vpack.c.b16 %v1997, %v1993
        %v2758 = vpack.c.b16 %v1998, %v1994
        %v2759 = vpack.c.b16 %v2003, %v1999
        %v2760 = vpack.c.b16 %v2004, %v2000
        %v2761 = vpack.c.b16 %v2005, %v2001
        %v2762 = vpack.c.b16 %v2006, %v2002
        %v2763 = vpack.c.b16 %v2011, %v2007
        %v2764 = vpack.c.b16 %v2012, %v2008
        %v2765 = vpack.c.b16 %v2013, %v2009
        %v2766 = vpack.c.b16 %v2014, %v2010
        %v2767 = vpack.c.b16 %v2019, %v2015
        %v2768 = vpack.c.b16 %v2020, %v2016
        %v2769 = vpack.c.b16 %v2021, %v2017
        %v2770 = vpack.c.b16 %v2022, %v2018
        %v2771 = vpack.c.b16 %v2027, %v2023
        %v2772 = vpack.c.b16 %v2028, %v2024
        %v2773 = vpack.c.b16 %v2029, %v2025
        %v2774 = vpack.c.b16 %v2030, %v2026
        %v2775 = vpack.c.b16 %v2035, %v2031
        %v2776 = vpack.c.b16 %v2036, %v2032
        %v2777 = vpack.c.b16 %v2037, %v2033
        %v2778 = vpack.c.b16 %v2038, %v2034
        %v2779 = vpack.c.b16 %v2043, %v2039
        %v2780 = vpack.c.b16 %v2044, %v2040
        %v2781 = vpack.c.b16 %v2045, %v2041
        %v2782 = vpack.c.b16 %v2046, %v2042
        %v2783 = vpack.c.b16 %v2051, %v2047
        %v2784 = vpack.c.b16 %v2052, %v2048
        %v2785 = vpack.c.b16 %v2053, %v2049
        %v2786 = vpack.c.b16 %v2054, %v2050
        %v2787 = vpack.c.b16 %v2059, %v2055
        %v2788 = vpack.c.b16 %v2060, %v2056
        %v2789 = vpack.c.b16 %v2061, %v2057
        %v2790 = vpack.c.b16 %v2062, %v2058
        %v2791 = vpack.c.b16 %v2067, %v2063
        %v2792 = vpack.c.b16 %v2068, %v2064
        %v2793 = vpack.c.b16 %v2069, %v2065
        %v2794 = vpack.c.b16 %v2070, %v2066
        %v2795 = vpack.c.b16 %v2075, %v2071
        %v2796 = vpack.c.b16 %v2076, %v2072
        %v2797 = vpack.c.b16 %v2077, %v2073
        %v2798 = vpack.c.b16 %v2078, %v2074
        %v2799 = vpack.c.b16 %v2083, %v2079
        %v2800 = vpack.c.b16 %v2084, %v2080
        %v2801 = vpack.c.b16 %v2085, %v2081
        %v2802 = vpack.c.b16 %v2086, %v2082
        %v2803 = vpack.c.b16 %v2091, %v2087
        %v2804 = vpack.c.b16 %v2092, %v2088
        %v2805 = vpack.c.b16 %v2093, %v2089
        %v2806 = vpack.c.b16 %v2094, %v2090
        %v2807 = vpack.c.b16 %v2099, %v2095
        %v2808 = vpack.c.b16 %v2100, %v2096
        %v2809 = vpack.c.b16 %v2101, %v2097
        %v2810 = vpack.c.b16 %v2102, %v2098
        %v2811 = vpack.c.b16 %v2107, %v2103
        %v2812 = vpack.c.b16 %v2108, %v2104
        %v2813 = vpack.c.b16 %v2109, %v2105
        %v2814 = vpack.c.b16 %v2110, %v2106
        %v2815 = vpack.c.b16 %v2115, %v2111
        %v2816 = vpack.c.b16 %v2116, %v2112
        %v2817 = vpack.c.b16 %v2117, %v2113
        %v2818 = vpack.c.b16 %v2118, %v2114
        %v2819 = vpack.c.b16 %v2123, %v2119
        %v2820 = vpack.c.b16 %v2124, %v2120
        %v2821 = vpack.c.b16 %v2125, %v2121
        %v2822 = vpack.c.b16 %v2126, %v2122
        %v2823 = vpack.c.b16 %v2131, %v2127
        %v2824 = vpack.c.b16 %v2132, %v2128
        %v2825 = vpack.c.b16 %v2133, %v2129
        %v2826 = vpack.c.b16 %v2134, %v2130
        %v2827 = vpack.c.b16 %v2139, %v2135
        %v2828 = vpack.c.b16 %v2140, %v2136
        %v2829 = vpack.c.b16 %v2141, %v2137
        %v2830 = vpack.c.b16 %v2142, %v2138
        %v2831 = vpack.c.b16 %v2147, %v2143
        %v2832 = vpack.c.b16 %v2148, %v2144
        %v2833 = vpack.c.b16 %v2149, %v2145
        %v2834 = vpack.c.b16 %v2150, %v2146
        %v2835 = vpack.c.b16 %v2155, %v2151
        %v2836 = vpack.c.b16 %v2156, %v2152
        %v2837 = vpack.c.b16 %v2157, %v2153
        %v2838 = vpack.c.b16 %v2158, %v2154
        %v2839 = vpack.c.b16 %v2163, %v2159
        %v2840 = vpack.c.b16 %v2164, %v2160
        %v2841 = vpack.c.b16 %v2165, %v2161
        %v2842 = vpack.c.b16 %v2166, %v2162
        %v2843 = vpack.c.b16 %v2171, %v2167
        %v2844 = vpack.c.b16 %v2172, %v2168
        %v2845 = vpack.c.b16 %v2173, %v2169
        %v2846 = vpack.c.b16 %v2174, %v2170
        %v2847 = vpack.c.b16 %v2179, %v2175
        %v2848 = vpack.c.b16 %v2180, %v2176
        %v2849 = vpack.c.b16 %v2181, %v2177
        %v2850 = vpack.c.b16 %v2182, %v2178
        %v2851 = vpack.c.b16 %v2187, %v2183
        %v2852 = vpack.c.b16 %v2188, %v2184
        %v2853 = vpack.c.b16 %v2189, %v2185
        %v2854 = vpack.c.b16 %v2190, %v2186
        %v2855 = vpack.c.b16 %v2195, %v2191
        %v2856 = vpack.c.b16 %v2196, %v2192
        %v2857 = vpack.c.b16 %v2197, %v2193
        %v2858 = vpack.c.b16 %v2198, %v2194
        %v2859 = vpack.c.b16 %v2203, %v2199
        %v2860 = vpack.c.b16 %v2204, %v2200
        %v2861 = vpack.c.b16 %v2205, %v2201
        %v2862 = vpack.c.b16 %v2206, %v2202
        %v2863 = vpack.c.b16 %v2211, %v2207
        %v2864 = vpack.c.b16 %v2212, %v2208
        %v2865 = vpack.c.b16 %v2213, %v2209
        %v2866 = vpack.c.b16 %v2214, %v2210
        %v2867 = vpack.c.b16 %v2219, %v2215
        %v2868 = vpack.c.b16 %v2220, %v2216
        %v2869 = vpack.c.b16 %v2221, %v2217
        %v2870 = vpack.c.b16 %v2222, %v2218
        %v2871 = vpack.c.b16 %v2227, %v2223
        %v2872 = vpack.c.b16 %v2228, %v2224
        %v2873 = vpack.c.b16 %v2229, %v2225
        %v2874 = vpack.c.b16 %v2230, %v2226
        %v2875 = vpack.c.b16 %v2235, %v2231
        %v2876 = vpack.c.b16 %v2236, %v2232
        %v2877 = vpack.c.b16 %v2237, %v2233
        %v2878 = vpack.c.b16 %v2238, %v2234
        %v2879 = vpack.c.b16 %v2243, %v2239
        %v2880 = vpack.c.b16 %v2244, %v2240
        %v2881 = vpack.c.b16 %v2245, %v2241
        %v2882 = vpack.c.b16 %v2246, %v2242
        %v2883 = vpack.c.b16 %v2251, %v2247
        %v2884 = vpack.c.b16 %v2252, %v2248
        %v2885 = vpack.c.b16 %v2253, %v2249
        %v2886 = vpack.c.b16 %v2254, %v2250
        %v2887 = vpack.c.b16 %v2259, %v2255
        %v2888 = vpack.c.b16 %v2260, %v2256
        %v2889 = vpack.c.b16 %v2261, %v2257
        %v2890 = vpack.c.b16 %v2262, %v2258
        %v2891 = vpack.c.b16 %v2267, %v2263
        %v2892 = vpack.c.b16 %v2268, %v2264
        %v2893 = vpack.c.b16 %v2269, %v2265
        %v2894 = vpack.c.b16 %v2270, %v2266
        %v2895 = vpack.c.b16 %v2275, %v2271
        %v2896 = vpack.c.b16 %v2276, %v2272
        %v2897 = vpack.c.b16 %v2277, %v2273
        %v2898 = vpack.c.b16 %v2278, %v2274
        %v2899 = vpack.c.b16 %v2283, %v2279
        %v2900 = vpack.c.b16 %v2284, %v2280
        %v2901 = vpack.c.b16 %v2285, %v2281
        %v2902 = vpack.c.b16 %v2286, %v2282
        %v2903 = vpack.c.b16 %v2291, %v2287
        %v2904 = vpack.c.b16 %v2292, %v2288
        %v2905 = vpack.c.b16 %v2293, %v2289
        %v2906 = vpack.c.b16 %v2294, %v2290
        %v2907 = vpack.c.b16 %v2299, %v2295
        %v2908 = vpack.c.b16 %v2300, %v2296
        %v2909 = vpack.c.b16 %v2301, %v2297
        %v2910 = vpack.c.b16 %v2302, %v2298
        %v2911 = vpack.c.b16 %v2307, %v2303
        %v2912 = vpack.c.b16 %v2308, %v2304
        %v2913 = vpack.c.b16 %v2309, %v2305
        %v2914 = vpack.c.b16 %v2310, %v2306
        %v2915 = vpack.c.b16 %v2315, %v2311
        %v2916 = vpack.c.b16 %v2316, %v2312
        %v2917 = vpack.c.b16 %v2317, %v2313
        %v2918 = vpack.c.b16 %v2318, %v2314
        %v2919 = vpack.c.b16 %v2323, %v2319
        %v2920 = vpack.c.b16 %v2324, %v2320
        %v2921 = vpack.c.b16 %v2325, %v2321
        %v2922 = vpack.c.b16 %v2326, %v2322
        %v2923 = vpack.c.b16 %v2331, %v2327
        %v2924 = vpack.c.b16 %v2332, %v2328
        %v2925 = vpack.c.b16 %v2333, %v2329
        %v2926 = vpack.c.b16 %v2334, %v2330
        %v2927 = vpack.c.b16 %v2339, %v2335
        %v2928 = vpack.c.b16 %v2340, %v2336
        %v2929 = vpack.c.b16 %v2341, %v2337
        %v2930 = vpack.c.b16 %v2342, %v2338
        %v2931 = vpack.c.b16 %v2347, %v2343
        %v2932 = vpack.c.b16 %v2348, %v2344
        %v2933 = vpack.c.b16 %v2349, %v2345
        %v2934 = vpack.c.b16 %v2350, %v2346
        %v2935 = vpack.c.b16 %v2355, %v2351
        %v2936 = vpack.c.b16 %v2356, %v2352
        %v2937 = vpack.c.b16 %v2357, %v2353
        %v2938 = vpack.c.b16 %v2358, %v2354
        %v2939 = vpack.c.b16 %v2363, %v2359
        %v2940 = vpack.c.b16 %v2364, %v2360
        %v2941 = vpack.c.b16 %v2365, %v2361
        %v2942 = vpack.c.b16 %v2366, %v2362
        %v2943 = vpack.c.b16 %v2371, %v2367
        %v2944 = vpack.c.b16 %v2372, %v2368
        %v2945 = vpack.c.b16 %v2373, %v2369
        %v2946 = vpack.c.b16 %v2374, %v2370
        %v2947 = vpack.c.b16 %v2379, %v2375
        %v2948 = vpack.c.b16 %v2380, %v2376
        %v2949 = vpack.c.b16 %v2381, %v2377
        %v2950 = vpack.c.b16 %v2382, %v2378
        %v2951 = vpack.c.b16 %v2387, %v2383
        %v2952 = vpack.c.b16 %v2388, %v2384
        %v2953 = vpack.c.b16 %v2389, %v2385
        %v2954 = vpack.c.b16 %v2390, %v2386
        %v2955 = vpack.c.b16 %v2395, %v2391
        %v2956 = vpack.c.b16 %v2396, %v2392
        %v2957 = vpack.c.b16 %v2397, %v2393
        %v2958 = vpack.c.b16 %v2398, %v2394
        %v2959 = vpack.c.b16 %v2403, %v2399
        %v2960 = vpack.c.b16 %v2404, %v2400
        %v2961 = vpack.c.b16 %v2405, %v2401
        %v2962 = vpack.c.b16 %v2406, %v2402
        %v2963 = vpack.c.b16 %v2411, %v2407
        %v2964 = vpack.c.b16 %v2412, %v2408
        %v2965 = vpack.c.b16 %v2413, %v2409
        %v2966 = vpack.c.b16 %v2414, %v2410
        %v2967 = vpack.c.b16 %v2419, %v2415
        %v2968 = vpack.c.b16 %v2420, %v2416
        %v2969 = vpack.c.b16 %v2421, %v2417
        %v2970 = vpack.c.b16 %v2422, %v2418
        %v2971 = vpack.c.b16 %v2427, %v2423
        %v2972 = vpack.c.b16 %v2428, %v2424
        %v2973 = vpack.c.b16 %v2429, %v2425
        %v2974 = vpack.c.b16 %v2430, %v2426
        %v2975 = vpack.c.b16 %v2435, %v2431
        %v2976 = vpack.c.b16 %v2436, %v2432
        %v2977 = vpack.c.b16 %v2437, %v2433
        %v2978 = vpack.c.b16 %v2438, %v2434
        %v2979 = vpack.c.b16 %v2443, %v2439
        %v2980 = vpack.c.b16 %v2444, %v2440
        %v2981 = vpack.c.b16 %v2445, %v2441
        %v2982 = vpack.c.b16 %v2446, %v2442
        %v2983 = vpack.c.b16 %v2451, %v2447
        %v2984 = vpack.c.b16 %v2452, %v2448
        %v2985 = vpack.c.b16 %v2453, %v2449
        %v2986 = vpack.c.b16 %v2454, %v2450
        %v2987 = vpack.c.b16 %v2459, %v2455
        %v2988 = vpack.c.b16 %v2460, %v2456
        %v2989 = vpack.c.b16 %v2461, %v2457
        %v2990 = vpack.c.b16 %v2462, %v2458
        %v2991 = vpack.c.b16 %v2467, %v2463
        %v2992 = vpack.c.b16 %v2468, %v2464
        %v2993 = vpack.c.b16 %v2469, %v2465
        %v2994 = vpack.c.b16 %v2470, %v2466
        %v2995 = vpack.c.b16 %v2475, %v2471
        %v2996 = vpack.c.b16 %v2476, %v2472
        %v2997 = vpack.c.b16 %v2477, %v2473
        %v2998 = vpack.c.b16 %v2478, %v2474
        %v2999 = vpack.c.b16 %v2483, %v2479
        %v3000 = vpack.c.b16 %v2484, %v2480
        %v3001 = vpack.c.b16 %v2485, %v2481
        %v3002 = vpack.c.b16 %v2486, %v2482
        %v3003 = vpack.c.b16 %v2491, %v2487
        %v3004 = vpack.c.b16 %v2492, %v2488
        %v3005 = vpack.c.b16 %v2493, %v2489
        %v3006 = vpack.c.b16 %v2494, %v2490
        %3519 = vmatprep.subr.bf16.mxu0 %v2524
        %3520 = vmatpush1.bf16.msra.mxu0 %v2523
        %3521 = vmatprep.subr.bf16.mxu0 %v2520
        %3522 = vmatpush1.bf16.msra.mxu0 %v2519
        %3523 = vmatprep.subr.bf16.mxu0 %v2516
        %3524 = vmatpush1.bf16.msra.mxu0 %v2515
        %3525 = vmatprep.subr.bf16.mxu0 %v2512
        %3526 = vmatpush1.bf16.msra.mxu0 %v2511
        %3527 = vmatprep.subr.bf16.mxu0 %v2508
        %3528 = vmatpush1.bf16.msra.mxu0 %v2507
        %3529 = vmatprep.subr.bf16.mxu0 %v2504
        %3530 = vmatpush1.bf16.msra.mxu0 %v2503
        %3531 = vmatprep.subr.bf16.mxu0 %v2500
        %3532 = vmatpush1.bf16.msra.mxu0 %v2499
        %3533 = vmatprep.subr.bf16.mxu0 %v2496
        %3534 = vmatpush1.bf16.msra.mxu0 %v2495
        %3535 = vmatprep.subr.bf16.mxu0 %v2556
        %3536 = vmatpush2.bf16.msra.mxu0 %v2555
        %3537 = vmatprep.subr.bf16.mxu0 %v2552
        %3538 = vmatpush2.bf16.msra.mxu0 %v2551
        %3539 = vmatprep.subr.bf16.mxu0 %v2548
        %3540 = vmatpush2.bf16.msra.mxu0 %v2547
        %3541 = vmatprep.subr.bf16.mxu0 %v2544
        %3542 = vmatpush2.bf16.msra.mxu0 %v2543
        %3543 = vmatprep.subr.bf16.mxu0 %v2540
        %3544 = vmatpush2.bf16.msra.mxu0 %v2539
        %3545 = vmatprep.subr.bf16.mxu0 %v2536
        %3546 = vmatpush2.bf16.msra.mxu0 %v2535
        %3547 = vmatprep.subr.bf16.mxu0 %v2532
        %3548 = vmatpush2.bf16.msra.mxu0 %v2531
        %3549 = vmatprep.subr.bf16.mxu0 %v2528
        %3550 = vmatpush2.bf16.msra.mxu0 %v2527
        %3551 = vmatprep.mubr.bf16.mxu0 %v928
        %3552 = vmatmul.mubr.bf16.gmra.mxu0 %v927
        %v3553 = vpop.f32.mrf.mxu0
        %v3554 = vadd.f32 0.0, %v3553
        %v3555 = vpop.f32.mrf.mxu0
        %v3556 = vadd.f32 0.0, %v3555
        %v3557 = vpop.f32.mrf.mxu0
        %v3558 = vadd.f32 0.0, %v3557
        %v3559 = vpop.f32.mrf.mxu0
        %v3560 = vadd.f32 0.0, %v3559
        %3561 = vdwg.mxu0
        %3562 = vmatprep.subr.bf16.mxu0 %v2588
        %3563 = vmatpush1.bf16.msra.mxu0 %v2587
        %3564 = vmatprep.subr.bf16.mxu0 %v2584
        %3565 = vmatpush1.bf16.msra.mxu0 %v2583
        %3566 = vmatprep.subr.bf16.mxu0 %v2580
        %3567 = vmatpush1.bf16.msra.mxu0 %v2579
        %3568 = vmatprep.subr.bf16.mxu0 %v2576
        %3569 = vmatpush1.bf16.msra.mxu0 %v2575
        %3570 = vmatprep.subr.bf16.mxu0 %v2572
        %3571 = vmatpush1.bf16.msra.mxu0 %v2571
        %3572 = vmatprep.subr.bf16.mxu0 %v2568
        %3573 = vmatpush1.bf16.msra.mxu0 %v2567
        %3574 = vmatprep.subr.bf16.mxu0 %v2564
        %3575 = vmatpush1.bf16.msra.mxu0 %v2563
        %3576 = vmatprep.subr.bf16.mxu0 %v2560
        %3577 = vmatpush1.bf16.msra.mxu0 %v2559
        %3578 = vmatprep.subr.bf16.mxu0 %v2620
        %3579 = vmatpush2.bf16.msra.mxu0 %v2619
        %3580 = vmatprep.subr.bf16.mxu0 %v2616
        %3581 = vmatpush2.bf16.msra.mxu0 %v2615
        %3582 = vmatprep.subr.bf16.mxu0 %v2612
        %3583 = vmatpush2.bf16.msra.mxu0 %v2611
        %3584 = vmatprep.subr.bf16.mxu0 %v2608
        %3585 = vmatpush2.bf16.msra.mxu0 %v2607
        %3586 = vmatprep.subr.bf16.mxu0 %v2604
        %3587 = vmatpush2.bf16.msra.mxu0 %v2603
        %3588 = vmatprep.subr.bf16.mxu0 %v2600
        %3589 = vmatpush2.bf16.msra.mxu0 %v2599
        %3590 = vmatprep.subr.bf16.mxu0 %v2596
        %3591 = vmatpush2.bf16.msra.mxu0 %v2595
        %3592 = vmatprep.subr.bf16.mxu0 %v2592
        %3593 = vmatpush2.bf16.msra.mxu0 %v2591
        %3594 = vmatprep.mubr.bf16.mxu0 %v930
        %3595 = vmatmul.mubr.bf16.gmra.mxu0 %v929
        %v3596 = vpop.f32.mrf.mxu0
        %v3597 = vadd.f32 %v3554, %v3596
        %v3598 = vpop.f32.mrf.mxu0
        %v3599 = vadd.f32 %v3556, %v3598
        %v3600 = vpop.f32.mrf.mxu0
        %v3601 = vadd.f32 %v3558, %v3600
        %v3602 = vpop.f32.mrf.mxu0
        %v3603 = vadd.f32 %v3560, %v3602
        %3604 = vdwg.mxu0
        %3605 = vmatprep.subr.bf16.mxu0 %v2652
        %3606 = vmatpush1.bf16.msra.mxu0 %v2651
        %3607 = vmatprep.subr.bf16.mxu0 %v2648
        %3608 = vmatpush1.bf16.msra.mxu0 %v2647
        %3609 = vmatprep.subr.bf16.mxu0 %v2644
        %3610 = vmatpush1.bf16.msra.mxu0 %v2643
        %3611 = vmatprep.subr.bf16.mxu0 %v2640
        %3612 = vmatpush1.bf16.msra.mxu0 %v2639
        %3613 = vmatprep.subr.bf16.mxu0 %v2636
        %3614 = vmatpush1.bf16.msra.mxu0 %v2635
        %3615 = vmatprep.subr.bf16.mxu0 %v2632
        %3616 = vmatpush1.bf16.msra.mxu0 %v2631
        %3617 = vmatprep.subr.bf16.mxu0 %v2628
        %3618 = vmatpush1.bf16.msra.mxu0 %v2627
        %3619 = vmatprep.subr.bf16.mxu0 %v2624
        %3620 = vmatpush1.bf16.msra.mxu0 %v2623
        %3621 = vmatprep.subr.bf16.mxu0 %v2684
        %3622 = vmatpush2.bf16.msra.mxu0 %v2683
        %3623 = vmatprep.subr.bf16.mxu0 %v2680
        %3624 = vmatpush2.bf16.msra.mxu0 %v2679
        %3625 = vmatprep.subr.bf16.mxu0 %v2676
        %3626 = vmatpush2.bf16.msra.mxu0 %v2675
        %3627 = vmatprep.subr.bf16.mxu0 %v2672
        %3628 = vmatpush2.bf16.msra.mxu0 %v2671
        %3629 = vmatprep.subr.bf16.mxu0 %v2668
        %3630 = vmatpush2.bf16.msra.mxu0 %v2667
        %3631 = vmatprep.subr.bf16.mxu0 %v2664
        %3632 = vmatpush2.bf16.msra.mxu0 %v2663
        %3633 = vmatprep.subr.bf16.mxu0 %v2660
        %3634 = vmatpush2.bf16.msra.mxu0 %v2659
        %3635 = vmatprep.subr.bf16.mxu0 %v2656
        %3636 = vmatpush2.bf16.msra.mxu0 %v2655
        %3637 = vmatprep.mubr.bf16.mxu0 %v932
        %3638 = vmatmul.mubr.bf16.gmra.mxu0 %v931
        %v3639 = vpop.f32.mrf.mxu0
        %v3640 = vadd.f32 %v3597, %v3639
        %v3641 = vpop.f32.mrf.mxu0
        %v3642 = vadd.f32 %v3599, %v3641
        %v3643 = vpop.f32.mrf.mxu0
        %v3644 = vadd.f32 %v3601, %v3643
        %v3645 = vpop.f32.mrf.mxu0
        %v3646 = vadd.f32 %v3603, %v3645
        %3647 = vdwg.mxu0
        %3648 = vmatprep.subr.bf16.mxu0 %v2716
        %3649 = vmatpush1.bf16.msra.mxu0 %v2715
        %3650 = vmatprep.subr.bf16.mxu0 %v2712
        %3651 = vmatpush1.bf16.msra.mxu0 %v2711
        %3652 = vmatprep.subr.bf16.mxu0 %v2708
        %3653 = vmatpush1.bf16.msra.mxu0 %v2707
        %3654 = vmatprep.subr.bf16.mxu0 %v2704
        %3655 = vmatpush1.bf16.msra.mxu0 %v2703
        %3656 = vmatprep.subr.bf16.mxu0 %v2700
        %3657 = vmatpush1.bf16.msra.mxu0 %v2699
        %3658 = vmatprep.subr.bf16.mxu0 %v2696
        %3659 = vmatpush1.bf16.msra.mxu0 %v2695
        %3660 = vmatprep.subr.bf16.mxu0 %v2692
        %3661 = vmatpush1.bf16.msra.mxu0 %v2691
        %3662 = vmatprep.subr.bf16.mxu0 %v2688
        %3663 = vmatpush1.bf16.msra.mxu0 %v2687
        %3664 = vmatprep.subr.bf16.mxu0 %v2748
        %3665 = vmatpush2.bf16.msra.mxu0 %v2747
        %3666 = vmatprep.subr.bf16.mxu0 %v2744
        %3667 = vmatpush2.bf16.msra.mxu0 %v2743
        %3668 = vmatprep.subr.bf16.mxu0 %v2740
        %3669 = vmatpush2.bf16.msra.mxu0 %v2739
        %3670 = vmatprep.subr.bf16.mxu0 %v2736
        %3671 = vmatpush2.bf16.msra.mxu0 %v2735
        %3672 = vmatprep.subr.bf16.mxu0 %v2732
        %3673 = vmatpush2.bf16.msra.mxu0 %v2731
        %3674 = vmatprep.subr.bf16.mxu0 %v2728
        %3675 = vmatpush2.bf16.msra.mxu0 %v2727
        %3676 = vmatprep.subr.bf16.mxu0 %v2724
        %3677 = vmatpush2.bf16.msra.mxu0 %v2723
        %3678 = vmatprep.subr.bf16.mxu0 %v2720
        %3679 = vmatpush2.bf16.msra.mxu0 %v2719
        %3680 = vmatprep.mubr.bf16.mxu0 %v934
        %3681 = vmatmul.mubr.bf16.gmra.mxu0 %v933
        %v3682 = vpop.f32.mrf.mxu0
        %v3683 = vadd.f32 %v3640, %v3682
        %v3684 = vpop.f32.mrf.mxu0
        %v3685 = vadd.f32 %v3642, %v3684
        %v3686 = vpop.f32.mrf.mxu0
        %v3687 = vadd.f32 %v3644, %v3686
        %v3688 = vpop.f32.mrf.mxu0
        %v3689 = vadd.f32 %v3646, %v3688
        %3690 = vdwg.mxu0
        %3691 = vmatprep.subr.bf16.mxu0 %v2780
        %3692 = vmatpush1.bf16.msra.mxu0 %v2779
        %3693 = vmatprep.subr.bf16.mxu0 %v2776
        %3694 = vmatpush1.bf16.msra.mxu0 %v2775
        %3695 = vmatprep.subr.bf16.mxu0 %v2772
        %3696 = vmatpush1.bf16.msra.mxu0 %v2771
        %3697 = vmatprep.subr.bf16.mxu0 %v2768
        %3698 = vmatpush1.bf16.msra.mxu0 %v2767
        %3699 = vmatprep.subr.bf16.mxu0 %v2764
        %3700 = vmatpush1.bf16.msra.mxu0 %v2763
        %3701 = vmatprep.subr.bf16.mxu0 %v2760
        %3702 = vmatpush1.bf16.msra.mxu0 %v2759
        %3703 = vmatprep.subr.bf16.mxu0 %v2756
        %3704 = vmatpush1.bf16.msra.mxu0 %v2755
        %3705 = vmatprep.subr.bf16.mxu0 %v2752
        %3706 = vmatpush1.bf16.msra.mxu0 %v2751
        %3707 = vmatprep.subr.bf16.mxu0 %v2812
        %3708 = vmatpush2.bf16.msra.mxu0 %v2811
        %3709 = vmatprep.subr.bf16.mxu0 %v2808
        %3710 = vmatpush2.bf16.msra.mxu0 %v2807
        %3711 = vmatprep.subr.bf16.mxu0 %v2804
        %3712 = vmatpush2.bf16.msra.mxu0 %v2803
        %3713 = vmatprep.subr.bf16.mxu0 %v2800
        %3714 = vmatpush2.bf16.msra.mxu0 %v2799
        %3715 = vmatprep.subr.bf16.mxu0 %v2796
        %3716 = vmatpush2.bf16.msra.mxu0 %v2795
        %3717 = vmatprep.subr.bf16.mxu0 %v2792
        %3718 = vmatpush2.bf16.msra.mxu0 %v2791
        %3719 = vmatprep.subr.bf16.mxu0 %v2788
        %3720 = vmatpush2.bf16.msra.mxu0 %v2787
        %3721 = vmatprep.subr.bf16.mxu0 %v2784
        %3722 = vmatpush2.bf16.msra.mxu0 %v2783
        %3723 = vmatprep.mubr.bf16.mxu0 %v936
        %3724 = vmatmul.mubr.bf16.gmra.mxu0 %v935
        %v3725 = vpop.f32.mrf.mxu0
        %v3726 = vadd.f32 %v3683, %v3725
        %v3727 = vpop.f32.mrf.mxu0
        %v3728 = vadd.f32 %v3685, %v3727
        %v3729 = vpop.f32.mrf.mxu0
        %v3730 = vadd.f32 %v3687, %v3729
        %v3731 = vpop.f32.mrf.mxu0
        %v3732 = vadd.f32 %v3689, %v3731
        %3733 = vdwg.mxu0
        %3734 = vmatprep.subr.bf16.mxu0 %v2844
        %3735 = vmatpush1.bf16.msra.mxu0 %v2843
        %3736 = vmatprep.subr.bf16.mxu0 %v2840
        %3737 = vmatpush1.bf16.msra.mxu0 %v2839
        %3738 = vmatprep.subr.bf16.mxu0 %v2836
        %3739 = vmatpush1.bf16.msra.mxu0 %v2835
        %3740 = vmatprep.subr.bf16.mxu0 %v2832
        %3741 = vmatpush1.bf16.msra.mxu0 %v2831
        %3742 = vmatprep.subr.bf16.mxu0 %v2828
        %3743 = vmatpush1.bf16.msra.mxu0 %v2827
        %3744 = vmatprep.subr.bf16.mxu0 %v2824
        %3745 = vmatpush1.bf16.msra.mxu0 %v2823
        %3746 = vmatprep.subr.bf16.mxu0 %v2820
        %3747 = vmatpush1.bf16.msra.mxu0 %v2819
        %3748 = vmatprep.subr.bf16.mxu0 %v2816
        %3749 = vmatpush1.bf16.msra.mxu0 %v2815
        %3750 = vmatprep.subr.bf16.mxu0 %v2876
        %3751 = vmatpush2.bf16.msra.mxu0 %v2875
        %3752 = vmatprep.subr.bf16.mxu0 %v2872
        %3753 = vmatpush2.bf16.msra.mxu0 %v2871
        %3754 = vmatprep.subr.bf16.mxu0 %v2868
        %3755 = vmatpush2.bf16.msra.mxu0 %v2867
        %3756 = vmatprep.subr.bf16.mxu0 %v2864
        %3757 = vmatpush2.bf16.msra.mxu0 %v2863
        %3758 = vmatprep.subr.bf16.mxu0 %v2860
        %3759 = vmatpush2.bf16.msra.mxu0 %v2859
        %3760 = vmatprep.subr.bf16.mxu0 %v2856
        %3761 = vmatpush2.bf16.msra.mxu0 %v2855
        %3762 = vmatprep.subr.bf16.mxu0 %v2852
        %3763 = vmatpush2.bf16.msra.mxu0 %v2851
        %3764 = vmatprep.subr.bf16.mxu0 %v2848
        %3765 = vmatpush2.bf16.msra.mxu0 %v2847
        %3766 = vmatprep.mubr.bf16.mxu0 %v938
        %3767 = vmatmul.mubr.bf16.gmra.mxu0 %v937
        %v3768 = vpop.f32.mrf.mxu0
        %v3769 = vadd.f32 %v3726, %v3768
        %v3770 = vpop.f32.mrf.mxu0
        %v3771 = vadd.f32 %v3728, %v3770
        %v3772 = vpop.f32.mrf.mxu0
        %v3773 = vadd.f32 %v3730, %v3772
        %v3774 = vpop.f32.mrf.mxu0
        %v3775 = vadd.f32 %v3732, %v3774
        %3776 = vdwg.mxu0
        %3777 = vmatprep.subr.bf16.mxu0 %v2908
        %3778 = vmatpush1.bf16.msra.mxu0 %v2907
        %3779 = vmatprep.subr.bf16.mxu0 %v2904
        %3780 = vmatpush1.bf16.msra.mxu0 %v2903
        %3781 = vmatprep.subr.bf16.mxu0 %v2900
        %3782 = vmatpush1.bf16.msra.mxu0 %v2899
        %3783 = vmatprep.subr.bf16.mxu0 %v2896
        %3784 = vmatpush1.bf16.msra.mxu0 %v2895
        %3785 = vmatprep.subr.bf16.mxu0 %v2892
        %3786 = vmatpush1.bf16.msra.mxu0 %v2891
        %3787 = vmatprep.subr.bf16.mxu0 %v2888
        %3788 = vmatpush1.bf16.msra.mxu0 %v2887
        %3789 = vmatprep.subr.bf16.mxu0 %v2884
        %3790 = vmatpush1.bf16.msra.mxu0 %v2883
        %3791 = vmatprep.subr.bf16.mxu0 %v2880
        %3792 = vmatpush1.bf16.msra.mxu0 %v2879
        %3793 = vmatprep.subr.bf16.mxu0 %v2940
        %3794 = vmatpush2.bf16.msra.mxu0 %v2939
        %3795 = vmatprep.subr.bf16.mxu0 %v2936
        %3796 = vmatpush2.bf16.msra.mxu0 %v2935
        %3797 = vmatprep.subr.bf16.mxu0 %v2932
        %3798 = vmatpush2.bf16.msra.mxu0 %v2931
        %3799 = vmatprep.subr.bf16.mxu0 %v2928
        %3800 = vmatpush2.bf16.msra.mxu0 %v2927
        %3801 = vmatprep.subr.bf16.mxu0 %v2924
        %3802 = vmatpush2.bf16.msra.mxu0 %v2923
        %3803 = vmatprep.subr.bf16.mxu0 %v2920
        %3804 = vmatpush2.bf16.msra.mxu0 %v2919
        %3805 = vmatprep.subr.bf16.mxu0 %v2916
        %3806 = vmatpush2.bf16.msra.mxu0 %v2915
        %3807 = vmatprep.subr.bf16.mxu0 %v2912
        %3808 = vmatpush2.bf16.msra.mxu0 %v2911
        %3809 = vmatprep.mubr.bf16.mxu0 %v940
        %3810 = vmatmul.mubr.bf16.gmra.mxu0 %v939
        %v3811 = vpop.f32.mrf.mxu0
        %v3812 = vadd.f32 %v3769, %v3811
        %v3813 = vpop.f32.mrf.mxu0
        %v3814 = vadd.f32 %v3771, %v3813
        %v3815 = vpop.f32.mrf.mxu0
        %v3816 = vadd.f32 %v3773, %v3815
        %v3817 = vpop.f32.mrf.mxu0
        %v3818 = vadd.f32 %v3775, %v3817
        %3819 = vdwg.mxu0
        %3820 = vmatprep.subr.bf16.mxu0 %v2972
        %3821 = vmatpush1.bf16.msra.mxu0 %v2971
        %3822 = vmatprep.subr.bf16.mxu0 %v2968
        %3823 = vmatpush1.bf16.msra.mxu0 %v2967
        %3824 = vmatprep.subr.bf16.mxu0 %v2964
        %3825 = vmatpush1.bf16.msra.mxu0 %v2963
        %3826 = vmatprep.subr.bf16.mxu0 %v2960
        %3827 = vmatpush1.bf16.msra.mxu0 %v2959
        %3828 = vmatprep.subr.bf16.mxu0 %v2956
        %3829 = vmatpush1.bf16.msra.mxu0 %v2955
        %3830 = vmatprep.subr.bf16.mxu0 %v2952
        %3831 = vmatpush1.bf16.msra.mxu0 %v2951
        %3832 = vmatprep.subr.bf16.mxu0 %v2948
        %3833 = vmatpush1.bf16.msra.mxu0 %v2947
        %3834 = vmatprep.subr.bf16.mxu0 %v2944
        %3835 = vmatpush1.bf16.msra.mxu0 %v2943
        %3836 = vmatprep.subr.bf16.mxu0 %v3004
        %3837 = vmatpush2.bf16.msra.mxu0 %v3003
        %3838 = vmatprep.subr.bf16.mxu0 %v3000
        %3839 = vmatpush2.bf16.msra.mxu0 %v2999
        %3840 = vmatprep.subr.bf16.mxu0 %v2996
        %3841 = vmatpush2.bf16.msra.mxu0 %v2995
        %3842 = vmatprep.subr.bf16.mxu0 %v2992
        %3843 = vmatpush2.bf16.msra.mxu0 %v2991
        %3844 = vmatprep.subr.bf16.mxu0 %v2988
        %3845 = vmatpush2.bf16.msra.mxu0 %v2987
        %3846 = vmatprep.subr.bf16.mxu0 %v2984
        %3847 = vmatpush2.bf16.msra.mxu0 %v2983
        %3848 = vmatprep.subr.bf16.mxu0 %v2980
        %3849 = vmatpush2.bf16.msra.mxu0 %v2979
        %3850 = vmatprep.subr.bf16.mxu0 %v2976
        %3851 = vmatpush2.bf16.msra.mxu0 %v2975
        %3852 = vmatprep.mubr.bf16.mxu0 %v942
        %3853 = vmatmul.mubr.bf16.gmra.mxu0 %v941
        %v3854 = vpop.f32.mrf.mxu0
        %v3855 = vadd.f32 %v3812, %v3854
        %v3856 = vpop.f32.mrf.mxu0
        %v3857 = vadd.f32 %v3814, %v3856
        %v3858 = vpop.f32.mrf.mxu0
        %v3859 = vadd.f32 %v3816, %v3858
        %v3860 = vpop.f32.mrf.mxu0
        %v3861 = vadd.f32 %v3818, %v3860
        %3862 = vdwg.mxu0
        %3863 = vmatprep.subr.bf16.mxu0 %v2526
        %3864 = vmatpush1.bf16.msra.mxu0 %v2525
        %3865 = vmatprep.subr.bf16.mxu0 %v2522
        %3866 = vmatpush1.bf16.msra.mxu0 %v2521
        %3867 = vmatprep.subr.bf16.mxu0 %v2518
        %3868 = vmatpush1.bf16.msra.mxu0 %v2517
        %3869 = vmatprep.subr.bf16.mxu0 %v2514
        %3870 = vmatpush1.bf16.msra.mxu0 %v2513
        %3871 = vmatprep.subr.bf16.mxu0 %v2510
        %3872 = vmatpush1.bf16.msra.mxu0 %v2509
        %3873 = vmatprep.subr.bf16.mxu0 %v2506
        %3874 = vmatpush1.bf16.msra.mxu0 %v2505
        %3875 = vmatprep.subr.bf16.mxu0 %v2502
        %3876 = vmatpush1.bf16.msra.mxu0 %v2501
        %3877 = vmatprep.subr.bf16.mxu0 %v2498
        %3878 = vmatpush1.bf16.msra.mxu0 %v2497
        %3879 = vmatprep.subr.bf16.mxu0 %v2558
        %3880 = vmatpush2.bf16.msra.mxu0 %v2557
        %3881 = vmatprep.subr.bf16.mxu0 %v2554
        %3882 = vmatpush2.bf16.msra.mxu0 %v2553
        %3883 = vmatprep.subr.bf16.mxu0 %v2550
        %3884 = vmatpush2.bf16.msra.mxu0 %v2549
        %3885 = vmatprep.subr.bf16.mxu0 %v2546
        %3886 = vmatpush2.bf16.msra.mxu0 %v2545
        %3887 = vmatprep.subr.bf16.mxu0 %v2542
        %3888 = vmatpush2.bf16.msra.mxu0 %v2541
        %3889 = vmatprep.subr.bf16.mxu0 %v2538
        %3890 = vmatpush2.bf16.msra.mxu0 %v2537
        %3891 = vmatprep.subr.bf16.mxu0 %v2534
        %3892 = vmatpush2.bf16.msra.mxu0 %v2533
        %3893 = vmatprep.subr.bf16.mxu0 %v2530
        %3894 = vmatpush2.bf16.msra.mxu0 %v2529
        %3895 = vmatprep.mubr.bf16.mxu0 %v928
        %3896 = vmatmul.mubr.bf16.gmra.mxu0 %v927
        %v3897 = vpop.f32.mrf.mxu0
        %v3898 = vadd.f32 0.0, %v3897
        %v3899 = vpop.f32.mrf.mxu0
        %v3900 = vadd.f32 0.0, %v3899
        %v3901 = vpop.f32.mrf.mxu0
        %v3902 = vadd.f32 0.0, %v3901
        %v3903 = vpop.f32.mrf.mxu0
        %v3904 = vadd.f32 0.0, %v3903
        %3905 = vdwg.mxu0
        %3906 = vmatprep.subr.bf16.mxu0 %v2590
        %3907 = vmatpush1.bf16.msra.mxu0 %v2589
        %3908 = vmatprep.subr.bf16.mxu0 %v2586
        %3909 = vmatpush1.bf16.msra.mxu0 %v2585
        %3910 = vmatprep.subr.bf16.mxu0 %v2582
        %3911 = vmatpush1.bf16.msra.mxu0 %v2581
        %3912 = vmatprep.subr.bf16.mxu0 %v2578
        %3913 = vmatpush1.bf16.msra.mxu0 %v2577
        %3914 = vmatprep.subr.bf16.mxu0 %v2574
        %3915 = vmatpush1.bf16.msra.mxu0 %v2573
        %3916 = vmatprep.subr.bf16.mxu0 %v2570
        %3917 = vmatpush1.bf16.msra.mxu0 %v2569
        %3918 = vmatprep.subr.bf16.mxu0 %v2566
        %3919 = vmatpush1.bf16.msra.mxu0 %v2565
        %3920 = vmatprep.subr.bf16.mxu0 %v2562
        %3921 = vmatpush1.bf16.msra.mxu0 %v2561
        %3922 = vmatprep.subr.bf16.mxu0 %v2622
        %3923 = vmatpush2.bf16.msra.mxu0 %v2621
        %3924 = vmatprep.subr.bf16.mxu0 %v2618
        %3925 = vmatpush2.bf16.msra.mxu0 %v2617
        %3926 = vmatprep.subr.bf16.mxu0 %v2614
        %3927 = vmatpush2.bf16.msra.mxu0 %v2613
        %3928 = vmatprep.subr.bf16.mxu0 %v2610
        %3929 = vmatpush2.bf16.msra.mxu0 %v2609
        %3930 = vmatprep.subr.bf16.mxu0 %v2606
        %3931 = vmatpush2.bf16.msra.mxu0 %v2605
        %3932 = vmatprep.subr.bf16.mxu0 %v2602
        %3933 = vmatpush2.bf16.msra.mxu0 %v2601
        %3934 = vmatprep.subr.bf16.mxu0 %v2598
        %3935 = vmatpush2.bf16.msra.mxu0 %v2597
        %3936 = vmatprep.subr.bf16.mxu0 %v2594
        %3937 = vmatpush2.bf16.msra.mxu0 %v2593
        %3938 = vmatprep.mubr.bf16.mxu0 %v930
        %3939 = vmatmul.mubr.bf16.gmra.mxu0 %v929
        %v3940 = vpop.f32.mrf.mxu0
        %v3941 = vadd.f32 %v3898, %v3940
        %v3942 = vpop.f32.mrf.mxu0
        %v3943 = vadd.f32 %v3900, %v3942
        %v3944 = vpop.f32.mrf.mxu0
        %v3945 = vadd.f32 %v3902, %v3944
        %v3946 = vpop.f32.mrf.mxu0
        %v3947 = vadd.f32 %v3904, %v3946
        %3948 = vdwg.mxu0
        %3949 = vmatprep.subr.bf16.mxu0 %v2654
        %3950 = vmatpush1.bf16.msra.mxu0 %v2653
        %3951 = vmatprep.subr.bf16.mxu0 %v2650
        %3952 = vmatpush1.bf16.msra.mxu0 %v2649
        %3953 = vmatprep.subr.bf16.mxu0 %v2646
        %3954 = vmatpush1.bf16.msra.mxu0 %v2645
        %3955 = vmatprep.subr.bf16.mxu0 %v2642
        %3956 = vmatpush1.bf16.msra.mxu0 %v2641
        %3957 = vmatprep.subr.bf16.mxu0 %v2638
        %3958 = vmatpush1.bf16.msra.mxu0 %v2637
        %3959 = vmatprep.subr.bf16.mxu0 %v2634
        %3960 = vmatpush1.bf16.msra.mxu0 %v2633
        %3961 = vmatprep.subr.bf16.mxu0 %v2630
        %3962 = vmatpush1.bf16.msra.mxu0 %v2629
        %3963 = vmatprep.subr.bf16.mxu0 %v2626
        %3964 = vmatpush1.bf16.msra.mxu0 %v2625
        %3965 = vmatprep.subr.bf16.mxu0 %v2686
        %3966 = vmatpush2.bf16.msra.mxu0 %v2685
        %3967 = vmatprep.subr.bf16.mxu0 %v2682
        %3968 = vmatpush2.bf16.msra.mxu0 %v2681
        %3969 = vmatprep.subr.bf16.mxu0 %v2678
        %3970 = vmatpush2.bf16.msra.mxu0 %v2677
        %3971 = vmatprep.subr.bf16.mxu0 %v2674
        %3972 = vmatpush2.bf16.msra.mxu0 %v2673
        %3973 = vmatprep.subr.bf16.mxu0 %v2670
        %3974 = vmatpush2.bf16.msra.mxu0 %v2669
        %3975 = vmatprep.subr.bf16.mxu0 %v2666
        %3976 = vmatpush2.bf16.msra.mxu0 %v2665
        %3977 = vmatprep.subr.bf16.mxu0 %v2662
        %3978 = vmatpush2.bf16.msra.mxu0 %v2661
        %3979 = vmatprep.subr.bf16.mxu0 %v2658
        %3980 = vmatpush2.bf16.msra.mxu0 %v2657
        %3981 = vmatprep.mubr.bf16.mxu0 %v932
        %3982 = vmatmul.mubr.bf16.gmra.mxu0 %v931
        %v3983 = vpop.f32.mrf.mxu0
        %v3984 = vadd.f32 %v3941, %v3983
        %v3985 = vpop.f32.mrf.mxu0
        %v3986 = vadd.f32 %v3943, %v3985
        %v3987 = vpop.f32.mrf.mxu0
        %v3988 = vadd.f32 %v3945, %v3987
        %v3989 = vpop.f32.mrf.mxu0
        %v3990 = vadd.f32 %v3947, %v3989
        %3991 = vdwg.mxu0
        %3992 = vmatprep.subr.bf16.mxu0 %v2718
        %3993 = vmatpush1.bf16.msra.mxu0 %v2717
        %3994 = vmatprep.subr.bf16.mxu0 %v2714
        %3995 = vmatpush1.bf16.msra.mxu0 %v2713
        %3996 = vmatprep.subr.bf16.mxu0 %v2710
        %3997 = vmatpush1.bf16.msra.mxu0 %v2709
        %3998 = vmatprep.subr.bf16.mxu0 %v2706
        %3999 = vmatpush1.bf16.msra.mxu0 %v2705
        %4000 = vmatprep.subr.bf16.mxu0 %v2702
        %4001 = vmatpush1.bf16.msra.mxu0 %v2701
        %4002 = vmatprep.subr.bf16.mxu0 %v2698
        %4003 = vmatpush1.bf16.msra.mxu0 %v2697
        %4004 = vmatprep.subr.bf16.mxu0 %v2694
        %4005 = vmatpush1.bf16.msra.mxu0 %v2693
        %4006 = vmatprep.subr.bf16.mxu0 %v2690
        %4007 = vmatpush1.bf16.msra.mxu0 %v2689
        %4008 = vmatprep.subr.bf16.mxu0 %v2750
        %4009 = vmatpush2.bf16.msra.mxu0 %v2749
        %4010 = vmatprep.subr.bf16.mxu0 %v2746
        %4011 = vmatpush2.bf16.msra.mxu0 %v2745
        %4012 = vmatprep.subr.bf16.mxu0 %v2742
        %4013 = vmatpush2.bf16.msra.mxu0 %v2741
        %4014 = vmatprep.subr.bf16.mxu0 %v2738
        %4015 = vmatpush2.bf16.msra.mxu0 %v2737
        %4016 = vmatprep.subr.bf16.mxu0 %v2734
        %4017 = vmatpush2.bf16.msra.mxu0 %v2733
        %4018 = vmatprep.subr.bf16.mxu0 %v2730
        %4019 = vmatpush2.bf16.msra.mxu0 %v2729
        %4020 = vmatprep.subr.bf16.mxu0 %v2726
        %4021 = vmatpush2.bf16.msra.mxu0 %v2725
        %4022 = vmatprep.subr.bf16.mxu0 %v2722
        %4023 = vmatpush2.bf16.msra.mxu0 %v2721
        %4024 = vmatprep.mubr.bf16.mxu0 %v934
        %4025 = vmatmul.mubr.bf16.gmra.mxu0 %v933
        %v4026 = vpop.f32.mrf.mxu0
        %v4027 = vadd.f32 %v3984, %v4026
        %v4028 = vpop.f32.mrf.mxu0
        %v4029 = vadd.f32 %v3986, %v4028
        %v4030 = vpop.f32.mrf.mxu0
        %v4031 = vadd.f32 %v3988, %v4030
        %v4032 = vpop.f32.mrf.mxu0
        %v4033 = vadd.f32 %v3990, %v4032
        %4034 = vdwg.mxu0
        %4035 = vmatprep.subr.bf16.mxu0 %v2782
        %4036 = vmatpush1.bf16.msra.mxu0 %v2781
        %4037 = vmatprep.subr.bf16.mxu0 %v2778
        %4038 = vmatpush1.bf16.msra.mxu0 %v2777
        %4039 = vmatprep.subr.bf16.mxu0 %v2774
        %4040 = vmatpush1.bf16.msra.mxu0 %v2773
        %4041 = vmatprep.subr.bf16.mxu0 %v2770
        %4042 = vmatpush1.bf16.msra.mxu0 %v2769
        %4043 = vmatprep.subr.bf16.mxu0 %v2766
        %4044 = vmatpush1.bf16.msra.mxu0 %v2765
        %4045 = vmatprep.subr.bf16.mxu0 %v2762
        %4046 = vmatpush1.bf16.msra.mxu0 %v2761
        %4047 = vmatprep.subr.bf16.mxu0 %v2758
        %4048 = vmatpush1.bf16.msra.mxu0 %v2757
        %4049 = vmatprep.subr.bf16.mxu0 %v2754
        %4050 = vmatpush1.bf16.msra.mxu0 %v2753
        %4051 = vmatprep.subr.bf16.mxu0 %v2814
        %4052 = vmatpush2.bf16.msra.mxu0 %v2813
        %4053 = vmatprep.subr.bf16.mxu0 %v2810
        %4054 = vmatpush2.bf16.msra.mxu0 %v2809
        %4055 = vmatprep.subr.bf16.mxu0 %v2806
        %4056 = vmatpush2.bf16.msra.mxu0 %v2805
        %4057 = vmatprep.subr.bf16.mxu0 %v2802
        %4058 = vmatpush2.bf16.msra.mxu0 %v2801
        %4059 = vmatprep.subr.bf16.mxu0 %v2798
        %4060 = vmatpush2.bf16.msra.mxu0 %v2797
        %4061 = vmatprep.subr.bf16.mxu0 %v2794
        %4062 = vmatpush2.bf16.msra.mxu0 %v2793
        %4063 = vmatprep.subr.bf16.mxu0 %v2790
        %4064 = vmatpush2.bf16.msra.mxu0 %v2789
        %4065 = vmatprep.subr.bf16.mxu0 %v2786
        %4066 = vmatpush2.bf16.msra.mxu0 %v2785
        %4067 = vmatprep.mubr.bf16.mxu0 %v936
        %4068 = vmatmul.mubr.bf16.gmra.mxu0 %v935
        %v4069 = vpop.f32.mrf.mxu0
        %v4070 = vadd.f32 %v4027, %v4069
        %v4071 = vpop.f32.mrf.mxu0
        %v4072 = vadd.f32 %v4029, %v4071
        %v4073 = vpop.f32.mrf.mxu0
        %v4074 = vadd.f32 %v4031, %v4073
        %v4075 = vpop.f32.mrf.mxu0
        %v4076 = vadd.f32 %v4033, %v4075
        %4077 = vdwg.mxu0
        %4078 = vmatprep.subr.bf16.mxu0 %v2846
        %4079 = vmatpush1.bf16.msra.mxu0 %v2845
        %4080 = vmatprep.subr.bf16.mxu0 %v2842
        %4081 = vmatpush1.bf16.msra.mxu0 %v2841
        %4082 = vmatprep.subr.bf16.mxu0 %v2838
        %4083 = vmatpush1.bf16.msra.mxu0 %v2837
        %4084 = vmatprep.subr.bf16.mxu0 %v2834
        %4085 = vmatpush1.bf16.msra.mxu0 %v2833
        %4086 = vmatprep.subr.bf16.mxu0 %v2830
        %4087 = vmatpush1.bf16.msra.mxu0 %v2829
        %4088 = vmatprep.subr.bf16.mxu0 %v2826
        %4089 = vmatpush1.bf16.msra.mxu0 %v2825
        %4090 = vmatprep.subr.bf16.mxu0 %v2822
        %4091 = vmatpush1.bf16.msra.mxu0 %v2821
        %4092 = vmatprep.subr.bf16.mxu0 %v2818
        %4093 = vmatpush1.bf16.msra.mxu0 %v2817
        %4094 = vmatprep.subr.bf16.mxu0 %v2878
        %4095 = vmatpush2.bf16.msra.mxu0 %v2877
        %4096 = vmatprep.subr.bf16.mxu0 %v2874
        %4097 = vmatpush2.bf16.msra.mxu0 %v2873
        %4098 = vmatprep.subr.bf16.mxu0 %v2870
        %4099 = vmatpush2.bf16.msra.mxu0 %v2869
        %4100 = vmatprep.subr.bf16.mxu0 %v2866
        %4101 = vmatpush2.bf16.msra.mxu0 %v2865
        %4102 = vmatprep.subr.bf16.mxu0 %v2862
        %4103 = vmatpush2.bf16.msra.mxu0 %v2861
        %4104 = vmatprep.subr.bf16.mxu0 %v2858
        %4105 = vmatpush2.bf16.msra.mxu0 %v2857
        %4106 = vmatprep.subr.bf16.mxu0 %v2854
        %4107 = vmatpush2.bf16.msra.mxu0 %v2853
        %4108 = vmatprep.subr.bf16.mxu0 %v2850
        %4109 = vmatpush2.bf16.msra.mxu0 %v2849
        %4110 = vmatprep.mubr.bf16.mxu0 %v938
        %4111 = vmatmul.mubr.bf16.gmra.mxu0 %v937
        %v4112 = vpop.f32.mrf.mxu0
        %v4113 = vadd.f32 %v4070, %v4112
        %v4114 = vpop.f32.mrf.mxu0
        %v4115 = vadd.f32 %v4072, %v4114
        %v4116 = vpop.f32.mrf.mxu0
        %v4117 = vadd.f32 %v4074, %v4116
        %v4118 = vpop.f32.mrf.mxu0
        %v4119 = vadd.f32 %v4076, %v4118
        %4120 = vdwg.mxu0
        %4121 = vmatprep.subr.bf16.mxu0 %v2910
        %4122 = vmatpush1.bf16.msra.mxu0 %v2909
        %4123 = vmatprep.subr.bf16.mxu0 %v2906
        %4124 = vmatpush1.bf16.msra.mxu0 %v2905
        %4125 = vmatprep.subr.bf16.mxu0 %v2902
        %4126 = vmatpush1.bf16.msra.mxu0 %v2901
        %4127 = vmatprep.subr.bf16.mxu0 %v2898
        %4128 = vmatpush1.bf16.msra.mxu0 %v2897
        %4129 = vmatprep.subr.bf16.mxu0 %v2894
        %4130 = vmatpush1.bf16.msra.mxu0 %v2893
        %4131 = vmatprep.subr.bf16.mxu0 %v2890
        %4132 = vmatpush1.bf16.msra.mxu0 %v2889
        %4133 = vmatprep.subr.bf16.mxu0 %v2886
        %4134 = vmatpush1.bf16.msra.mxu0 %v2885
        %4135 = vmatprep.subr.bf16.mxu0 %v2882
        %4136 = vmatpush1.bf16.msra.mxu0 %v2881
        %4137 = vmatprep.subr.bf16.mxu0 %v2942
        %4138 = vmatpush2.bf16.msra.mxu0 %v2941
        %4139 = vmatprep.subr.bf16.mxu0 %v2938
        %4140 = vmatpush2.bf16.msra.mxu0 %v2937
        %4141 = vmatprep.subr.bf16.mxu0 %v2934
        %4142 = vmatpush2.bf16.msra.mxu0 %v2933
        %4143 = vmatprep.subr.bf16.mxu0 %v2930
        %4144 = vmatpush2.bf16.msra.mxu0 %v2929
        %4145 = vmatprep.subr.bf16.mxu0 %v2926
        %4146 = vmatpush2.bf16.msra.mxu0 %v2925
        %4147 = vmatprep.subr.bf16.mxu0 %v2922
        %4148 = vmatpush2.bf16.msra.mxu0 %v2921
        %4149 = vmatprep.subr.bf16.mxu0 %v2918
        %4150 = vmatpush2.bf16.msra.mxu0 %v2917
        %4151 = vmatprep.subr.bf16.mxu0 %v2914
        %4152 = vmatpush2.bf16.msra.mxu0 %v2913
        %4153 = vmatprep.mubr.bf16.mxu0 %v940
        %4154 = vmatmul.mubr.bf16.gmra.mxu0 %v939
        %v4155 = vpop.f32.mrf.mxu0
        %v4156 = vadd.f32 %v4113, %v4155
        %v4157 = vpop.f32.mrf.mxu0
        %v4158 = vadd.f32 %v4115, %v4157
        %v4159 = vpop.f32.mrf.mxu0
        %v4160 = vadd.f32 %v4117, %v4159
        %v4161 = vpop.f32.mrf.mxu0
        %v4162 = vadd.f32 %v4119, %v4161
        %4163 = vdwg.mxu0
        %4164 = vmatprep.subr.bf16.mxu0 %v2974
        %4165 = vmatpush1.bf16.msra.mxu0 %v2973
        %4166 = vmatprep.subr.bf16.mxu0 %v2970
        %4167 = vmatpush1.bf16.msra.mxu0 %v2969
        %4168 = vmatprep.subr.bf16.mxu0 %v2966
        %4169 = vmatpush1.bf16.msra.mxu0 %v2965
        %4170 = vmatprep.subr.bf16.mxu0 %v2962
        %4171 = vmatpush1.bf16.msra.mxu0 %v2961
        %4172 = vmatprep.subr.bf16.mxu0 %v2958
        %4173 = vmatpush1.bf16.msra.mxu0 %v2957
        %4174 = vmatprep.subr.bf16.mxu0 %v2954
        %4175 = vmatpush1.bf16.msra.mxu0 %v2953
        %4176 = vmatprep.subr.bf16.mxu0 %v2950
        %4177 = vmatpush1.bf16.msra.mxu0 %v2949
        %4178 = vmatprep.subr.bf16.mxu0 %v2946
        %4179 = vmatpush1.bf16.msra.mxu0 %v2945
        %4180 = vmatprep.subr.bf16.mxu0 %v3006
        %4181 = vmatpush2.bf16.msra.mxu0 %v3005
        %4182 = vmatprep.subr.bf16.mxu0 %v3002
        %4183 = vmatpush2.bf16.msra.mxu0 %v3001
        %4184 = vmatprep.subr.bf16.mxu0 %v2998
        %4185 = vmatpush2.bf16.msra.mxu0 %v2997
        %4186 = vmatprep.subr.bf16.mxu0 %v2994
        %4187 = vmatpush2.bf16.msra.mxu0 %v2993
        %4188 = vmatprep.subr.bf16.mxu0 %v2990
        %4189 = vmatpush2.bf16.msra.mxu0 %v2989
        %4190 = vmatprep.subr.bf16.mxu0 %v2986
        %4191 = vmatpush2.bf16.msra.mxu0 %v2985
        %4192 = vmatprep.subr.bf16.mxu0 %v2982
        %4193 = vmatpush2.bf16.msra.mxu0 %v2981
        %4194 = vmatprep.subr.bf16.mxu0 %v2978
        %4195 = vmatpush2.bf16.msra.mxu0 %v2977
        %4196 = vmatprep.mubr.bf16.mxu0 %v942
        %4197 = vmatmul.mubr.bf16.gmra.mxu0 %v941
        %v4198 = vpop.f32.mrf.mxu0
        %v4199 = vadd.f32 %v4156, %v4198
        %v4200 = vpop.f32.mrf.mxu0
        %v4201 = vadd.f32 %v4158, %v4200
        %v4202 = vpop.f32.mrf.mxu0
        %v4203 = vadd.f32 %v4160, %v4202
        %v4204 = vpop.f32.mrf.mxu0
        %v4205 = vadd.f32 %v4162, %v4204
        %4206 = vdwg.mxu0
        %v4207 = vadd.f32 %v343, %v3855
        %v4208 = vadd.f32 %v344, %v3857
        %v4209 = vadd.f32 %v345, %v4199
        %v4210 = vadd.f32 %v346, %v4201
        %v4211 = vadd.f32 %v347, %v3859
        %v4212 = vadd.f32 %v348, %v3861
        %v4213 = vadd.f32 %v349, %v4203
        %v4214 = vadd.f32 %v350, %v4205
        %4215 = vst [vmem:[#allocation2] sm:$0xff] %v4207
        %4216 = vst [vmem:[#allocation2 + $0x8] sm:$0xff] %v4208
        %4217 = vst [vmem:[#allocation2 + $0x10] sm:$0xff] %v4209
        %4218 = vst [vmem:[#allocation2 + $0x18] sm:$0xff] %v4210
        %4219 = vst [vmem:[#allocation2 + $0x20] sm:$0xff] %v4211
        %4220 = vst [vmem:[#allocation2 + $0x28] sm:$0xff] %v4212
        %4221 = vst [vmem:[#allocation2 + $0x30] sm:$0xff] %v4213
        %4222 = vst [vmem:[#allocation2 + $0x38] sm:$0xff] %v4214
        %p4223 = scmp.eq.s32.totalorder %s27, 8
        // Predicated region
        $region68: #{cpi_regression_forward.9} parent=50 // pred_check
          %p4224 = pneg %p4223
        $region69: #{cpi_regression_forward.9} parent=50 // pred_check_branch
          %4226 = sbr.rel (%p4224) target = $region71
        $region70: #{cpi_regression_forward.9} parent=50 // pred_region
          %v4227 = vld [vmem:[#allocation2] sm:$0xff]
          %v4228 = vld [vmem:[#allocation2 + $0x8] sm:$0xff]
          %v4229 = vld [vmem:[#allocation2 + $0x10] sm:$0xff]
          %v4230 = vld [vmem:[#allocation2 + $0x18] sm:$0xff]
          %v4231 = vld [vmem:[#allocation2 + $0x20] sm:$0xff]
          %v4232 = vld [vmem:[#allocation2 + $0x28] sm:$0xff]
          %v4233 = vld [vmem:[#allocation2 + $0x30] sm:$0xff]
          %v4234 = vld [vmem:[#allocation2 + $0x38] sm:$0xff]
          %v4235 = vld [vmem:[%s293] sm:$0xf]
          %v4237 = vlaneseq
          %v4238 = vshrl.u32 %v4237, 7
          %v4239 = vsub.s32 0, %v4238
          %v4240 = vrot.slane %v4235, %v4239
          %v4241 = vlaneseq
          %v4242 = vshrl.u32 %v4241, 7
          %v4243 = vsub.s32 1, %v4242
          %v4244 = vrot.slane %v4235, %v4243
          %v4245 = vlaneseq
          %v4246 = vshrl.u32 %v4245, 7
          %v4247 = vsub.s32 2, %v4246
          %v4248 = vrot.slane %v4235, %v4247
          %v4249 = vlaneseq
          %v4250 = vshrl.u32 %v4249, 7
          %v4251 = vsub.s32 3, %v4250
          %v4252 = vrot.slane %v4235, %v4251
          %v4257 = vadd.f32 %v4227, %v4240
          %v4258 = vadd.f32 %v4228, %v4244
          %v4259 = vadd.f32 %v4229, %v4248
          %v4260 = vadd.f32 %v4230, %v4252
          %v4261 = vadd.f32 %v4231, %v4240
          %v4262 = vadd.f32 %v4232, %v4244
          %v4263 = vadd.f32 %v4233, %v4248
          %v4264 = vadd.f32 %v4234, %v4252
          %vm4265 = vcmp.gt.f32.partialorder %v4257, 0.0
          %vm4266 = vcmp.gt.f32.partialorder %v4258, 0.0
          %vm4267 = vcmp.gt.f32.partialorder %v4259, 0.0
          %vm4268 = vcmp.gt.f32.partialorder %v4260, 0.0
          %vm4269 = vcmp.gt.f32.partialorder %v4261, 0.0
          %vm4270 = vcmp.gt.f32.partialorder %v4262, 0.0
          %vm4271 = vcmp.gt.f32.partialorder %v4263, 0.0
          %vm4272 = vcmp.gt.f32.partialorder %v4264, 0.0
          %v4273 = vmul.f32 %v4257, 0.01
          %v4274 = vmul.f32 %v4258, 0.01
          %v4275 = vmul.f32 %v4259, 0.01
          %v4276 = vmul.f32 %v4260, 0.01
          %v4277 = vmul.f32 %v4261, 0.01
          %v4278 = vmul.f32 %v4262, 0.01
          %v4279 = vmul.f32 %v4263, 0.01
          %v4280 = vmul.f32 %v4264, 0.01
          %v4281 = vsel %vm4265, %v4257, %v4273
          %v4282 = vsel %vm4266, %v4258, %v4274
          %v4283 = vsel %vm4267, %v4259, %v4275
          %v4284 = vsel %vm4268, %v4260, %v4276
          %v4285 = vsel %vm4269, %v4261, %v4277
          %v4286 = vsel %vm4270, %v4262, %v4278
          %v4287 = vsel %vm4271, %v4263, %v4279
          %v4288 = vsel %vm4272, %v4264, %v4280
          %4289 = vst [vmem:[%s323] sm:$0xff] %v4281
          %4290 = vst [vmem:[%s323 + $0x8] sm:$0xff] %v4282
          %4291 = vst [vmem:[%s323 + $0x10] sm:$0xff] %v4283
          %4292 = vst [vmem:[%s323 + $0x18] sm:$0xff] %v4284
          %4293 = vst [vmem:[%s323 + $0x20] sm:$0xff] %v4285
          %4294 = vst [vmem:[%s323 + $0x28] sm:$0xff] %v4286
          %4295 = vst [vmem:[%s323 + $0x30] sm:$0xff] %v4287
          %4296 = vst [vmem:[%s323 + $0x38] sm:$0xff] %v4288
        $region71: #{cpi_regression_forward.9} parent=50 // pred_fallthru
          _
        %s4297 = sand.u32 %s131, 1
        %s4298 = sand.u32 %s131, 1
        %s4299 = smul.addr %s4298, 64
        %s4300 = scalar_lea.vmem [#allocation8], %s4299
        // Predicated region
        $region72: #{cpi_regression_forward.9} parent=50 // pred_check
          %p4301 = pneg %p141
        $region73: #{cpi_regression_forward.9} parent=50 // pred_check_branch
          %4303 = sbr.rel (%p4301) target = $region75
        $region74: #{cpi_regression_forward.9} parent=50 // pred_region
          %s4304 = smul.u32 2, %s25
          %s4305 = smul.u32 4, %s26
          %s4306 = smul.addr %s4304, 8
          %s4307 = sadd.s32 %s4305, %s4306
          %s4308 = smul.addr %s4307, 8
          %s4309 = scalar_lea.vmem %s3, %s4308
          // Predicated region
          $region76: #{cpi_regression_forward.9} parent=74 // pred_check
            _
          $region77: #{cpi_regression_forward.9} parent=74 // pred_check_branch
            %4311 = sbr.rel (0) target = $region79
          $region78: #{cpi_regression_forward.9} parent=74 // pred_region
            // Predicated region
            $region80: #{cpi_regression_forward.9} parent=78 // pred_check
              _
            $region81: #{cpi_regression_forward.9} parent=78 // pred_check_branch
              %4313 = sbr.rel (0) target = $region83
            $region82: #{cpi_regression_forward.9} parent=78 // pred_region
              loop: start=0, step=1, limit=1
              $region84: #{cpi_regression_forward.9} parent=82 // loop_pre_header
                _
              $region85: #{cpi_regression_forward.9} parent=82 // loop_header
                %s4315 = sphi 0, %s4319
                %p4316 = scmp.ge.s32.totalorder %s4315, 1
                %s4320 = sphi %s4300, %s4300
                %s4321 = sphi %s4309, %s4309
              $region86: #{cpi_regression_forward.9} parent=82 // loop_header_branch
                %4318 = sbr.rel (%p4316) target = $region90
              $region87: #{cpi_regression_forward.9} parent=82 // loop_body
                %v4322 = vld [vmem:[%s4320] sm:$0xff]
                %4323 = vst [vmem:[%s4321] sm:$0xff] %v4322
                %v4324 = vld [vmem:[%s4320 + $0x8] sm:$0xff]
                %4325 = vst [vmem:[%s4321 + $0x8] sm:$0xff] %v4324
                %v4326 = vld [vmem:[%s4320 + $0x10] sm:$0xff]
                %4327 = vst [vmem:[%s4321 + $0x10] sm:$0xff] %v4326
                %v4328 = vld [vmem:[%s4320 + $0x18] sm:$0xff]
                %4329 = vst [vmem:[%s4321 + $0x18] sm:$0xff] %v4328
                %v4330 = vld [vmem:[%s4320 + $0x20] sm:$0xff]
                %4331 = vst [vmem:[%s4321 + $0x40] sm:$0xff] %v4330
                %v4332 = vld [vmem:[%s4320 + $0x28] sm:$0xff]
                %4333 = vst [vmem:[%s4321 + $0x48] sm:$0xff] %v4332
                %v4334 = vld [vmem:[%s4320 + $0x30] sm:$0xff]
                %4335 = vst [vmem:[%s4321 + $0x50] sm:$0xff] %v4334
                %v4336 = vld [vmem:[%s4320 + $0x38] sm:$0xff]
                %4337 = vst [vmem:[%s4321 + $0x58] sm:$0xff] %v4336
              $region88: #{cpi_regression_forward.9} parent=82 // loop_footer
                %s4319 = sadd.s32 1, %s4315
              $region89: #{cpi_regression_forward.9} parent=82 // loop_footer_branch
                %4314 = sbr.rel target = $region85
              $region90: #{cpi_regression_forward.9} parent=82 // loop_exit
                _
            $region83: #{cpi_regression_forward.9} parent=78 // pred_fallthru
              _
            // Predicated region
            $region91: #{cpi_regression_forward.9} parent=78 // pred_check
              _
            $region92: #{cpi_regression_forward.9} parent=78 // pred_check_branch
              %4339 = sbr.rel target = $region94
            $region93: #{cpi_regression_forward.9} parent=78 // pred_region
              _
            $region94: #{cpi_regression_forward.9} parent=78 // pred_fallthru
              _
          $region79: #{cpi_regression_forward.9} parent=74 // pred_fallthru
            _
          %4340 = vnop
        $region75: #{cpi_regression_forward.9} parent=50 // pred_fallthru
          _
      $region51: #{cpi_regression_forward.9} parent=5 // pred_fallthru
        _
      %p4341 = scmp.le.s32.totalorder 2, %s15
      // Predicated region
      $region95: #{cpi_regression_forward.9} parent=5 // pred_check
        %p4342 = pneg %p4341
      $region96: #{cpi_regression_forward.9} parent=5 // pred_check_branch
        %4344 = sbr.rel (%p4342) target = $region98
      $region97: #{cpi_regression_forward.9} parent=5 // pred_region
        %s4345 = ssub.s32 %s15, 2
        // Predicated region
        $region99: #{cpi_regression_forward.9} parent=97 // pred_check
          %p4346 = pneg %p147
        $region100: #{cpi_regression_forward.9} parent=97 // pred_check_branch
          %4348 = sbr.rel (%p4346) target = $region102
        $region101: #{cpi_regression_forward.9} parent=97 // pred_region
          %s4349 = sand.u32 %s132, 1
          %s4350 = sand.u32 %s132, 1
          %s4351 = smul.addr %s4350, 64
          %s4352 = scalar_lea.vmem [#allocation8], %s4351
        $region102: #{cpi_regression_forward.9} parent=97 // pred_fallthru
          _
      $region98: #{cpi_regression_forward.9} parent=5 // pred_fallthru
        _
    $region6: #{cpi_regression_forward.9} parent=1 // loop_footer
      %s19 = sadd.s32 1, %s15
    $region7: #{cpi_regression_forward.9} parent=1 // loop_footer_branch
      %14 = sbr.rel target = $region3
    $region8: #{cpi_regression_forward.9} parent=1 // loop_exit
      _
    %4353 = vsyncpa [#allocation5], 1
    %s4354 = scalar_lea.sflag [#allocation5], 1
    %4355 = vsyncpa %s4354, 1
    %4356 = vsyncpa [#allocation7], 1
    %s4357 = scalar_lea.sflag [#allocation7], 1
    %4358 = vsyncpa %s4357, 1

</llo_original>
